<compile_context>
chip_gen: v7x
topology: tpu7x:2x2x1
jax: 0.10.0
libtpu: 0.0.40
codegen_flags: <defaults>
</compile_context>

<pallas_src>
import math

import jax
import jax.numpy as jnp
from jax.experimental import pallas as pl
from jax.experimental.pallas import tpu as pltpu

# ---------------------------- model hyper-params ----------------------------
BATCH = 2
SRC_LEN = 8
TGT_LEN = 8
D_MODEL = 32          # Para.d_model
N_HEADS = 4
D_HEAD = D_MODEL // N_HEADS
D_FF = 64
LINEAR_2 = 64         # Para.linear_2
LINEAR_1 = 16         # Para.linear_1
D_WORD_VOCAB = 48     # Para.d_word_vocab
SRC_VOCAB = 24
TGT_VOCAB = D_WORD_VOCAB
BN_EPS = 1e-5
LN_EPS = 1e-5
ATTN_SCALE = 1.0 / math.sqrt(D_HEAD)


# ------------------------------ spec helpers --------------------------------
def _full_specs(arrays):
    """Whole-array VMEM blocks for a grid=(1,) kernel."""
    return [pl.BlockSpec(a.shape, lambda i, n=a.ndim: (0,) * n) for a in arrays]


_ARB = pltpu.CompilerParams(dimension_semantics=("arbitrary",))


# --------------------------- in-kernel building blocks -----------------------
def _layer_norm(x, g, b):
    mu = jnp.mean(x, axis=-1, keepdims=True)
    var = jnp.mean((x - mu) ** 2, axis=-1, keepdims=True)
    return (x - mu) * jax.lax.rsqrt(var + LN_EPS) * g + b


def _softmax_rows(s):
    s = s - jnp.max(s, axis=-1, keepdims=True)
    p = jnp.exp(s)
    return p * pl.reciprocal(jnp.sum(p, axis=-1, keepdims=True), approx=True)


def _mha_block(q, k, v, wo_ref, attn_ref, n_q, n_kv, mask):
    """Multi-head attention + output projection, fully in-register.

    q: (B*n_q, D); k, v: (B*n_kv, D).  Heads are column blocks of width D_HEAD.
    The output projection is folded into the head loop as wo row-block
    accumulation, so the per-head context never needs lane-offset writes.
    Writes attention probs to attn_ref[(b*H + h)] and returns (B*n_q, D).
    """
    per_batch_out = []
    for b in range(BATCH):
        q_rows = slice(b * n_q, (b + 1) * n_q)
        kv_rows = slice(b * n_kv, (b + 1) * n_kv)
        acc = None
        for h in range(N_HEADS):
            cols = slice(h * D_HEAD, (h + 1) * D_HEAD)
            qb = q[q_rows, cols]                       # (n_q, Dh)
            kb = k[kv_rows, cols]                      # (n_kv, Dh)
            vb = v[kv_rows, cols]                      # (n_kv, Dh)
            s = jax.lax.dot_general(
                qb, kb, (((1,), (1,)), ((), ())),
                preferred_element_type=jnp.float32) * ATTN_SCALE
            if mask is not None:
                s = s + mask                           # additive mask (0 / -1e9)
            p = _softmax_rows(s)                       # (n_q, n_kv)
            attn_ref[b * N_HEADS + h, :, :] = p
            ctx = jnp.dot(p, vb, preferred_element_type=jnp.float32)
            term = jnp.dot(ctx, wo_ref[h * D_HEAD:(h + 1) * D_HEAD, :],
                           preferred_element_type=jnp.float32)
            acc = term if acc is None else acc + term
        per_batch_out.append(acc)
    return jnp.concatenate(per_batch_out, axis=0)      # (B*n_q, D)


# ------------------------------ fused kernels --------------------------------
def _encoder_kernel(x_ref, wqkv_ref, wo_ref, ln1g_ref, ln1b_ref,
                    w1_ref, b1_ref, w2_ref, b2_ref, ln2g_ref, ln2b_ref,
                    out_ref, attn_ref):
    x = x_ref[...]                                     # (B*S, D)
    qkv = jnp.dot(x, wqkv_ref[...], preferred_element_type=jnp.float32)
    q = qkv[:, :D_MODEL]
    k = qkv[:, D_MODEL:2 * D_MODEL]
    v = qkv[:, 2 * D_MODEL:]
    attn_out = _mha_block(q, k, v, wo_ref, attn_ref, SRC_LEN, SRC_LEN, None)
    y = _layer_norm(x + attn_out, ln1g_ref[...], ln1b_ref[...])
    h = jnp.maximum(
        jnp.dot(y, w1_ref[...], preferred_element_type=jnp.float32) + b1_ref[...],
        0.0)
    ffn = jnp.dot(h, w2_ref[...], preferred_element_type=jnp.float32) + b2_ref[...]
    out_ref[...] = _layer_norm(y + ffn, ln2g_ref[...], ln2b_ref[...])


def _decoder_kernel(y_ref, enc_ref, mask_ref,
                    s_wqkv_ref, s_wo_ref, ln1g_ref, ln1b_ref,
                    c_wq_ref, c_wkv_ref, c_wo_ref, ln2g_ref, ln2b_ref,
                    w1_ref, b1_ref, w2_ref, b2_ref, ln3g_ref, ln3b_ref,
                    out_ref, sattn_ref, cattn_ref):
    y0 = y_ref[...]                                    # (B*T, D)
    enc = enc_ref[...]                                 # (B*S, D)
    mask = mask_ref[...]                               # (T, T)

    # masked self-attention
    qkv = jnp.dot(y0, s_wqkv_ref[...], preferred_element_type=jnp.float32)
    q = qkv[:, :D_MODEL]
    k = qkv[:, D_MODEL:2 * D_MODEL]
    v = qkv[:, 2 * D_MODEL:]
    sa_out = _mha_block(q, k, v, s_wo_ref, sattn_ref, TGT_LEN, TGT_LEN, mask)
    y1 = _layer_norm(y0 + sa_out, ln1g_ref[...], ln1b_ref[...])

    # cross-attention (no mask)
    q = jnp.dot(y1, c_wq_ref[...], preferred_element_type=jnp.float32)
    kv = jnp.dot(enc, c_wkv_ref[...], preferred_element_type=jnp.float32)
    k = kv[:, :D_MODEL]
    v = kv[:, D_MODEL:]
    ca_out = _mha_block(q, k, v, c_wo_ref, cattn_ref, TGT_LEN, SRC_LEN, None)
    z = _layer_norm(y1 + ca_out, ln2g_ref[...], ln2b_ref[...])

    # feed-forward
    h = jnp.maximum(
        jnp.dot(z, w1_ref[...], preferred_element_type=jnp.float32) + b1_ref[...],
        0.0)
    ffn = jnp.dot(h, w2_ref[...], preferred_element_type=jnp.float32) + b2_ref[...]
    out_ref[...] = _layer_norm(z + ffn, ln3g_ref[...], ln3b_ref[...])


def _projection_kernel(x_ref, *refs):
    # refs = 5 * (w, gamma, beta, mean, var), out_ref
    out_ref = refs[-1]
    n_layers = (len(refs) - 1) // 5
    x = x_ref[...]
    for layer in range(n_layers):
        w, g, b, m, v = refs[layer * 5:layer * 5 + 5]
        # Linear(no bias) -> BatchNorm1d(eval) -> Dropout(identity) -> LeakyReLU(0.2)
        y = jnp.dot(x, w[...], preferred_element_type=jnp.float32)
        y = (y - m[...]) * jax.lax.rsqrt(v[...] + BN_EPS) * g[...] + b[...]
        x = jnp.where(y >= 0.0, y, 0.2 * y)
    out_ref[...] = x


# ------------------------------ kernel wrappers -------------------------------
def encoder_forward(p, x2d):
    n = x2d.shape[0]
    inputs = (x2d, p["wqkv"], p["wo"], p["ln1_g"], p["ln1_b"],
              p["ffn_w1"], p["ffn_b1"], p["ffn_w2"], p["ffn_b2"],
              p["ln2_g"], p["ln2_b"])
    out, attn = pl.pallas_call(
        _encoder_kernel,
        out_shape=(jax.ShapeDtypeStruct((n, D_MODEL), jnp.float32),
                   jax.ShapeDtypeStruct((BATCH * N_HEADS, SRC_LEN, SRC_LEN),
                                        jnp.float32)),
        grid=(1,),
        in_specs=_full_specs(inputs),
        out_specs=(pl.BlockSpec((n, D_MODEL), lambda i: (0, 0)),
                   pl.BlockSpec((BATCH * N_HEADS, SRC_LEN, SRC_LEN),
                                lambda i: (0, 0, 0))),
        compiler_params=_ARB,
    )(*inputs)
    return out, attn


def decoder_forward(p, y2d, enc2d, self_mask):
    n = y2d.shape[0]
    inputs = (y2d, enc2d, self_mask,
              p["s_wqkv"], p["s_wo"], p["ln1_g"], p["ln1_b"],
              p["c_wq"], p["c_wkv"], p["c_wo"], p["ln2_g"], p["ln2_b"],
              p["ffn_w1"], p["ffn_b1"], p["ffn_w2"], p["ffn_b2"],
              p["ln3_g"], p["ln3_b"])
    out, sattn, cattn = pl.pallas_call(
        _decoder_kernel,
        out_shape=(jax.ShapeDtypeStruct((n, D_MODEL), jnp.float32),
                   jax.ShapeDtypeStruct((BATCH * N_HEADS, TGT_LEN, TGT_LEN),
                                        jnp.float32),
                   jax.ShapeDtypeStruct((BATCH * N_HEADS, TGT_LEN, SRC_LEN),
                                        jnp.float32)),
        grid=(1,),
        in_specs=_full_specs(inputs),
        out_specs=(pl.BlockSpec((n, D_MODEL), lambda i: (0, 0)),
                   pl.BlockSpec((BATCH * N_HEADS, TGT_LEN, TGT_LEN),
                                lambda i: (0, 0, 0)),
                   pl.BlockSpec((BATCH * N_HEADS, TGT_LEN, SRC_LEN),
                                lambda i: (0, 0, 0))),
        compiler_params=_ARB,
    )(*inputs)
    return out, sattn, cattn


def projection_forward(layers, x2d):
    n = x2d.shape[0]
    flat = [x2d]
    for layer in layers:
        flat += [layer["w"], layer["gamma"], layer["beta"],
                 layer["mean"], layer["var"]]
    return pl.pallas_call(
        _projection_kernel,
        out_shape=jax.ShapeDtypeStruct((n, D_WORD_VOCAB), jnp.float32),
        grid=(1,),
        in_specs=_full_specs(flat),
        out_specs=pl.BlockSpec((n, D_WORD_VOCAB), lambda i: (0, 0)),
        compiler_params=_ARB,
    )(*flat)


# ------------------------------- full forward --------------------------------
def get_subsequence_mask_additive(t):
    idx = jnp.arange(t)
    return jnp.where(idx[None, :] > idx[:, None], -1e9, 0.0).astype(jnp.float32)


def generator_forward(params, src_seq, tgt_seq):
    # embedding lookups + positional encoding are JAX glue (gather)
    x = (params["src_emb"][src_seq] + params["pos_src"]).reshape(-1, D_MODEL)
    y = (params["tgt_emb"][tgt_seq] + params["pos_tgt"]).reshape(-1, D_MODEL)
    tgt_mask = get_subsequence_mask_additive(TGT_LEN)   # src_mask = None

    enc_out, enc_attn = encoder_forward(params["encoder"], x)
    dec_out, dec_attn, dec_enc_attn = decoder_forward(
        params["decoder"], y, enc_out, tgt_mask)
    proj_out = projection_forward(params["projection"], dec_out)

    enc_attn = enc_attn.reshape(BATCH, N_HEADS, SRC_LEN, SRC_LEN)
    dec_attn = dec_attn.reshape(BATCH, N_HEADS, TGT_LEN, TGT_LEN)
    dec_enc_attn = dec_enc_attn.reshape(BATCH, N_HEADS, TGT_LEN, SRC_LEN)
    return proj_out, enc_attn, dec_attn, dec_enc_attn


# ------------------------------ parameter init --------------------------------
def xavier_normal(key, shape):
    fan_in, fan_out = shape[0], shape[1]
    std = math.sqrt(2.0 / (fan_in + fan_out))
    return (std * jax.random.normal(key, shape)).astype(jnp.float32)


def sinusoid_pos(seq_len, d_model):
    pos = jnp.arange(seq_len, dtype=jnp.float32)[:, None]
    i = jnp.arange(d_model, dtype=jnp.float32)[None, :]
    angle = pos / jnp.power(10000.0, (2.0 * jnp.floor(i / 2.0)) / d_model)
    pe = jnp.where(jnp.arange(d_model)[None, :] % 2 == 0,
                   jnp.sin(angle), jnp.cos(angle))
    return pe[None].astype(jnp.float32)   # [1, S, D]


def init_attn_mats(key):
    ks = jax.random.split(key, 4)
    wq = xavier_normal(ks[0], (D_MODEL, D_MODEL))
    wk = xavier_normal(ks[1], (D_MODEL, D_MODEL))
    wv = xavier_normal(ks[2], (D_MODEL, D_MODEL))
    wo = xavier_normal(ks[3], (D_MODEL, D_MODEL))
    return wq, wk, wv, wo


def init_params(key):
    keys = jax.random.split(key, 16)
    ones = lambda n: jnp.ones((1, n), jnp.float32)
    zeros = lambda n: jnp.zeros((1, n), jnp.float32)

    e_wq, e_wk, e_wv, e_wo = init_attn_mats(keys[0])
    encoder = {
        "wqkv": jnp.concatenate([e_wq, e_wk, e_wv], axis=1),   # (D, 3D) fused QKV
        "wo": e_wo,
        "ffn_w1": xavier_normal(keys[1], (D_MODEL, D_FF)),
        "ffn_b1": zeros(D_FF),
        "ffn_w2": xavier_normal(keys[2], (D_FF, D_MODEL)),
        "ffn_b2": zeros(D_MODEL),
        "ln1_g": ones(D_MODEL), "ln1_b": zeros(D_MODEL),
        "ln2_g": ones(D_MODEL), "ln2_b": zeros(D_MODEL),
    }

    s_wq, s_wk, s_wv, s_wo = init_attn_mats(keys[3])
    c_wq, c_wk, c_wv, c_wo = init_attn_mats(keys[4])
    decoder = {
        "s_wqkv": jnp.concatenate([s_wq, s_wk, s_wv], axis=1),
        "s_wo": s_wo,
        "c_wq": c_wq,
        "c_wkv": jnp.concatenate([c_wk, c_wv], axis=1),
        "c_wo": c_wo,
        "ffn_w1": xavier_normal(keys[5], (D_MODEL, D_FF)),
        "ffn_b1": zeros(D_FF),
        "ffn_w2": xavier_normal(keys[6], (D_FF, D_MODEL)),
        "ffn_b2": zeros(D_MODEL),
        "ln1_g": ones(D_MODEL), "ln1_b": zeros(D_MODEL),
        "ln2_g": ones(D_MODEL), "ln2_b": zeros(D_MODEL),
        "ln3_g": ones(D_MODEL), "ln3_b": zeros(D_MODEL),
    }

    proj_dims = [(D_MODEL, LINEAR_2), (LINEAR_2, LINEAR_1),
                 (LINEAR_1, LINEAR_1 * 2), (LINEAR_1 * 2, LINEAR_1 * 2),
                 (LINEAR_1 * 2, D_WORD_VOCAB)]
    proj_keys = jax.random.split(keys[7], len(proj_dims))
    projection = []
    for pk, (din, dout) in zip(proj_keys, proj_dims):
        projection.append({"w": xavier_normal(pk, (din, dout)),
                           "gamma": ones(dout), "beta": zeros(dout),
                           "mean": zeros(dout), "var": ones(dout)})

    return {
        "src_emb": xavier_normal(keys[8], (SRC_VOCAB, D_MODEL)),
        "tgt_emb": xavier_normal(keys[9], (TGT_VOCAB, D_MODEL)),
        "pos_src": sinusoid_pos(SRC_LEN, D_MODEL),
        "pos_tgt": sinusoid_pos(TGT_LEN, D_MODEL),
        "encoder": encoder,
        "decoder": decoder,
        "projection": projection,
    }


# ----------------------------------- main -------------------------------------
if __name__ == "__main__":
    root = jax.random.PRNGKey(0)
    k_params, k_src, k_tgt = jax.random.split(root, 3)
    params = init_params(k_params)

    src_seq = jax.random.randint(k_src, (BATCH, SRC_LEN), 0, SRC_VOCAB,
                                 dtype=jnp.int32)
    tgt_seq = jax.random.randint(k_tgt, (BATCH, TGT_LEN), 0, TGT_VOCAB,
                                 dtype=jnp.int32)

    fwd = jax.jit(generator_forward)
    dec_output, enc_attn, dec_attn, dec_enc_attn = fwd(params, src_seq, tgt_seq)
    jax.block_until_ready((dec_output, enc_attn, dec_attn, dec_enc_attn))

    assert dec_output.shape == (BATCH * TGT_LEN, D_WORD_VOCAB)
    assert enc_attn.shape == (BATCH, N_HEADS, SRC_LEN, SRC_LEN)
    assert dec_attn.shape == (BATCH, N_HEADS, TGT_LEN, TGT_LEN)
    assert dec_enc_attn.shape == (BATCH, N_HEADS, TGT_LEN, SRC_LEN)
    assert bool(jnp.all(jnp.isfinite(dec_output)))
    assert bool(jnp.all(jnp.isfinite(enc_attn)))
    print("KERNEL_OK")
</pallas_src>

<mosaic_0001>
module attributes {stable_mosaic.version = 11 : i64} {
  func.func @_encoder_kernel(%arg0: i32, %arg1: memref<16x32xf32, #tpu.memory_space<vmem>>, %arg2: memref<32x96xf32, #tpu.memory_space<vmem>>, %arg3: memref<32x32xf32, #tpu.memory_space<vmem>>, %arg4: memref<1x32xf32, #tpu.memory_space<vmem>>, %arg5: memref<1x32xf32, #tpu.memory_space<vmem>>, %arg6: memref<32x64xf32, #tpu.memory_space<vmem>>, %arg7: memref<1x64xf32, #tpu.memory_space<vmem>>, %arg8: memref<64x32xf32, #tpu.memory_space<vmem>>, %arg9: memref<1x32xf32, #tpu.memory_space<vmem>>, %arg10: memref<1x32xf32, #tpu.memory_space<vmem>>, %arg11: memref<1x32xf32, #tpu.memory_space<vmem>>, %arg12: memref<16x32xf32, #tpu.memory_space<vmem>>, %arg13: memref<8x8x8xf32, #tpu.memory_space<vmem>>) attributes {dimension_semantics = [#tpu.dimension_semantics<arbitrary>], iteration_bounds = array<i64: 1>, scalar_prefetch = 0 : i64, scratch_operands = 0 : i64, tpu.core_type = #tpu.core_type<tc>, window_params = [{pipeline_mode = #tpu.pipeline_mode<synchronous>, transform_indices = @transform_0, window_bounds = array<i64: 16, 32>}, {pipeline_mode = #tpu.pipeline_mode<synchronous>, transform_indices = @transform_1, window_bounds = array<i64: 32, 96>}, {pipeline_mode = #tpu.pipeline_mode<synchronous>, transform_indices = @transform_2, window_bounds = array<i64: 32, 32>}, {pipeline_mode = #tpu.pipeline_mode<synchronous>, transform_indices = @transform_3, window_bounds = array<i64: 1, 32>}, {pipeline_mode = #tpu.pipeline_mode<synchronous>, transform_indices = @transform_4, window_bounds = array<i64: 1, 32>}, {pipeline_mode = #tpu.pipeline_mode<synchronous>, transform_indices = @transform_5, window_bounds = array<i64: 32, 64>}, {pipeline_mode = #tpu.pipeline_mode<synchronous>, transform_indices = @transform_6, window_bounds = array<i64: 1, 64>}, {pipeline_mode = #tpu.pipeline_mode<synchronous>, transform_indices = @transform_7, window_bounds = array<i64: 64, 32>}, {pipeline_mode = #tpu.pipeline_mode<synchronous>, transform_indices = @transform_8, window_bounds = array<i64: 1, 32>}, {pipeline_mode = #tpu.pipeline_mode<synchronous>, transform_indices = @transform_9, window_bounds = array<i64: 1, 32>}, {pipeline_mode = #tpu.pipeline_mode<synchronous>, transform_indices = @transform_10, window_bounds = array<i64: 1, 32>}, {pipeline_mode = #tpu.pipeline_mode<synchronous>, transform_indices = @transform_11, window_bounds = array<i64: 16, 32>}, {pipeline_mode = #tpu.pipeline_mode<synchronous>, transform_indices = @transform_12, window_bounds = array<i64: 8, 8, 8>}]} {
    %c0 = arith.constant 0 : index
    %c0_0 = arith.constant 0 : index
    %0 = vector.load %arg1[%c0, %c0_0] : memref<16x32xf32, #tpu.memory_space<vmem>>, vector<16x32xf32>
    %c0_1 = arith.constant 0 : index
    %c0_2 = arith.constant 0 : index
    %1 = vector.load %arg2[%c0_1, %c0_2] : memref<32x96xf32, #tpu.memory_space<vmem>>, vector<32x96xf32>
    %cst = arith.constant dense<0.000000e+00> : vector<16x96xf32>
    %2 = tpu.matmul %0, %1, %cst {dimension_numbers = #tpu.dot_dimension_numbers<[1], [0], [0], [1], [0, 0, 1, 1], [], []>} : vector<16x32xf32>, vector<32x96xf32>, vector<16x96xf32> -> vector<16x96xf32>
    %3 = vector.extract_strided_slice %2 {offsets = [0, 0], sizes = [16, 32], strides = [1, 1]} : vector<16x96xf32> to vector<16x32xf32>
    %4 = vector.extract_strided_slice %2 {offsets = [0, 32], sizes = [16, 32], strides = [1, 1]} : vector<16x96xf32> to vector<16x32xf32>
    %5 = vector.extract_strided_slice %2 {offsets = [0, 64], sizes = [16, 32], strides = [1, 1]} : vector<16x96xf32> to vector<16x32xf32>
    %6 = vector.extract_strided_slice %3 {offsets = [0, 0], sizes = [8, 8], strides = [1, 1]} : vector<16x32xf32> to vector<8x8xf32>
    %7 = vector.extract_strided_slice %4 {offsets = [0, 0], sizes = [8, 8], strides = [1, 1]} : vector<16x32xf32> to vector<8x8xf32>
    %8 = vector.extract_strided_slice %5 {offsets = [0, 0], sizes = [8, 8], strides = [1, 1]} : vector<16x32xf32> to vector<8x8xf32>
    %cst_3 = arith.constant dense<0.000000e+00> : vector<8x8xf32>
    %9 = tpu.matmul %6, %7, %cst_3 {dimension_numbers = #tpu.dot_dimension_numbers<[1], [1], [0], [0], [0, 0, 1, 0], [], []>} : vector<8x8xf32>, vector<8x8xf32>, vector<8x8xf32> -> vector<8x8xf32>
    %cst_4 = arith.constant 0.353553385 : f32
    %10 = vector.broadcast %cst_4 : f32 to vector<8x8xf32>
    %11 = arith.mulf %9, %10 : vector<8x8xf32>
    %cst_5 = arith.constant dense<0xFF800000> : vector<8xf32>
    %12 = vector.multi_reduction <maximumf>, %11, %cst_5 [1] : vector<8x8xf32> to vector<8xf32>
    %13 = vector.shape_cast %12 : vector<8xf32> to vector<8x1xf32>
    %14 = vector.broadcast %13 : vector<8x1xf32> to vector<8x8xf32>
    %15 = arith.subf %11, %14 : vector<8x8xf32>
    %16 = math.exp %15 : vector<8x8xf32>
    %cst_6 = arith.constant dense<0.000000e+00> : vector<8xf32>
    %17 = vector.multi_reduction <add>, %16, %cst_6 [1] : vector<8x8xf32> to vector<8xf32>
    %18 = vector.shape_cast %17 : vector<8xf32> to vector<8x1xf32>
    %19 = tpu.reciprocal %18 {approx = true} : vector<8x1xf32> -> vector<8x1xf32>
    %20 = vector.broadcast %19 : vector<8x1xf32> to vector<8x8xf32>
    %21 = arith.mulf %16, %20 : vector<8x8xf32>
    %c0_7 = arith.constant 0 : index
    %c0_8 = arith.constant 0 : index
    %c0_9 = arith.constant 0 : index
    %22 = vector.load %arg13[%c0_7, %c0_8, %c0_9] : memref<8x8x8xf32, #tpu.memory_space<vmem>>, vector<1x8x8xf32>
    %23 = vector.shape_cast %22 : vector<1x8x8xf32> to vector<8x8xf32>
    %24 = vector.shape_cast %21 : vector<8x8xf32> to vector<1x8x8xf32>
    tpu.vector_store %arg13[%c0_7, %c0_8, %c0_9], %24 {strides = array<i32>} : memref<8x8x8xf32, #tpu.memory_space<vmem>>, vector<1x8x8xf32>,
    %cst_10 = arith.constant dense<0.000000e+00> : vector<8x8xf32>
    %25 = tpu.matmul %21, %8, %cst_10 {dimension_numbers = #tpu.dot_dimension_numbers<[1], [0], [0], [1], [0, 0, 1, 1], [], []>} : vector<8x8xf32>, vector<8x8xf32>, vector<8x8xf32> -> vector<8x8xf32>
    %c0_11 = arith.constant 0 : index
    %c0_12 = arith.constant 0 : index
    %26 = vector.load %arg3[%c0_11, %c0_12] : memref<32x32xf32, #tpu.memory_space<vmem>>, vector<8x32xf32>
    %cst_13 = arith.constant dense<0.000000e+00> : vector<8x32xf32>
    %27 = tpu.matmul %25, %26, %cst_13 {dimension_numbers = #tpu.dot_dimension_numbers<[1], [0], [0], [1], [0, 0, 1, 1], [], []>} : vector<8x8xf32>, vector<8x32xf32>, vector<8x32xf32> -> vector<8x32xf32>
    %28 = vector.extract_strided_slice %3 {offsets = [0, 8], sizes = [8, 8], strides = [1, 1]} : vector<16x32xf32> to vector<8x8xf32>
    %29 = vector.extract_strided_slice %4 {offsets = [0, 8], sizes = [8, 8], strides = [1, 1]} : vector<16x32xf32> to vector<8x8xf32>
    %30 = vector.extract_strided_slice %5 {offsets = [0, 8], sizes = [8, 8], strides = [1, 1]} : vector<16x32xf32> to vector<8x8xf32>
    %cst_14 = arith.constant dense<0.000000e+00> : vector<8x8xf32>
    %31 = tpu.matmul %28, %29, %cst_14 {dimension_numbers = #tpu.dot_dimension_numbers<[1], [1], [0], [0], [0, 0, 1, 0], [], []>} : vector<8x8xf32>, vector<8x8xf32>, vector<8x8xf32> -> vector<8x8xf32>
    %cst_15 = arith.constant 0.353553385 : f32
    %32 = vector.broadcast %cst_15 : f32 to vector<8x8xf32>
    %33 = arith.mulf %31, %32 : vector<8x8xf32>
    %cst_16 = arith.constant dense<0xFF800000> : vector<8xf32>
    %34 = vector.multi_reduction <maximumf>, %33, %cst_16 [1] : vector<8x8xf32> to vector<8xf32>
    %35 = vector.shape_cast %34 : vector<8xf32> to vector<8x1xf32>
    %36 = vector.broadcast %35 : vector<8x1xf32> to vector<8x8xf32>
    %37 = arith.subf %33, %36 : vector<8x8xf32>
    %38 = math.exp %37 : vector<8x8xf32>
    %cst_17 = arith.constant dense<0.000000e+00> : vector<8xf32>
    %39 = vector.multi_reduction <add>, %38, %cst_17 [1] : vector<8x8xf32> to vector<8xf32>
    %40 = vector.shape_cast %39 : vector<8xf32> to vector<8x1xf32>
    %41 = tpu.reciprocal %40 {approx = true} : vector<8x1xf32> -> vector<8x1xf32>
    %42 = vector.broadcast %41 : vector<8x1xf32> to vector<8x8xf32>
    %43 = arith.mulf %38, %42 : vector<8x8xf32>
    %c1 = arith.constant 1 : index
    %c0_18 = arith.constant 0 : index
    %c0_19 = arith.constant 0 : index
    %44 = vector.load %arg13[%c1, %c0_18, %c0_19] : memref<8x8x8xf32, #tpu.memory_space<vmem>>, vector<1x8x8xf32>
    %45 = vector.shape_cast %44 : vector<1x8x8xf32> to vector<8x8xf32>
    %46 = vector.shape_cast %43 : vector<8x8xf32> to vector<1x8x8xf32>
    tpu.vector_store %arg13[%c1, %c0_18, %c0_19], %46 {strides = array<i32>} : memref<8x8x8xf32, #tpu.memory_space<vmem>>, vector<1x8x8xf32>,
    %cst_20 = arith.constant dense<0.000000e+00> : vector<8x8xf32>
    %47 = tpu.matmul %43, %30, %cst_20 {dimension_numbers = #tpu.dot_dimension_numbers<[1], [0], [0], [1], [0, 0, 1, 1], [], []>} : vector<8x8xf32>, vector<8x8xf32>, vector<8x8xf32> -> vector<8x8xf32>
    %c8 = arith.constant 8 : index
    %c0_21 = arith.constant 0 : index
    %48 = vector.load %arg3[%c8, %c0_21] : memref<32x32xf32, #tpu.memory_space<vmem>>, vector<8x32xf32>
    %cst_22 = arith.constant dense<0.000000e+00> : vector<8x32xf32>
    %49 = tpu.matmul %47, %48, %cst_22 {dimension_numbers = #tpu.dot_dimension_numbers<[1], [0], [0], [1], [0, 0, 1, 1], [], []>} : vector<8x8xf32>, vector<8x32xf32>, vector<8x32xf32> -> vector<8x32xf32>
    %50 = arith.addf %27, %49 : vector<8x32xf32>
    %51 = vector.extract_strided_slice %3 {offsets = [0, 16], sizes = [8, 8], strides = [1, 1]} : vector<16x32xf32> to vector<8x8xf32>
    %52 = vector.extract_strided_slice %4 {offsets = [0, 16], sizes = [8, 8], strides = [1, 1]} : vector<16x32xf32> to vector<8x8xf32>
    %53 = vector.extract_strided_slice %5 {offsets = [0, 16], sizes = [8, 8], strides = [1, 1]} : vector<16x32xf32> to vector<8x8xf32>
    %cst_23 = arith.constant dense<0.000000e+00> : vector<8x8xf32>
    %54 = tpu.matmul %51, %52, %cst_23 {dimension_numbers = #tpu.dot_dimension_numbers<[1], [1], [0], [0], [0, 0, 1, 0], [], []>} : vector<8x8xf32>, vector<8x8xf32>, vector<8x8xf32> -> vector<8x8xf32>
    %cst_24 = arith.constant 0.353553385 : f32
    %55 = vector.broadcast %cst_24 : f32 to vector<8x8xf32>
    %56 = arith.mulf %54, %55 : vector<8x8xf32>
    %cst_25 = arith.constant dense<0xFF800000> : vector<8xf32>
    %57 = vector.multi_reduction <maximumf>, %56, %cst_25 [1] : vector<8x8xf32> to vector<8xf32>
    %58 = vector.shape_cast %57 : vector<8xf32> to vector<8x1xf32>
    %59 = vector.broadcast %58 : vector<8x1xf32> to vector<8x8xf32>
    %60 = arith.subf %56, %59 : vector<8x8xf32>
    %61 = math.exp %60 : vector<8x8xf32>
    %cst_26 = arith.constant dense<0.000000e+00> : vector<8xf32>
    %62 = vector.multi_reduction <add>, %61, %cst_26 [1] : vector<8x8xf32> to vector<8xf32>
    %63 = vector.shape_cast %62 : vector<8xf32> to vector<8x1xf32>
    %64 = tpu.reciprocal %63 {approx = true} : vector<8x1xf32> -> vector<8x1xf32>
    %65 = vector.broadcast %64 : vector<8x1xf32> to vector<8x8xf32>
    %66 = arith.mulf %61, %65 : vector<8x8xf32>
    %c2 = arith.constant 2 : index
    %c0_27 = arith.constant 0 : index
    %c0_28 = arith.constant 0 : index
    %67 = vector.load %arg13[%c2, %c0_27, %c0_28] : memref<8x8x8xf32, #tpu.memory_space<vmem>>, vector<1x8x8xf32>
    %68 = vector.shape_cast %67 : vector<1x8x8xf32> to vector<8x8xf32>
    %69 = vector.shape_cast %66 : vector<8x8xf32> to vector<1x8x8xf32>
    tpu.vector_store %arg13[%c2, %c0_27, %c0_28], %69 {strides = array<i32>} : memref<8x8x8xf32, #tpu.memory_space<vmem>>, vector<1x8x8xf32>,
    %cst_29 = arith.constant dense<0.000000e+00> : vector<8x8xf32>
    %70 = tpu.matmul %66, %53, %cst_29 {dimension_numbers = #tpu.dot_dimension_numbers<[1], [0], [0], [1], [0, 0, 1, 1], [], []>} : vector<8x8xf32>, vector<8x8xf32>, vector<8x8xf32> -> vector<8x8xf32>
    %c16 = arith.constant 16 : index
    %c0_30 = arith.constant 0 : index
    %71 = vector.load %arg3[%c16, %c0_30] : memref<32x32xf32, #tpu.memory_space<vmem>>, vector<8x32xf32>
    %cst_31 = arith.constant dense<0.000000e+00> : vector<8x32xf32>
    %72 = tpu.matmul %70, %71, %cst_31 {dimension_numbers = #tpu.dot_dimension_numbers<[1], [0], [0], [1], [0, 0, 1, 1], [], []>} : vector<8x8xf32>, vector<8x32xf32>, vector<8x32xf32> -> vector<8x32xf32>
    %73 = arith.addf %50, %72 : vector<8x32xf32>
    %74 = vector.extract_strided_slice %3 {offsets = [0, 24], sizes = [8, 8], strides = [1, 1]} : vector<16x32xf32> to vector<8x8xf32>
    %75 = vector.extract_strided_slice %4 {offsets = [0, 24], sizes = [8, 8], strides = [1, 1]} : vector<16x32xf32> to vector<8x8xf32>
    %76 = vector.extract_strided_slice %5 {offsets = [0, 24], sizes = [8, 8], strides = [1, 1]} : vector<16x32xf32> to vector<8x8xf32>
    %cst_32 = arith.constant dense<0.000000e+00> : vector<8x8xf32>
    %77 = tpu.matmul %74, %75, %cst_32 {dimension_numbers = #tpu.dot_dimension_numbers<[1], [1], [0], [0], [0, 0, 1, 0], [], []>} : vector<8x8xf32>, vector<8x8xf32>, vector<8x8xf32> -> vector<8x8xf32>
    %cst_33 = arith.constant 0.353553385 : f32
    %78 = vector.broadcast %cst_33 : f32 to vector<8x8xf32>
    %79 = arith.mulf %77, %78 : vector<8x8xf32>
    %cst_34 = arith.constant dense<0xFF800000> : vector<8xf32>
    %80 = vector.multi_reduction <maximumf>, %79, %cst_34 [1] : vector<8x8xf32> to vector<8xf32>
    %81 = vector.shape_cast %80 : vector<8xf32> to vector<8x1xf32>
    %82 = vector.broadcast %81 : vector<8x1xf32> to vector<8x8xf32>
    %83 = arith.subf %79, %82 : vector<8x8xf32>
    %84 = math.exp %83 : vector<8x8xf32>
    %cst_35 = arith.constant dense<0.000000e+00> : vector<8xf32>
    %85 = vector.multi_reduction <add>, %84, %cst_35 [1] : vector<8x8xf32> to vector<8xf32>
    %86 = vector.shape_cast %85 : vector<8xf32> to vector<8x1xf32>
    %87 = tpu.reciprocal %86 {approx = true} : vector<8x1xf32> -> vector<8x1xf32>
    %88 = vector.broadcast %87 : vector<8x1xf32> to vector<8x8xf32>
    %89 = arith.mulf %84, %88 : vector<8x8xf32>
    %c3 = arith.constant 3 : index
    %c0_36 = arith.constant 0 : index
    %c0_37 = arith.constant 0 : index
    %90 = vector.load %arg13[%c3, %c0_36, %c0_37] : memref<8x8x8xf32, #tpu.memory_space<vmem>>, vector<1x8x8xf32>
    %91 = vector.shape_cast %90 : vector<1x8x8xf32> to vector<8x8xf32>
    %92 = vector.shape_cast %89 : vector<8x8xf32> to vector<1x8x8xf32>
    tpu.vector_store %arg13[%c3, %c0_36, %c0_37], %92 {strides = array<i32>} : memref<8x8x8xf32, #tpu.memory_space<vmem>>, vector<1x8x8xf32>,
    %cst_38 = arith.constant dense<0.000000e+00> : vector<8x8xf32>
    %93 = tpu.matmul %89, %76, %cst_38 {dimension_numbers = #tpu.dot_dimension_numbers<[1], [0], [0], [1], [0, 0, 1, 1], [], []>} : vector<8x8xf32>, vector<8x8xf32>, vector<8x8xf32> -> vector<8x8xf32>
    %c24 = arith.constant 24 : index
    %c0_39 = arith.constant 0 : index
    %94 = vector.load %arg3[%c24, %c0_39] : memref<32x32xf32, #tpu.memory_space<vmem>>, vector<8x32xf32>
    %cst_40 = arith.constant dense<0.000000e+00> : vector<8x32xf32>
    %95 = tpu.matmul %93, %94, %cst_40 {dimension_numbers = #tpu.dot_dimension_numbers<[1], [0], [0], [1], [0, 0, 1, 1], [], []>} : vector<8x8xf32>, vector<8x32xf32>, vector<8x32xf32> -> vector<8x32xf32>
    %96 = arith.addf %73, %95 : vector<8x32xf32>
    %97 = vector.extract_strided_slice %3 {offsets = [8, 0], sizes = [8, 8], strides = [1, 1]} : vector<16x32xf32> to vector<8x8xf32>
    %98 = vector.extract_strided_slice %4 {offsets = [8, 0], sizes = [8, 8], strides = [1, 1]} : vector<16x32xf32> to vector<8x8xf32>
    %99 = vector.extract_strided_slice %5 {offsets = [8, 0], sizes = [8, 8], strides = [1, 1]} : vector<16x32xf32> to vector<8x8xf32>
    %cst_41 = arith.constant dense<0.000000e+00> : vector<8x8xf32>
    %100 = tpu.matmul %97, %98, %cst_41 {dimension_numbers = #tpu.dot_dimension_numbers<[1], [1], [0], [0], [0, 0, 1, 0], [], []>} : vector<8x8xf32>, vector<8x8xf32>, vector<8x8xf32> -> vector<8x8xf32>
    %cst_42 = arith.constant 0.353553385 : f32
    %101 = vector.broadcast %cst_42 : f32 to vector<8x8xf32>
    %102 = arith.mulf %100, %101 : vector<8x8xf32>
    %cst_43 = arith.constant dense<0xFF800000> : vector<8xf32>
    %103 = vector.multi_reduction <maximumf>, %102, %cst_43 [1] : vector<8x8xf32> to vector<8xf32>
    %104 = vector.shape_cast %103 : vector<8xf32> to vector<8x1xf32>
    %105 = vector.broadcast %104 : vector<8x1xf32> to vector<8x8xf32>
    %106 = arith.subf %102, %105 : vector<8x8xf32>
    %107 = math.exp %106 : vector<8x8xf32>
    %cst_44 = arith.constant dense<0.000000e+00> : vector<8xf32>
    %108 = vector.multi_reduction <add>, %107, %cst_44 [1] : vector<8x8xf32> to vector<8xf32>
    %109 = vector.shape_cast %108 : vector<8xf32> to vector<8x1xf32>
    %110 = tpu.reciprocal %109 {approx = true} : vector<8x1xf32> -> vector<8x1xf32>
    %111 = vector.broadcast %110 : vector<8x1xf32> to vector<8x8xf32>
    %112 = arith.mulf %107, %111 : vector<8x8xf32>
    %c4 = arith.constant 4 : index
    %c0_45 = arith.constant 0 : index
    %c0_46 = arith.constant 0 : index
    %113 = vector.load %arg13[%c4, %c0_45, %c0_46] : memref<8x8x8xf32, #tpu.memory_space<vmem>>, vector<1x8x8xf32>
    %114 = vector.shape_cast %113 : vector<1x8x8xf32> to vector<8x8xf32>
    %115 = vector.shape_cast %112 : vector<8x8xf32> to vector<1x8x8xf32>
    tpu.vector_store %arg13[%c4, %c0_45, %c0_46], %115 {strides = array<i32>} : memref<8x8x8xf32, #tpu.memory_space<vmem>>, vector<1x8x8xf32>,
    %cst_47 = arith.constant dense<0.000000e+00> : vector<8x8xf32>
    %116 = tpu.matmul %112, %99, %cst_47 {dimension_numbers = #tpu.dot_dimension_numbers<[1], [0], [0], [1], [0, 0, 1, 1], [], []>} : vector<8x8xf32>, vector<8x8xf32>, vector<8x8xf32> -> vector<8x8xf32>
    %c0_48 = arith.constant 0 : index
    %c0_49 = arith.constant 0 : index
    %117 = vector.load %arg3[%c0_48, %c0_49] : memref<32x32xf32, #tpu.memory_space<vmem>>, vector<8x32xf32>
    %cst_50 = arith.constant dense<0.000000e+00> : vector<8x32xf32>
    %118 = tpu.matmul %116, %117, %cst_50 {dimension_numbers = #tpu.dot_dimension_numbers<[1], [0], [0], [1], [0, 0, 1, 1], [], []>} : vector<8x8xf32>, vector<8x32xf32>, vector<8x32xf32> -> vector<8x32xf32>
    %119 = vector.extract_strided_slice %3 {offsets = [8, 8], sizes = [8, 8], strides = [1, 1]} : vector<16x32xf32> to vector<8x8xf32>
    %120 = vector.extract_strided_slice %4 {offsets = [8, 8], sizes = [8, 8], strides = [1, 1]} : vector<16x32xf32> to vector<8x8xf32>
    %121 = vector.extract_strided_slice %5 {offsets = [8, 8], sizes = [8, 8], strides = [1, 1]} : vector<16x32xf32> to vector<8x8xf32>
    %cst_51 = arith.constant dense<0.000000e+00> : vector<8x8xf32>
    %122 = tpu.matmul %119, %120, %cst_51 {dimension_numbers = #tpu.dot_dimension_numbers<[1], [1], [0], [0], [0, 0, 1, 0], [], []>} : vector<8x8xf32>, vector<8x8xf32>, vector<8x8xf32> -> vector<8x8xf32>
    %cst_52 = arith.constant 0.353553385 : f32
    %123 = vector.broadcast %cst_52 : f32 to vector<8x8xf32>
    %124 = arith.mulf %122, %123 : vector<8x8xf32>
    %cst_53 = arith.constant dense<0xFF800000> : vector<8xf32>
    %125 = vector.multi_reduction <maximumf>, %124, %cst_53 [1] : vector<8x8xf32> to vector<8xf32>
    %126 = vector.shape_cast %125 : vector<8xf32> to vector<8x1xf32>
    %127 = vector.broadcast %126 : vector<8x1xf32> to vector<8x8xf32>
    %128 = arith.subf %124, %127 : vector<8x8xf32>
    %129 = math.exp %128 : vector<8x8xf32>
    %cst_54 = arith.constant dense<0.000000e+00> : vector<8xf32>
    %130 = vector.multi_reduction <add>, %129, %cst_54 [1] : vector<8x8xf32> to vector<8xf32>
    %131 = vector.shape_cast %130 : vector<8xf32> to vector<8x1xf32>
    %132 = tpu.reciprocal %131 {approx = true} : vector<8x1xf32> -> vector<8x1xf32>
    %133 = vector.broadcast %132 : vector<8x1xf32> to vector<8x8xf32>
    %134 = arith.mulf %129, %133 : vector<8x8xf32>
    %c5 = arith.constant 5 : index
    %c0_55 = arith.constant 0 : index
    %c0_56 = arith.constant 0 : index
    %135 = vector.load %arg13[%c5, %c0_55, %c0_56] : memref<8x8x8xf32, #tpu.memory_space<vmem>>, vector<1x8x8xf32>
    %136 = vector.shape_cast %135 : vector<1x8x8xf32> to vector<8x8xf32>
    %137 = vector.shape_cast %134 : vector<8x8xf32> to vector<1x8x8xf32>
    tpu.vector_store %arg13[%c5, %c0_55, %c0_56], %137 {strides = array<i32>} : memref<8x8x8xf32, #tpu.memory_space<vmem>>, vector<1x8x8xf32>,
    %cst_57 = arith.constant dense<0.000000e+00> : vector<8x8xf32>
    %138 = tpu.matmul %134, %121, %cst_57 {dimension_numbers = #tpu.dot_dimension_numbers<[1], [0], [0], [1], [0, 0, 1, 1], [], []>} : vector<8x8xf32>, vector<8x8xf32>, vector<8x8xf32> -> vector<8x8xf32>
    %c8_58 = arith.constant 8 : index
    %c0_59 = arith.constant 0 : index
    %139 = vector.load %arg3[%c8_58, %c0_59] : memref<32x32xf32, #tpu.memory_space<vmem>>, vector<8x32xf32>
    %cst_60 = arith.constant dense<0.000000e+00> : vector<8x32xf32>
    %140 = tpu.matmul %138, %139, %cst_60 {dimension_numbers = #tpu.dot_dimension_numbers<[1], [0], [0], [1], [0, 0, 1, 1], [], []>} : vector<8x8xf32>, vector<8x32xf32>, vector<8x32xf32> -> vector<8x32xf32>
    %141 = arith.addf %118, %140 : vector<8x32xf32>
    %142 = vector.extract_strided_slice %3 {offsets = [8, 16], sizes = [8, 8], strides = [1, 1]} : vector<16x32xf32> to vector<8x8xf32>
    %143 = vector.extract_strided_slice %4 {offsets = [8, 16], sizes = [8, 8], strides = [1, 1]} : vector<16x32xf32> to vector<8x8xf32>
    %144 = vector.extract_strided_slice %5 {offsets = [8, 16], sizes = [8, 8], strides = [1, 1]} : vector<16x32xf32> to vector<8x8xf32>
    %cst_61 = arith.constant dense<0.000000e+00> : vector<8x8xf32>
    %145 = tpu.matmul %142, %143, %cst_61 {dimension_numbers = #tpu.dot_dimension_numbers<[1], [1], [0], [0], [0, 0, 1, 0], [], []>} : vector<8x8xf32>, vector<8x8xf32>, vector<8x8xf32> -> vector<8x8xf32>
    %cst_62 = arith.constant 0.353553385 : f32
    %146 = vector.broadcast %cst_62 : f32 to vector<8x8xf32>
    %147 = arith.mulf %145, %146 : vector<8x8xf32>
    %cst_63 = arith.constant dense<0xFF800000> : vector<8xf32>
    %148 = vector.multi_reduction <maximumf>, %147, %cst_63 [1] : vector<8x8xf32> to vector<8xf32>
    %149 = vector.shape_cast %148 : vector<8xf32> to vector<8x1xf32>
    %150 = vector.broadcast %149 : vector<8x1xf32> to vector<8x8xf32>
    %151 = arith.subf %147, %150 : vector<8x8xf32>
    %152 = math.exp %151 : vector<8x8xf32>
    %cst_64 = arith.constant dense<0.000000e+00> : vector<8xf32>
    %153 = vector.multi_reduction <add>, %152, %cst_64 [1] : vector<8x8xf32> to vector<8xf32>
    %154 = vector.shape_cast %153 : vector<8xf32> to vector<8x1xf32>
    %155 = tpu.reciprocal %154 {approx = true} : vector<8x1xf32> -> vector<8x1xf32>
    %156 = vector.broadcast %155 : vector<8x1xf32> to vector<8x8xf32>
    %157 = arith.mulf %152, %156 : vector<8x8xf32>
    %c6 = arith.constant 6 : index
    %c0_65 = arith.constant 0 : index
    %c0_66 = arith.constant 0 : index
    %158 = vector.load %arg13[%c6, %c0_65, %c0_66] : memref<8x8x8xf32, #tpu.memory_space<vmem>>, vector<1x8x8xf32>
    %159 = vector.shape_cast %158 : vector<1x8x8xf32> to vector<8x8xf32>
    %160 = vector.shape_cast %157 : vector<8x8xf32> to vector<1x8x8xf32>
    tpu.vector_store %arg13[%c6, %c0_65, %c0_66], %160 {strides = array<i32>} : memref<8x8x8xf32, #tpu.memory_space<vmem>>, vector<1x8x8xf32>,
    %cst_67 = arith.constant dense<0.000000e+00> : vector<8x8xf32>
    %161 = tpu.matmul %157, %144, %cst_67 {dimension_numbers = #tpu.dot_dimension_numbers<[1], [0], [0], [1], [0, 0, 1, 1], [], []>} : vector<8x8xf32>, vector<8x8xf32>, vector<8x8xf32> -> vector<8x8xf32>
    %c16_68 = arith.constant 16 : index
    %c0_69 = arith.constant 0 : index
    %162 = vector.load %arg3[%c16_68, %c0_69] : memref<32x32xf32, #tpu.memory_space<vmem>>, vector<8x32xf32>
    %cst_70 = arith.constant dense<0.000000e+00> : vector<8x32xf32>
    %163 = tpu.matmul %161, %162, %cst_70 {dimension_numbers = #tpu.dot_dimension_numbers<[1], [0], [0], [1], [0, 0, 1, 1], [], []>} : vector<8x8xf32>, vector<8x32xf32>, vector<8x32xf32> -> vector<8x32xf32>
    %164 = arith.addf %141, %163 : vector<8x32xf32>
    %165 = vector.extract_strided_slice %3 {offsets = [8, 24], sizes = [8, 8], strides = [1, 1]} : vector<16x32xf32> to vector<8x8xf32>
    %166 = vector.extract_strided_slice %4 {offsets = [8, 24], sizes = [8, 8], strides = [1, 1]} : vector<16x32xf32> to vector<8x8xf32>
    %167 = vector.extract_strided_slice %5 {offsets = [8, 24], sizes = [8, 8], strides = [1, 1]} : vector<16x32xf32> to vector<8x8xf32>
    %cst_71 = arith.constant dense<0.000000e+00> : vector<8x8xf32>
    %168 = tpu.matmul %165, %166, %cst_71 {dimension_numbers = #tpu.dot_dimension_numbers<[1], [1], [0], [0], [0, 0, 1, 0], [], []>} : vector<8x8xf32>, vector<8x8xf32>, vector<8x8xf32> -> vector<8x8xf32>
    %cst_72 = arith.constant 0.353553385 : f32
    %169 = vector.broadcast %cst_72 : f32 to vector<8x8xf32>
    %170 = arith.mulf %168, %169 : vector<8x8xf32>
    %cst_73 = arith.constant dense<0xFF800000> : vector<8xf32>
    %171 = vector.multi_reduction <maximumf>, %170, %cst_73 [1] : vector<8x8xf32> to vector<8xf32>
    %172 = vector.shape_cast %171 : vector<8xf32> to vector<8x1xf32>
    %173 = vector.broadcast %172 : vector<8x1xf32> to vector<8x8xf32>
    %174 = arith.subf %170, %173 : vector<8x8xf32>
    %175 = math.exp %174 : vector<8x8xf32>
    %cst_74 = arith.constant dense<0.000000e+00> : vector<8xf32>
    %176 = vector.multi_reduction <add>, %175, %cst_74 [1] : vector<8x8xf32> to vector<8xf32>
    %177 = vector.shape_cast %176 : vector<8xf32> to vector<8x1xf32>
    %178 = tpu.reciprocal %177 {approx = true} : vector<8x1xf32> -> vector<8x1xf32>
    %179 = vector.broadcast %178 : vector<8x1xf32> to vector<8x8xf32>
    %180 = arith.mulf %175, %179 : vector<8x8xf32>
    %c7 = arith.constant 7 : index
    %c0_75 = arith.constant 0 : index
    %c0_76 = arith.constant 0 : index
    %181 = vector.load %arg13[%c7, %c0_75, %c0_76] : memref<8x8x8xf32, #tpu.memory_space<vmem>>, vector<1x8x8xf32>
    %182 = vector.shape_cast %181 : vector<1x8x8xf32> to vector<8x8xf32>
    %183 = vector.shape_cast %180 : vector<8x8xf32> to vector<1x8x8xf32>
    tpu.vector_store %arg13[%c7, %c0_75, %c0_76], %183 {strides = array<i32>} : memref<8x8x8xf32, #tpu.memory_space<vmem>>, vector<1x8x8xf32>,
    %cst_77 = arith.constant dense<0.000000e+00> : vector<8x8xf32>
    %184 = tpu.matmul %180, %167, %cst_77 {dimension_numbers = #tpu.dot_dimension_numbers<[1], [0], [0], [1], [0, 0, 1, 1], [], []>} : vector<8x8xf32>, vector<8x8xf32>, vector<8x8xf32> -> vector<8x8xf32>
    %c24_78 = arith.constant 24 : index
    %c0_79 = arith.constant 0 : index
    %185 = vector.load %arg3[%c24_78, %c0_79] : memref<32x32xf32, #tpu.memory_space<vmem>>, vector<8x32xf32>
    %cst_80 = arith.constant dense<0.000000e+00> : vector<8x32xf32>
    %186 = tpu.matmul %184, %185, %cst_80 {dimension_numbers = #tpu.dot_dimension_numbers<[1], [0], [0], [1], [0, 0, 1, 1], [], []>} : vector<8x8xf32>, vector<8x32xf32>, vector<8x32xf32> -> vector<8x32xf32>
    %187 = arith.addf %164, %186 : vector<8x32xf32>
    %188 = tpu.concatenate %96, %187 in 0 : vector<8x32xf32>, vector<8x32xf32> -> vector<16x32xf32>
    %189 = arith.addf %0, %188 : vector<16x32xf32>
    %c0_81 = arith.constant 0 : index
    %c0_82 = arith.constant 0 : index
    %190 = vector.load %arg4[%c0_81, %c0_82] : memref<1x32xf32, #tpu.memory_space<vmem>>, vector<1x32xf32>
    %c0_83 = arith.constant 0 : index
    %c0_84 = arith.constant 0 : index
    %191 = vector.load %arg5[%c0_83, %c0_84] : memref<1x32xf32, #tpu.memory_space<vmem>>, vector<1x32xf32>
    %cst_85 = arith.constant dense<0.000000e+00> : vector<16xf32>
    %192 = vector.multi_reduction <add>, %189, %cst_85 [1] : vector<16x32xf32> to vector<16xf32>
    %193 = vector.shape_cast %192 : vector<16xf32> to vector<16x1xf32>
    %cst_86 = arith.constant 3.200000e+01 : f32
    %194 = vector.broadcast %cst_86 : f32 to vector<16x1xf32>
    %195 = arith.divf %193, %194 : vector<16x1xf32>
    %196 = vector.broadcast %195 : vector<16x1xf32> to vector<16x32xf32>
    %197 = arith.subf %189, %196 : vector<16x32xf32>
    %198 = arith.mulf %197, %197 : vector<16x32xf32>
    %cst_87 = arith.constant dense<0.000000e+00> : vector<16xf32>
    %199 = vector.multi_reduction <add>, %198, %cst_87 [1] : vector<16x32xf32> to vector<16xf32>
    %200 = vector.shape_cast %199 : vector<16xf32> to vector<16x1xf32>
    %cst_88 = arith.constant 3.200000e+01 : f32
    %201 = vector.broadcast %cst_88 : f32 to vector<16x1xf32>
    %202 = arith.divf %200, %201 : vector<16x1xf32>
    %203 = vector.broadcast %195 : vector<16x1xf32> to vector<16x32xf32>
    %204 = arith.subf %189, %203 : vector<16x32xf32>
    %cst_89 = arith.constant 9.99999974E-6 : f32
    %205 = vector.broadcast %cst_89 : f32 to vector<16x1xf32>
    %206 = arith.addf %202, %205 : vector<16x1xf32>
    %207 = math.rsqrt %206 : vector<16x1xf32>
    %208 = vector.broadcast %207 : vector<16x1xf32> to vector<16x32xf32>
    %209 = arith.mulf %204, %208 : vector<16x32xf32>
    %210 = vector.broadcast %190 : vector<1x32xf32> to vector<16x32xf32>
    %211 = arith.mulf %209, %210 : vector<16x32xf32>
    %212 = vector.broadcast %191 : vector<1x32xf32> to vector<16x32xf32>
    %213 = arith.addf %211, %212 : vector<16x32xf32>
    %c0_90 = arith.constant 0 : index
    %c0_91 = arith.constant 0 : index
    %214 = vector.load %arg6[%c0_90, %c0_91] : memref<32x64xf32, #tpu.memory_space<vmem>>, vector<32x64xf32>
    %cst_92 = arith.constant dense<0.000000e+00> : vector<16x64xf32>
    %215 = tpu.matmul %213, %214, %cst_92 {dimension_numbers = #tpu.dot_dimension_numbers<[1], [0], [0], [1], [0, 0, 1, 1], [], []>} : vector<16x32xf32>, vector<32x64xf32>, vector<16x64xf32> -> vector<16x64xf32>
    %c0_93 = arith.constant 0 : index
    %c0_94 = arith.constant 0 : index
    %216 = vector.load %arg7[%c0_93, %c0_94] : memref<1x64xf32, #tpu.memory_space<vmem>>, vector<1x64xf32>
    %217 = vector.broadcast %216 : vector<1x64xf32> to vector<16x64xf32>
    %218 = arith.addf %215, %217 : vector<16x64xf32>
    %cst_95 = arith.constant 0.000000e+00 : f32
    %219 = vector.broadcast %cst_95 : f32 to vector<16x64xf32>
    %220 = arith.maximumf %218, %219 : vector<16x64xf32>
    %c0_96 = arith.constant 0 : index
    %c0_97 = arith.constant 0 : index
    %221 = vector.load %arg8[%c0_96, %c0_97] : memref<64x32xf32, #tpu.memory_space<vmem>>, vector<64x32xf32>
    %cst_98 = arith.constant dense<0.000000e+00> : vector<16x32xf32>
    %222 = tpu.matmul %220, %221, %cst_98 {dimension_numbers = #tpu.dot_dimension_numbers<[1], [0], [0], [1], [0, 0, 1, 1], [], []>} : vector<16x64xf32>, vector<64x32xf32>, vector<16x32xf32> -> vector<16x32xf32>
    %c0_99 = arith.constant 0 : index
    %c0_100 = arith.constant 0 : index
    %223 = vector.load %arg9[%c0_99, %c0_100] : memref<1x32xf32, #tpu.memory_space<vmem>>, vector<1x32xf32>
    %224 = vector.broadcast %223 : vector<1x32xf32> to vector<16x32xf32>
    %225 = arith.addf %222, %224 : vector<16x32xf32>
    %226 = arith.addf %213, %225 : vector<16x32xf32>
    %c0_101 = arith.constant 0 : index
    %c0_102 = arith.constant 0 : index
    %227 = vector.load %arg10[%c0_101, %c0_102] : memref<1x32xf32, #tpu.memory_space<vmem>>, vector<1x32xf32>
    %c0_103 = arith.constant 0 : index
    %c0_104 = arith.constant 0 : index
    %228 = vector.load %arg11[%c0_103, %c0_104] : memref<1x32xf32, #tpu.memory_space<vmem>>, vector<1x32xf32>
    %cst_105 = arith.constant dense<0.000000e+00> : vector<16xf32>
    %229 = vector.multi_reduction <add>, %226, %cst_105 [1] : vector<16x32xf32> to vector<16xf32>
    %230 = vector.shape_cast %229 : vector<16xf32> to vector<16x1xf32>
    %cst_106 = arith.constant 3.200000e+01 : f32
    %231 = vector.broadcast %cst_106 : f32 to vector<16x1xf32>
    %232 = arith.divf %230, %231 : vector<16x1xf32>
    %233 = vector.broadcast %232 : vector<16x1xf32> to vector<16x32xf32>
    %234 = arith.subf %226, %233 : vector<16x32xf32>
    %235 = arith.mulf %234, %234 : vector<16x32xf32>
    %cst_107 = arith.constant dense<0.000000e+00> : vector<16xf32>
    %236 = vector.multi_reduction <add>, %235, %cst_107 [1] : vector<16x32xf32> to vector<16xf32>
    %237 = vector.shape_cast %236 : vector<16xf32> to vector<16x1xf32>
    %cst_108 = arith.constant 3.200000e+01 : f32
    %238 = vector.broadcast %cst_108 : f32 to vector<16x1xf32>
    %239 = arith.divf %237, %238 : vector<16x1xf32>
    %240 = vector.broadcast %232 : vector<16x1xf32> to vector<16x32xf32>
    %241 = arith.subf %226, %240 : vector<16x32xf32>
    %cst_109 = arith.constant 9.99999974E-6 : f32
    %242 = vector.broadcast %cst_109 : f32 to vector<16x1xf32>
    %243 = arith.addf %239, %242 : vector<16x1xf32>
    %244 = math.rsqrt %243 : vector<16x1xf32>
    %245 = vector.broadcast %244 : vector<16x1xf32> to vector<16x32xf32>
    %246 = arith.mulf %241, %245 : vector<16x32xf32>
    %247 = vector.broadcast %227 : vector<1x32xf32> to vector<16x32xf32>
    %248 = arith.mulf %246, %247 : vector<16x32xf32>
    %249 = vector.broadcast %228 : vector<1x32xf32> to vector<16x32xf32>
    %250 = arith.addf %248, %249 : vector<16x32xf32>
    %c0_110 = arith.constant 0 : index
    %c0_111 = arith.constant 0 : index
    %251 = vector.load %arg12[%c0_110, %c0_111] : memref<16x32xf32, #tpu.memory_space<vmem>>, vector<16x32xf32>
    tpu.vector_store %arg12[%c0_110, %c0_111], %250 {strides = array<i32>} : memref<16x32xf32, #tpu.memory_space<vmem>>, vector<16x32xf32>,
    return
  }
  func.func @transform_0(%arg0: i32) -> (i32, i32) {
    %c0_i32 = arith.constant 0 : i32
    %c0_i32_0 = arith.constant 0 : i32
    %c0_i32_1 = arith.constant 0 : i32
    return %c0_i32, %c0_i32_0 : i32, i32
  }
  func.func @transform_1(%arg0: i32) -> (i32, i32) {
    %c0_i32 = arith.constant 0 : i32
    %c0_i32_0 = arith.constant 0 : i32
    %c0_i32_1 = arith.constant 0 : i32
    return %c0_i32, %c0_i32_0 : i32, i32
  }
  func.func @transform_2(%arg0: i32) -> (i32, i32) {
    %c0_i32 = arith.constant 0 : i32
    %c0_i32_0 = arith.constant 0 : i32
    %c0_i32_1 = arith.constant 0 : i32
    return %c0_i32, %c0_i32_0 : i32, i32
  }
  func.func @transform_3(%arg0: i32) -> (i32, i32) {
    %c0_i32 = arith.constant 0 : i32
    %c0_i32_0 = arith.constant 0 : i32
    %c0_i32_1 = arith.constant 0 : i32
    return %c0_i32, %c0_i32_0 : i32, i32
  }
  func.func @transform_4(%arg0: i32) -> (i32, i32) {
    %c0_i32 = arith.constant 0 : i32
    %c0_i32_0 = arith.constant 0 : i32
    %c0_i32_1 = arith.constant 0 : i32
    return %c0_i32, %c0_i32_0 : i32, i32
  }
  func.func @transform_5(%arg0: i32) -> (i32, i32) {
    %c0_i32 = arith.constant 0 : i32
    %c0_i32_0 = arith.constant 0 : i32
    %c0_i32_1 = arith.constant 0 : i32
    return %c0_i32, %c0_i32_0 : i32, i32
  }
  func.func @transform_6(%arg0: i32) -> (i32, i32) {
    %c0_i32 = arith.constant 0 : i32
    %c0_i32_0 = arith.constant 0 : i32
    %c0_i32_1 = arith.constant 0 : i32
    return %c0_i32, %c0_i32_0 : i32, i32
  }
  func.func @transform_7(%arg0: i32) -> (i32, i32) {
    %c0_i32 = arith.constant 0 : i32
    %c0_i32_0 = arith.constant 0 : i32
    %c0_i32_1 = arith.constant 0 : i32
    return %c0_i32, %c0_i32_0 : i32, i32
  }
  func.func @transform_8(%arg0: i32) -> (i32, i32) {
    %c0_i32 = arith.constant 0 : i32
    %c0_i32_0 = arith.constant 0 : i32
    %c0_i32_1 = arith.constant 0 : i32
    return %c0_i32, %c0_i32_0 : i32, i32
  }
  func.func @transform_9(%arg0: i32) -> (i32, i32) {
    %c0_i32 = arith.constant 0 : i32
    %c0_i32_0 = arith.constant 0 : i32
    %c0_i32_1 = arith.constant 0 : i32
    return %c0_i32, %c0_i32_0 : i32, i32
  }
  func.func @transform_10(%arg0: i32) -> (i32, i32) {
    %c0_i32 = arith.constant 0 : i32
    %c0_i32_0 = arith.constant 0 : i32
    %c0_i32_1 = arith.constant 0 : i32
    return %c0_i32, %c0_i32_0 : i32, i32
  }
  func.func @transform_11(%arg0: i32) -> (i32, i32) {
    %c0_i32 = arith.constant 0 : i32
    %c0_i32_0 = arith.constant 0 : i32
    %c0_i32_1 = arith.constant 0 : i32
    return %c0_i32, %c0_i32_0 : i32, i32
  }
  func.func @transform_12(%arg0: i32) -> (i32, i32, i32) {
    %c0_i32 = arith.constant 0 : i32
    %c0_i32_0 = arith.constant 0 : i32
    %c0_i32_1 = arith.constant 0 : i32
    %c0_i32_2 = arith.constant 0 : i32
    return %c0_i32, %c0_i32_0, %c0_i32_1 : i32, i32, i32
  }
}

module attributes {stable_mosaic.version = 11 : i64} {
  func.func @_projection_kernel(%arg0: i32, %arg1: memref<16x32xf32, #tpu.memory_space<vmem>>, %arg2: memref<32x64xf32, #tpu.memory_space<vmem>>, %arg3: memref<1x64xf32, #tpu.memory_space<vmem>>, %arg4: memref<1x64xf32, #tpu.memory_space<vmem>>, %arg5: memref<1x64xf32, #tpu.memory_space<vmem>>, %arg6: memref<1x64xf32, #tpu.memory_space<vmem>>, %arg7: memref<64x16xf32, #tpu.memory_space<vmem>>, %arg8: memref<1x16xf32, #tpu.memory_space<vmem>>, %arg9: memref<1x16xf32, #tpu.memory_space<vmem>>, %arg10: memref<1x16xf32, #tpu.memory_space<vmem>>, %arg11: memref<1x16xf32, #tpu.memory_space<vmem>>, %arg12: memref<16x32xf32, #tpu.memory_space<vmem>>, %arg13: memref<1x32xf32, #tpu.memory_space<vmem>>, %arg14: memref<1x32xf32, #tpu.memory_space<vmem>>, %arg15: memref<1x32xf32, #tpu.memory_space<vmem>>, %arg16: memref<1x32xf32, #tpu.memory_space<vmem>>, %arg17: memref<32x32xf32, #tpu.memory_space<vmem>>, %arg18: memref<1x32xf32, #tpu.memory_space<vmem>>, %arg19: memref<1x32xf32, #tpu.memory_space<vmem>>, %arg20: memref<1x32xf32, #tpu.memory_space<vmem>>, %arg21: memref<1x32xf32, #tpu.memory_space<vmem>>, %arg22: memref<32x48xf32, #tpu.memory_space<vmem>>, %arg23: memref<1x48xf32, #tpu.memory_space<vmem>>, %arg24: memref<1x48xf32, #tpu.memory_space<vmem>>, %arg25: memref<1x48xf32, #tpu.memory_space<vmem>>, %arg26: memref<1x48xf32, #tpu.memory_space<vmem>>, %arg27: memref<16x48xf32, #tpu.memory_space<vmem>>) attributes {dimension_semantics = [#tpu.dimension_semantics<arbitrary>], iteration_bounds = array<i64: 1>, scalar_prefetch = 0 : i64, scratch_operands = 0 : i64, tpu.core_type = #tpu.core_type<tc>, window_params = [{pipeline_mode = #tpu.pipeline_mode<synchronous>, transform_indices = @transform_0, window_bounds = array<i64: 16, 32>}, {pipeline_mode = #tpu.pipeline_mode<synchronous>, transform_indices = @transform_1, window_bounds = array<i64: 32, 64>}, {pipeline_mode = #tpu.pipeline_mode<synchronous>, transform_indices = @transform_2, window_bounds = array<i64: 1, 64>}, {pipeline_mode = #tpu.pipeline_mode<synchronous>, transform_indices = @transform_3, window_bounds = array<i64: 1, 64>}, {pipeline_mode = #tpu.pipeline_mode<synchronous>, transform_indices = @transform_4, window_bounds = array<i64: 1, 64>}, {pipeline_mode = #tpu.pipeline_mode<synchronous>, transform_indices = @transform_5, window_bounds = array<i64: 1, 64>}, {pipeline_mode = #tpu.pipeline_mode<synchronous>, transform_indices = @transform_6, window_bounds = array<i64: 64, 16>}, {pipeline_mode = #tpu.pipeline_mode<synchronous>, transform_indices = @transform_7, window_bounds = array<i64: 1, 16>}, {pipeline_mode = #tpu.pipeline_mode<synchronous>, transform_indices = @transform_8, window_bounds = array<i64: 1, 16>}, {pipeline_mode = #tpu.pipeline_mode<synchronous>, transform_indices = @transform_9, window_bounds = array<i64: 1, 16>}, {pipeline_mode = #tpu.pipeline_mode<synchronous>, transform_indices = @transform_10, window_bounds = array<i64: 1, 16>}, {pipeline_mode = #tpu.pipeline_mode<synchronous>, transform_indices = @transform_11, window_bounds = array<i64: 16, 32>}, {pipeline_mode = #tpu.pipeline_mode<synchronous>, transform_indices = @transform_12, window_bounds = array<i64: 1, 32>}, {pipeline_mode = #tpu.pipeline_mode<synchronous>, transform_indices = @transform_13, window_bounds = array<i64: 1, 32>}, {pipeline_mode = #tpu.pipeline_mode<synchronous>, transform_indices = @transform_14, window_bounds = array<i64: 1, 32>}, {pipeline_mode = #tpu.pipeline_mode<synchronous>, transform_indices = @transform_15, window_bounds = array<i64: 1, 32>}, {pipeline_mode = #tpu.pipeline_mode<synchronous>, transform_indices = @transform_16, window_bounds = array<i64: 32, 32>}, {pipeline_mode = #tpu.pipeline_mode<synchronous>, transform_indices = @transform_17, window_bounds = array<i64: 1, 32>}, {pipeline_mode = #tpu.pipeline_mode<synchronous>, transform_indices = @transform_18, window_bounds = array<i64: 1, 32>}, {pipeline_mode = #tpu.pipeline_mode<synchronous>, transform_indices = @transform_19, window_bounds = array<i64: 1, 32>}, {pipeline_mode = #tpu.pipeline_mode<synchronous>, transform_indices = @transform_20, window_bounds = array<i64: 1, 32>}, {pipeline_mode = #tpu.pipeline_mode<synchronous>, transform_indices = @transform_21, window_bounds = array<i64: 32, 48>}, {pipeline_mode = #tpu.pipeline_mode<synchronous>, transform_indices = @transform_22, window_bounds = array<i64: 1, 48>}, {pipeline_mode = #tpu.pipeline_mode<synchronous>, transform_indices = @transform_23, window_bounds = array<i64: 1, 48>}, {pipeline_mode = #tpu.pipeline_mode<synchronous>, transform_indices = @transform_24, window_bounds = array<i64: 1, 48>}, {pipeline_mode = #tpu.pipeline_mode<synchronous>, transform_indices = @transform_25, window_bounds = array<i64: 1, 48>}, {pipeline_mode = #tpu.pipeline_mode<synchronous>, transform_indices = @transform_26, window_bounds = array<i64: 16, 48>}]} {
    %c0 = arith.constant 0 : index
    %c0_0 = arith.constant 0 : index
    %0 = vector.load %arg1[%c0, %c0_0] : memref<16x32xf32, #tpu.memory_space<vmem>>, vector<16x32xf32>
    %c0_1 = arith.constant 0 : index
    %c0_2 = arith.constant 0 : index
    %1 = vector.load %arg2[%c0_1, %c0_2] : memref<32x64xf32, #tpu.memory_space<vmem>>, vector<32x64xf32>
    %cst = arith.constant dense<0.000000e+00> : vector<16x64xf32>
    %2 = tpu.matmul %0, %1, %cst {dimension_numbers = #tpu.dot_dimension_numbers<[1], [0], [0], [1], [0, 0, 1, 1], [], []>} : vector<16x32xf32>, vector<32x64xf32>, vector<16x64xf32> -> vector<16x64xf32>
    %c0_3 = arith.constant 0 : index
    %c0_4 = arith.constant 0 : index
    %3 = vector.load %arg5[%c0_3, %c0_4] : memref<1x64xf32, #tpu.memory_space<vmem>>, vector<1x64xf32>
    %4 = vector.broadcast %3 : vector<1x64xf32> to vector<16x64xf32>
    %5 = arith.subf %2, %4 : vector<16x64xf32>
    %c0_5 = arith.constant 0 : index
    %c0_6 = arith.constant 0 : index
    %6 = vector.load %arg6[%c0_5, %c0_6] : memref<1x64xf32, #tpu.memory_space<vmem>>, vector<1x64xf32>
    %cst_7 = arith.constant 9.99999974E-6 : f32
    %7 = vector.broadcast %cst_7 : f32 to vector<1x64xf32>
    %8 = arith.addf %6, %7 : vector<1x64xf32>
    %9 = math.rsqrt %8 : vector<1x64xf32>
    %10 = vector.broadcast %9 : vector<1x64xf32> to vector<16x64xf32>
    %11 = arith.mulf %5, %10 : vector<16x64xf32>
    %c0_8 = arith.constant 0 : index
    %c0_9 = arith.constant 0 : index
    %12 = vector.load %arg3[%c0_8, %c0_9] : memref<1x64xf32, #tpu.memory_space<vmem>>, vector<1x64xf32>
    %13 = vector.broadcast %12 : vector<1x64xf32> to vector<16x64xf32>
    %14 = arith.mulf %11, %13 : vector<16x64xf32>
    %c0_10 = arith.constant 0 : index
    %c0_11 = arith.constant 0 : index
    %15 = vector.load %arg4[%c0_10, %c0_11] : memref<1x64xf32, #tpu.memory_space<vmem>>, vector<1x64xf32>
    %16 = vector.broadcast %15 : vector<1x64xf32> to vector<16x64xf32>
    %17 = arith.addf %14, %16 : vector<16x64xf32>
    %cst_12 = arith.constant 0.000000e+00 : f32
    %18 = vector.broadcast %cst_12 : f32 to vector<16x64xf32>
    %19 = arith.cmpf oge, %17, %18 : vector<16x64xf32>
    %cst_13 = arith.constant 2.000000e-01 : f32
    %20 = vector.broadcast %cst_13 : f32 to vector<16x64xf32>
    %21 = arith.mulf %20, %17 : vector<16x64xf32>
    %22 = arith.select %19, %17, %21 : vector<16x64xi1>, vector<16x64xf32>
    %c0_14 = arith.constant 0 : index
    %c0_15 = arith.constant 0 : index
    %23 = vector.load %arg7[%c0_14, %c0_15] : memref<64x16xf32, #tpu.memory_space<vmem>>, vector<64x16xf32>
    %cst_16 = arith.constant dense<0.000000e+00> : vector<16x16xf32>
    %24 = tpu.matmul %22, %23, %cst_16 {dimension_numbers = #tpu.dot_dimension_numbers<[1], [0], [0], [1], [0, 0, 1, 1], [], []>} : vector<16x64xf32>, vector<64x16xf32>, vector<16x16xf32> -> vector<16x16xf32>
    %c0_17 = arith.constant 0 : index
    %c0_18 = arith.constant 0 : index
    %25 = vector.load %arg10[%c0_17, %c0_18] : memref<1x16xf32, #tpu.memory_space<vmem>>, vector<1x16xf32>
    %26 = vector.broadcast %25 : vector<1x16xf32> to vector<16x16xf32>
    %27 = arith.subf %24, %26 : vector<16x16xf32>
    %c0_19 = arith.constant 0 : index
    %c0_20 = arith.constant 0 : index
    %28 = vector.load %arg11[%c0_19, %c0_20] : memref<1x16xf32, #tpu.memory_space<vmem>>, vector<1x16xf32>
    %cst_21 = arith.constant 9.99999974E-6 : f32
    %29 = vector.broadcast %cst_21 : f32 to vector<1x16xf32>
    %30 = arith.addf %28, %29 : vector<1x16xf32>
    %31 = math.rsqrt %30 : vector<1x16xf32>
    %32 = vector.broadcast %31 : vector<1x16xf32> to vector<16x16xf32>
    %33 = arith.mulf %27, %32 : vector<16x16xf32>
    %c0_22 = arith.constant 0 : index
    %c0_23 = arith.constant 0 : index
    %34 = vector.load %arg8[%c0_22, %c0_23] : memref<1x16xf32, #tpu.memory_space<vmem>>, vector<1x16xf32>
    %35 = vector.broadcast %34 : vector<1x16xf32> to vector<16x16xf32>
    %36 = arith.mulf %33, %35 : vector<16x16xf32>
    %c0_24 = arith.constant 0 : index
    %c0_25 = arith.constant 0 : index
    %37 = vector.load %arg9[%c0_24, %c0_25] : memref<1x16xf32, #tpu.memory_space<vmem>>, vector<1x16xf32>
    %38 = vector.broadcast %37 : vector<1x16xf32> to vector<16x16xf32>
    %39 = arith.addf %36, %38 : vector<16x16xf32>
    %cst_26 = arith.constant 0.000000e+00 : f32
    %40 = vector.broadcast %cst_26 : f32 to vector<16x16xf32>
    %41 = arith.cmpf oge, %39, %40 : vector<16x16xf32>
    %cst_27 = arith.constant 2.000000e-01 : f32
    %42 = vector.broadcast %cst_27 : f32 to vector<16x16xf32>
    %43 = arith.mulf %42, %39 : vector<16x16xf32>
    %44 = arith.select %41, %39, %43 : vector<16x16xi1>, vector<16x16xf32>
    %c0_28 = arith.constant 0 : index
    %c0_29 = arith.constant 0 : index
    %45 = vector.load %arg12[%c0_28, %c0_29] : memref<16x32xf32, #tpu.memory_space<vmem>>, vector<16x32xf32>
    %cst_30 = arith.constant dense<0.000000e+00> : vector<16x32xf32>
    %46 = tpu.matmul %44, %45, %cst_30 {dimension_numbers = #tpu.dot_dimension_numbers<[1], [0], [0], [1], [0, 0, 1, 1], [], []>} : vector<16x16xf32>, vector<16x32xf32>, vector<16x32xf32> -> vector<16x32xf32>
    %c0_31 = arith.constant 0 : index
    %c0_32 = arith.constant 0 : index
    %47 = vector.load %arg15[%c0_31, %c0_32] : memref<1x32xf32, #tpu.memory_space<vmem>>, vector<1x32xf32>
    %48 = vector.broadcast %47 : vector<1x32xf32> to vector<16x32xf32>
    %49 = arith.subf %46, %48 : vector<16x32xf32>
    %c0_33 = arith.constant 0 : index
    %c0_34 = arith.constant 0 : index
    %50 = vector.load %arg16[%c0_33, %c0_34] : memref<1x32xf32, #tpu.memory_space<vmem>>, vector<1x32xf32>
    %cst_35 = arith.constant 9.99999974E-6 : f32
    %51 = vector.broadcast %cst_35 : f32 to vector<1x32xf32>
    %52 = arith.addf %50, %51 : vector<1x32xf32>
    %53 = math.rsqrt %52 : vector<1x32xf32>
    %54 = vector.broadcast %53 : vector<1x32xf32> to vector<16x32xf32>
    %55 = arith.mulf %49, %54 : vector<16x32xf32>
    %c0_36 = arith.constant 0 : index
    %c0_37 = arith.constant 0 : index
    %56 = vector.load %arg13[%c0_36, %c0_37] : memref<1x32xf32, #tpu.memory_space<vmem>>, vector<1x32xf32>
    %57 = vector.broadcast %56 : vector<1x32xf32> to vector<16x32xf32>
    %58 = arith.mulf %55, %57 : vector<16x32xf32>
    %c0_38 = arith.constant 0 : index
    %c0_39 = arith.constant 0 : index
    %59 = vector.load %arg14[%c0_38, %c0_39] : memref<1x32xf32, #tpu.memory_space<vmem>>, vector<1x32xf32>
    %60 = vector.broadcast %59 : vector<1x32xf32> to vector<16x32xf32>
    %61 = arith.addf %58, %60 : vector<16x32xf32>
    %cst_40 = arith.constant 0.000000e+00 : f32
    %62 = vector.broadcast %cst_40 : f32 to vector<16x32xf32>
    %63 = arith.cmpf oge, %61, %62 : vector<16x32xf32>
    %cst_41 = arith.constant 2.000000e-01 : f32
    %64 = vector.broadcast %cst_41 : f32 to vector<16x32xf32>
    %65 = arith.mulf %64, %61 : vector<16x32xf32>
    %66 = arith.select %63, %61, %65 : vector<16x32xi1>, vector<16x32xf32>
    %c0_42 = arith.constant 0 : index
    %c0_43 = arith.constant 0 : index
    %67 = vector.load %arg17[%c0_42, %c0_43] : memref<32x32xf32, #tpu.memory_space<vmem>>, vector<32x32xf32>
    %cst_44 = arith.constant dense<0.000000e+00> : vector<16x32xf32>
    %68 = tpu.matmul %66, %67, %cst_44 {dimension_numbers = #tpu.dot_dimension_numbers<[1], [0], [0], [1], [0, 0, 1, 1], [], []>} : vector<16x32xf32>, vector<32x32xf32>, vector<16x32xf32> -> vector<16x32xf32>
    %c0_45 = arith.constant 0 : index
    %c0_46 = arith.constant 0 : index
    %69 = vector.load %arg20[%c0_45, %c0_46] : memref<1x32xf32, #tpu.memory_space<vmem>>, vector<1x32xf32>
    %70 = vector.broadcast %69 : vector<1x32xf32> to vector<16x32xf32>
    %71 = arith.subf %68, %70 : vector<16x32xf32>
    %c0_47 = arith.constant 0 : index
    %c0_48 = arith.constant 0 : index
    %72 = vector.load %arg21[%c0_47, %c0_48] : memref<1x32xf32, #tpu.memory_space<vmem>>, vector<1x32xf32>
    %cst_49 = arith.constant 9.99999974E-6 : f32
    %73 = vector.broadcast %cst_49 : f32 to vector<1x32xf32>
    %74 = arith.addf %72, %73 : vector<1x32xf32>
    %75 = math.rsqrt %74 : vector<1x32xf32>
    %76 = vector.broadcast %75 : vector<1x32xf32> to vector<16x32xf32>
    %77 = arith.mulf %71, %76 : vector<16x32xf32>
    %c0_50 = arith.constant 0 : index
    %c0_51 = arith.constant 0 : index
    %78 = vector.load %arg18[%c0_50, %c0_51] : memref<1x32xf32, #tpu.memory_space<vmem>>, vector<1x32xf32>
    %79 = vector.broadcast %78 : vector<1x32xf32> to vector<16x32xf32>
    %80 = arith.mulf %77, %79 : vector<16x32xf32>
    %c0_52 = arith.constant 0 : index
    %c0_53 = arith.constant 0 : index
    %81 = vector.load %arg19[%c0_52, %c0_53] : memref<1x32xf32, #tpu.memory_space<vmem>>, vector<1x32xf32>
    %82 = vector.broadcast %81 : vector<1x32xf32> to vector<16x32xf32>
    %83 = arith.addf %80, %82 : vector<16x32xf32>
    %cst_54 = arith.constant 0.000000e+00 : f32
    %84 = vector.broadcast %cst_54 : f32 to vector<16x32xf32>
    %85 = arith.cmpf oge, %83, %84 : vector<16x32xf32>
    %cst_55 = arith.constant 2.000000e-01 : f32
    %86 = vector.broadcast %cst_55 : f32 to vector<16x32xf32>
    %87 = arith.mulf %86, %83 : vector<16x32xf32>
    %88 = arith.select %85, %83, %87 : vector<16x32xi1>, vector<16x32xf32>
    %c0_56 = arith.constant 0 : index
    %c0_57 = arith.constant 0 : index
    %89 = vector.load %arg22[%c0_56, %c0_57] : memref<32x48xf32, #tpu.memory_space<vmem>>, vector<32x48xf32>
    %cst_58 = arith.constant dense<0.000000e+00> : vector<16x48xf32>
    %90 = tpu.matmul %88, %89, %cst_58 {dimension_numbers = #tpu.dot_dimension_numbers<[1], [0], [0], [1], [0, 0, 1, 1], [], []>} : vector<16x32xf32>, vector<32x48xf32>, vector<16x48xf32> -> vector<16x48xf32>
    %c0_59 = arith.constant 0 : index
    %c0_60 = arith.constant 0 : index
    %91 = vector.load %arg25[%c0_59, %c0_60] : memref<1x48xf32, #tpu.memory_space<vmem>>, vector<1x48xf32>
    %92 = vector.broadcast %91 : vector<1x48xf32> to vector<16x48xf32>
    %93 = arith.subf %90, %92 : vector<16x48xf32>
    %c0_61 = arith.constant 0 : index
    %c0_62 = arith.constant 0 : index
    %94 = vector.load %arg26[%c0_61, %c0_62] : memref<1x48xf32, #tpu.memory_space<vmem>>, vector<1x48xf32>
    %cst_63 = arith.constant 9.99999974E-6 : f32
    %95 = vector.broadcast %cst_63 : f32 to vector<1x48xf32>
    %96 = arith.addf %94, %95 : vector<1x48xf32>
    %97 = math.rsqrt %96 : vector<1x48xf32>
    %98 = vector.broadcast %97 : vector<1x48xf32> to vector<16x48xf32>
    %99 = arith.mulf %93, %98 : vector<16x48xf32>
    %c0_64 = arith.constant 0 : index
    %c0_65 = arith.constant 0 : index
    %100 = vector.load %arg23[%c0_64, %c0_65] : memref<1x48xf32, #tpu.memory_space<vmem>>, vector<1x48xf32>
    %101 = vector.broadcast %100 : vector<1x48xf32> to vector<16x48xf32>
    %102 = arith.mulf %99, %101 : vector<16x48xf32>
    %c0_66 = arith.constant 0 : index
    %c0_67 = arith.constant 0 : index
    %103 = vector.load %arg24[%c0_66, %c0_67] : memref<1x48xf32, #tpu.memory_space<vmem>>, vector<1x48xf32>
    %104 = vector.broadcast %103 : vector<1x48xf32> to vector<16x48xf32>
    %105 = arith.addf %102, %104 : vector<16x48xf32>
    %cst_68 = arith.constant 0.000000e+00 : f32
    %106 = vector.broadcast %cst_68 : f32 to vector<16x48xf32>
    %107 = arith.cmpf oge, %105, %106 : vector<16x48xf32>
    %cst_69 = arith.constant 2.000000e-01 : f32
    %108 = vector.broadcast %cst_69 : f32 to vector<16x48xf32>
    %109 = arith.mulf %108, %105 : vector<16x48xf32>
    %110 = arith.select %107, %105, %109 : vector<16x48xi1>, vector<16x48xf32>
    %c0_70 = arith.constant 0 : index
    %c0_71 = arith.constant 0 : index
    %111 = vector.load %arg27[%c0_70, %c0_71] : memref<16x48xf32, #tpu.memory_space<vmem>>, vector<16x48xf32>
    tpu.vector_store %arg27[%c0_70, %c0_71], %110 {strides = array<i32>} : memref<16x48xf32, #tpu.memory_space<vmem>>, vector<16x48xf32>,
    return
  }
  func.func @transform_0(%arg0: i32) -> (i32, i32) {
    %c0_i32 = arith.constant 0 : i32
    %c0_i32_0 = arith.constant 0 : i32
    %c0_i32_1 = arith.constant 0 : i32
    return %c0_i32, %c0_i32_0 : i32, i32
  }
  func.func @transform_1(%arg0: i32) -> (i32, i32) {
    %c0_i32 = arith.constant 0 : i32
    %c0_i32_0 = arith.constant 0 : i32
    %c0_i32_1 = arith.constant 0 : i32
    return %c0_i32, %c0_i32_0 : i32, i32
  }
  func.func @transform_2(%arg0: i32) -> (i32, i32) {
    %c0_i32 = arith.constant 0 : i32
    %c0_i32_0 = arith.constant 0 : i32
    %c0_i32_1 = arith.constant 0 : i32
    return %c0_i32, %c0_i32_0 : i32, i32
  }
  func.func @transform_3(%arg0: i32) -> (i32, i32) {
    %c0_i32 = arith.constant 0 : i32
    %c0_i32_0 = arith.constant 0 : i32
    %c0_i32_1 = arith.constant 0 : i32
    return %c0_i32, %c0_i32_0 : i32, i32
  }
  func.func @transform_4(%arg0: i32) -> (i32, i32) {
    %c0_i32 = arith.constant 0 : i32
    %c0_i32_0 = arith.constant 0 : i32
    %c0_i32_1 = arith.constant 0 : i32
    return %c0_i32, %c0_i32_0 : i32, i32
  }
  func.func @transform_5(%arg0: i32) -> (i32, i32) {
    %c0_i32 = arith.constant 0 : i32
    %c0_i32_0 = arith.constant 0 : i32
    %c0_i32_1 = arith.constant 0 : i32
    return %c0_i32, %c0_i32_0 : i32, i32
  }
  func.func @transform_6(%arg0: i32) -> (i32, i32) {
    %c0_i32 = arith.constant 0 : i32
    %c0_i32_0 = arith.constant 0 : i32
    %c0_i32_1 = arith.constant 0 : i32
    return %c0_i32, %c0_i32_0 : i32, i32
  }
  func.func @transform_7(%arg0: i32) -> (i32, i32) {
    %c0_i32 = arith.constant 0 : i32
    %c0_i32_0 = arith.constant 0 : i32
    %c0_i32_1 = arith.constant 0 : i32
    return %c0_i32, %c0_i32_0 : i32, i32
  }
  func.func @transform_8(%arg0: i32) -> (i32, i32) {
    %c0_i32 = arith.constant 0 : i32
    %c0_i32_0 = arith.constant 0 : i32
    %c0_i32_1 = arith.constant 0 : i32
    return %c0_i32, %c0_i32_0 : i32, i32
  }
  func.func @transform_9(%arg0: i32) -> (i32, i32) {
    %c0_i32 = arith.constant 0 : i32
    %c0_i32_0 = arith.constant 0 : i32
    %c0_i32_1 = arith.constant 0 : i32
    return %c0_i32, %c0_i32_0 : i32, i32
  }
  func.func @transform_10(%arg0: i32) -> (i32, i32) {
    %c0_i32 = arith.constant 0 : i32
    %c0_i32_0 = arith.constant 0 : i32
    %c0_i32_1 = arith.constant 0 : i32
    return %c0_i32, %c0_i32_0 : i32, i32
  }
  func.func @transform_11(%arg0: i32) -> (i32, i32) {
    %c0_i32 = arith.constant 0 : i32
    %c0_i32_0 = arith.constant 0 : i32
    %c0_i32_1 = arith.constant 0 : i32
    return %c0_i32, %c0_i32_0 : i32, i32
  }
  func.func @transform_12(%arg0: i32) -> (i32, i32) {
    %c0_i32 = arith.constant 0 : i32
    %c0_i32_0 = arith.constant 0 : i32
    %c0_i32_1 = arith.constant 0 : i32
    return %c0_i32, %c0_i32_0 : i32, i32
  }
  func.func @transform_13(%arg0: i32) -> (i32, i32) {
    %c0_i32 = arith.constant 0 : i32
    %c0_i32_0 = arith.constant 0 : i32
    %c0_i32_1 = arith.constant 0 : i32
    return %c0_i32, %c0_i32_0 : i32, i32
  }
  func.func @transform_14(%arg0: i32) -> (i32, i32) {
    %c0_i32 = arith.constant 0 : i32
    %c0_i32_0 = arith.constant 0 : i32
    %c0_i32_1 = arith.constant 0 : i32
    return %c0_i32, %c0_i32_0 : i32, i32
  }
  func.func @transform_15(%arg0: i32) -> (i32, i32) {
    %c0_i32 = arith.constant 0 : i32
    %c0_i32_0 = arith.constant 0 : i32
    %c0_i32_1 = arith.constant 0 : i32
    return %c0_i32, %c0_i32_0 : i32, i32
  }
  func.func @transform_16(%arg0: i32) -> (i32, i32) {
    %c0_i32 = arith.constant 0 : i32
    %c0_i32_0 = arith.constant 0 : i32
    %c0_i32_1 = arith.constant 0 : i32
    return %c0_i32, %c0_i32_0 : i32, i32
  }
  func.func @transform_17(%arg0: i32) -> (i32, i32) {
    %c0_i32 = arith.constant 0 : i32
    %c0_i32_0 = arith.constant 0 : i32
    %c0_i32_1 = arith.constant 0 : i32
    return %c0_i32, %c0_i32_0 : i32, i32
  }
  func.func @transform_18(%arg0: i32) -> (i32, i32) {
    %c0_i32 = arith.constant 0 : i32
    %c0_i32_0 = arith.constant 0 : i32
    %c0_i32_1 = arith.constant 0 : i32
    return %c0_i32, %c0_i32_0 : i32, i32
  }
  func.func @transform_19(%arg0: i32) -> (i32, i32) {
    %c0_i32 = arith.constant 0 : i32
    %c0_i32_0 = arith.constant 0 : i32
    %c0_i32_1 = arith.constant 0 : i32
    return %c0_i32, %c0_i32_0 : i32, i32
  }
  func.func @transform_20(%arg0: i32) -> (i32, i32) {
    %c0_i32 = arith.constant 0 : i32
    %c0_i32_0 = arith.constant 0 : i32
    %c0_i32_1 = arith.constant 0 : i32
    return %c0_i32, %c0_i32_0 : i32, i32
  }
  func.func @transform_21(%arg0: i32) -> (i32, i32) {
    %c0_i32 = arith.constant 0 : i32
    %c0_i32_0 = arith.constant 0 : i32
    %c0_i32_1 = arith.constant 0 : i32
    return %c0_i32, %c0_i32_0 : i32, i32
  }
  func.func @transform_22(%arg0: i32) -> (i32, i32) {
    %c0_i32 = arith.constant 0 : i32
    %c0_i32_0 = arith.constant 0 : i32
    %c0_i32_1 = arith.constant 0 : i32
    return %c0_i32, %c0_i32_0 : i32, i32
  }
  func.func @transform_23(%arg0: i32) -> (i32, i32) {
    %c0_i32 = arith.constant 0 : i32
    %c0_i32_0 = arith.constant 0 : i32
    %c0_i32_1 = arith.constant 0 : i32
    return %c0_i32, %c0_i32_0 : i32, i32
  }
  func.func @transform_24(%arg0: i32) -> (i32, i32) {
    %c0_i32 = arith.constant 0 : i32
    %c0_i32_0 = arith.constant 0 : i32
    %c0_i32_1 = arith.constant 0 : i32
    return %c0_i32, %c0_i32_0 : i32, i32
  }
  func.func @transform_25(%arg0: i32) -> (i32, i32) {
    %c0_i32 = arith.constant 0 : i32
    %c0_i32_0 = arith.constant 0 : i32
    %c0_i32_1 = arith.constant 0 : i32
    return %c0_i32, %c0_i32_0 : i32, i32
  }
  func.func @transform_26(%arg0: i32) -> (i32, i32) {
    %c0_i32 = arith.constant 0 : i32
    %c0_i32_0 = arith.constant 0 : i32
    %c0_i32_1 = arith.constant 0 : i32
    return %c0_i32, %c0_i32_0 : i32, i32
  }
}

module attributes {stable_mosaic.version = 11 : i64} {
  func.func @_decoder_kernel(%arg0: i32, %arg1: memref<16x32xf32, #tpu.memory_space<vmem>>, %arg2: memref<16x32xf32, #tpu.memory_space<vmem>>, %arg3: memref<8x8xf32, #tpu.memory_space<vmem>>, %arg4: memref<32x96xf32, #tpu.memory_space<vmem>>, %arg5: memref<32x32xf32, #tpu.memory_space<vmem>>, %arg6: memref<1x32xf32, #tpu.memory_space<vmem>>, %arg7: memref<1x32xf32, #tpu.memory_space<vmem>>, %arg8: memref<32x32xf32, #tpu.memory_space<vmem>>, %arg9: memref<32x64xf32, #tpu.memory_space<vmem>>, %arg10: memref<32x32xf32, #tpu.memory_space<vmem>>, %arg11: memref<1x32xf32, #tpu.memory_space<vmem>>, %arg12: memref<1x32xf32, #tpu.memory_space<vmem>>, %arg13: memref<32x64xf32, #tpu.memory_space<vmem>>, %arg14: memref<1x64xf32, #tpu.memory_space<vmem>>, %arg15: memref<64x32xf32, #tpu.memory_space<vmem>>, %arg16: memref<1x32xf32, #tpu.memory_space<vmem>>, %arg17: memref<1x32xf32, #tpu.memory_space<vmem>>, %arg18: memref<1x32xf32, #tpu.memory_space<vmem>>, %arg19: memref<16x32xf32, #tpu.memory_space<vmem>>, %arg20: memref<8x8x8xf32, #tpu.memory_space<vmem>>, %arg21: memref<8x8x8xf32, #tpu.memory_space<vmem>>) attributes {dimension_semantics = [#tpu.dimension_semantics<arbitrary>], iteration_bounds = array<i64: 1>, scalar_prefetch = 0 : i64, scratch_operands = 0 : i64, tpu.core_type = #tpu.core_type<tc>, window_params = [{pipeline_mode = #tpu.pipeline_mode<synchronous>, transform_indices = @transform_0, window_bounds = array<i64: 16, 32>}, {pipeline_mode = #tpu.pipeline_mode<synchronous>, transform_indices = @transform_1, window_bounds = array<i64: 16, 32>}, {pipeline_mode = #tpu.pipeline_mode<synchronous>, transform_indices = @transform_2, window_bounds = array<i64: 8, 8>}, {pipeline_mode = #tpu.pipeline_mode<synchronous>, transform_indices = @transform_3, window_bounds = array<i64: 32, 96>}, {pipeline_mode = #tpu.pipeline_mode<synchronous>, transform_indices = @transform_4, window_bounds = array<i64: 32, 32>}, {pipeline_mode = #tpu.pipeline_mode<synchronous>, transform_indices = @transform_5, window_bounds = array<i64: 1, 32>}, {pipeline_mode = #tpu.pipeline_mode<synchronous>, transform_indices = @transform_6, window_bounds = array<i64: 1, 32>}, {pipeline_mode = #tpu.pipeline_mode<synchronous>, transform_indices = @transform_7, window_bounds = array<i64: 32, 32>}, {pipeline_mode = #tpu.pipeline_mode<synchronous>, transform_indices = @transform_8, window_bounds = array<i64: 32, 64>}, {pipeline_mode = #tpu.pipeline_mode<synchronous>, transform_indices = @transform_9, window_bounds = array<i64: 32, 32>}, {pipeline_mode = #tpu.pipeline_mode<synchronous>, transform_indices = @transform_10, window_bounds = array<i64: 1, 32>}, {pipeline_mode = #tpu.pipeline_mode<synchronous>, transform_indices = @transform_11, window_bounds = array<i64: 1, 32>}, {pipeline_mode = #tpu.pipeline_mode<synchronous>, transform_indices = @transform_12, window_bounds = array<i64: 32, 64>}, {pipeline_mode = #tpu.pipeline_mode<synchronous>, transform_indices = @transform_13, window_bounds = array<i64: 1, 64>}, {pipeline_mode = #tpu.pipeline_mode<synchronous>, transform_indices = @transform_14, window_bounds = array<i64: 64, 32>}, {pipeline_mode = #tpu.pipeline_mode<synchronous>, transform_indices = @transform_15, window_bounds = array<i64: 1, 32>}, {pipeline_mode = #tpu.pipeline_mode<synchronous>, transform_indices = @transform_16, window_bounds = array<i64: 1, 32>}, {pipeline_mode = #tpu.pipeline_mode<synchronous>, transform_indices = @transform_17, window_bounds = array<i64: 1, 32>}, {pipeline_mode = #tpu.pipeline_mode<synchronous>, transform_indices = @transform_18, window_bounds = array<i64: 16, 32>}, {pipeline_mode = #tpu.pipeline_mode<synchronous>, transform_indices = @transform_19, window_bounds = array<i64: 8, 8, 8>}, {pipeline_mode = #tpu.pipeline_mode<synchronous>, transform_indices = @transform_20, window_bounds = array<i64: 8, 8, 8>}]} {
    %c0 = arith.constant 0 : index
    %c0_0 = arith.constant 0 : index
    %0 = vector.load %arg1[%c0, %c0_0] : memref<16x32xf32, #tpu.memory_space<vmem>>, vector<16x32xf32>
    %c0_1 = arith.constant 0 : index
    %c0_2 = arith.constant 0 : index
    %1 = vector.load %arg2[%c0_1, %c0_2] : memref<16x32xf32, #tpu.memory_space<vmem>>, vector<16x32xf32>
    %c0_3 = arith.constant 0 : index
    %c0_4 = arith.constant 0 : index
    %2 = vector.load %arg3[%c0_3, %c0_4] : memref<8x8xf32, #tpu.memory_space<vmem>>, vector<8x8xf32>
    %c0_5 = arith.constant 0 : index
    %c0_6 = arith.constant 0 : index
    %3 = vector.load %arg4[%c0_5, %c0_6] : memref<32x96xf32, #tpu.memory_space<vmem>>, vector<32x96xf32>
    %cst = arith.constant dense<0.000000e+00> : vector<16x96xf32>
    %4 = tpu.matmul %0, %3, %cst {dimension_numbers = #tpu.dot_dimension_numbers<[1], [0], [0], [1], [0, 0, 1, 1], [], []>} : vector<16x32xf32>, vector<32x96xf32>, vector<16x96xf32> -> vector<16x96xf32>
    %5 = vector.extract_strided_slice %4 {offsets = [0, 0], sizes = [16, 32], strides = [1, 1]} : vector<16x96xf32> to vector<16x32xf32>
    %6 = vector.extract_strided_slice %4 {offsets = [0, 32], sizes = [16, 32], strides = [1, 1]} : vector<16x96xf32> to vector<16x32xf32>
    %7 = vector.extract_strided_slice %4 {offsets = [0, 64], sizes = [16, 32], strides = [1, 1]} : vector<16x96xf32> to vector<16x32xf32>
    %8 = vector.extract_strided_slice %5 {offsets = [0, 0], sizes = [8, 8], strides = [1, 1]} : vector<16x32xf32> to vector<8x8xf32>
    %9 = vector.extract_strided_slice %6 {offsets = [0, 0], sizes = [8, 8], strides = [1, 1]} : vector<16x32xf32> to vector<8x8xf32>
    %10 = vector.extract_strided_slice %7 {offsets = [0, 0], sizes = [8, 8], strides = [1, 1]} : vector<16x32xf32> to vector<8x8xf32>
    %cst_7 = arith.constant dense<0.000000e+00> : vector<8x8xf32>
    %11 = tpu.matmul %8, %9, %cst_7 {dimension_numbers = #tpu.dot_dimension_numbers<[1], [1], [0], [0], [0, 0, 1, 0], [], []>} : vector<8x8xf32>, vector<8x8xf32>, vector<8x8xf32> -> vector<8x8xf32>
    %cst_8 = arith.constant 0.353553385 : f32
    %12 = vector.broadcast %cst_8 : f32 to vector<8x8xf32>
    %13 = arith.mulf %11, %12 : vector<8x8xf32>
    %14 = arith.addf %13, %2 : vector<8x8xf32>
    %cst_9 = arith.constant dense<0xFF800000> : vector<8xf32>
    %15 = vector.multi_reduction <maximumf>, %14, %cst_9 [1] : vector<8x8xf32> to vector<8xf32>
    %16 = vector.shape_cast %15 : vector<8xf32> to vector<8x1xf32>
    %17 = vector.broadcast %16 : vector<8x1xf32> to vector<8x8xf32>
    %18 = arith.subf %14, %17 : vector<8x8xf32>
    %19 = math.exp %18 : vector<8x8xf32>
    %cst_10 = arith.constant dense<0.000000e+00> : vector<8xf32>
    %20 = vector.multi_reduction <add>, %19, %cst_10 [1] : vector<8x8xf32> to vector<8xf32>
    %21 = vector.shape_cast %20 : vector<8xf32> to vector<8x1xf32>
    %22 = tpu.reciprocal %21 {approx = true} : vector<8x1xf32> -> vector<8x1xf32>
    %23 = vector.broadcast %22 : vector<8x1xf32> to vector<8x8xf32>
    %24 = arith.mulf %19, %23 : vector<8x8xf32>
    %c0_11 = arith.constant 0 : index
    %c0_12 = arith.constant 0 : index
    %c0_13 = arith.constant 0 : index
    %25 = vector.load %arg20[%c0_11, %c0_12, %c0_13] : memref<8x8x8xf32, #tpu.memory_space<vmem>>, vector<1x8x8xf32>
    %26 = vector.shape_cast %25 : vector<1x8x8xf32> to vector<8x8xf32>
    %27 = vector.shape_cast %24 : vector<8x8xf32> to vector<1x8x8xf32>
    tpu.vector_store %arg20[%c0_11, %c0_12, %c0_13], %27 {strides = array<i32>} : memref<8x8x8xf32, #tpu.memory_space<vmem>>, vector<1x8x8xf32>,
    %cst_14 = arith.constant dense<0.000000e+00> : vector<8x8xf32>
    %28 = tpu.matmul %24, %10, %cst_14 {dimension_numbers = #tpu.dot_dimension_numbers<[1], [0], [0], [1], [0, 0, 1, 1], [], []>} : vector<8x8xf32>, vector<8x8xf32>, vector<8x8xf32> -> vector<8x8xf32>
    %c0_15 = arith.constant 0 : index
    %c0_16 = arith.constant 0 : index
    %29 = vector.load %arg5[%c0_15, %c0_16] : memref<32x32xf32, #tpu.memory_space<vmem>>, vector<8x32xf32>
    %cst_17 = arith.constant dense<0.000000e+00> : vector<8x32xf32>
    %30 = tpu.matmul %28, %29, %cst_17 {dimension_numbers = #tpu.dot_dimension_numbers<[1], [0], [0], [1], [0, 0, 1, 1], [], []>} : vector<8x8xf32>, vector<8x32xf32>, vector<8x32xf32> -> vector<8x32xf32>
    %31 = vector.extract_strided_slice %5 {offsets = [0, 8], sizes = [8, 8], strides = [1, 1]} : vector<16x32xf32> to vector<8x8xf32>
    %32 = vector.extract_strided_slice %6 {offsets = [0, 8], sizes = [8, 8], strides = [1, 1]} : vector<16x32xf32> to vector<8x8xf32>
    %33 = vector.extract_strided_slice %7 {offsets = [0, 8], sizes = [8, 8], strides = [1, 1]} : vector<16x32xf32> to vector<8x8xf32>
    %cst_18 = arith.constant dense<0.000000e+00> : vector<8x8xf32>
    %34 = tpu.matmul %31, %32, %cst_18 {dimension_numbers = #tpu.dot_dimension_numbers<[1], [1], [0], [0], [0, 0, 1, 0], [], []>} : vector<8x8xf32>, vector<8x8xf32>, vector<8x8xf32> -> vector<8x8xf32>
    %cst_19 = arith.constant 0.353553385 : f32
    %35 = vector.broadcast %cst_19 : f32 to vector<8x8xf32>
    %36 = arith.mulf %34, %35 : vector<8x8xf32>
    %37 = arith.addf %36, %2 : vector<8x8xf32>
    %cst_20 = arith.constant dense<0xFF800000> : vector<8xf32>
    %38 = vector.multi_reduction <maximumf>, %37, %cst_20 [1] : vector<8x8xf32> to vector<8xf32>
    %39 = vector.shape_cast %38 : vector<8xf32> to vector<8x1xf32>
    %40 = vector.broadcast %39 : vector<8x1xf32> to vector<8x8xf32>
    %41 = arith.subf %37, %40 : vector<8x8xf32>
    %42 = math.exp %41 : vector<8x8xf32>
    %cst_21 = arith.constant dense<0.000000e+00> : vector<8xf32>
    %43 = vector.multi_reduction <add>, %42, %cst_21 [1] : vector<8x8xf32> to vector<8xf32>
    %44 = vector.shape_cast %43 : vector<8xf32> to vector<8x1xf32>
    %45 = tpu.reciprocal %44 {approx = true} : vector<8x1xf32> -> vector<8x1xf32>
    %46 = vector.broadcast %45 : vector<8x1xf32> to vector<8x8xf32>
    %47 = arith.mulf %42, %46 : vector<8x8xf32>
    %c1 = arith.constant 1 : index
    %c0_22 = arith.constant 0 : index
    %c0_23 = arith.constant 0 : index
    %48 = vector.load %arg20[%c1, %c0_22, %c0_23] : memref<8x8x8xf32, #tpu.memory_space<vmem>>, vector<1x8x8xf32>
    %49 = vector.shape_cast %48 : vector<1x8x8xf32> to vector<8x8xf32>
    %50 = vector.shape_cast %47 : vector<8x8xf32> to vector<1x8x8xf32>
    tpu.vector_store %arg20[%c1, %c0_22, %c0_23], %50 {strides = array<i32>} : memref<8x8x8xf32, #tpu.memory_space<vmem>>, vector<1x8x8xf32>,
    %cst_24 = arith.constant dense<0.000000e+00> : vector<8x8xf32>
    %51 = tpu.matmul %47, %33, %cst_24 {dimension_numbers = #tpu.dot_dimension_numbers<[1], [0], [0], [1], [0, 0, 1, 1], [], []>} : vector<8x8xf32>, vector<8x8xf32>, vector<8x8xf32> -> vector<8x8xf32>
    %c8 = arith.constant 8 : index
    %c0_25 = arith.constant 0 : index
    %52 = vector.load %arg5[%c8, %c0_25] : memref<32x32xf32, #tpu.memory_space<vmem>>, vector<8x32xf32>
    %cst_26 = arith.constant dense<0.000000e+00> : vector<8x32xf32>
    %53 = tpu.matmul %51, %52, %cst_26 {dimension_numbers = #tpu.dot_dimension_numbers<[1], [0], [0], [1], [0, 0, 1, 1], [], []>} : vector<8x8xf32>, vector<8x32xf32>, vector<8x32xf32> -> vector<8x32xf32>
    %54 = arith.addf %30, %53 : vector<8x32xf32>
    %55 = vector.extract_strided_slice %5 {offsets = [0, 16], sizes = [8, 8], strides = [1, 1]} : vector<16x32xf32> to vector<8x8xf32>
    %56 = vector.extract_strided_slice %6 {offsets = [0, 16], sizes = [8, 8], strides = [1, 1]} : vector<16x32xf32> to vector<8x8xf32>
    %57 = vector.extract_strided_slice %7 {offsets = [0, 16], sizes = [8, 8], strides = [1, 1]} : vector<16x32xf32> to vector<8x8xf32>
    %cst_27 = arith.constant dense<0.000000e+00> : vector<8x8xf32>
    %58 = tpu.matmul %55, %56, %cst_27 {dimension_numbers = #tpu.dot_dimension_numbers<[1], [1], [0], [0], [0, 0, 1, 0], [], []>} : vector<8x8xf32>, vector<8x8xf32>, vector<8x8xf32> -> vector<8x8xf32>
    %cst_28 = arith.constant 0.353553385 : f32
    %59 = vector.broadcast %cst_28 : f32 to vector<8x8xf32>
    %60 = arith.mulf %58, %59 : vector<8x8xf32>
    %61 = arith.addf %60, %2 : vector<8x8xf32>
    %cst_29 = arith.constant dense<0xFF800000> : vector<8xf32>
    %62 = vector.multi_reduction <maximumf>, %61, %cst_29 [1] : vector<8x8xf32> to vector<8xf32>
    %63 = vector.shape_cast %62 : vector<8xf32> to vector<8x1xf32>
    %64 = vector.broadcast %63 : vector<8x1xf32> to vector<8x8xf32>
    %65 = arith.subf %61, %64 : vector<8x8xf32>
    %66 = math.exp %65 : vector<8x8xf32>
    %cst_30 = arith.constant dense<0.000000e+00> : vector<8xf32>
    %67 = vector.multi_reduction <add>, %66, %cst_30 [1] : vector<8x8xf32> to vector<8xf32>
    %68 = vector.shape_cast %67 : vector<8xf32> to vector<8x1xf32>
    %69 = tpu.reciprocal %68 {approx = true} : vector<8x1xf32> -> vector<8x1xf32>
    %70 = vector.broadcast %69 : vector<8x1xf32> to vector<8x8xf32>
    %71 = arith.mulf %66, %70 : vector<8x8xf32>
    %c2 = arith.constant 2 : index
    %c0_31 = arith.constant 0 : index
    %c0_32 = arith.constant 0 : index
    %72 = vector.load %arg20[%c2, %c0_31, %c0_32] : memref<8x8x8xf32, #tpu.memory_space<vmem>>, vector<1x8x8xf32>
    %73 = vector.shape_cast %72 : vector<1x8x8xf32> to vector<8x8xf32>
    %74 = vector.shape_cast %71 : vector<8x8xf32> to vector<1x8x8xf32>
    tpu.vector_store %arg20[%c2, %c0_31, %c0_32], %74 {strides = array<i32>} : memref<8x8x8xf32, #tpu.memory_space<vmem>>, vector<1x8x8xf32>,
    %cst_33 = arith.constant dense<0.000000e+00> : vector<8x8xf32>
    %75 = tpu.matmul %71, %57, %cst_33 {dimension_numbers = #tpu.dot_dimension_numbers<[1], [0], [0], [1], [0, 0, 1, 1], [], []>} : vector<8x8xf32>, vector<8x8xf32>, vector<8x8xf32> -> vector<8x8xf32>
    %c16 = arith.constant 16 : index
    %c0_34 = arith.constant 0 : index
    %76 = vector.load %arg5[%c16, %c0_34] : memref<32x32xf32, #tpu.memory_space<vmem>>, vector<8x32xf32>
    %cst_35 = arith.constant dense<0.000000e+00> : vector<8x32xf32>
    %77 = tpu.matmul %75, %76, %cst_35 {dimension_numbers = #tpu.dot_dimension_numbers<[1], [0], [0], [1], [0, 0, 1, 1], [], []>} : vector<8x8xf32>, vector<8x32xf32>, vector<8x32xf32> -> vector<8x32xf32>
    %78 = arith.addf %54, %77 : vector<8x32xf32>
    %79 = vector.extract_strided_slice %5 {offsets = [0, 24], sizes = [8, 8], strides = [1, 1]} : vector<16x32xf32> to vector<8x8xf32>
    %80 = vector.extract_strided_slice %6 {offsets = [0, 24], sizes = [8, 8], strides = [1, 1]} : vector<16x32xf32> to vector<8x8xf32>
    %81 = vector.extract_strided_slice %7 {offsets = [0, 24], sizes = [8, 8], strides = [1, 1]} : vector<16x32xf32> to vector<8x8xf32>
    %cst_36 = arith.constant dense<0.000000e+00> : vector<8x8xf32>
    %82 = tpu.matmul %79, %80, %cst_36 {dimension_numbers = #tpu.dot_dimension_numbers<[1], [1], [0], [0], [0, 0, 1, 0], [], []>} : vector<8x8xf32>, vector<8x8xf32>, vector<8x8xf32> -> vector<8x8xf32>
    %cst_37 = arith.constant 0.353553385 : f32
    %83 = vector.broadcast %cst_37 : f32 to vector<8x8xf32>
    %84 = arith.mulf %82, %83 : vector<8x8xf32>
    %85 = arith.addf %84, %2 : vector<8x8xf32>
    %cst_38 = arith.constant dense<0xFF800000> : vector<8xf32>
    %86 = vector.multi_reduction <maximumf>, %85, %cst_38 [1] : vector<8x8xf32> to vector<8xf32>
    %87 = vector.shape_cast %86 : vector<8xf32> to vector<8x1xf32>
    %88 = vector.broadcast %87 : vector<8x1xf32> to vector<8x8xf32>
    %89 = arith.subf %85, %88 : vector<8x8xf32>
    %90 = math.exp %89 : vector<8x8xf32>
    %cst_39 = arith.constant dense<0.000000e+00> : vector<8xf32>
    %91 = vector.multi_reduction <add>, %90, %cst_39 [1] : vector<8x8xf32> to vector<8xf32>
    %92 = vector.shape_cast %91 : vector<8xf32> to vector<8x1xf32>
    %93 = tpu.reciprocal %92 {approx = true} : vector<8x1xf32> -> vector<8x1xf32>
    %94 = vector.broadcast %93 : vector<8x1xf32> to vector<8x8xf32>
    %95 = arith.mulf %90, %94 : vector<8x8xf32>
    %c3 = arith.constant 3 : index
    %c0_40 = arith.constant 0 : index
    %c0_41 = arith.constant 0 : index
    %96 = vector.load %arg20[%c3, %c0_40, %c0_41] : memref<8x8x8xf32, #tpu.memory_space<vmem>>, vector<1x8x8xf32>
    %97 = vector.shape_cast %96 : vector<1x8x8xf32> to vector<8x8xf32>
    %98 = vector.shape_cast %95 : vector<8x8xf32> to vector<1x8x8xf32>
    tpu.vector_store %arg20[%c3, %c0_40, %c0_41], %98 {strides = array<i32>} : memref<8x8x8xf32, #tpu.memory_space<vmem>>, vector<1x8x8xf32>,
    %cst_42 = arith.constant dense<0.000000e+00> : vector<8x8xf32>
    %99 = tpu.matmul %95, %81, %cst_42 {dimension_numbers = #tpu.dot_dimension_numbers<[1], [0], [0], [1], [0, 0, 1, 1], [], []>} : vector<8x8xf32>, vector<8x8xf32>, vector<8x8xf32> -> vector<8x8xf32>
    %c24 = arith.constant 24 : index
    %c0_43 = arith.constant 0 : index
    %100 = vector.load %arg5[%c24, %c0_43] : memref<32x32xf32, #tpu.memory_space<vmem>>, vector<8x32xf32>
    %cst_44 = arith.constant dense<0.000000e+00> : vector<8x32xf32>
    %101 = tpu.matmul %99, %100, %cst_44 {dimension_numbers = #tpu.dot_dimension_numbers<[1], [0], [0], [1], [0, 0, 1, 1], [], []>} : vector<8x8xf32>, vector<8x32xf32>, vector<8x32xf32> -> vector<8x32xf32>
    %102 = arith.addf %78, %101 : vector<8x32xf32>
    %103 = vector.extract_strided_slice %5 {offsets = [8, 0], sizes = [8, 8], strides = [1, 1]} : vector<16x32xf32> to vector<8x8xf32>
    %104 = vector.extract_strided_slice %6 {offsets = [8, 0], sizes = [8, 8], strides = [1, 1]} : vector<16x32xf32> to vector<8x8xf32>
    %105 = vector.extract_strided_slice %7 {offsets = [8, 0], sizes = [8, 8], strides = [1, 1]} : vector<16x32xf32> to vector<8x8xf32>
    %cst_45 = arith.constant dense<0.000000e+00> : vector<8x8xf32>
    %106 = tpu.matmul %103, %104, %cst_45 {dimension_numbers = #tpu.dot_dimension_numbers<[1], [1], [0], [0], [0, 0, 1, 0], [], []>} : vector<8x8xf32>, vector<8x8xf32>, vector<8x8xf32> -> vector<8x8xf32>
    %cst_46 = arith.constant 0.353553385 : f32
    %107 = vector.broadcast %cst_46 : f32 to vector<8x8xf32>
    %108 = arith.mulf %106, %107 : vector<8x8xf32>
    %109 = arith.addf %108, %2 : vector<8x8xf32>
    %cst_47 = arith.constant dense<0xFF800000> : vector<8xf32>
    %110 = vector.multi_reduction <maximumf>, %109, %cst_47 [1] : vector<8x8xf32> to vector<8xf32>
    %111 = vector.shape_cast %110 : vector<8xf32> to vector<8x1xf32>
    %112 = vector.broadcast %111 : vector<8x1xf32> to vector<8x8xf32>
    %113 = arith.subf %109, %112 : vector<8x8xf32>
    %114 = math.exp %113 : vector<8x8xf32>
    %cst_48 = arith.constant dense<0.000000e+00> : vector<8xf32>
    %115 = vector.multi_reduction <add>, %114, %cst_48 [1] : vector<8x8xf32> to vector<8xf32>
    %116 = vector.shape_cast %115 : vector<8xf32> to vector<8x1xf32>
    %117 = tpu.reciprocal %116 {approx = true} : vector<8x1xf32> -> vector<8x1xf32>
    %118 = vector.broadcast %117 : vector<8x1xf32> to vector<8x8xf32>
    %119 = arith.mulf %114, %118 : vector<8x8xf32>
    %c4 = arith.constant 4 : index
    %c0_49 = arith.constant 0 : index
    %c0_50 = arith.constant 0 : index
    %120 = vector.load %arg20[%c4, %c0_49, %c0_50] : memref<8x8x8xf32, #tpu.memory_space<vmem>>, vector<1x8x8xf32>
    %121 = vector.shape_cast %120 : vector<1x8x8xf32> to vector<8x8xf32>
    %122 = vector.shape_cast %119 : vector<8x8xf32> to vector<1x8x8xf32>
    tpu.vector_store %arg20[%c4, %c0_49, %c0_50], %122 {strides = array<i32>} : memref<8x8x8xf32, #tpu.memory_space<vmem>>, vector<1x8x8xf32>,
    %cst_51 = arith.constant dense<0.000000e+00> : vector<8x8xf32>
    %123 = tpu.matmul %119, %105, %cst_51 {dimension_numbers = #tpu.dot_dimension_numbers<[1], [0], [0], [1], [0, 0, 1, 1], [], []>} : vector<8x8xf32>, vector<8x8xf32>, vector<8x8xf32> -> vector<8x8xf32>
    %c0_52 = arith.constant 0 : index
    %c0_53 = arith.constant 0 : index
    %124 = vector.load %arg5[%c0_52, %c0_53] : memref<32x32xf32, #tpu.memory_space<vmem>>, vector<8x32xf32>
    %cst_54 = arith.constant dense<0.000000e+00> : vector<8x32xf32>
    %125 = tpu.matmul %123, %124, %cst_54 {dimension_numbers = #tpu.dot_dimension_numbers<[1], [0], [0], [1], [0, 0, 1, 1], [], []>} : vector<8x8xf32>, vector<8x32xf32>, vector<8x32xf32> -> vector<8x32xf32>
    %126 = vector.extract_strided_slice %5 {offsets = [8, 8], sizes = [8, 8], strides = [1, 1]} : vector<16x32xf32> to vector<8x8xf32>
    %127 = vector.extract_strided_slice %6 {offsets = [8, 8], sizes = [8, 8], strides = [1, 1]} : vector<16x32xf32> to vector<8x8xf32>
    %128 = vector.extract_strided_slice %7 {offsets = [8, 8], sizes = [8, 8], strides = [1, 1]} : vector<16x32xf32> to vector<8x8xf32>
    %cst_55 = arith.constant dense<0.000000e+00> : vector<8x8xf32>
    %129 = tpu.matmul %126, %127, %cst_55 {dimension_numbers = #tpu.dot_dimension_numbers<[1], [1], [0], [0], [0, 0, 1, 0], [], []>} : vector<8x8xf32>, vector<8x8xf32>, vector<8x8xf32> -> vector<8x8xf32>
    %cst_56 = arith.constant 0.353553385 : f32
    %130 = vector.broadcast %cst_56 : f32 to vector<8x8xf32>
    %131 = arith.mulf %129, %130 : vector<8x8xf32>
    %132 = arith.addf %131, %2 : vector<8x8xf32>
    %cst_57 = arith.constant dense<0xFF800000> : vector<8xf32>
    %133 = vector.multi_reduction <maximumf>, %132, %cst_57 [1] : vector<8x8xf32> to vector<8xf32>
    %134 = vector.shape_cast %133 : vector<8xf32> to vector<8x1xf32>
    %135 = vector.broadcast %134 : vector<8x1xf32> to vector<8x8xf32>
    %136 = arith.subf %132, %135 : vector<8x8xf32>
    %137 = math.exp %136 : vector<8x8xf32>
    %cst_58 = arith.constant dense<0.000000e+00> : vector<8xf32>
    %138 = vector.multi_reduction <add>, %137, %cst_58 [1] : vector<8x8xf32> to vector<8xf32>
    %139 = vector.shape_cast %138 : vector<8xf32> to vector<8x1xf32>
    %140 = tpu.reciprocal %139 {approx = true} : vector<8x1xf32> -> vector<8x1xf32>
    %141 = vector.broadcast %140 : vector<8x1xf32> to vector<8x8xf32>
    %142 = arith.mulf %137, %141 : vector<8x8xf32>
    %c5 = arith.constant 5 : index
    %c0_59 = arith.constant 0 : index
    %c0_60 = arith.constant 0 : index
    %143 = vector.load %arg20[%c5, %c0_59, %c0_60] : memref<8x8x8xf32, #tpu.memory_space<vmem>>, vector<1x8x8xf32>
    %144 = vector.shape_cast %143 : vector<1x8x8xf32> to vector<8x8xf32>
    %145 = vector.shape_cast %142 : vector<8x8xf32> to vector<1x8x8xf32>
    tpu.vector_store %arg20[%c5, %c0_59, %c0_60], %145 {strides = array<i32>} : memref<8x8x8xf32, #tpu.memory_space<vmem>>, vector<1x8x8xf32>,
    %cst_61 = arith.constant dense<0.000000e+00> : vector<8x8xf32>
    %146 = tpu.matmul %142, %128, %cst_61 {dimension_numbers = #tpu.dot_dimension_numbers<[1], [0], [0], [1], [0, 0, 1, 1], [], []>} : vector<8x8xf32>, vector<8x8xf32>, vector<8x8xf32> -> vector<8x8xf32>
    %c8_62 = arith.constant 8 : index
    %c0_63 = arith.constant 0 : index
    %147 = vector.load %arg5[%c8_62, %c0_63] : memref<32x32xf32, #tpu.memory_space<vmem>>, vector<8x32xf32>
    %cst_64 = arith.constant dense<0.000000e+00> : vector<8x32xf32>
    %148 = tpu.matmul %146, %147, %cst_64 {dimension_numbers = #tpu.dot_dimension_numbers<[1], [0], [0], [1], [0, 0, 1, 1], [], []>} : vector<8x8xf32>, vector<8x32xf32>, vector<8x32xf32> -> vector<8x32xf32>
    %149 = arith.addf %125, %148 : vector<8x32xf32>
    %150 = vector.extract_strided_slice %5 {offsets = [8, 16], sizes = [8, 8], strides = [1, 1]} : vector<16x32xf32> to vector<8x8xf32>
    %151 = vector.extract_strided_slice %6 {offsets = [8, 16], sizes = [8, 8], strides = [1, 1]} : vector<16x32xf32> to vector<8x8xf32>
    %152 = vector.extract_strided_slice %7 {offsets = [8, 16], sizes = [8, 8], strides = [1, 1]} : vector<16x32xf32> to vector<8x8xf32>
    %cst_65 = arith.constant dense<0.000000e+00> : vector<8x8xf32>
    %153 = tpu.matmul %150, %151, %cst_65 {dimension_numbers = #tpu.dot_dimension_numbers<[1], [1], [0], [0], [0, 0, 1, 0], [], []>} : vector<8x8xf32>, vector<8x8xf32>, vector<8x8xf32> -> vector<8x8xf32>
    %cst_66 = arith.constant 0.353553385 : f32
    %154 = vector.broadcast %cst_66 : f32 to vector<8x8xf32>
    %155 = arith.mulf %153, %154 : vector<8x8xf32>
    %156 = arith.addf %155, %2 : vector<8x8xf32>
    %cst_67 = arith.constant dense<0xFF800000> : vector<8xf32>
    %157 = vector.multi_reduction <maximumf>, %156, %cst_67 [1] : vector<8x8xf32> to vector<8xf32>
    %158 = vector.shape_cast %157 : vector<8xf32> to vector<8x1xf32>
    %159 = vector.broadcast %158 : vector<8x1xf32> to vector<8x8xf32>
    %160 = arith.subf %156, %159 : vector<8x8xf32>
    %161 = math.exp %160 : vector<8x8xf32>
    %cst_68 = arith.constant dense<0.000000e+00> : vector<8xf32>
    %162 = vector.multi_reduction <add>, %161, %cst_68 [1] : vector<8x8xf32> to vector<8xf32>
    %163 = vector.shape_cast %162 : vector<8xf32> to vector<8x1xf32>
    %164 = tpu.reciprocal %163 {approx = true} : vector<8x1xf32> -> vector<8x1xf32>
    %165 = vector.broadcast %164 : vector<8x1xf32> to vector<8x8xf32>
    %166 = arith.mulf %161, %165 : vector<8x8xf32>
    %c6 = arith.constant 6 : index
    %c0_69 = arith.constant 0 : index
    %c0_70 = arith.constant 0 : index
    %167 = vector.load %arg20[%c6, %c0_69, %c0_70] : memref<8x8x8xf32, #tpu.memory_space<vmem>>, vector<1x8x8xf32>
    %168 = vector.shape_cast %167 : vector<1x8x8xf32> to vector<8x8xf32>
    %169 = vector.shape_cast %166 : vector<8x8xf32> to vector<1x8x8xf32>
    tpu.vector_store %arg20[%c6, %c0_69, %c0_70], %169 {strides = array<i32>} : memref<8x8x8xf32, #tpu.memory_space<vmem>>, vector<1x8x8xf32>,
    %cst_71 = arith.constant dense<0.000000e+00> : vector<8x8xf32>
    %170 = tpu.matmul %166, %152, %cst_71 {dimension_numbers = #tpu.dot_dimension_numbers<[1], [0], [0], [1], [0, 0, 1, 1], [], []>} : vector<8x8xf32>, vector<8x8xf32>, vector<8x8xf32> -> vector<8x8xf32>
    %c16_72 = arith.constant 16 : index
    %c0_73 = arith.constant 0 : index
    %171 = vector.load %arg5[%c16_72, %c0_73] : memref<32x32xf32, #tpu.memory_space<vmem>>, vector<8x32xf32>
    %cst_74 = arith.constant dense<0.000000e+00> : vector<8x32xf32>
    %172 = tpu.matmul %170, %171, %cst_74 {dimension_numbers = #tpu.dot_dimension_numbers<[1], [0], [0], [1], [0, 0, 1, 1], [], []>} : vector<8x8xf32>, vector<8x32xf32>, vector<8x32xf32> -> vector<8x32xf32>
    %173 = arith.addf %149, %172 : vector<8x32xf32>
    %174 = vector.extract_strided_slice %5 {offsets = [8, 24], sizes = [8, 8], strides = [1, 1]} : vector<16x32xf32> to vector<8x8xf32>
    %175 = vector.extract_strided_slice %6 {offsets = [8, 24], sizes = [8, 8], strides = [1, 1]} : vector<16x32xf32> to vector<8x8xf32>
    %176 = vector.extract_strided_slice %7 {offsets = [8, 24], sizes = [8, 8], strides = [1, 1]} : vector<16x32xf32> to vector<8x8xf32>
    %cst_75 = arith.constant dense<0.000000e+00> : vector<8x8xf32>
    %177 = tpu.matmul %174, %175, %cst_75 {dimension_numbers = #tpu.dot_dimension_numbers<[1], [1], [0], [0], [0, 0, 1, 0], [], []>} : vector<8x8xf32>, vector<8x8xf32>, vector<8x8xf32> -> vector<8x8xf32>
    %cst_76 = arith.constant 0.353553385 : f32
    %178 = vector.broadcast %cst_76 : f32 to vector<8x8xf32>
    %179 = arith.mulf %177, %178 : vector<8x8xf32>
    %180 = arith.addf %179, %2 : vector<8x8xf32>
    %cst_77 = arith.constant dense<0xFF800000> : vector<8xf32>
    %181 = vector.multi_reduction <maximumf>, %180, %cst_77 [1] : vector<8x8xf32> to vector<8xf32>
    %182 = vector.shape_cast %181 : vector<8xf32> to vector<8x1xf32>
    %183 = vector.broadcast %182 : vector<8x1xf32> to vector<8x8xf32>
    %184 = arith.subf %180, %183 : vector<8x8xf32>
    %185 = math.exp %184 : vector<8x8xf32>
    %cst_78 = arith.constant dense<0.000000e+00> : vector<8xf32>
    %186 = vector.multi_reduction <add>, %185, %cst_78 [1] : vector<8x8xf32> to vector<8xf32>
    %187 = vector.shape_cast %186 : vector<8xf32> to vector<8x1xf32>
    %188 = tpu.reciprocal %187 {approx = true} : vector<8x1xf32> -> vector<8x1xf32>
    %189 = vector.broadcast %188 : vector<8x1xf32> to vector<8x8xf32>
    %190 = arith.mulf %185, %189 : vector<8x8xf32>
    %c7 = arith.constant 7 : index
    %c0_79 = arith.constant 0 : index
    %c0_80 = arith.constant 0 : index
    %191 = vector.load %arg20[%c7, %c0_79, %c0_80] : memref<8x8x8xf32, #tpu.memory_space<vmem>>, vector<1x8x8xf32>
    %192 = vector.shape_cast %191 : vector<1x8x8xf32> to vector<8x8xf32>
    %193 = vector.shape_cast %190 : vector<8x8xf32> to vector<1x8x8xf32>
    tpu.vector_store %arg20[%c7, %c0_79, %c0_80], %193 {strides = array<i32>} : memref<8x8x8xf32, #tpu.memory_space<vmem>>, vector<1x8x8xf32>,
    %cst_81 = arith.constant dense<0.000000e+00> : vector<8x8xf32>
    %194 = tpu.matmul %190, %176, %cst_81 {dimension_numbers = #tpu.dot_dimension_numbers<[1], [0], [0], [1], [0, 0, 1, 1], [], []>} : vector<8x8xf32>, vector<8x8xf32>, vector<8x8xf32> -> vector<8x8xf32>
    %c24_82 = arith.constant 24 : index
    %c0_83 = arith.constant 0 : index
    %195 = vector.load %arg5[%c24_82, %c0_83] : memref<32x32xf32, #tpu.memory_space<vmem>>, vector<8x32xf32>
    %cst_84 = arith.constant dense<0.000000e+00> : vector<8x32xf32>
    %196 = tpu.matmul %194, %195, %cst_84 {dimension_numbers = #tpu.dot_dimension_numbers<[1], [0], [0], [1], [0, 0, 1, 1], [], []>} : vector<8x8xf32>, vector<8x32xf32>, vector<8x32xf32> -> vector<8x32xf32>
    %197 = arith.addf %173, %196 : vector<8x32xf32>
    %198 = tpu.concatenate %102, %197 in 0 : vector<8x32xf32>, vector<8x32xf32> -> vector<16x32xf32>
    %199 = arith.addf %0, %198 : vector<16x32xf32>
    %c0_85 = arith.constant 0 : index
    %c0_86 = arith.constant 0 : index
    %200 = vector.load %arg6[%c0_85, %c0_86] : memref<1x32xf32, #tpu.memory_space<vmem>>, vector<1x32xf32>
    %c0_87 = arith.constant 0 : index
    %c0_88 = arith.constant 0 : index
    %201 = vector.load %arg7[%c0_87, %c0_88] : memref<1x32xf32, #tpu.memory_space<vmem>>, vector<1x32xf32>
    %cst_89 = arith.constant dense<0.000000e+00> : vector<16xf32>
    %202 = vector.multi_reduction <add>, %199, %cst_89 [1] : vector<16x32xf32> to vector<16xf32>
    %203 = vector.shape_cast %202 : vector<16xf32> to vector<16x1xf32>
    %cst_90 = arith.constant 3.200000e+01 : f32
    %204 = vector.broadcast %cst_90 : f32 to vector<16x1xf32>
    %205 = arith.divf %203, %204 : vector<16x1xf32>
    %206 = vector.broadcast %205 : vector<16x1xf32> to vector<16x32xf32>
    %207 = arith.subf %199, %206 : vector<16x32xf32>
    %208 = arith.mulf %207, %207 : vector<16x32xf32>
    %cst_91 = arith.constant dense<0.000000e+00> : vector<16xf32>
    %209 = vector.multi_reduction <add>, %208, %cst_91 [1] : vector<16x32xf32> to vector<16xf32>
    %210 = vector.shape_cast %209 : vector<16xf32> to vector<16x1xf32>
    %cst_92 = arith.constant 3.200000e+01 : f32
    %211 = vector.broadcast %cst_92 : f32 to vector<16x1xf32>
    %212 = arith.divf %210, %211 : vector<16x1xf32>
    %213 = vector.broadcast %205 : vector<16x1xf32> to vector<16x32xf32>
    %214 = arith.subf %199, %213 : vector<16x32xf32>
    %cst_93 = arith.constant 9.99999974E-6 : f32
    %215 = vector.broadcast %cst_93 : f32 to vector<16x1xf32>
    %216 = arith.addf %212, %215 : vector<16x1xf32>
    %217 = math.rsqrt %216 : vector<16x1xf32>
    %218 = vector.broadcast %217 : vector<16x1xf32> to vector<16x32xf32>
    %219 = arith.mulf %214, %218 : vector<16x32xf32>
    %220 = vector.broadcast %200 : vector<1x32xf32> to vector<16x32xf32>
    %221 = arith.mulf %219, %220 : vector<16x32xf32>
    %222 = vector.broadcast %201 : vector<1x32xf32> to vector<16x32xf32>
    %223 = arith.addf %221, %222 : vector<16x32xf32>
    %c0_94 = arith.constant 0 : index
    %c0_95 = arith.constant 0 : index
    %224 = vector.load %arg8[%c0_94, %c0_95] : memref<32x32xf32, #tpu.memory_space<vmem>>, vector<32x32xf32>
    %cst_96 = arith.constant dense<0.000000e+00> : vector<16x32xf32>
    %225 = tpu.matmul %223, %224, %cst_96 {dimension_numbers = #tpu.dot_dimension_numbers<[1], [0], [0], [1], [0, 0, 1, 1], [], []>} : vector<16x32xf32>, vector<32x32xf32>, vector<16x32xf32> -> vector<16x32xf32>
    %c0_97 = arith.constant 0 : index
    %c0_98 = arith.constant 0 : index
    %226 = vector.load %arg9[%c0_97, %c0_98] : memref<32x64xf32, #tpu.memory_space<vmem>>, vector<32x64xf32>
    %cst_99 = arith.constant dense<0.000000e+00> : vector<16x64xf32>
    %227 = tpu.matmul %1, %226, %cst_99 {dimension_numbers = #tpu.dot_dimension_numbers<[1], [0], [0], [1], [0, 0, 1, 1], [], []>} : vector<16x32xf32>, vector<32x64xf32>, vector<16x64xf32> -> vector<16x64xf32>
    %228 = vector.extract_strided_slice %227 {offsets = [0, 0], sizes = [16, 32], strides = [1, 1]} : vector<16x64xf32> to vector<16x32xf32>
    %229 = vector.extract_strided_slice %227 {offsets = [0, 32], sizes = [16, 32], strides = [1, 1]} : vector<16x64xf32> to vector<16x32xf32>
    %230 = vector.extract_strided_slice %225 {offsets = [0, 0], sizes = [8, 8], strides = [1, 1]} : vector<16x32xf32> to vector<8x8xf32>
    %231 = vector.extract_strided_slice %228 {offsets = [0, 0], sizes = [8, 8], strides = [1, 1]} : vector<16x32xf32> to vector<8x8xf32>
    %232 = vector.extract_strided_slice %229 {offsets = [0, 0], sizes = [8, 8], strides = [1, 1]} : vector<16x32xf32> to vector<8x8xf32>
    %cst_100 = arith.constant dense<0.000000e+00> : vector<8x8xf32>
    %233 = tpu.matmul %230, %231, %cst_100 {dimension_numbers = #tpu.dot_dimension_numbers<[1], [1], [0], [0], [0, 0, 1, 0], [], []>} : vector<8x8xf32>, vector<8x8xf32>, vector<8x8xf32> -> vector<8x8xf32>
    %cst_101 = arith.constant 0.353553385 : f32
    %234 = vector.broadcast %cst_101 : f32 to vector<8x8xf32>
    %235 = arith.mulf %233, %234 : vector<8x8xf32>
    %cst_102 = arith.constant dense<0xFF800000> : vector<8xf32>
    %236 = vector.multi_reduction <maximumf>, %235, %cst_102 [1] : vector<8x8xf32> to vector<8xf32>
    %237 = vector.shape_cast %236 : vector<8xf32> to vector<8x1xf32>
    %238 = vector.broadcast %237 : vector<8x1xf32> to vector<8x8xf32>
    %239 = arith.subf %235, %238 : vector<8x8xf32>
    %240 = math.exp %239 : vector<8x8xf32>
    %cst_103 = arith.constant dense<0.000000e+00> : vector<8xf32>
    %241 = vector.multi_reduction <add>, %240, %cst_103 [1] : vector<8x8xf32> to vector<8xf32>
    %242 = vector.shape_cast %241 : vector<8xf32> to vector<8x1xf32>
    %243 = tpu.reciprocal %242 {approx = true} : vector<8x1xf32> -> vector<8x1xf32>
    %244 = vector.broadcast %243 : vector<8x1xf32> to vector<8x8xf32>
    %245 = arith.mulf %240, %244 : vector<8x8xf32>
    %c0_104 = arith.constant 0 : index
    %c0_105 = arith.constant 0 : index
    %c0_106 = arith.constant 0 : index
    %246 = vector.load %arg21[%c0_104, %c0_105, %c0_106] : memref<8x8x8xf32, #tpu.memory_space<vmem>>, vector<1x8x8xf32>
    %247 = vector.shape_cast %246 : vector<1x8x8xf32> to vector<8x8xf32>
    %248 = vector.shape_cast %245 : vector<8x8xf32> to vector<1x8x8xf32>
    tpu.vector_store %arg21[%c0_104, %c0_105, %c0_106], %248 {strides = array<i32>} : memref<8x8x8xf32, #tpu.memory_space<vmem>>, vector<1x8x8xf32>,
    %cst_107 = arith.constant dense<0.000000e+00> : vector<8x8xf32>
    %249 = tpu.matmul %245, %232, %cst_107 {dimension_numbers = #tpu.dot_dimension_numbers<[1], [0], [0], [1], [0, 0, 1, 1], [], []>} : vector<8x8xf32>, vector<8x8xf32>, vector<8x8xf32> -> vector<8x8xf32>
    %c0_108 = arith.constant 0 : index
    %c0_109 = arith.constant 0 : index
    %250 = vector.load %arg10[%c0_108, %c0_109] : memref<32x32xf32, #tpu.memory_space<vmem>>, vector<8x32xf32>
    %cst_110 = arith.constant dense<0.000000e+00> : vector<8x32xf32>
    %251 = tpu.matmul %249, %250, %cst_110 {dimension_numbers = #tpu.dot_dimension_numbers<[1], [0], [0], [1], [0, 0, 1, 1], [], []>} : vector<8x8xf32>, vector<8x32xf32>, vector<8x32xf32> -> vector<8x32xf32>
    %252 = vector.extract_strided_slice %225 {offsets = [0, 8], sizes = [8, 8], strides = [1, 1]} : vector<16x32xf32> to vector<8x8xf32>
    %253 = vector.extract_strided_slice %228 {offsets = [0, 8], sizes = [8, 8], strides = [1, 1]} : vector<16x32xf32> to vector<8x8xf32>
    %254 = vector.extract_strided_slice %229 {offsets = [0, 8], sizes = [8, 8], strides = [1, 1]} : vector<16x32xf32> to vector<8x8xf32>
    %cst_111 = arith.constant dense<0.000000e+00> : vector<8x8xf32>
    %255 = tpu.matmul %252, %253, %cst_111 {dimension_numbers = #tpu.dot_dimension_numbers<[1], [1], [0], [0], [0, 0, 1, 0], [], []>} : vector<8x8xf32>, vector<8x8xf32>, vector<8x8xf32> -> vector<8x8xf32>
    %cst_112 = arith.constant 0.353553385 : f32
    %256 = vector.broadcast %cst_112 : f32 to vector<8x8xf32>
    %257 = arith.mulf %255, %256 : vector<8x8xf32>
    %cst_113 = arith.constant dense<0xFF800000> : vector<8xf32>
    %258 = vector.multi_reduction <maximumf>, %257, %cst_113 [1] : vector<8x8xf32> to vector<8xf32>
    %259 = vector.shape_cast %258 : vector<8xf32> to vector<8x1xf32>
    %260 = vector.broadcast %259 : vector<8x1xf32> to vector<8x8xf32>
    %261 = arith.subf %257, %260 : vector<8x8xf32>
    %262 = math.exp %261 : vector<8x8xf32>
    %cst_114 = arith.constant dense<0.000000e+00> : vector<8xf32>
    %263 = vector.multi_reduction <add>, %262, %cst_114 [1] : vector<8x8xf32> to vector<8xf32>
    %264 = vector.shape_cast %263 : vector<8xf32> to vector<8x1xf32>
    %265 = tpu.reciprocal %264 {approx = true} : vector<8x1xf32> -> vector<8x1xf32>
    %266 = vector.broadcast %265 : vector<8x1xf32> to vector<8x8xf32>
    %267 = arith.mulf %262, %266 : vector<8x8xf32>
    %c1_115 = arith.constant 1 : index
    %c0_116 = arith.constant 0 : index
    %c0_117 = arith.constant 0 : index
    %268 = vector.load %arg21[%c1_115, %c0_116, %c0_117] : memref<8x8x8xf32, #tpu.memory_space<vmem>>, vector<1x8x8xf32>
    %269 = vector.shape_cast %268 : vector<1x8x8xf32> to vector<8x8xf32>
    %270 = vector.shape_cast %267 : vector<8x8xf32> to vector<1x8x8xf32>
    tpu.vector_store %arg21[%c1_115, %c0_116, %c0_117], %270 {strides = array<i32>} : memref<8x8x8xf32, #tpu.memory_space<vmem>>, vector<1x8x8xf32>,
    %cst_118 = arith.constant dense<0.000000e+00> : vector<8x8xf32>
    %271 = tpu.matmul %267, %254, %cst_118 {dimension_numbers = #tpu.dot_dimension_numbers<[1], [0], [0], [1], [0, 0, 1, 1], [], []>} : vector<8x8xf32>, vector<8x8xf32>, vector<8x8xf32> -> vector<8x8xf32>
    %c8_119 = arith.constant 8 : index
    %c0_120 = arith.constant 0 : index
    %272 = vector.load %arg10[%c8_119, %c0_120] : memref<32x32xf32, #tpu.memory_space<vmem>>, vector<8x32xf32>
    %cst_121 = arith.constant dense<0.000000e+00> : vector<8x32xf32>
    %273 = tpu.matmul %271, %272, %cst_121 {dimension_numbers = #tpu.dot_dimension_numbers<[1], [0], [0], [1], [0, 0, 1, 1], [], []>} : vector<8x8xf32>, vector<8x32xf32>, vector<8x32xf32> -> vector<8x32xf32>
    %274 = arith.addf %251, %273 : vector<8x32xf32>
    %275 = vector.extract_strided_slice %225 {offsets = [0, 16], sizes = [8, 8], strides = [1, 1]} : vector<16x32xf32> to vector<8x8xf32>
    %276 = vector.extract_strided_slice %228 {offsets = [0, 16], sizes = [8, 8], strides = [1, 1]} : vector<16x32xf32> to vector<8x8xf32>
    %277 = vector.extract_strided_slice %229 {offsets = [0, 16], sizes = [8, 8], strides = [1, 1]} : vector<16x32xf32> to vector<8x8xf32>
    %cst_122 = arith.constant dense<0.000000e+00> : vector<8x8xf32>
    %278 = tpu.matmul %275, %276, %cst_122 {dimension_numbers = #tpu.dot_dimension_numbers<[1], [1], [0], [0], [0, 0, 1, 0], [], []>} : vector<8x8xf32>, vector<8x8xf32>, vector<8x8xf32> -> vector<8x8xf32>
    %cst_123 = arith.constant 0.353553385 : f32
    %279 = vector.broadcast %cst_123 : f32 to vector<8x8xf32>
    %280 = arith.mulf %278, %279 : vector<8x8xf32>
    %cst_124 = arith.constant dense<0xFF800000> : vector<8xf32>
    %281 = vector.multi_reduction <maximumf>, %280, %cst_124 [1] : vector<8x8xf32> to vector<8xf32>
    %282 = vector.shape_cast %281 : vector<8xf32> to vector<8x1xf32>
    %283 = vector.broadcast %282 : vector<8x1xf32> to vector<8x8xf32>
    %284 = arith.subf %280, %283 : vector<8x8xf32>
    %285 = math.exp %284 : vector<8x8xf32>
    %cst_125 = arith.constant dense<0.000000e+00> : vector<8xf32>
    %286 = vector.multi_reduction <add>, %285, %cst_125 [1] : vector<8x8xf32> to vector<8xf32>
    %287 = vector.shape_cast %286 : vector<8xf32> to vector<8x1xf32>
    %288 = tpu.reciprocal %287 {approx = true} : vector<8x1xf32> -> vector<8x1xf32>
    %289 = vector.broadcast %288 : vector<8x1xf32> to vector<8x8xf32>
    %290 = arith.mulf %285, %289 : vector<8x8xf32>
    %c2_126 = arith.constant 2 : index
    %c0_127 = arith.constant 0 : index
    %c0_128 = arith.constant 0 : index
    %291 = vector.load %arg21[%c2_126, %c0_127, %c0_128] : memref<8x8x8xf32, #tpu.memory_space<vmem>>, vector<1x8x8xf32>
    %292 = vector.shape_cast %291 : vector<1x8x8xf32> to vector<8x8xf32>
    %293 = vector.shape_cast %290 : vector<8x8xf32> to vector<1x8x8xf32>
    tpu.vector_store %arg21[%c2_126, %c0_127, %c0_128], %293 {strides = array<i32>} : memref<8x8x8xf32, #tpu.memory_space<vmem>>, vector<1x8x8xf32>,
    %cst_129 = arith.constant dense<0.000000e+00> : vector<8x8xf32>
    %294 = tpu.matmul %290, %277, %cst_129 {dimension_numbers = #tpu.dot_dimension_numbers<[1], [0], [0], [1], [0, 0, 1, 1], [], []>} : vector<8x8xf32>, vector<8x8xf32>, vector<8x8xf32> -> vector<8x8xf32>
    %c16_130 = arith.constant 16 : index
    %c0_131 = arith.constant 0 : index
    %295 = vector.load %arg10[%c16_130, %c0_131] : memref<32x32xf32, #tpu.memory_space<vmem>>, vector<8x32xf32>
    %cst_132 = arith.constant dense<0.000000e+00> : vector<8x32xf32>
    %296 = tpu.matmul %294, %295, %cst_132 {dimension_numbers = #tpu.dot_dimension_numbers<[1], [0], [0], [1], [0, 0, 1, 1], [], []>} : vector<8x8xf32>, vector<8x32xf32>, vector<8x32xf32> -> vector<8x32xf32>
    %297 = arith.addf %274, %296 : vector<8x32xf32>
    %298 = vector.extract_strided_slice %225 {offsets = [0, 24], sizes = [8, 8], strides = [1, 1]} : vector<16x32xf32> to vector<8x8xf32>
    %299 = vector.extract_strided_slice %228 {offsets = [0, 24], sizes = [8, 8], strides = [1, 1]} : vector<16x32xf32> to vector<8x8xf32>
    %300 = vector.extract_strided_slice %229 {offsets = [0, 24], sizes = [8, 8], strides = [1, 1]} : vector<16x32xf32> to vector<8x8xf32>
    %cst_133 = arith.constant dense<0.000000e+00> : vector<8x8xf32>
    %301 = tpu.matmul %298, %299, %cst_133 {dimension_numbers = #tpu.dot_dimension_numbers<[1], [1], [0], [0], [0, 0, 1, 0], [], []>} : vector<8x8xf32>, vector<8x8xf32>, vector<8x8xf32> -> vector<8x8xf32>
    %cst_134 = arith.constant 0.353553385 : f32
    %302 = vector.broadcast %cst_134 : f32 to vector<8x8xf32>
    %303 = arith.mulf %301, %302 : vector<8x8xf32>
    %cst_135 = arith.constant dense<0xFF800000> : vector<8xf32>
    %304 = vector.multi_reduction <maximumf>, %303, %cst_135 [1] : vector<8x8xf32> to vector<8xf32>
    %305 = vector.shape_cast %304 : vector<8xf32> to vector<8x1xf32>
    %306 = vector.broadcast %305 : vector<8x1xf32> to vector<8x8xf32>
    %307 = arith.subf %303, %306 : vector<8x8xf32>
    %308 = math.exp %307 : vector<8x8xf32>
    %cst_136 = arith.constant dense<0.000000e+00> : vector<8xf32>
    %309 = vector.multi_reduction <add>, %308, %cst_136 [1] : vector<8x8xf32> to vector<8xf32>
    %310 = vector.shape_cast %309 : vector<8xf32> to vector<8x1xf32>
    %311 = tpu.reciprocal %310 {approx = true} : vector<8x1xf32> -> vector<8x1xf32>
    %312 = vector.broadcast %311 : vector<8x1xf32> to vector<8x8xf32>
    %313 = arith.mulf %308, %312 : vector<8x8xf32>
    %c3_137 = arith.constant 3 : index
    %c0_138 = arith.constant 0 : index
    %c0_139 = arith.constant 0 : index
    %314 = vector.load %arg21[%c3_137, %c0_138, %c0_139] : memref<8x8x8xf32, #tpu.memory_space<vmem>>, vector<1x8x8xf32>
    %315 = vector.shape_cast %314 : vector<1x8x8xf32> to vector<8x8xf32>
    %316 = vector.shape_cast %313 : vector<8x8xf32> to vector<1x8x8xf32>
    tpu.vector_store %arg21[%c3_137, %c0_138, %c0_139], %316 {strides = array<i32>} : memref<8x8x8xf32, #tpu.memory_space<vmem>>, vector<1x8x8xf32>,
    %cst_140 = arith.constant dense<0.000000e+00> : vector<8x8xf32>
    %317 = tpu.matmul %313, %300, %cst_140 {dimension_numbers = #tpu.dot_dimension_numbers<[1], [0], [0], [1], [0, 0, 1, 1], [], []>} : vector<8x8xf32>, vector<8x8xf32>, vector<8x8xf32> -> vector<8x8xf32>
    %c24_141 = arith.constant 24 : index
    %c0_142 = arith.constant 0 : index
    %318 = vector.load %arg10[%c24_141, %c0_142] : memref<32x32xf32, #tpu.memory_space<vmem>>, vector<8x32xf32>
    %cst_143 = arith.constant dense<0.000000e+00> : vector<8x32xf32>
    %319 = tpu.matmul %317, %318, %cst_143 {dimension_numbers = #tpu.dot_dimension_numbers<[1], [0], [0], [1], [0, 0, 1, 1], [], []>} : vector<8x8xf32>, vector<8x32xf32>, vector<8x32xf32> -> vector<8x32xf32>
    %320 = arith.addf %297, %319 : vector<8x32xf32>
    %321 = vector.extract_strided_slice %225 {offsets = [8, 0], sizes = [8, 8], strides = [1, 1]} : vector<16x32xf32> to vector<8x8xf32>
    %322 = vector.extract_strided_slice %228 {offsets = [8, 0], sizes = [8, 8], strides = [1, 1]} : vector<16x32xf32> to vector<8x8xf32>
    %323 = vector.extract_strided_slice %229 {offsets = [8, 0], sizes = [8, 8], strides = [1, 1]} : vector<16x32xf32> to vector<8x8xf32>
    %cst_144 = arith.constant dense<0.000000e+00> : vector<8x8xf32>
    %324 = tpu.matmul %321, %322, %cst_144 {dimension_numbers = #tpu.dot_dimension_numbers<[1], [1], [0], [0], [0, 0, 1, 0], [], []>} : vector<8x8xf32>, vector<8x8xf32>, vector<8x8xf32> -> vector<8x8xf32>
    %cst_145 = arith.constant 0.353553385 : f32
    %325 = vector.broadcast %cst_145 : f32 to vector<8x8xf32>
    %326 = arith.mulf %324, %325 : vector<8x8xf32>
    %cst_146 = arith.constant dense<0xFF800000> : vector<8xf32>
    %327 = vector.multi_reduction <maximumf>, %326, %cst_146 [1] : vector<8x8xf32> to vector<8xf32>
    %328 = vector.shape_cast %327 : vector<8xf32> to vector<8x1xf32>
    %329 = vector.broadcast %328 : vector<8x1xf32> to vector<8x8xf32>
    %330 = arith.subf %326, %329 : vector<8x8xf32>
    %331 = math.exp %330 : vector<8x8xf32>
    %cst_147 = arith.constant dense<0.000000e+00> : vector<8xf32>
    %332 = vector.multi_reduction <add>, %331, %cst_147 [1] : vector<8x8xf32> to vector<8xf32>
    %333 = vector.shape_cast %332 : vector<8xf32> to vector<8x1xf32>
    %334 = tpu.reciprocal %333 {approx = true} : vector<8x1xf32> -> vector<8x1xf32>
    %335 = vector.broadcast %334 : vector<8x1xf32> to vector<8x8xf32>
    %336 = arith.mulf %331, %335 : vector<8x8xf32>
    %c4_148 = arith.constant 4 : index
    %c0_149 = arith.constant 0 : index
    %c0_150 = arith.constant 0 : index
    %337 = vector.load %arg21[%c4_148, %c0_149, %c0_150] : memref<8x8x8xf32, #tpu.memory_space<vmem>>, vector<1x8x8xf32>
    %338 = vector.shape_cast %337 : vector<1x8x8xf32> to vector<8x8xf32>
    %339 = vector.shape_cast %336 : vector<8x8xf32> to vector<1x8x8xf32>
    tpu.vector_store %arg21[%c4_148, %c0_149, %c0_150], %339 {strides = array<i32>} : memref<8x8x8xf32, #tpu.memory_space<vmem>>, vector<1x8x8xf32>,
    %cst_151 = arith.constant dense<0.000000e+00> : vector<8x8xf32>
    %340 = tpu.matmul %336, %323, %cst_151 {dimension_numbers = #tpu.dot_dimension_numbers<[1], [0], [0], [1], [0, 0, 1, 1], [], []>} : vector<8x8xf32>, vector<8x8xf32>, vector<8x8xf32> -> vector<8x8xf32>
    %c0_152 = arith.constant 0 : index
    %c0_153 = arith.constant 0 : index
    %341 = vector.load %arg10[%c0_152, %c0_153] : memref<32x32xf32, #tpu.memory_space<vmem>>, vector<8x32xf32>
    %cst_154 = arith.constant dense<0.000000e+00> : vector<8x32xf32>
    %342 = tpu.matmul %340, %341, %cst_154 {dimension_numbers = #tpu.dot_dimension_numbers<[1], [0], [0], [1], [0, 0, 1, 1], [], []>} : vector<8x8xf32>, vector<8x32xf32>, vector<8x32xf32> -> vector<8x32xf32>
    %343 = vector.extract_strided_slice %225 {offsets = [8, 8], sizes = [8, 8], strides = [1, 1]} : vector<16x32xf32> to vector<8x8xf32>
    %344 = vector.extract_strided_slice %228 {offsets = [8, 8], sizes = [8, 8], strides = [1, 1]} : vector<16x32xf32> to vector<8x8xf32>
    %345 = vector.extract_strided_slice %229 {offsets = [8, 8], sizes = [8, 8], strides = [1, 1]} : vector<16x32xf32> to vector<8x8xf32>
    %cst_155 = arith.constant dense<0.000000e+00> : vector<8x8xf32>
    %346 = tpu.matmul %343, %344, %cst_155 {dimension_numbers = #tpu.dot_dimension_numbers<[1], [1], [0], [0], [0, 0, 1, 0], [], []>} : vector<8x8xf32>, vector<8x8xf32>, vector<8x8xf32> -> vector<8x8xf32>
    %cst_156 = arith.constant 0.353553385 : f32
    %347 = vector.broadcast %cst_156 : f32 to vector<8x8xf32>
    %348 = arith.mulf %346, %347 : vector<8x8xf32>
    %cst_157 = arith.constant dense<0xFF800000> : vector<8xf32>
    %349 = vector.multi_reduction <maximumf>, %348, %cst_157 [1] : vector<8x8xf32> to vector<8xf32>
    %350 = vector.shape_cast %349 : vector<8xf32> to vector<8x1xf32>
    %351 = vector.broadcast %350 : vector<8x1xf32> to vector<8x8xf32>
    %352 = arith.subf %348, %351 : vector<8x8xf32>
    %353 = math.exp %352 : vector<8x8xf32>
    %cst_158 = arith.constant dense<0.000000e+00> : vector<8xf32>
    %354 = vector.multi_reduction <add>, %353, %cst_158 [1] : vector<8x8xf32> to vector<8xf32>
    %355 = vector.shape_cast %354 : vector<8xf32> to vector<8x1xf32>
    %356 = tpu.reciprocal %355 {approx = true} : vector<8x1xf32> -> vector<8x1xf32>
    %357 = vector.broadcast %356 : vector<8x1xf32> to vector<8x8xf32>
    %358 = arith.mulf %353, %357 : vector<8x8xf32>
    %c5_159 = arith.constant 5 : index
    %c0_160 = arith.constant 0 : index
    %c0_161 = arith.constant 0 : index
    %359 = vector.load %arg21[%c5_159, %c0_160, %c0_161] : memref<8x8x8xf32, #tpu.memory_space<vmem>>, vector<1x8x8xf32>
    %360 = vector.shape_cast %359 : vector<1x8x8xf32> to vector<8x8xf32>
    %361 = vector.shape_cast %358 : vector<8x8xf32> to vector<1x8x8xf32>
    tpu.vector_store %arg21[%c5_159, %c0_160, %c0_161], %361 {strides = array<i32>} : memref<8x8x8xf32, #tpu.memory_space<vmem>>, vector<1x8x8xf32>,
    %cst_162 = arith.constant dense<0.000000e+00> : vector<8x8xf32>
    %362 = tpu.matmul %358, %345, %cst_162 {dimension_numbers = #tpu.dot_dimension_numbers<[1], [0], [0], [1], [0, 0, 1, 1], [], []>} : vector<8x8xf32>, vector<8x8xf32>, vector<8x8xf32> -> vector<8x8xf32>
    %c8_163 = arith.constant 8 : index
    %c0_164 = arith.constant 0 : index
    %363 = vector.load %arg10[%c8_163, %c0_164] : memref<32x32xf32, #tpu.memory_space<vmem>>, vector<8x32xf32>
    %cst_165 = arith.constant dense<0.000000e+00> : vector<8x32xf32>
    %364 = tpu.matmul %362, %363, %cst_165 {dimension_numbers = #tpu.dot_dimension_numbers<[1], [0], [0], [1], [0, 0, 1, 1], [], []>} : vector<8x8xf32>, vector<8x32xf32>, vector<8x32xf32> -> vector<8x32xf32>
    %365 = arith.addf %342, %364 : vector<8x32xf32>
    %366 = vector.extract_strided_slice %225 {offsets = [8, 16], sizes = [8, 8], strides = [1, 1]} : vector<16x32xf32> to vector<8x8xf32>
    %367 = vector.extract_strided_slice %228 {offsets = [8, 16], sizes = [8, 8], strides = [1, 1]} : vector<16x32xf32> to vector<8x8xf32>
    %368 = vector.extract_strided_slice %229 {offsets = [8, 16], sizes = [8, 8], strides = [1, 1]} : vector<16x32xf32> to vector<8x8xf32>
    %cst_166 = arith.constant dense<0.000000e+00> : vector<8x8xf32>
    %369 = tpu.matmul %366, %367, %cst_166 {dimension_numbers = #tpu.dot_dimension_numbers<[1], [1], [0], [0], [0, 0, 1, 0], [], []>} : vector<8x8xf32>, vector<8x8xf32>, vector<8x8xf32> -> vector<8x8xf32>
    %cst_167 = arith.constant 0.353553385 : f32
    %370 = vector.broadcast %cst_167 : f32 to vector<8x8xf32>
    %371 = arith.mulf %369, %370 : vector<8x8xf32>
    %cst_168 = arith.constant dense<0xFF800000> : vector<8xf32>
    %372 = vector.multi_reduction <maximumf>, %371, %cst_168 [1] : vector<8x8xf32> to vector<8xf32>
    %373 = vector.shape_cast %372 : vector<8xf32> to vector<8x1xf32>
    %374 = vector.broadcast %373 : vector<8x1xf32> to vector<8x8xf32>
    %375 = arith.subf %371, %374 : vector<8x8xf32>
    %376 = math.exp %375 : vector<8x8xf32>
    %cst_169 = arith.constant dense<0.000000e+00> : vector<8xf32>
    %377 = vector.multi_reduction <add>, %376, %cst_169 [1] : vector<8x8xf32> to vector<8xf32>
    %378 = vector.shape_cast %377 : vector<8xf32> to vector<8x1xf32>
    %379 = tpu.reciprocal %378 {approx = true} : vector<8x1xf32> -> vector<8x1xf32>
    %380 = vector.broadcast %379 : vector<8x1xf32> to vector<8x8xf32>
    %381 = arith.mulf %376, %380 : vector<8x8xf32>
    %c6_170 = arith.constant 6 : index
    %c0_171 = arith.constant 0 : index
    %c0_172 = arith.constant 0 : index
    %382 = vector.load %arg21[%c6_170, %c0_171, %c0_172] : memref<8x8x8xf32, #tpu.memory_space<vmem>>, vector<1x8x8xf32>
    %383 = vector.shape_cast %382 : vector<1x8x8xf32> to vector<8x8xf32>
    %384 = vector.shape_cast %381 : vector<8x8xf32> to vector<1x8x8xf32>
    tpu.vector_store %arg21[%c6_170, %c0_171, %c0_172], %384 {strides = array<i32>} : memref<8x8x8xf32, #tpu.memory_space<vmem>>, vector<1x8x8xf32>,
    %cst_173 = arith.constant dense<0.000000e+00> : vector<8x8xf32>
    %385 = tpu.matmul %381, %368, %cst_173 {dimension_numbers = #tpu.dot_dimension_numbers<[1], [0], [0], [1], [0, 0, 1, 1], [], []>} : vector<8x8xf32>, vector<8x8xf32>, vector<8x8xf32> -> vector<8x8xf32>
    %c16_174 = arith.constant 16 : index
    %c0_175 = arith.constant 0 : index
    %386 = vector.load %arg10[%c16_174, %c0_175] : memref<32x32xf32, #tpu.memory_space<vmem>>, vector<8x32xf32>
    %cst_176 = arith.constant dense<0.000000e+00> : vector<8x32xf32>
    %387 = tpu.matmul %385, %386, %cst_176 {dimension_numbers = #tpu.dot_dimension_numbers<[1], [0], [0], [1], [0, 0, 1, 1], [], []>} : vector<8x8xf32>, vector<8x32xf32>, vector<8x32xf32> -> vector<8x32xf32>
    %388 = arith.addf %365, %387 : vector<8x32xf32>
    %389 = vector.extract_strided_slice %225 {offsets = [8, 24], sizes = [8, 8], strides = [1, 1]} : vector<16x32xf32> to vector<8x8xf32>
    %390 = vector.extract_strided_slice %228 {offsets = [8, 24], sizes = [8, 8], strides = [1, 1]} : vector<16x32xf32> to vector<8x8xf32>
    %391 = vector.extract_strided_slice %229 {offsets = [8, 24], sizes = [8, 8], strides = [1, 1]} : vector<16x32xf32> to vector<8x8xf32>
    %cst_177 = arith.constant dense<0.000000e+00> : vector<8x8xf32>
    %392 = tpu.matmul %389, %390, %cst_177 {dimension_numbers = #tpu.dot_dimension_numbers<[1], [1], [0], [0], [0, 0, 1, 0], [], []>} : vector<8x8xf32>, vector<8x8xf32>, vector<8x8xf32> -> vector<8x8xf32>
    %cst_178 = arith.constant 0.353553385 : f32
    %393 = vector.broadcast %cst_178 : f32 to vector<8x8xf32>
    %394 = arith.mulf %392, %393 : vector<8x8xf32>
    %cst_179 = arith.constant dense<0xFF800000> : vector<8xf32>
    %395 = vector.multi_reduction <maximumf>, %394, %cst_179 [1] : vector<8x8xf32> to vector<8xf32>
    %396 = vector.shape_cast %395 : vector<8xf32> to vector<8x1xf32>
    %397 = vector.broadcast %396 : vector<8x1xf32> to vector<8x8xf32>
    %398 = arith.subf %394, %397 : vector<8x8xf32>
    %399 = math.exp %398 : vector<8x8xf32>
    %cst_180 = arith.constant dense<0.000000e+00> : vector<8xf32>
    %400 = vector.multi_reduction <add>, %399, %cst_180 [1] : vector<8x8xf32> to vector<8xf32>
    %401 = vector.shape_cast %400 : vector<8xf32> to vector<8x1xf32>
    %402 = tpu.reciprocal %401 {approx = true} : vector<8x1xf32> -> vector<8x1xf32>
    %403 = vector.broadcast %402 : vector<8x1xf32> to vector<8x8xf32>
    %404 = arith.mulf %399, %403 : vector<8x8xf32>
    %c7_181 = arith.constant 7 : index
    %c0_182 = arith.constant 0 : index
    %c0_183 = arith.constant 0 : index
    %405 = vector.load %arg21[%c7_181, %c0_182, %c0_183] : memref<8x8x8xf32, #tpu.memory_space<vmem>>, vector<1x8x8xf32>
    %406 = vector.shape_cast %405 : vector<1x8x8xf32> to vector<8x8xf32>
    %407 = vector.shape_cast %404 : vector<8x8xf32> to vector<1x8x8xf32>
    tpu.vector_store %arg21[%c7_181, %c0_182, %c0_183], %407 {strides = array<i32>} : memref<8x8x8xf32, #tpu.memory_space<vmem>>, vector<1x8x8xf32>,
    %cst_184 = arith.constant dense<0.000000e+00> : vector<8x8xf32>
    %408 = tpu.matmul %404, %391, %cst_184 {dimension_numbers = #tpu.dot_dimension_numbers<[1], [0], [0], [1], [0, 0, 1, 1], [], []>} : vector<8x8xf32>, vector<8x8xf32>, vector<8x8xf32> -> vector<8x8xf32>
    %c24_185 = arith.constant 24 : index
    %c0_186 = arith.constant 0 : index
    %409 = vector.load %arg10[%c24_185, %c0_186] : memref<32x32xf32, #tpu.memory_space<vmem>>, vector<8x32xf32>
    %cst_187 = arith.constant dense<0.000000e+00> : vector<8x32xf32>
    %410 = tpu.matmul %408, %409, %cst_187 {dimension_numbers = #tpu.dot_dimension_numbers<[1], [0], [0], [1], [0, 0, 1, 1], [], []>} : vector<8x8xf32>, vector<8x32xf32>, vector<8x32xf32> -> vector<8x32xf32>
    %411 = arith.addf %388, %410 : vector<8x32xf32>
    %412 = tpu.concatenate %320, %411 in 0 : vector<8x32xf32>, vector<8x32xf32> -> vector<16x32xf32>
    %413 = arith.addf %223, %412 : vector<16x32xf32>
    %c0_188 = arith.constant 0 : index
    %c0_189 = arith.constant 0 : index
    %414 = vector.load %arg11[%c0_188, %c0_189] : memref<1x32xf32, #tpu.memory_space<vmem>>, vector<1x32xf32>
    %c0_190 = arith.constant 0 : index
    %c0_191 = arith.constant 0 : index
    %415 = vector.load %arg12[%c0_190, %c0_191] : memref<1x32xf32, #tpu.memory_space<vmem>>, vector<1x32xf32>
    %cst_192 = arith.constant dense<0.000000e+00> : vector<16xf32>
    %416 = vector.multi_reduction <add>, %413, %cst_192 [1] : vector<16x32xf32> to vector<16xf32>
    %417 = vector.shape_cast %416 : vector<16xf32> to vector<16x1xf32>
    %cst_193 = arith.constant 3.200000e+01 : f32
    %418 = vector.broadcast %cst_193 : f32 to vector<16x1xf32>
    %419 = arith.divf %417, %418 : vector<16x1xf32>
    %420 = vector.broadcast %419 : vector<16x1xf32> to vector<16x32xf32>
    %421 = arith.subf %413, %420 : vector<16x32xf32>
    %422 = arith.mulf %421, %421 : vector<16x32xf32>
    %cst_194 = arith.constant dense<0.000000e+00> : vector<16xf32>
    %423 = vector.multi_reduction <add>, %422, %cst_194 [1] : vector<16x32xf32> to vector<16xf32>
    %424 = vector.shape_cast %423 : vector<16xf32> to vector<16x1xf32>
    %cst_195 = arith.constant 3.200000e+01 : f32
    %425 = vector.broadcast %cst_195 : f32 to vector<16x1xf32>
    %426 = arith.divf %424, %425 : vector<16x1xf32>
    %427 = vector.broadcast %419 : vector<16x1xf32> to vector<16x32xf32>
    %428 = arith.subf %413, %427 : vector<16x32xf32>
    %cst_196 = arith.constant 9.99999974E-6 : f32
    %429 = vector.broadcast %cst_196 : f32 to vector<16x1xf32>
    %430 = arith.addf %426, %429 : vector<16x1xf32>
    %431 = math.rsqrt %430 : vector<16x1xf32>
    %432 = vector.broadcast %431 : vector<16x1xf32> to vector<16x32xf32>
    %433 = arith.mulf %428, %432 : vector<16x32xf32>
    %434 = vector.broadcast %414 : vector<1x32xf32> to vector<16x32xf32>
    %435 = arith.mulf %433, %434 : vector<16x32xf32>
    %436 = vector.broadcast %415 : vector<1x32xf32> to vector<16x32xf32>
    %437 = arith.addf %435, %436 : vector<16x32xf32>
    %c0_197 = arith.constant 0 : index
    %c0_198 = arith.constant 0 : index
    %438 = vector.load %arg13[%c0_197, %c0_198] : memref<32x64xf32, #tpu.memory_space<vmem>>, vector<32x64xf32>
    %cst_199 = arith.constant dense<0.000000e+00> : vector<16x64xf32>
    %439 = tpu.matmul %437, %438, %cst_199 {dimension_numbers = #tpu.dot_dimension_numbers<[1], [0], [0], [1], [0, 0, 1, 1], [], []>} : vector<16x32xf32>, vector<32x64xf32>, vector<16x64xf32> -> vector<16x64xf32>
    %c0_200 = arith.constant 0 : index
    %c0_201 = arith.constant 0 : index
    %440 = vector.load %arg14[%c0_200, %c0_201] : memref<1x64xf32, #tpu.memory_space<vmem>>, vector<1x64xf32>
    %441 = vector.broadcast %440 : vector<1x64xf32> to vector<16x64xf32>
    %442 = arith.addf %439, %441 : vector<16x64xf32>
    %cst_202 = arith.constant 0.000000e+00 : f32
    %443 = vector.broadcast %cst_202 : f32 to vector<16x64xf32>
    %444 = arith.maximumf %442, %443 : vector<16x64xf32>
    %c0_203 = arith.constant 0 : index
    %c0_204 = arith.constant 0 : index
    %445 = vector.load %arg15[%c0_203, %c0_204] : memref<64x32xf32, #tpu.memory_space<vmem>>, vector<64x32xf32>
    %cst_205 = arith.constant dense<0.000000e+00> : vector<16x32xf32>
    %446 = tpu.matmul %444, %445, %cst_205 {dimension_numbers = #tpu.dot_dimension_numbers<[1], [0], [0], [1], [0, 0, 1, 1], [], []>} : vector<16x64xf32>, vector<64x32xf32>, vector<16x32xf32> -> vector<16x32xf32>
    %c0_206 = arith.constant 0 : index
    %c0_207 = arith.constant 0 : index
    %447 = vector.load %arg16[%c0_206, %c0_207] : memref<1x32xf32, #tpu.memory_space<vmem>>, vector<1x32xf32>
    %448 = vector.broadcast %447 : vector<1x32xf32> to vector<16x32xf32>
    %449 = arith.addf %446, %448 : vector<16x32xf32>
    %450 = arith.addf %437, %449 : vector<16x32xf32>
    %c0_208 = arith.constant 0 : index
    %c0_209 = arith.constant 0 : index
    %451 = vector.load %arg17[%c0_208, %c0_209] : memref<1x32xf32, #tpu.memory_space<vmem>>, vector<1x32xf32>
    %c0_210 = arith.constant 0 : index
    %c0_211 = arith.constant 0 : index
    %452 = vector.load %arg18[%c0_210, %c0_211] : memref<1x32xf32, #tpu.memory_space<vmem>>, vector<1x32xf32>
    %cst_212 = arith.constant dense<0.000000e+00> : vector<16xf32>
    %453 = vector.multi_reduction <add>, %450, %cst_212 [1] : vector<16x32xf32> to vector<16xf32>
    %454 = vector.shape_cast %453 : vector<16xf32> to vector<16x1xf32>
    %cst_213 = arith.constant 3.200000e+01 : f32
    %455 = vector.broadcast %cst_213 : f32 to vector<16x1xf32>
    %456 = arith.divf %454, %455 : vector<16x1xf32>
    %457 = vector.broadcast %456 : vector<16x1xf32> to vector<16x32xf32>
    %458 = arith.subf %450, %457 : vector<16x32xf32>
    %459 = arith.mulf %458, %458 : vector<16x32xf32>
    %cst_214 = arith.constant dense<0.000000e+00> : vector<16xf32>
    %460 = vector.multi_reduction <add>, %459, %cst_214 [1] : vector<16x32xf32> to vector<16xf32>
    %461 = vector.shape_cast %460 : vector<16xf32> to vector<16x1xf32>
    %cst_215 = arith.constant 3.200000e+01 : f32
    %462 = vector.broadcast %cst_215 : f32 to vector<16x1xf32>
    %463 = arith.divf %461, %462 : vector<16x1xf32>
    %464 = vector.broadcast %456 : vector<16x1xf32> to vector<16x32xf32>
    %465 = arith.subf %450, %464 : vector<16x32xf32>
    %cst_216 = arith.constant 9.99999974E-6 : f32
    %466 = vector.broadcast %cst_216 : f32 to vector<16x1xf32>
    %467 = arith.addf %463, %466 : vector<16x1xf32>
    %468 = math.rsqrt %467 : vector<16x1xf32>
    %469 = vector.broadcast %468 : vector<16x1xf32> to vector<16x32xf32>
    %470 = arith.mulf %465, %469 : vector<16x32xf32>
    %471 = vector.broadcast %451 : vector<1x32xf32> to vector<16x32xf32>
    %472 = arith.mulf %470, %471 : vector<16x32xf32>
    %473 = vector.broadcast %452 : vector<1x32xf32> to vector<16x32xf32>
    %474 = arith.addf %472, %473 : vector<16x32xf32>
    %c0_217 = arith.constant 0 : index
    %c0_218 = arith.constant 0 : index
    %475 = vector.load %arg19[%c0_217, %c0_218] : memref<16x32xf32, #tpu.memory_space<vmem>>, vector<16x32xf32>
    tpu.vector_store %arg19[%c0_217, %c0_218], %474 {strides = array<i32>} : memref<16x32xf32, #tpu.memory_space<vmem>>, vector<16x32xf32>,
    return
  }
  func.func @transform_0(%arg0: i32) -> (i32, i32) {
    %c0_i32 = arith.constant 0 : i32
    %c0_i32_0 = arith.constant 0 : i32
    %c0_i32_1 = arith.constant 0 : i32
    return %c0_i32, %c0_i32_0 : i32, i32
  }
  func.func @transform_1(%arg0: i32) -> (i32, i32) {
    %c0_i32 = arith.constant 0 : i32
    %c0_i32_0 = arith.constant 0 : i32
    %c0_i32_1 = arith.constant 0 : i32
    return %c0_i32, %c0_i32_0 : i32, i32
  }
  func.func @transform_2(%arg0: i32) -> (i32, i32) {
    %c0_i32 = arith.constant 0 : i32
    %c0_i32_0 = arith.constant 0 : i32
    %c0_i32_1 = arith.constant 0 : i32
    return %c0_i32, %c0_i32_0 : i32, i32
  }
  func.func @transform_3(%arg0: i32) -> (i32, i32) {
    %c0_i32 = arith.constant 0 : i32
    %c0_i32_0 = arith.constant 0 : i32
    %c0_i32_1 = arith.constant 0 : i32
    return %c0_i32, %c0_i32_0 : i32, i32
  }
  func.func @transform_4(%arg0: i32) -> (i32, i32) {
    %c0_i32 = arith.constant 0 : i32
    %c0_i32_0 = arith.constant 0 : i32
    %c0_i32_1 = arith.constant 0 : i32
    return %c0_i32, %c0_i32_0 : i32, i32
  }
  func.func @transform_5(%arg0: i32) -> (i32, i32) {
    %c0_i32 = arith.constant 0 : i32
    %c0_i32_0 = arith.constant 0 : i32
    %c0_i32_1 = arith.constant 0 : i32
    return %c0_i32, %c0_i32_0 : i32, i32
  }
  func.func @transform_6(%arg0: i32) -> (i32, i32) {
    %c0_i32 = arith.constant 0 : i32
    %c0_i32_0 = arith.constant 0 : i32
    %c0_i32_1 = arith.constant 0 : i32
    return %c0_i32, %c0_i32_0 : i32, i32
  }
  func.func @transform_7(%arg0: i32) -> (i32, i32) {
    %c0_i32 = arith.constant 0 : i32
    %c0_i32_0 = arith.constant 0 : i32
    %c0_i32_1 = arith.constant 0 : i32
    return %c0_i32, %c0_i32_0 : i32, i32
  }
  func.func @transform_8(%arg0: i32) -> (i32, i32) {
    %c0_i32 = arith.constant 0 : i32
    %c0_i32_0 = arith.constant 0 : i32
    %c0_i32_1 = arith.constant 0 : i32
    return %c0_i32, %c0_i32_0 : i32, i32
  }
  func.func @transform_9(%arg0: i32) -> (i32, i32) {
    %c0_i32 = arith.constant 0 : i32
    %c0_i32_0 = arith.constant 0 : i32
    %c0_i32_1 = arith.constant 0 : i32
    return %c0_i32, %c0_i32_0 : i32, i32
  }
  func.func @transform_10(%arg0: i32) -> (i32, i32) {
    %c0_i32 = arith.constant 0 : i32
    %c0_i32_0 = arith.constant 0 : i32
    %c0_i32_1 = arith.constant 0 : i32
    return %c0_i32, %c0_i32_0 : i32, i32
  }
  func.func @transform_11(%arg0: i32) -> (i32, i32) {
    %c0_i32 = arith.constant 0 : i32
    %c0_i32_0 = arith.constant 0 : i32
    %c0_i32_1 = arith.constant 0 : i32
    return %c0_i32, %c0_i32_0 : i32, i32
  }
  func.func @transform_12(%arg0: i32) -> (i32, i32) {
    %c0_i32 = arith.constant 0 : i32
    %c0_i32_0 = arith.constant 0 : i32
    %c0_i32_1 = arith.constant 0 : i32
    return %c0_i32, %c0_i32_0 : i32, i32
  }
  func.func @transform_13(%arg0: i32) -> (i32, i32) {
    %c0_i32 = arith.constant 0 : i32
    %c0_i32_0 = arith.constant 0 : i32
    %c0_i32_1 = arith.constant 0 : i32
    return %c0_i32, %c0_i32_0 : i32, i32
  }
  func.func @transform_14(%arg0: i32) -> (i32, i32) {
    %c0_i32 = arith.constant 0 : i32
    %c0_i32_0 = arith.constant 0 : i32
    %c0_i32_1 = arith.constant 0 : i32
    return %c0_i32, %c0_i32_0 : i32, i32
  }
  func.func @transform_15(%arg0: i32) -> (i32, i32) {
    %c0_i32 = arith.constant 0 : i32
    %c0_i32_0 = arith.constant 0 : i32
    %c0_i32_1 = arith.constant 0 : i32
    return %c0_i32, %c0_i32_0 : i32, i32
  }
  func.func @transform_16(%arg0: i32) -> (i32, i32) {
    %c0_i32 = arith.constant 0 : i32
    %c0_i32_0 = arith.constant 0 : i32
    %c0_i32_1 = arith.constant 0 : i32
    return %c0_i32, %c0_i32_0 : i32, i32
  }
  func.func @transform_17(%arg0: i32) -> (i32, i32) {
    %c0_i32 = arith.constant 0 : i32
    %c0_i32_0 = arith.constant 0 : i32
    %c0_i32_1 = arith.constant 0 : i32
    return %c0_i32, %c0_i32_0 : i32, i32
  }
  func.func @transform_18(%arg0: i32) -> (i32, i32) {
    %c0_i32 = arith.constant 0 : i32
    %c0_i32_0 = arith.constant 0 : i32
    %c0_i32_1 = arith.constant 0 : i32
    return %c0_i32, %c0_i32_0 : i32, i32
  }
  func.func @transform_19(%arg0: i32) -> (i32, i32, i32) {
    %c0_i32 = arith.constant 0 : i32
    %c0_i32_0 = arith.constant 0 : i32
    %c0_i32_1 = arith.constant 0 : i32
    %c0_i32_2 = arith.constant 0 : i32
    return %c0_i32, %c0_i32_0, %c0_i32_1 : i32, i32, i32
  }
  func.func @transform_20(%arg0: i32) -> (i32, i32, i32) {
    %c0_i32 = arith.constant 0 : i32
    %c0_i32_0 = arith.constant 0 : i32
    %c0_i32_1 = arith.constant 0 : i32
    %c0_i32_2 = arith.constant 0 : i32
    return %c0_i32, %c0_i32_0, %c0_i32_1 : i32, i32, i32
  }
}

</mosaic_0001>

<llo_original>
// kernel: generator_forward.5
$region0: #{generator_forward.5}
  #allocation0 [shape = 'u32[]', space=smem, size = 0x4, offset = 0x4, fixed_abs, tag = 'smem constant byte address 0x4 - core index']
  #allocation1 [shape = 'u32[144,128]{1,0:T(1,128)}', space=vmem, size = 0x12000, scoped, tag = 'internal scratch']
  %s0 = inlined_call_operand.vmem [shape: f32[16,32], index: 0, kind: input, shape index: {}]
  %s1 = inlined_call_operand.vmem [shape: f32[32,64], index: 1, kind: input, shape index: {}]
  %s2 = inlined_call_operand.vmem [shape: f32[1,64], index: 2, kind: input, shape index: {}]
  %s3 = inlined_call_operand.vmem [shape: f32[1,64], index: 3, kind: input, shape index: {}]
  %s4 = inlined_call_operand.vmem [shape: f32[1,64], index: 4, kind: input, shape index: {}]
  %s5 = inlined_call_operand.vmem [shape: f32[1,64], index: 5, kind: input, shape index: {}]
  %s6 = inlined_call_operand.vmem [shape: f32[64,16], index: 6, kind: input, shape index: {}]
  %s7 = inlined_call_operand.vmem [shape: f32[1,16], index: 7, kind: input, shape index: {}]
  %s8 = inlined_call_operand.vmem [shape: f32[1,16], index: 8, kind: input, shape index: {}]
  %s9 = inlined_call_operand.vmem [shape: f32[1,16], index: 9, kind: input, shape index: {}]
  %s10 = inlined_call_operand.vmem [shape: f32[1,16], index: 10, kind: input, shape index: {}]
  %s11 = inlined_call_operand.vmem [shape: f32[16,32], index: 11, kind: input, shape index: {}]
  %s12 = inlined_call_operand.vmem [shape: f32[1,32], index: 12, kind: input, shape index: {}]
  %s13 = inlined_call_operand.vmem [shape: f32[1,32], index: 13, kind: input, shape index: {}]
  %s14 = inlined_call_operand.vmem [shape: f32[1,32], index: 14, kind: input, shape index: {}]
  %s15 = inlined_call_operand.vmem [shape: f32[1,32], index: 15, kind: input, shape index: {}]
  %s16 = inlined_call_operand.vmem [shape: f32[32,32], index: 16, kind: input, shape index: {}]
  %s17 = inlined_call_operand.vmem [shape: f32[1,32], index: 17, kind: input, shape index: {}]
  %s18 = inlined_call_operand.vmem [shape: f32[1,32], index: 18, kind: input, shape index: {}]
  %s19 = inlined_call_operand.vmem [shape: f32[1,32], index: 19, kind: input, shape index: {}]
  %s20 = inlined_call_operand.vmem [shape: f32[1,32], index: 20, kind: input, shape index: {}]
  %s21 = inlined_call_operand.vmem [shape: f32[32,48], index: 21, kind: input, shape index: {}]
  %s22 = inlined_call_operand.vmem [shape: f32[1,48], index: 22, kind: input, shape index: {}]
  %s23 = inlined_call_operand.vmem [shape: f32[1,48], index: 23, kind: input, shape index: {}]
  %s24 = inlined_call_operand.vmem [shape: f32[1,48], index: 24, kind: input, shape index: {}]
  %s25 = inlined_call_operand.vmem [shape: f32[1,48], index: 25, kind: input, shape index: {}]
  %s26 = inlined_call_operand.hbm [shape: f32[16,48], index: 26, kind: output, shape index: {}]
  %s27 = sld [smem:[#allocation0]]
  $region114: #{generator_forward.5} parent=0
    _
  %s29 = ssub.s32 1, %s27
  %s30 = scalar_select 0, %s29, %s27
  $region1: #{generator_forward.5} parent=0
    #allocation2 [shape = 'u8[8192]{0}', space=vmem, size = 0x2000, scoped, tag = 'output window, operand 0, single buffered']
    #allocation3 [shape = 's32[1]{0}', space=sflag, size = 0x4, scoped, tag = 'scoped memory for generator_forward.5']
    %31 = vsyncpa [#allocation3], 0
    // Predicated region
    $region2: #{generator_forward.5} parent=1 // pred_check
      _
    $region3: #{generator_forward.5} parent=1 // pred_check_branch
      %33 = sbr.rel (0) target = $region5
    $region4: #{generator_forward.5} parent=1 // pred_region
      _
    $region5: #{generator_forward.5} parent=1 // pred_fallthru
      _
    // Predicated region
    $region6: #{generator_forward.5} parent=1 // pred_check
      _
    $region7: #{generator_forward.5} parent=1 // pred_check_branch
      %35 = sbr.rel (0) target = $region9
    $region8: #{generator_forward.5} parent=1 // pred_region
      _
    $region9: #{generator_forward.5} parent=1 // pred_fallthru
      _
    // Predicated region
    $region10: #{generator_forward.5} parent=1 // pred_check
      _
    $region11: #{generator_forward.5} parent=1 // pred_check_branch
      %37 = sbr.rel (0) target = $region13
    $region12: #{generator_forward.5} parent=1 // pred_region
      _
    $region13: #{generator_forward.5} parent=1 // pred_fallthru
      _
    // Predicated region
    $region14: #{generator_forward.5} parent=1 // pred_check
      _
    $region15: #{generator_forward.5} parent=1 // pred_check_branch
      %39 = sbr.rel (0) target = $region17
    $region16: #{generator_forward.5} parent=1 // pred_region
      _
    $region17: #{generator_forward.5} parent=1 // pred_fallthru
      _
    // Predicated region
    $region18: #{generator_forward.5} parent=1 // pred_check
      _
    $region19: #{generator_forward.5} parent=1 // pred_check_branch
      %41 = sbr.rel (0) target = $region21
    $region20: #{generator_forward.5} parent=1 // pred_region
      _
    $region21: #{generator_forward.5} parent=1 // pred_fallthru
      _
    // Predicated region
    $region22: #{generator_forward.5} parent=1 // pred_check
      _
    $region23: #{generator_forward.5} parent=1 // pred_check_branch
      %43 = sbr.rel (0) target = $region25
    $region24: #{generator_forward.5} parent=1 // pred_region
      _
    $region25: #{generator_forward.5} parent=1 // pred_fallthru
      _
    // Predicated region
    $region26: #{generator_forward.5} parent=1 // pred_check
      _
    $region27: #{generator_forward.5} parent=1 // pred_check_branch
      %45 = sbr.rel (0) target = $region29
    $region28: #{generator_forward.5} parent=1 // pred_region
      _
    $region29: #{generator_forward.5} parent=1 // pred_fallthru
      _
    // Predicated region
    $region30: #{generator_forward.5} parent=1 // pred_check
      _
    $region31: #{generator_forward.5} parent=1 // pred_check_branch
      %47 = sbr.rel (0) target = $region33
    $region32: #{generator_forward.5} parent=1 // pred_region
      _
    $region33: #{generator_forward.5} parent=1 // pred_fallthru
      _
    // Predicated region
    $region34: #{generator_forward.5} parent=1 // pred_check
      _
    $region35: #{generator_forward.5} parent=1 // pred_check_branch
      %49 = sbr.rel (0) target = $region37
    $region36: #{generator_forward.5} parent=1 // pred_region
      _
    $region37: #{generator_forward.5} parent=1 // pred_fallthru
      _
    // Predicated region
    $region38: #{generator_forward.5} parent=1 // pred_check
      _
    $region39: #{generator_forward.5} parent=1 // pred_check_branch
      %51 = sbr.rel (0) target = $region41
    $region40: #{generator_forward.5} parent=1 // pred_region
      _
    $region41: #{generator_forward.5} parent=1 // pred_fallthru
      _
    // Predicated region
    $region42: #{generator_forward.5} parent=1 // pred_check
      _
    $region43: #{generator_forward.5} parent=1 // pred_check_branch
      %53 = sbr.rel (0) target = $region45
    $region44: #{generator_forward.5} parent=1 // pred_region
      _
    $region45: #{generator_forward.5} parent=1 // pred_fallthru
      _
    // Predicated region
    $region46: #{generator_forward.5} parent=1 // pred_check
      _
    $region47: #{generator_forward.5} parent=1 // pred_check_branch
      %55 = sbr.rel (0) target = $region49
    $region48: #{generator_forward.5} parent=1 // pred_region
      _
    $region49: #{generator_forward.5} parent=1 // pred_fallthru
      _
    // Predicated region
    $region50: #{generator_forward.5} parent=1 // pred_check
      _
    $region51: #{generator_forward.5} parent=1 // pred_check_branch
      %57 = sbr.rel (0) target = $region53
    $region52: #{generator_forward.5} parent=1 // pred_region
      _
    $region53: #{generator_forward.5} parent=1 // pred_fallthru
      _
    // Predicated region
    $region54: #{generator_forward.5} parent=1 // pred_check
      _
    $region55: #{generator_forward.5} parent=1 // pred_check_branch
      %59 = sbr.rel (0) target = $region57
    $region56: #{generator_forward.5} parent=1 // pred_region
      _
    $region57: #{generator_forward.5} parent=1 // pred_fallthru
      _
    // Predicated region
    $region58: #{generator_forward.5} parent=1 // pred_check
      _
    $region59: #{generator_forward.5} parent=1 // pred_check_branch
      %61 = sbr.rel (0) target = $region61
    $region60: #{generator_forward.5} parent=1 // pred_region
      _
    $region61: #{generator_forward.5} parent=1 // pred_fallthru
      _
    // Predicated region
    $region62: #{generator_forward.5} parent=1 // pred_check
      _
    $region63: #{generator_forward.5} parent=1 // pred_check_branch
      %63 = sbr.rel (0) target = $region65
    $region64: #{generator_forward.5} parent=1 // pred_region
      _
    $region65: #{generator_forward.5} parent=1 // pred_fallthru
      _
    // Predicated region
    $region66: #{generator_forward.5} parent=1 // pred_check
      _
    $region67: #{generator_forward.5} parent=1 // pred_check_branch
      %65 = sbr.rel (0) target = $region69
    $region68: #{generator_forward.5} parent=1 // pred_region
      _
    $region69: #{generator_forward.5} parent=1 // pred_fallthru
      _
    // Predicated region
    $region70: #{generator_forward.5} parent=1 // pred_check
      _
    $region71: #{generator_forward.5} parent=1 // pred_check_branch
      %67 = sbr.rel (0) target = $region73
    $region72: #{generator_forward.5} parent=1 // pred_region
      _
    $region73: #{generator_forward.5} parent=1 // pred_fallthru
      _
    // Predicated region
    $region74: #{generator_forward.5} parent=1 // pred_check
      _
    $region75: #{generator_forward.5} parent=1 // pred_check_branch
      %69 = sbr.rel (0) target = $region77
    $region76: #{generator_forward.5} parent=1 // pred_region
      _
    $region77: #{generator_forward.5} parent=1 // pred_fallthru
      _
    // Predicated region
    $region78: #{generator_forward.5} parent=1 // pred_check
      _
    $region79: #{generator_forward.5} parent=1 // pred_check_branch
      %71 = sbr.rel (0) target = $region81
    $region80: #{generator_forward.5} parent=1 // pred_region
      _
    $region81: #{generator_forward.5} parent=1 // pred_fallthru
      _
    // Predicated region
    $region82: #{generator_forward.5} parent=1 // pred_check
      _
    $region83: #{generator_forward.5} parent=1 // pred_check_branch
      %73 = sbr.rel (0) target = $region85
    $region84: #{generator_forward.5} parent=1 // pred_region
      _
    $region85: #{generator_forward.5} parent=1 // pred_fallthru
      _
    // Predicated region
    $region86: #{generator_forward.5} parent=1 // pred_check
      _
    $region87: #{generator_forward.5} parent=1 // pred_check_branch
      %75 = sbr.rel (0) target = $region89
    $region88: #{generator_forward.5} parent=1 // pred_region
      _
    $region89: #{generator_forward.5} parent=1 // pred_fallthru
      _
    // Predicated region
    $region90: #{generator_forward.5} parent=1 // pred_check
      _
    $region91: #{generator_forward.5} parent=1 // pred_check_branch
      %77 = sbr.rel (0) target = $region93
    $region92: #{generator_forward.5} parent=1 // pred_region
      _
    $region93: #{generator_forward.5} parent=1 // pred_fallthru
      _
    // Predicated region
    $region94: #{generator_forward.5} parent=1 // pred_check
      _
    $region95: #{generator_forward.5} parent=1 // pred_check_branch
      %79 = sbr.rel (0) target = $region97
    $region96: #{generator_forward.5} parent=1 // pred_region
      _
    $region97: #{generator_forward.5} parent=1 // pred_fallthru
      _
    // Predicated region
    $region98: #{generator_forward.5} parent=1 // pred_check
      _
    $region99: #{generator_forward.5} parent=1 // pred_check_branch
      %81 = sbr.rel (0) target = $region101
    $region100: #{generator_forward.5} parent=1 // pred_region
      _
    $region101: #{generator_forward.5} parent=1 // pred_fallthru
      _
    // Predicated region
    $region102: #{generator_forward.5} parent=1 // pred_check
      _
    $region103: #{generator_forward.5} parent=1 // pred_check_branch
      %83 = sbr.rel (0) target = $region105
    $region104: #{generator_forward.5} parent=1 // pred_region
      _
    $region105: #{generator_forward.5} parent=1 // pred_fallthru
      _
    %v84 = vld [vmem:[%s0] sm:$0xff]
    %v85 = vld [vmem:[%s0 + $0x8] sm:$0xff]
    %v86 = vld [vmem:[%s1] sm:$0xff]
    %v87 = vld [vmem:[%s1 + $0x8] sm:$0xff]
    %v88 = vld [vmem:[%s1 + $0x10] sm:$0xff]
    %v89 = vld [vmem:[%s1 + $0x18] sm:$0xff]
    %vm90 = vcmask 261120
    %v92 = vsel %vm90, %v84, 0
    %v95 = vsel %vm90, %v85, 0
    %97 = vmatprep.subr.mxu0 0.0
    %98 = vmatpush1.msra.mxu0 %v86
    %99 = vmatprep.subr.mxu0 0.0
    %100 = vmatpush1.msra.mxu0 %v87
    %101 = vmatprep.subr.mxu0 0.0
    %102 = vmatpush1.msra.mxu0 %v88
    %103 = vmatprep.subr.mxu0 0.0
    %104 = vmatpush1.msra.mxu0 %v89
    %105 = vmatprep.subr.mxu0 0.0
    %106 = vmatpush1.msra.mxu0 0.0
    %107 = vmatprep.subr.mxu0 0.0
    %108 = vmatpush1.msra.mxu0 0.0
    %109 = vmatprep.subr.mxu0 0.0
    %110 = vmatpush1.msra.mxu0 0.0
    %111 = vmatprep.subr.mxu0 0.0
    %112 = vmatpush1.msra.mxu0 0.0
    %113 = vmatprep.subr.mxu0 0.0
    %114 = vmatpush1.msra.mxu0 0.0
    %115 = vmatprep.subr.mxu0 0.0
    %116 = vmatpush1.msra.mxu0 0.0
    %117 = vmatprep.subr.mxu0 0.0
    %118 = vmatpush1.msra.mxu0 0.0
    %119 = vmatprep.subr.mxu0 0.0
    %120 = vmatpush1.msra.mxu0 0.0
    %121 = vmatprep.subr.mxu0 0.0
    %122 = vmatpush1.msra.mxu0 0.0
    %123 = vmatprep.subr.mxu0 0.0
    %124 = vmatpush1.msra.mxu0 0.0
    %125 = vmatprep.subr.mxu0 0.0
    %126 = vmatpush1.msra.mxu0 0.0
    %127 = vmatprep.subr.mxu0 0.0
    %128 = vmatpush1.msra.mxu0 0.0
    %129 = vmatprep.subr.mxu0 0.0
    %130 = vmatpush1.msra.mxu0 0.0
    %131 = vmatprep.subr.mxu0 0.0
    %132 = vmatpush1.msra.mxu0 0.0
    %133 = vmatprep.subr.mxu0 0.0
    %134 = vmatpush1.msra.mxu0 0.0
    %135 = vmatprep.subr.mxu0 0.0
    %136 = vmatpush1.msra.mxu0 0.0
    %137 = vmatprep.subr.mxu0 0.0
    %138 = vmatpush1.msra.mxu0 0.0
    %139 = vmatprep.subr.mxu0 0.0
    %140 = vmatpush1.msra.mxu0 0.0
    %141 = vmatprep.subr.mxu0 0.0
    %142 = vmatpush1.msra.mxu0 0.0
    %143 = vmatprep.subr.mxu0 0.0
    %144 = vmatpush1.msra.mxu0 0.0
    %145 = vmatprep.subr.mxu0 0.0
    %146 = vmatpush1.msra.mxu0 0.0
    %147 = vmatprep.subr.mxu0 0.0
    %148 = vmatpush1.msra.mxu0 0.0
    %149 = vmatprep.subr.mxu0 0.0
    %150 = vmatpush1.msra.mxu0 0.0
    %151 = vmatprep.subr.mxu0 0.0
    %152 = vmatpush1.msra.mxu0 0.0
    %153 = vmatprep.subr.mxu0 0.0
    %154 = vmatpush1.msra.mxu0 0.0
    %155 = vmatprep.subr.mxu0 0.0
    %156 = vmatpush1.msra.mxu0 0.0
    %157 = vmatprep.subr.mxu0 0.0
    %158 = vmatpush1.msra.mxu0 0.0
    %159 = vmatprep.subr.mxu0 0.0
    %160 = vmatpush1.msra.mxu0 0.0
    %161 = vmatprep.mubr.f32.mxu0 0.0
    %162 = vmatmul.mubr.f32.gmra.mrb[0].mxu0 %v92
    %v163 = vpop.f32.mrb[0].mxu0
    %v164 = vadd.f32 0.0, %v163
    %v165 = vpop.f32.mrb[0].mxu0
    %166 = vmatprep.mubr.f32.mxu0 0.0
    %167 = vmatmul.mubr.f32.gmra.mrb[0].mxu0 %v95
    %v168 = vpop.f32.mrb[0].mxu0
    %v169 = vadd.f32 0.0, %v168
    %v170 = vpop.f32.mrb[0].mxu0
    %171 = vdwg.mxu0
    %v172 = vld [vmem:[%s4] sm:$0x1]
    %v174 = vlaneseq
    %v175 = vshrl.u32 %v174, 7
    %v176 = vsub.s32 0, %v175
    %v177 = vrot.slane %v172, %v176
    %v179 = vsub.f32 %v164, %v177
    %v180 = vsub.f32 %v169, %v177
    %v181 = vld [vmem:[%s5] sm:$0x1]
    %v182 = vadd.f32 %v181, 1e-05
    %v183 = vrsqrt.pop %v182
    %v185 = vlaneseq
    %v186 = vshrl.u32 %v185, 7
    %v187 = vsub.s32 0, %v186
    %v188 = vrot.slane %v183, %v187
    %v190 = vmul.f32 %v179, %v188
    %v191 = vmul.f32 %v180, %v188
    %v192 = vld [vmem:[%s2] sm:$0x1]
    %v194 = vlaneseq
    %v195 = vshrl.u32 %v194, 7
    %v196 = vsub.s32 0, %v195
    %v197 = vrot.slane %v192, %v196
    %v199 = vmul.f32 %v190, %v197
    %v200 = vmul.f32 %v191, %v197
    %v201 = vld [vmem:[%s3] sm:$0x1]
    %v203 = vlaneseq
    %v204 = vshrl.u32 %v203, 7
    %v205 = vsub.s32 0, %v204
    %v206 = vrot.slane %v201, %v205
    %v208 = vadd.f32 %v199, %v206
    %v209 = vadd.f32 %v200, %v206
    %vm210 = vcmp.ge.f32.partialorder %v208, 0.0
    %vm211 = vcmp.ge.f32.partialorder %v209, 0.0
    %v212 = vmul.f32 %v208, 0.2
    %v213 = vmul.f32 %v209, 0.2
    %v214 = vsel %vm210, %v208, %v212
    %v215 = vsel %vm211, %v209, %v213
    %v216 = vld [vmem:[%s6] sm:$0xff]
    %v217 = vld [vmem:[%s6 + $0x8] sm:$0xff]
    %v218 = vld [vmem:[%s6 + $0x10] sm:$0xff]
    %v219 = vld [vmem:[%s6 + $0x18] sm:$0xff]
    %v220 = vld [vmem:[%s6 + $0x20] sm:$0xff]
    %v221 = vld [vmem:[%s6 + $0x28] sm:$0xff]
    %v222 = vld [vmem:[%s6 + $0x30] sm:$0xff]
    %v223 = vld [vmem:[%s6 + $0x38] sm:$0xff]
    %vm224 = vcmask 523264
    %v226 = vsel %vm224, %v214, 0
    %v229 = vsel %vm224, %v215, 0
    %231 = vmatprep.subr.mxu0 0.0
    %232 = vmatpush1.msra.mxu0 %v216
    %233 = vmatprep.subr.mxu0 0.0
    %234 = vmatpush1.msra.mxu0 %v217
    %235 = vmatprep.subr.mxu0 0.0
    %236 = vmatpush1.msra.mxu0 %v218
    %237 = vmatprep.subr.mxu0 0.0
    %238 = vmatpush1.msra.mxu0 %v219
    %239 = vmatprep.subr.mxu0 0.0
    %240 = vmatpush1.msra.mxu0 %v220
    %241 = vmatprep.subr.mxu0 0.0
    %242 = vmatpush1.msra.mxu0 %v221
    %243 = vmatprep.subr.mxu0 0.0
    %244 = vmatpush1.msra.mxu0 %v222
    %245 = vmatprep.subr.mxu0 0.0
    %246 = vmatpush1.msra.mxu0 %v223
    %247 = vmatprep.subr.mxu0 0.0
    %248 = vmatpush1.msra.mxu0 0.0
    %249 = vmatprep.subr.mxu0 0.0
    %250 = vmatpush1.msra.mxu0 0.0
    %251 = vmatprep.subr.mxu0 0.0
    %252 = vmatpush1.msra.mxu0 0.0
    %253 = vmatprep.subr.mxu0 0.0
    %254 = vmatpush1.msra.mxu0 0.0
    %255 = vmatprep.subr.mxu0 0.0
    %256 = vmatpush1.msra.mxu0 0.0
    %257 = vmatprep.subr.mxu0 0.0
    %258 = vmatpush1.msra.mxu0 0.0
    %259 = vmatprep.subr.mxu0 0.0
    %260 = vmatpush1.msra.mxu0 0.0
    %261 = vmatprep.subr.mxu0 0.0
    %262 = vmatpush1.msra.mxu0 0.0
    %263 = vmatprep.subr.mxu0 0.0
    %264 = vmatpush1.msra.mxu0 0.0
    %265 = vmatprep.subr.mxu0 0.0
    %266 = vmatpush1.msra.mxu0 0.0
    %267 = vmatprep.subr.mxu0 0.0
    %268 = vmatpush1.msra.mxu0 0.0
    %269 = vmatprep.subr.mxu0 0.0
    %270 = vmatpush1.msra.mxu0 0.0
    %271 = vmatprep.subr.mxu0 0.0
    %272 = vmatpush1.msra.mxu0 0.0
    %273 = vmatprep.subr.mxu0 0.0
    %274 = vmatpush1.msra.mxu0 0.0
    %275 = vmatprep.subr.mxu0 0.0
    %276 = vmatpush1.msra.mxu0 0.0
    %277 = vmatprep.subr.mxu0 0.0
    %278 = vmatpush1.msra.mxu0 0.0
    %279 = vmatprep.subr.mxu0 0.0
    %280 = vmatpush1.msra.mxu0 0.0
    %281 = vmatprep.subr.mxu0 0.0
    %282 = vmatpush1.msra.mxu0 0.0
    %283 = vmatprep.subr.mxu0 0.0
    %284 = vmatpush1.msra.mxu0 0.0
    %285 = vmatprep.subr.mxu0 0.0
    %286 = vmatpush1.msra.mxu0 0.0
    %287 = vmatprep.subr.mxu0 0.0
    %288 = vmatpush1.msra.mxu0 0.0
    %289 = vmatprep.subr.mxu0 0.0
    %290 = vmatpush1.msra.mxu0 0.0
    %291 = vmatprep.subr.mxu0 0.0
    %292 = vmatpush1.msra.mxu0 0.0
    %293 = vmatprep.subr.mxu0 0.0
    %294 = vmatpush1.msra.mxu0 0.0
    %295 = vmatprep.mubr.f32.mxu0 0.0
    %296 = vmatmul.mubr.f32.gmra.mrb[0].mxu0 %v226
    %v297 = vpop.f32.mrb[0].mxu0
    %v298 = vadd.f32 0.0, %v297
    %v299 = vpop.f32.mrb[0].mxu0
    %300 = vmatprep.mubr.f32.mxu0 0.0
    %301 = vmatmul.mubr.f32.gmra.mrb[0].mxu0 %v229
    %v302 = vpop.f32.mrb[0].mxu0
    %v303 = vadd.f32 0.0, %v302
    %v304 = vpop.f32.mrb[0].mxu0
    %305 = vdwg.mxu0
    %v306 = vld [vmem:[%s9] sm:$0x1]
    %v308 = vlaneseq
    %v309 = vshrl.u32 %v308, 7
    %v310 = vsub.s32 0, %v309
    %v311 = vrot.slane %v306, %v310
    %v313 = vsub.f32 %v298, %v311
    %v314 = vsub.f32 %v303, %v311
    %v315 = vld [vmem:[%s10] sm:$0x1]
    %v316 = vadd.f32 %v315, 1e-05
    %v317 = vrsqrt.pop %v316
    %v319 = vlaneseq
    %v320 = vshrl.u32 %v319, 7
    %v321 = vsub.s32 0, %v320
    %v322 = vrot.slane %v317, %v321
    %v324 = vmul.f32 %v313, %v322
    %v325 = vmul.f32 %v314, %v322
    %v326 = vld [vmem:[%s7] sm:$0x1]
    %v328 = vlaneseq
    %v329 = vshrl.u32 %v328, 7
    %v330 = vsub.s32 0, %v329
    %v331 = vrot.slane %v326, %v330
    %v333 = vmul.f32 %v324, %v331
    %v334 = vmul.f32 %v325, %v331
    %v335 = vld [vmem:[%s8] sm:$0x1]
    %v337 = vlaneseq
    %v338 = vshrl.u32 %v337, 7
    %v339 = vsub.s32 0, %v338
    %v340 = vrot.slane %v335, %v339
    %v342 = vadd.f32 %v333, %v340
    %v343 = vadd.f32 %v334, %v340
    %vm344 = vcmp.ge.f32.partialorder %v342, 0.0
    %vm345 = vcmp.ge.f32.partialorder %v343, 0.0
    %v346 = vmul.f32 %v342, 0.2
    %v347 = vmul.f32 %v343, 0.2
    %v348 = vsel %vm344, %v342, %v346
    %v349 = vsel %vm345, %v343, %v347
    %v350 = vld [vmem:[%s11] sm:$0xff]
    %v351 = vld [vmem:[%s11 + $0x8] sm:$0xff]
    %vm352 = vcmask 130048
    %v354 = vsel %vm352, %v348, 0
    %v357 = vsel %vm352, %v349, 0
    %359 = vmatprep.subr.mxu0 0.0
    %360 = vmatpush1.msra.mxu0 %v350
    %361 = vmatprep.subr.mxu0 0.0
    %362 = vmatpush1.msra.mxu0 %v351
    %363 = vmatprep.subr.mxu0 0.0
    %364 = vmatpush1.msra.mxu0 0.0
    %365 = vmatprep.subr.mxu0 0.0
    %366 = vmatpush1.msra.mxu0 0.0
    %367 = vmatprep.subr.mxu0 0.0
    %368 = vmatpush1.msra.mxu0 0.0
    %369 = vmatprep.subr.mxu0 0.0
    %370 = vmatpush1.msra.mxu0 0.0
    %371 = vmatprep.subr.mxu0 0.0
    %372 = vmatpush1.msra.mxu0 0.0
    %373 = vmatprep.subr.mxu0 0.0
    %374 = vmatpush1.msra.mxu0 0.0
    %375 = vmatprep.subr.mxu0 0.0
    %376 = vmatpush1.msra.mxu0 0.0
    %377 = vmatprep.subr.mxu0 0.0
    %378 = vmatpush1.msra.mxu0 0.0
    %379 = vmatprep.subr.mxu0 0.0
    %380 = vmatpush1.msra.mxu0 0.0
    %381 = vmatprep.subr.mxu0 0.0
    %382 = vmatpush1.msra.mxu0 0.0
    %383 = vmatprep.subr.mxu0 0.0
    %384 = vmatpush1.msra.mxu0 0.0
    %385 = vmatprep.subr.mxu0 0.0
    %386 = vmatpush1.msra.mxu0 0.0
    %387 = vmatprep.subr.mxu0 0.0
    %388 = vmatpush1.msra.mxu0 0.0
    %389 = vmatprep.subr.mxu0 0.0
    %390 = vmatpush1.msra.mxu0 0.0
    %391 = vmatprep.subr.mxu0 0.0
    %392 = vmatpush1.msra.mxu0 0.0
    %393 = vmatprep.subr.mxu0 0.0
    %394 = vmatpush1.msra.mxu0 0.0
    %395 = vmatprep.subr.mxu0 0.0
    %396 = vmatpush1.msra.mxu0 0.0
    %397 = vmatprep.subr.mxu0 0.0
    %398 = vmatpush1.msra.mxu0 0.0
    %399 = vmatprep.subr.mxu0 0.0
    %400 = vmatpush1.msra.mxu0 0.0
    %401 = vmatprep.subr.mxu0 0.0
    %402 = vmatpush1.msra.mxu0 0.0
    %403 = vmatprep.subr.mxu0 0.0
    %404 = vmatpush1.msra.mxu0 0.0
    %405 = vmatprep.subr.mxu0 0.0
    %406 = vmatpush1.msra.mxu0 0.0
    %407 = vmatprep.subr.mxu0 0.0
    %408 = vmatpush1.msra.mxu0 0.0
    %409 = vmatprep.subr.mxu0 0.0
    %410 = vmatpush1.msra.mxu0 0.0
    %411 = vmatprep.subr.mxu0 0.0
    %412 = vmatpush1.msra.mxu0 0.0
    %413 = vmatprep.subr.mxu0 0.0
    %414 = vmatpush1.msra.mxu0 0.0
    %415 = vmatprep.subr.mxu0 0.0
    %416 = vmatpush1.msra.mxu0 0.0
    %417 = vmatprep.subr.mxu0 0.0
    %418 = vmatpush1.msra.mxu0 0.0
    %419 = vmatprep.subr.mxu0 0.0
    %420 = vmatpush1.msra.mxu0 0.0
    %421 = vmatprep.subr.mxu0 0.0
    %422 = vmatpush1.msra.mxu0 0.0
    %423 = vmatprep.mubr.f32.mxu0 0.0
    %424 = vmatmul.mubr.f32.gmra.mrb[0].mxu0 %v354
    %v425 = vpop.f32.mrb[0].mxu0
    %v426 = vadd.f32 0.0, %v425
    %v427 = vpop.f32.mrb[0].mxu0
    %428 = vmatprep.mubr.f32.mxu0 0.0
    %429 = vmatmul.mubr.f32.gmra.mrb[0].mxu0 %v357
    %v430 = vpop.f32.mrb[0].mxu0
    %v431 = vadd.f32 0.0, %v430
    %v432 = vpop.f32.mrb[0].mxu0
    %433 = vdwg.mxu0
    %v434 = vld [vmem:[%s14] sm:$0x1]
    %v436 = vlaneseq
    %v437 = vshrl.u32 %v436, 7
    %v438 = vsub.s32 0, %v437
    %v439 = vrot.slane %v434, %v438
    %v441 = vsub.f32 %v426, %v439
    %v442 = vsub.f32 %v431, %v439
    %v443 = vld [vmem:[%s15] sm:$0x1]
    %v444 = vadd.f32 %v443, 1e-05
    %v445 = vrsqrt.pop %v444
    %v447 = vlaneseq
    %v448 = vshrl.u32 %v447, 7
    %v449 = vsub.s32 0, %v448
    %v450 = vrot.slane %v445, %v449
    %v452 = vmul.f32 %v441, %v450
    %v453 = vmul.f32 %v442, %v450
    %v454 = vld [vmem:[%s12] sm:$0x1]
    %v456 = vlaneseq
    %v457 = vshrl.u32 %v456, 7
    %v458 = vsub.s32 0, %v457
    %v459 = vrot.slane %v454, %v458
    %v461 = vmul.f32 %v452, %v459
    %v462 = vmul.f32 %v453, %v459
    %v463 = vld [vmem:[%s13] sm:$0x1]
    %v465 = vlaneseq
    %v466 = vshrl.u32 %v465, 7
    %v467 = vsub.s32 0, %v466
    %v468 = vrot.slane %v463, %v467
    %v470 = vadd.f32 %v461, %v468
    %v471 = vadd.f32 %v462, %v468
    %vm472 = vcmp.ge.f32.partialorder %v470, 0.0
    %vm473 = vcmp.ge.f32.partialorder %v471, 0.0
    %v474 = vmul.f32 %v470, 0.2
    %v475 = vmul.f32 %v471, 0.2
    %v476 = vsel %vm472, %v470, %v474
    %v477 = vsel %vm473, %v471, %v475
    %v478 = vld [vmem:[%s16] sm:$0xff]
    %v479 = vld [vmem:[%s16 + $0x8] sm:$0xff]
    %v480 = vld [vmem:[%s16 + $0x10] sm:$0xff]
    %v481 = vld [vmem:[%s16 + $0x18] sm:$0xff]
    %v483 = vsel %vm90, %v476, 0
    %v486 = vsel %vm90, %v477, 0
    %488 = vmatprep.subr.mxu0 0.0
    %489 = vmatpush1.msra.mxu0 %v478
    %490 = vmatprep.subr.mxu0 0.0
    %491 = vmatpush1.msra.mxu0 %v479
    %492 = vmatprep.subr.mxu0 0.0
    %493 = vmatpush1.msra.mxu0 %v480
    %494 = vmatprep.subr.mxu0 0.0
    %495 = vmatpush1.msra.mxu0 %v481
    %496 = vmatprep.subr.mxu0 0.0
    %497 = vmatpush1.msra.mxu0 0.0
    %498 = vmatprep.subr.mxu0 0.0
    %499 = vmatpush1.msra.mxu0 0.0
    %500 = vmatprep.subr.mxu0 0.0
    %501 = vmatpush1.msra.mxu0 0.0
    %502 = vmatprep.subr.mxu0 0.0
    %503 = vmatpush1.msra.mxu0 0.0
    %504 = vmatprep.subr.mxu0 0.0
    %505 = vmatpush1.msra.mxu0 0.0
    %506 = vmatprep.subr.mxu0 0.0
    %507 = vmatpush1.msra.mxu0 0.0
    %508 = vmatprep.subr.mxu0 0.0
    %509 = vmatpush1.msra.mxu0 0.0
    %510 = vmatprep.subr.mxu0 0.0
    %511 = vmatpush1.msra.mxu0 0.0
    %512 = vmatprep.subr.mxu0 0.0
    %513 = vmatpush1.msra.mxu0 0.0
    %514 = vmatprep.subr.mxu0 0.0
    %515 = vmatpush1.msra.mxu0 0.0
    %516 = vmatprep.subr.mxu0 0.0
    %517 = vmatpush1.msra.mxu0 0.0
    %518 = vmatprep.subr.mxu0 0.0
    %519 = vmatpush1.msra.mxu0 0.0
    %520 = vmatprep.subr.mxu0 0.0
    %521 = vmatpush1.msra.mxu0 0.0
    %522 = vmatprep.subr.mxu0 0.0
    %523 = vmatpush1.msra.mxu0 0.0
    %524 = vmatprep.subr.mxu0 0.0
    %525 = vmatpush1.msra.mxu0 0.0
    %526 = vmatprep.subr.mxu0 0.0
    %527 = vmatpush1.msra.mxu0 0.0
    %528 = vmatprep.subr.mxu0 0.0
    %529 = vmatpush1.msra.mxu0 0.0
    %530 = vmatprep.subr.mxu0 0.0
    %531 = vmatpush1.msra.mxu0 0.0
    %532 = vmatprep.subr.mxu0 0.0
    %533 = vmatpush1.msra.mxu0 0.0
    %534 = vmatprep.subr.mxu0 0.0
    %535 = vmatpush1.msra.mxu0 0.0
    %536 = vmatprep.subr.mxu0 0.0
    %537 = vmatpush1.msra.mxu0 0.0
    %538 = vmatprep.subr.mxu0 0.0
    %539 = vmatpush1.msra.mxu0 0.0
    %540 = vmatprep.subr.mxu0 0.0
    %541 = vmatpush1.msra.mxu0 0.0
    %542 = vmatprep.subr.mxu0 0.0
    %543 = vmatpush1.msra.mxu0 0.0
    %544 = vmatprep.subr.mxu0 0.0
    %545 = vmatpush1.msra.mxu0 0.0
    %546 = vmatprep.subr.mxu0 0.0
    %547 = vmatpush1.msra.mxu0 0.0
    %548 = vmatprep.subr.mxu0 0.0
    %549 = vmatpush1.msra.mxu0 0.0
    %550 = vmatprep.subr.mxu0 0.0
    %551 = vmatpush1.msra.mxu0 0.0
    %552 = vmatprep.mubr.f32.mxu0 0.0
    %553 = vmatmul.mubr.f32.gmra.mrb[0].mxu0 %v483
    %v554 = vpop.f32.mrb[0].mxu0
    %v555 = vadd.f32 0.0, %v554
    %v556 = vpop.f32.mrb[0].mxu0
    %557 = vmatprep.mubr.f32.mxu0 0.0
    %558 = vmatmul.mubr.f32.gmra.mrb[0].mxu0 %v486
    %v559 = vpop.f32.mrb[0].mxu0
    %v560 = vadd.f32 0.0, %v559
    %v561 = vpop.f32.mrb[0].mxu0
    %562 = vdwg.mxu0
    %v563 = vld [vmem:[%s19] sm:$0x1]
    %v565 = vlaneseq
    %v566 = vshrl.u32 %v565, 7
    %v567 = vsub.s32 0, %v566
    %v568 = vrot.slane %v563, %v567
    %v570 = vsub.f32 %v555, %v568
    %v571 = vsub.f32 %v560, %v568
    %v572 = vld [vmem:[%s20] sm:$0x1]
    %v573 = vadd.f32 %v572, 1e-05
    %v574 = vrsqrt.pop %v573
    %v576 = vlaneseq
    %v577 = vshrl.u32 %v576, 7
    %v578 = vsub.s32 0, %v577
    %v579 = vrot.slane %v574, %v578
    %v581 = vmul.f32 %v570, %v579
    %v582 = vmul.f32 %v571, %v579
    %v583 = vld [vmem:[%s17] sm:$0x1]
    %v585 = vlaneseq
    %v586 = vshrl.u32 %v585, 7
    %v587 = vsub.s32 0, %v586
    %v588 = vrot.slane %v583, %v587
    %v590 = vmul.f32 %v581, %v588
    %v591 = vmul.f32 %v582, %v588
    %v592 = vld [vmem:[%s18] sm:$0x1]
    %v594 = vlaneseq
    %v595 = vshrl.u32 %v594, 7
    %v596 = vsub.s32 0, %v595
    %v597 = vrot.slane %v592, %v596
    %v599 = vadd.f32 %v590, %v597
    %v600 = vadd.f32 %v591, %v597
    %vm601 = vcmp.ge.f32.partialorder %v599, 0.0
    %vm602 = vcmp.ge.f32.partialorder %v600, 0.0
    %v603 = vmul.f32 %v599, 0.2
    %v604 = vmul.f32 %v600, 0.2
    %v605 = vsel %vm601, %v599, %v603
    %v606 = vsel %vm602, %v600, %v604
    %v607 = vld [vmem:[%s21] sm:$0xff]
    %v608 = vld [vmem:[%s21 + $0x8] sm:$0xff]
    %v609 = vld [vmem:[%s21 + $0x10] sm:$0xff]
    %v610 = vld [vmem:[%s21 + $0x18] sm:$0xff]
    %v612 = vsel %vm90, %v605, 0
    %v615 = vsel %vm90, %v606, 0
    %617 = vmatprep.subr.mxu0 0.0
    %618 = vmatpush1.msra.mxu0 %v607
    %619 = vmatprep.subr.mxu0 0.0
    %620 = vmatpush1.msra.mxu0 %v608
    %621 = vmatprep.subr.mxu0 0.0
    %622 = vmatpush1.msra.mxu0 %v609
    %623 = vmatprep.subr.mxu0 0.0
    %624 = vmatpush1.msra.mxu0 %v610
    %625 = vmatprep.subr.mxu0 0.0
    %626 = vmatpush1.msra.mxu0 0.0
    %627 = vmatprep.subr.mxu0 0.0
    %628 = vmatpush1.msra.mxu0 0.0
    %629 = vmatprep.subr.mxu0 0.0
    %630 = vmatpush1.msra.mxu0 0.0
    %631 = vmatprep.subr.mxu0 0.0
    %632 = vmatpush1.msra.mxu0 0.0
    %633 = vmatprep.subr.mxu0 0.0
    %634 = vmatpush1.msra.mxu0 0.0
    %635 = vmatprep.subr.mxu0 0.0
    %636 = vmatpush1.msra.mxu0 0.0
    %637 = vmatprep.subr.mxu0 0.0
    %638 = vmatpush1.msra.mxu0 0.0
    %639 = vmatprep.subr.mxu0 0.0
    %640 = vmatpush1.msra.mxu0 0.0
    %641 = vmatprep.subr.mxu0 0.0
    %642 = vmatpush1.msra.mxu0 0.0
    %643 = vmatprep.subr.mxu0 0.0
    %644 = vmatpush1.msra.mxu0 0.0
    %645 = vmatprep.subr.mxu0 0.0
    %646 = vmatpush1.msra.mxu0 0.0
    %647 = vmatprep.subr.mxu0 0.0
    %648 = vmatpush1.msra.mxu0 0.0
    %649 = vmatprep.subr.mxu0 0.0
    %650 = vmatpush1.msra.mxu0 0.0
    %651 = vmatprep.subr.mxu0 0.0
    %652 = vmatpush1.msra.mxu0 0.0
    %653 = vmatprep.subr.mxu0 0.0
    %654 = vmatpush1.msra.mxu0 0.0
    %655 = vmatprep.subr.mxu0 0.0
    %656 = vmatpush1.msra.mxu0 0.0
    %657 = vmatprep.subr.mxu0 0.0
    %658 = vmatpush1.msra.mxu0 0.0
    %659 = vmatprep.subr.mxu0 0.0
    %660 = vmatpush1.msra.mxu0 0.0
    %661 = vmatprep.subr.mxu0 0.0
    %662 = vmatpush1.msra.mxu0 0.0
    %663 = vmatprep.subr.mxu0 0.0
    %664 = vmatpush1.msra.mxu0 0.0
    %665 = vmatprep.subr.mxu0 0.0
    %666 = vmatpush1.msra.mxu0 0.0
    %667 = vmatprep.subr.mxu0 0.0
    %668 = vmatpush1.msra.mxu0 0.0
    %669 = vmatprep.subr.mxu0 0.0
    %670 = vmatpush1.msra.mxu0 0.0
    %671 = vmatprep.subr.mxu0 0.0
    %672 = vmatpush1.msra.mxu0 0.0
    %673 = vmatprep.subr.mxu0 0.0
    %674 = vmatpush1.msra.mxu0 0.0
    %675 = vmatprep.subr.mxu0 0.0
    %676 = vmatpush1.msra.mxu0 0.0
    %677 = vmatprep.subr.mxu0 0.0
    %678 = vmatpush1.msra.mxu0 0.0
    %679 = vmatprep.subr.mxu0 0.0
    %680 = vmatpush1.msra.mxu0 0.0
    %681 = vmatprep.mubr.f32.mxu0 0.0
    %682 = vmatmul.mubr.f32.gmra.mrb[0].mxu0 %v612
    %v683 = vpop.f32.mrb[0].mxu0
    %v684 = vadd.f32 0.0, %v683
    %v685 = vpop.f32.mrb[0].mxu0
    %686 = vmatprep.mubr.f32.mxu0 0.0
    %687 = vmatmul.mubr.f32.gmra.mrb[0].mxu0 %v615
    %v688 = vpop.f32.mrb[0].mxu0
    %v689 = vadd.f32 0.0, %v688
    %v690 = vpop.f32.mrb[0].mxu0
    %691 = vdwg.mxu0
    %v692 = vld [vmem:[%s24] sm:$0x1]
    %v694 = vlaneseq
    %v695 = vshrl.u32 %v694, 7
    %v696 = vsub.s32 0, %v695
    %v697 = vrot.slane %v692, %v696
    %v699 = vsub.f32 %v684, %v697
    %v700 = vsub.f32 %v689, %v697
    %v701 = vld [vmem:[%s25] sm:$0x1]
    %v702 = vadd.f32 %v701, 1e-05
    %v703 = vrsqrt.pop %v702
    %v705 = vlaneseq
    %v706 = vshrl.u32 %v705, 7
    %v707 = vsub.s32 0, %v706
    %v708 = vrot.slane %v703, %v707
    %v710 = vmul.f32 %v699, %v708
    %v711 = vmul.f32 %v700, %v708
    %v712 = vld [vmem:[%s22] sm:$0x1]
    %v714 = vlaneseq
    %v715 = vshrl.u32 %v714, 7
    %v716 = vsub.s32 0, %v715
    %v717 = vrot.slane %v712, %v716
    %v719 = vmul.f32 %v710, %v717
    %v720 = vmul.f32 %v711, %v717
    %v721 = vld [vmem:[%s23] sm:$0x1]
    %v723 = vlaneseq
    %v724 = vshrl.u32 %v723, 7
    %v725 = vsub.s32 0, %v724
    %v726 = vrot.slane %v721, %v725
    %v728 = vadd.f32 %v719, %v726
    %v729 = vadd.f32 %v720, %v726
    %vm730 = vcmp.ge.f32.partialorder %v728, 0.0
    %vm731 = vcmp.ge.f32.partialorder %v729, 0.0
    %v732 = vmul.f32 %v728, 0.2
    %v733 = vmul.f32 %v729, 0.2
    %v734 = vsel %vm730, %v728, %v732
    %v735 = vsel %vm731, %v729, %v733
    %vm736 = vcmask 392192
    %737 = vst.msk [vmem:[#allocation2] sm:$0xff] %vm736, %v734
    %738 = vst.msk [vmem:[#allocation2 + $0x8] sm:$0xff] %vm736, %v735
    // Predicated region
    $region106: #{generator_forward.5} parent=1 // pred_check
      _
    $region107: #{generator_forward.5} parent=1 // pred_check_branch
      %740 = sbr.rel (0) target = $region109
    $region108: #{generator_forward.5} parent=1 // pred_region
      %s742 = ssub.s32 256, 256
      %743 = vsyncadd [#allocation3], %s742
      %s744 = sshll.u32 [#allocation2], 4
      %s745 = int_to_ptr.vmem [resolvable:$true] %s744
      %750 = dma.vmem_to_hbm [thread:$0]  %s745, 256, %s26, [#allocation3], 128, 128, 8
    $region109: #{generator_forward.5} parent=1 // pred_fallthru
      _
    // Predicated region
    $region110: #{generator_forward.5} parent=1 // pred_check
      _
    $region111: #{generator_forward.5} parent=1 // pred_check_branch
      %752 = sbr.rel (0) target = $region113
    $region112: #{generator_forward.5} parent=1 // pred_region
      %753 = dma.done [#allocation3], 256
    $region113: #{generator_forward.5} parent=1 // pred_fallthru
      _
    %754 = vsyncpa [#allocation3], 1

// kernel: generator_forward.3
$region0: #{generator_forward.3}
  #allocation0 [shape = 'u32[]', space=smem, size = 0x4, offset = 0x4, fixed_abs, tag = 'smem constant byte address 0x4 - core index']
  #allocation1 [shape = 'u32[144,128]{1,0:T(1,128)}', space=vmem, size = 0x12000, scoped, tag = 'internal scratch']
  %s0 = inlined_call_operand.vmem [shape: f32[16,32], index: 0, kind: input, shape index: {}]
  %s1 = inlined_call_operand.vmem [shape: f32[32,96], index: 1, kind: input, shape index: {}]
  %s2 = inlined_call_operand.vmem [shape: f32[32,32], index: 2, kind: input, shape index: {}]
  %s3 = inlined_call_operand.vmem [shape: f32[1,32], index: 3, kind: input, shape index: {}]
  %s4 = inlined_call_operand.vmem [shape: f32[1,32], index: 4, kind: input, shape index: {}]
  %s5 = inlined_call_operand.vmem [shape: f32[32,64], index: 5, kind: input, shape index: {}]
  %s6 = inlined_call_operand.vmem [shape: f32[1,64], index: 6, kind: input, shape index: {}]
  %s7 = inlined_call_operand.vmem [shape: f32[64,32], index: 7, kind: input, shape index: {}]
  %s8 = inlined_call_operand.vmem [shape: f32[1,32], index: 8, kind: input, shape index: {}]
  %s9 = inlined_call_operand.vmem [shape: f32[1,32], index: 9, kind: input, shape index: {}]
  %s10 = inlined_call_operand.vmem [shape: f32[1,32], index: 10, kind: input, shape index: {}]
  %s11 = inlined_call_operand.vmem [shape: f32[16,32], index: 11, kind: output, shape index: {0}]
  %s12 = inlined_call_operand.hbm [shape: f32[8,8,8], index: 12, kind: output, shape index: {1}]
  %13 = xla_tuple %s11, %s12
  %s14 = sld [smem:[#allocation0]]
  $region62: #{generator_forward.3} parent=0
    _
  %s16 = ssub.s32 1, %s14
  %s17 = scalar_select 0, %s16, %s14
  $region1: #{generator_forward.3} parent=0
    #allocation2 [shape = 'u8[32768]{0}', space=vmem, size = 0x8000, scoped, tag = 'output window, operand 1, single buffered']
    #allocation3 [shape = 's32[1]{0}', space=sflag, size = 0x4, scoped, tag = 'scoped memory for generator_forward.3']
    %18 = vsyncpa [#allocation3], 0
    // Predicated region
    $region2: #{generator_forward.3} parent=1 // pred_check
      _
    $region3: #{generator_forward.3} parent=1 // pred_check_branch
      %20 = sbr.rel (0) target = $region5
    $region4: #{generator_forward.3} parent=1 // pred_region
      _
    $region5: #{generator_forward.3} parent=1 // pred_fallthru
      _
    // Predicated region
    $region6: #{generator_forward.3} parent=1 // pred_check
      _
    $region7: #{generator_forward.3} parent=1 // pred_check_branch
      %22 = sbr.rel (0) target = $region9
    $region8: #{generator_forward.3} parent=1 // pred_region
      _
    $region9: #{generator_forward.3} parent=1 // pred_fallthru
      _
    // Predicated region
    $region10: #{generator_forward.3} parent=1 // pred_check
      _
    $region11: #{generator_forward.3} parent=1 // pred_check_branch
      %24 = sbr.rel (0) target = $region13
    $region12: #{generator_forward.3} parent=1 // pred_region
      _
    $region13: #{generator_forward.3} parent=1 // pred_fallthru
      _
    // Predicated region
    $region14: #{generator_forward.3} parent=1 // pred_check
      _
    $region15: #{generator_forward.3} parent=1 // pred_check_branch
      %26 = sbr.rel (0) target = $region17
    $region16: #{generator_forward.3} parent=1 // pred_region
      _
    $region17: #{generator_forward.3} parent=1 // pred_fallthru
      _
    // Predicated region
    $region18: #{generator_forward.3} parent=1 // pred_check
      _
    $region19: #{generator_forward.3} parent=1 // pred_check_branch
      %28 = sbr.rel (0) target = $region21
    $region20: #{generator_forward.3} parent=1 // pred_region
      _
    $region21: #{generator_forward.3} parent=1 // pred_fallthru
      _
    // Predicated region
    $region22: #{generator_forward.3} parent=1 // pred_check
      _
    $region23: #{generator_forward.3} parent=1 // pred_check_branch
      %30 = sbr.rel (0) target = $region25
    $region24: #{generator_forward.3} parent=1 // pred_region
      _
    $region25: #{generator_forward.3} parent=1 // pred_fallthru
      _
    // Predicated region
    $region26: #{generator_forward.3} parent=1 // pred_check
      _
    $region27: #{generator_forward.3} parent=1 // pred_check_branch
      %32 = sbr.rel (0) target = $region29
    $region28: #{generator_forward.3} parent=1 // pred_region
      _
    $region29: #{generator_forward.3} parent=1 // pred_fallthru
      _
    // Predicated region
    $region30: #{generator_forward.3} parent=1 // pred_check
      _
    $region31: #{generator_forward.3} parent=1 // pred_check_branch
      %34 = sbr.rel (0) target = $region33
    $region32: #{generator_forward.3} parent=1 // pred_region
      _
    $region33: #{generator_forward.3} parent=1 // pred_fallthru
      _
    // Predicated region
    $region34: #{generator_forward.3} parent=1 // pred_check
      _
    $region35: #{generator_forward.3} parent=1 // pred_check_branch
      %36 = sbr.rel (0) target = $region37
    $region36: #{generator_forward.3} parent=1 // pred_region
      _
    $region37: #{generator_forward.3} parent=1 // pred_fallthru
      _
    // Predicated region
    $region38: #{generator_forward.3} parent=1 // pred_check
      _
    $region39: #{generator_forward.3} parent=1 // pred_check_branch
      %38 = sbr.rel (0) target = $region41
    $region40: #{generator_forward.3} parent=1 // pred_region
      _
    $region41: #{generator_forward.3} parent=1 // pred_fallthru
      _
    // Predicated region
    $region42: #{generator_forward.3} parent=1 // pred_check
      _
    $region43: #{generator_forward.3} parent=1 // pred_check_branch
      %40 = sbr.rel (0) target = $region45
    $region44: #{generator_forward.3} parent=1 // pred_region
      _
    $region45: #{generator_forward.3} parent=1 // pred_fallthru
      _
    %v41 = vld [vmem:[%s0] sm:$0xff]
    %v42 = vld [vmem:[%s0 + $0x8] sm:$0xff]
    %v43 = vld [vmem:[%s1] sm:$0xff]
    %v44 = vld [vmem:[%s1 + $0x8] sm:$0xff]
    %v45 = vld [vmem:[%s1 + $0x10] sm:$0xff]
    %v46 = vld [vmem:[%s1 + $0x18] sm:$0xff]
    %vm47 = vcmask 261120
    %v49 = vsel %vm47, %v41, 0
    %v52 = vsel %vm47, %v42, 0
    %54 = vmatprep.subr.mxu0 0.0
    %55 = vmatpush1.msra.mxu0 %v43
    %56 = vmatprep.subr.mxu0 0.0
    %57 = vmatpush1.msra.mxu0 %v44
    %58 = vmatprep.subr.mxu0 0.0
    %59 = vmatpush1.msra.mxu0 %v45
    %60 = vmatprep.subr.mxu0 0.0
    %61 = vmatpush1.msra.mxu0 %v46
    %62 = vmatprep.subr.mxu0 0.0
    %63 = vmatpush1.msra.mxu0 0.0
    %64 = vmatprep.subr.mxu0 0.0
    %65 = vmatpush1.msra.mxu0 0.0
    %66 = vmatprep.subr.mxu0 0.0
    %67 = vmatpush1.msra.mxu0 0.0
    %68 = vmatprep.subr.mxu0 0.0
    %69 = vmatpush1.msra.mxu0 0.0
    %70 = vmatprep.subr.mxu0 0.0
    %71 = vmatpush1.msra.mxu0 0.0
    %72 = vmatprep.subr.mxu0 0.0
    %73 = vmatpush1.msra.mxu0 0.0
    %74 = vmatprep.subr.mxu0 0.0
    %75 = vmatpush1.msra.mxu0 0.0
    %76 = vmatprep.subr.mxu0 0.0
    %77 = vmatpush1.msra.mxu0 0.0
    %78 = vmatprep.subr.mxu0 0.0
    %79 = vmatpush1.msra.mxu0 0.0
    %80 = vmatprep.subr.mxu0 0.0
    %81 = vmatpush1.msra.mxu0 0.0
    %82 = vmatprep.subr.mxu0 0.0
    %83 = vmatpush1.msra.mxu0 0.0
    %84 = vmatprep.subr.mxu0 0.0
    %85 = vmatpush1.msra.mxu0 0.0
    %86 = vmatprep.subr.mxu0 0.0
    %87 = vmatpush1.msra.mxu0 0.0
    %88 = vmatprep.subr.mxu0 0.0
    %89 = vmatpush1.msra.mxu0 0.0
    %90 = vmatprep.subr.mxu0 0.0
    %91 = vmatpush1.msra.mxu0 0.0
    %92 = vmatprep.subr.mxu0 0.0
    %93 = vmatpush1.msra.mxu0 0.0
    %94 = vmatprep.subr.mxu0 0.0
    %95 = vmatpush1.msra.mxu0 0.0
    %96 = vmatprep.subr.mxu0 0.0
    %97 = vmatpush1.msra.mxu0 0.0
    %98 = vmatprep.subr.mxu0 0.0
    %99 = vmatpush1.msra.mxu0 0.0
    %100 = vmatprep.subr.mxu0 0.0
    %101 = vmatpush1.msra.mxu0 0.0
    %102 = vmatprep.subr.mxu0 0.0
    %103 = vmatpush1.msra.mxu0 0.0
    %104 = vmatprep.subr.mxu0 0.0
    %105 = vmatpush1.msra.mxu0 0.0
    %106 = vmatprep.subr.mxu0 0.0
    %107 = vmatpush1.msra.mxu0 0.0
    %108 = vmatprep.subr.mxu0 0.0
    %109 = vmatpush1.msra.mxu0 0.0
    %110 = vmatprep.subr.mxu0 0.0
    %111 = vmatpush1.msra.mxu0 0.0
    %112 = vmatprep.subr.mxu0 0.0
    %113 = vmatpush1.msra.mxu0 0.0
    %114 = vmatprep.subr.mxu0 0.0
    %115 = vmatpush1.msra.mxu0 0.0
    %116 = vmatprep.subr.mxu0 0.0
    %117 = vmatpush1.msra.mxu0 0.0
    %118 = vmatprep.mubr.f32.mxu0 0.0
    %119 = vmatmul.mubr.f32.gmra.mrb[0].mxu0 %v49
    %v120 = vpop.f32.mrb[0].mxu0
    %v121 = vadd.f32 0.0, %v120
    %v122 = vpop.f32.mrb[0].mxu0
    %123 = vmatprep.mubr.f32.mxu0 0.0
    %124 = vmatmul.mubr.f32.gmra.mrb[0].mxu0 %v52
    %v125 = vpop.f32.mrb[0].mxu0
    %v126 = vadd.f32 0.0, %v125
    %v127 = vpop.f32.mrb[0].mxu0
    %128 = vdwg.mxu0
    %130 = vrot.lane.b32.xlu0 %v121, 96
    %v131 = vpop.permute.xlu0 %130
    %vm132 = vcmask 64512
    %v133 = vsel %vm132, %v121, 0
    %v135 = vsel %vm132, %v131, 0
    %137 = vmatprep.subr.mxu0 0.0
    %138 = vmatpush1.xpose.msra.mxu0 %v135
    %139 = vmatprep.subr.mxu0 0.0
    %140 = vmatpush1.xpose.msra.mxu0 0.0
    %141 = vmatprep.subr.mxu0 0.0
    %142 = vmatpush1.xpose.msra.mxu0 0.0
    %143 = vmatprep.subr.mxu0 0.0
    %144 = vmatpush1.xpose.msra.mxu0 0.0
    %145 = vmatprep.subr.mxu0 0.0
    %146 = vmatpush1.xpose.msra.mxu0 0.0
    %147 = vmatprep.subr.mxu0 0.0
    %148 = vmatpush1.xpose.msra.mxu0 0.0
    %149 = vmatprep.subr.mxu0 0.0
    %150 = vmatpush1.xpose.msra.mxu0 0.0
    %151 = vmatprep.subr.mxu0 0.0
    %152 = vmatpush1.xpose.msra.mxu0 0.0
    %153 = vmatprep.subr.mxu0 0.0
    %154 = vmatpush1.xpose.msra.mxu0 0.0
    %155 = vmatprep.subr.mxu0 0.0
    %156 = vmatpush1.xpose.msra.mxu0 0.0
    %157 = vmatprep.subr.mxu0 0.0
    %158 = vmatpush1.xpose.msra.mxu0 0.0
    %159 = vmatprep.subr.mxu0 0.0
    %160 = vmatpush1.xpose.msra.mxu0 0.0
    %161 = vmatprep.subr.mxu0 0.0
    %162 = vmatpush1.xpose.msra.mxu0 0.0
    %163 = vmatprep.subr.mxu0 0.0
    %164 = vmatpush1.xpose.msra.mxu0 0.0
    %165 = vmatprep.subr.mxu0 0.0
    %166 = vmatpush1.xpose.msra.mxu0 0.0
    %167 = vmatprep.subr.mxu0 0.0
    %168 = vmatpush1.xpose.msra.mxu0 0.0
    %169 = vmatprep.subr.mxu0 0.0
    %170 = vmatpush1.xpose.msra.mxu0 0.0
    %171 = vmatprep.subr.mxu0 0.0
    %172 = vmatpush1.xpose.msra.mxu0 0.0
    %173 = vmatprep.subr.mxu0 0.0
    %174 = vmatpush1.xpose.msra.mxu0 0.0
    %175 = vmatprep.subr.mxu0 0.0
    %176 = vmatpush1.xpose.msra.mxu0 0.0
    %177 = vmatprep.subr.mxu0 0.0
    %178 = vmatpush1.xpose.msra.mxu0 0.0
    %179 = vmatprep.subr.mxu0 0.0
    %180 = vmatpush1.xpose.msra.mxu0 0.0
    %181 = vmatprep.subr.mxu0 0.0
    %182 = vmatpush1.xpose.msra.mxu0 0.0
    %183 = vmatprep.subr.mxu0 0.0
    %184 = vmatpush1.xpose.msra.mxu0 0.0
    %185 = vmatprep.subr.mxu0 0.0
    %186 = vmatpush1.xpose.msra.mxu0 0.0
    %187 = vmatprep.subr.mxu0 0.0
    %188 = vmatpush1.xpose.msra.mxu0 0.0
    %189 = vmatprep.subr.mxu0 0.0
    %190 = vmatpush1.xpose.msra.mxu0 0.0
    %191 = vmatprep.subr.mxu0 0.0
    %192 = vmatpush1.xpose.msra.mxu0 0.0
    %193 = vmatprep.subr.mxu0 0.0
    %194 = vmatpush1.xpose.msra.mxu0 0.0
    %195 = vmatprep.subr.mxu0 0.0
    %196 = vmatpush1.xpose.msra.mxu0 0.0
    %197 = vmatprep.subr.mxu0 0.0
    %198 = vmatpush1.xpose.msra.mxu0 0.0
    %199 = vmatprep.subr.mxu0 0.0
    %200 = vmatpush1.xpose.msra.mxu0 0.0
    %201 = vmatprep.mubr.f32.mxu0 0.0
    %202 = vmatmul.mubr.f32.gmra.mrb[0].mxu0 %v133
    %v203 = vpop.f32.mrb[0].mxu0
    %v204 = vadd.f32 0.0, %v203
    %v205 = vpop.f32.mrb[0].mxu0
    %206 = vdwg.mxu0
    %v207 = vmul.f32 %v204, 0.35355338
    %v208 = vsel %vm132, %v207, -inf
    %209 = vmax.xlane.f32.xlu0 %v208
    %v210 = vpop.xlane.xlu0 %209
    %v211 = vsub.f32 %v207, %v210
    %v212 = vmul.f32 %v211, 1.442695
    %v213 = vpow.pop %v212
    %v214 = vsel %vm132, %v213, 0.0
    %215 = vadd.xlane.f32.xlu0 %v214
    %v216 = vpop.xlane.xlu0 %215
    %v217 = vrcp.pop %v216
    %v218 = vmul.f32 %v213, %v217
    %219 = vst.msk [vmem:[#allocation2] sm:$0xff] %vm132, %v218
    %220 = vrot.lane.b32.xlu0 %v121, 64
    %v221 = vpop.permute.xlu0 %220
    %v224 = vsel %vm132, %v218, 0
    %226 = vmatprep.subr.mxu0 0.0
    %227 = vmatpush1.msra.mxu0 %v221
    %228 = vmatprep.subr.mxu0 0.0
    %229 = vmatpush1.msra.mxu0 0.0
    %230 = vmatprep.subr.mxu0 0.0
    %231 = vmatpush1.msra.mxu0 0.0
    %232 = vmatprep.subr.mxu0 0.0
    %233 = vmatpush1.msra.mxu0 0.0
    %234 = vmatprep.subr.mxu0 0.0
    %235 = vmatpush1.msra.mxu0 0.0
    %236 = vmatprep.subr.mxu0 0.0
    %237 = vmatpush1.msra.mxu0 0.0
    %238 = vmatprep.subr.mxu0 0.0
    %239 = vmatpush1.msra.mxu0 0.0
    %240 = vmatprep.subr.mxu0 0.0
    %241 = vmatpush1.msra.mxu0 0.0
    %242 = vmatprep.subr.mxu0 0.0
    %243 = vmatpush1.msra.mxu0 0.0
    %244 = vmatprep.subr.mxu0 0.0
    %245 = vmatpush1.msra.mxu0 0.0
    %246 = vmatprep.subr.mxu0 0.0
    %247 = vmatpush1.msra.mxu0 0.0
    %248 = vmatprep.subr.mxu0 0.0
    %249 = vmatpush1.msra.mxu0 0.0
    %250 = vmatprep.subr.mxu0 0.0
    %251 = vmatpush1.msra.mxu0 0.0
    %252 = vmatprep.subr.mxu0 0.0
    %253 = vmatpush1.msra.mxu0 0.0
    %254 = vmatprep.subr.mxu0 0.0
    %255 = vmatpush1.msra.mxu0 0.0
    %256 = vmatprep.subr.mxu0 0.0
    %257 = vmatpush1.msra.mxu0 0.0
    %258 = vmatprep.subr.mxu0 0.0
    %259 = vmatpush1.msra.mxu0 0.0
    %260 = vmatprep.subr.mxu0 0.0
    %261 = vmatpush1.msra.mxu0 0.0
    %262 = vmatprep.subr.mxu0 0.0
    %263 = vmatpush1.msra.mxu0 0.0
    %264 = vmatprep.subr.mxu0 0.0
    %265 = vmatpush1.msra.mxu0 0.0
    %266 = vmatprep.subr.mxu0 0.0
    %267 = vmatpush1.msra.mxu0 0.0
    %268 = vmatprep.subr.mxu0 0.0
    %269 = vmatpush1.msra.mxu0 0.0
    %270 = vmatprep.subr.mxu0 0.0
    %271 = vmatpush1.msra.mxu0 0.0
    %272 = vmatprep.subr.mxu0 0.0
    %273 = vmatpush1.msra.mxu0 0.0
    %274 = vmatprep.subr.mxu0 0.0
    %275 = vmatpush1.msra.mxu0 0.0
    %276 = vmatprep.subr.mxu0 0.0
    %277 = vmatpush1.msra.mxu0 0.0
    %278 = vmatprep.subr.mxu0 0.0
    %279 = vmatpush1.msra.mxu0 0.0
    %280 = vmatprep.subr.mxu0 0.0
    %281 = vmatpush1.msra.mxu0 0.0
    %282 = vmatprep.subr.mxu0 0.0
    %283 = vmatpush1.msra.mxu0 0.0
    %284 = vmatprep.subr.mxu0 0.0
    %285 = vmatpush1.msra.mxu0 0.0
    %286 = vmatprep.subr.mxu0 0.0
    %287 = vmatpush1.msra.mxu0 0.0
    %288 = vmatprep.subr.mxu0 0.0
    %289 = vmatpush1.msra.mxu0 0.0
    %290 = vmatprep.mubr.f32.mxu0 0.0
    %291 = vmatmul.mubr.f32.gmra.mrb[0].mxu0 %v224
    %v292 = vpop.f32.mrb[0].mxu0
    %v293 = vadd.f32 0.0, %v292
    %v294 = vpop.f32.mrb[0].mxu0
    %295 = vdwg.mxu0
    %v296 = vld [vmem:[%s2] sm:$0xff]
    %297 = vrot.lane.b32.xlu0 %v121, 120
    %v298 = vpop.permute.xlu0 %297
    %299 = vrot.lane.b32.xlu0 %v121, 88
    %v300 = vpop.permute.xlu0 %299
    %v301 = vsel %vm132, %v298, 0
    %v303 = vsel %vm132, %v300, 0
    %305 = vmatprep.subr.mxu0 0.0
    %306 = vmatpush1.xpose.msra.mxu0 %v303
    %307 = vmatprep.subr.mxu0 0.0
    %308 = vmatpush1.xpose.msra.mxu0 0.0
    %309 = vmatprep.subr.mxu0 0.0
    %310 = vmatpush1.xpose.msra.mxu0 0.0
    %311 = vmatprep.subr.mxu0 0.0
    %312 = vmatpush1.xpose.msra.mxu0 0.0
    %313 = vmatprep.subr.mxu0 0.0
    %314 = vmatpush1.xpose.msra.mxu0 0.0
    %315 = vmatprep.subr.mxu0 0.0
    %316 = vmatpush1.xpose.msra.mxu0 0.0
    %317 = vmatprep.subr.mxu0 0.0
    %318 = vmatpush1.xpose.msra.mxu0 0.0
    %319 = vmatprep.subr.mxu0 0.0
    %320 = vmatpush1.xpose.msra.mxu0 0.0
    %321 = vmatprep.subr.mxu0 0.0
    %322 = vmatpush1.xpose.msra.mxu0 0.0
    %323 = vmatprep.subr.mxu0 0.0
    %324 = vmatpush1.xpose.msra.mxu0 0.0
    %325 = vmatprep.subr.mxu0 0.0
    %326 = vmatpush1.xpose.msra.mxu0 0.0
    %327 = vmatprep.subr.mxu0 0.0
    %328 = vmatpush1.xpose.msra.mxu0 0.0
    %329 = vmatprep.subr.mxu0 0.0
    %330 = vmatpush1.xpose.msra.mxu0 0.0
    %331 = vmatprep.subr.mxu0 0.0
    %332 = vmatpush1.xpose.msra.mxu0 0.0
    %333 = vmatprep.subr.mxu0 0.0
    %334 = vmatpush1.xpose.msra.mxu0 0.0
    %335 = vmatprep.subr.mxu0 0.0
    %336 = vmatpush1.xpose.msra.mxu0 0.0
    %337 = vmatprep.subr.mxu0 0.0
    %338 = vmatpush1.xpose.msra.mxu0 0.0
    %339 = vmatprep.subr.mxu0 0.0
    %340 = vmatpush1.xpose.msra.mxu0 0.0
    %341 = vmatprep.subr.mxu0 0.0
    %342 = vmatpush1.xpose.msra.mxu0 0.0
    %343 = vmatprep.subr.mxu0 0.0
    %344 = vmatpush1.xpose.msra.mxu0 0.0
    %345 = vmatprep.subr.mxu0 0.0
    %346 = vmatpush1.xpose.msra.mxu0 0.0
    %347 = vmatprep.subr.mxu0 0.0
    %348 = vmatpush1.xpose.msra.mxu0 0.0
    %349 = vmatprep.subr.mxu0 0.0
    %350 = vmatpush1.xpose.msra.mxu0 0.0
    %351 = vmatprep.subr.mxu0 0.0
    %352 = vmatpush1.xpose.msra.mxu0 0.0
    %353 = vmatprep.subr.mxu0 0.0
    %354 = vmatpush1.xpose.msra.mxu0 0.0
    %355 = vmatprep.subr.mxu0 0.0
    %356 = vmatpush1.xpose.msra.mxu0 0.0
    %357 = vmatprep.subr.mxu0 0.0
    %358 = vmatpush1.xpose.msra.mxu0 0.0
    %359 = vmatprep.subr.mxu0 0.0
    %360 = vmatpush1.xpose.msra.mxu0 0.0
    %361 = vmatprep.subr.mxu0 0.0
    %362 = vmatpush1.xpose.msra.mxu0 0.0
    %363 = vmatprep.subr.mxu0 0.0
    %364 = vmatpush1.xpose.msra.mxu0 0.0
    %365 = vmatprep.subr.mxu0 0.0
    %366 = vmatpush1.xpose.msra.mxu0 0.0
    %367 = vmatprep.subr.mxu0 0.0
    %368 = vmatpush1.xpose.msra.mxu0 0.0
    %369 = vmatprep.mubr.f32.mxu0 0.0
    %370 = vmatmul.mubr.f32.gmra.mrb[0].mxu0 %v301
    %v371 = vpop.f32.mrb[0].mxu0
    %v372 = vadd.f32 0.0, %v371
    %v373 = vpop.f32.mrb[0].mxu0
    %374 = vdwg.mxu0
    %v375 = vmul.f32 %v372, 0.35355338
    %v376 = vsel %vm132, %v375, -inf
    %377 = vmax.xlane.f32.xlu0 %v376
    %v378 = vpop.xlane.xlu0 %377
    %v379 = vsub.f32 %v375, %v378
    %v380 = vmul.f32 %v379, 1.442695
    %v381 = vpow.pop %v380
    %v382 = vsel %vm132, %v381, 0.0
    %383 = vadd.xlane.f32.xlu0 %v382
    %v384 = vpop.xlane.xlu0 %383
    %v385 = vrcp.pop %v384
    %v386 = vmul.f32 %v381, %v385
    %s387 = scalar_lea.vmem [#allocation2], 8
    %388 = vst.msk [vmem:[%s387] sm:$0xff] %vm132, %v386
    %389 = vrot.lane.b32.xlu0 %v121, 56
    %v390 = vpop.permute.xlu0 %389
    %v393 = vsel %vm132, %v386, 0
    %395 = vmatprep.subr.mxu0 0.0
    %396 = vmatpush1.msra.mxu0 %v390
    %397 = vmatprep.subr.mxu0 0.0
    %398 = vmatpush1.msra.mxu0 0.0
    %399 = vmatprep.subr.mxu0 0.0
    %400 = vmatpush1.msra.mxu0 0.0
    %401 = vmatprep.subr.mxu0 0.0
    %402 = vmatpush1.msra.mxu0 0.0
    %403 = vmatprep.subr.mxu0 0.0
    %404 = vmatpush1.msra.mxu0 0.0
    %405 = vmatprep.subr.mxu0 0.0
    %406 = vmatpush1.msra.mxu0 0.0
    %407 = vmatprep.subr.mxu0 0.0
    %408 = vmatpush1.msra.mxu0 0.0
    %409 = vmatprep.subr.mxu0 0.0
    %410 = vmatpush1.msra.mxu0 0.0
    %411 = vmatprep.subr.mxu0 0.0
    %412 = vmatpush1.msra.mxu0 0.0
    %413 = vmatprep.subr.mxu0 0.0
    %414 = vmatpush1.msra.mxu0 0.0
    %415 = vmatprep.subr.mxu0 0.0
    %416 = vmatpush1.msra.mxu0 0.0
    %417 = vmatprep.subr.mxu0 0.0
    %418 = vmatpush1.msra.mxu0 0.0
    %419 = vmatprep.subr.mxu0 0.0
    %420 = vmatpush1.msra.mxu0 0.0
    %421 = vmatprep.subr.mxu0 0.0
    %422 = vmatpush1.msra.mxu0 0.0
    %423 = vmatprep.subr.mxu0 0.0
    %424 = vmatpush1.msra.mxu0 0.0
    %425 = vmatprep.subr.mxu0 0.0
    %426 = vmatpush1.msra.mxu0 0.0
    %427 = vmatprep.subr.mxu0 0.0
    %428 = vmatpush1.msra.mxu0 0.0
    %429 = vmatprep.subr.mxu0 0.0
    %430 = vmatpush1.msra.mxu0 0.0
    %431 = vmatprep.subr.mxu0 0.0
    %432 = vmatpush1.msra.mxu0 0.0
    %433 = vmatprep.subr.mxu0 0.0
    %434 = vmatpush1.msra.mxu0 0.0
    %435 = vmatprep.subr.mxu0 0.0
    %436 = vmatpush1.msra.mxu0 0.0
    %437 = vmatprep.subr.mxu0 0.0
    %438 = vmatpush1.msra.mxu0 0.0
    %439 = vmatprep.subr.mxu0 0.0
    %440 = vmatpush1.msra.mxu0 0.0
    %441 = vmatprep.subr.mxu0 0.0
    %442 = vmatpush1.msra.mxu0 0.0
    %443 = vmatprep.subr.mxu0 0.0
    %444 = vmatpush1.msra.mxu0 0.0
    %445 = vmatprep.subr.mxu0 0.0
    %446 = vmatpush1.msra.mxu0 0.0
    %447 = vmatprep.subr.mxu0 0.0
    %448 = vmatpush1.msra.mxu0 0.0
    %449 = vmatprep.subr.mxu0 0.0
    %450 = vmatpush1.msra.mxu0 0.0
    %451 = vmatprep.subr.mxu0 0.0
    %452 = vmatpush1.msra.mxu0 0.0
    %453 = vmatprep.subr.mxu0 0.0
    %454 = vmatpush1.msra.mxu0 0.0
    %455 = vmatprep.subr.mxu0 0.0
    %456 = vmatpush1.msra.mxu0 0.0
    %457 = vmatprep.subr.mxu0 0.0
    %458 = vmatpush1.msra.mxu0 0.0
    %459 = vmatprep.mubr.f32.mxu0 0.0
    %460 = vmatmul.mubr.f32.gmra.mrb[0].mxu0 %v393
    %v461 = vpop.f32.mrb[0].mxu0
    %v462 = vadd.f32 0.0, %v461
    %v463 = vpop.f32.mrb[0].mxu0
    %464 = vdwg.mxu0
    %v465 = vld [vmem:[%s2 + $0x8] sm:$0xff]
    %v467 = vsel %vm132, %v462, 0
    %469 = vmatprep.subr.mxu0 0.0
    %470 = vmatpush1.msra.mxu0 %v465
    %471 = vmatprep.subr.mxu0 0.0
    %472 = vmatpush1.msra.mxu0 0.0
    %473 = vmatprep.subr.mxu0 0.0
    %474 = vmatpush1.msra.mxu0 0.0
    %475 = vmatprep.subr.mxu0 0.0
    %476 = vmatpush1.msra.mxu0 0.0
    %477 = vmatprep.subr.mxu0 0.0
    %478 = vmatpush1.msra.mxu0 0.0
    %479 = vmatprep.subr.mxu0 0.0
    %480 = vmatpush1.msra.mxu0 0.0
    %481 = vmatprep.subr.mxu0 0.0
    %482 = vmatpush1.msra.mxu0 0.0
    %483 = vmatprep.subr.mxu0 0.0
    %484 = vmatpush1.msra.mxu0 0.0
    %485 = vmatprep.subr.mxu0 0.0
    %486 = vmatpush1.msra.mxu0 0.0
    %487 = vmatprep.subr.mxu0 0.0
    %488 = vmatpush1.msra.mxu0 0.0
    %489 = vmatprep.subr.mxu0 0.0
    %490 = vmatpush1.msra.mxu0 0.0
    %491 = vmatprep.subr.mxu0 0.0
    %492 = vmatpush1.msra.mxu0 0.0
    %493 = vmatprep.subr.mxu0 0.0
    %494 = vmatpush1.msra.mxu0 0.0
    %495 = vmatprep.subr.mxu0 0.0
    %496 = vmatpush1.msra.mxu0 0.0
    %497 = vmatprep.subr.mxu0 0.0
    %498 = vmatpush1.msra.mxu0 0.0
    %499 = vmatprep.subr.mxu0 0.0
    %500 = vmatpush1.msra.mxu0 0.0
    %501 = vmatprep.subr.mxu0 0.0
    %502 = vmatpush1.msra.mxu0 0.0
    %503 = vmatprep.subr.mxu0 0.0
    %504 = vmatpush1.msra.mxu0 0.0
    %505 = vmatprep.subr.mxu0 0.0
    %506 = vmatpush1.msra.mxu0 0.0
    %507 = vmatprep.subr.mxu0 0.0
    %508 = vmatpush1.msra.mxu0 0.0
    %509 = vmatprep.subr.mxu0 0.0
    %510 = vmatpush1.msra.mxu0 0.0
    %511 = vmatprep.subr.mxu0 0.0
    %512 = vmatpush1.msra.mxu0 0.0
    %513 = vmatprep.subr.mxu0 0.0
    %514 = vmatpush1.msra.mxu0 0.0
    %515 = vmatprep.subr.mxu0 0.0
    %516 = vmatpush1.msra.mxu0 0.0
    %517 = vmatprep.subr.mxu0 0.0
    %518 = vmatpush1.msra.mxu0 0.0
    %519 = vmatprep.subr.mxu0 0.0
    %520 = vmatpush1.msra.mxu0 0.0
    %521 = vmatprep.subr.mxu0 0.0
    %522 = vmatpush1.msra.mxu0 0.0
    %523 = vmatprep.subr.mxu0 0.0
    %524 = vmatpush1.msra.mxu0 0.0
    %525 = vmatprep.subr.mxu0 0.0
    %526 = vmatpush1.msra.mxu0 0.0
    %527 = vmatprep.subr.mxu0 0.0
    %528 = vmatpush1.msra.mxu0 0.0
    %529 = vmatprep.subr.mxu0 0.0
    %530 = vmatpush1.msra.mxu0 0.0
    %531 = vmatprep.subr.mxu0 0.0
    %532 = vmatpush1.msra.mxu0 0.0
    %533 = vmatprep.mubr.f32.mxu0 0.0
    %534 = vmatmul.mubr.f32.gmra.mrb[0].mxu0 %v467
    %v535 = vpop.f32.mrb[0].mxu0
    %v536 = vadd.f32 0.0, %v535
    %v537 = vpop.f32.mrb[0].mxu0
    %538 = vdwg.mxu0
    %v540 = vsel %vm132, %v293, 0
    %542 = vmatprep.subr.mxu0 0.0
    %543 = vmatpush1.msra.mxu0 %v296
    %544 = vmatprep.subr.mxu0 0.0
    %545 = vmatpush1.msra.mxu0 0.0
    %546 = vmatprep.subr.mxu0 0.0
    %547 = vmatpush1.msra.mxu0 0.0
    %548 = vmatprep.subr.mxu0 0.0
    %549 = vmatpush1.msra.mxu0 0.0
    %550 = vmatprep.subr.mxu0 0.0
    %551 = vmatpush1.msra.mxu0 0.0
    %552 = vmatprep.subr.mxu0 0.0
    %553 = vmatpush1.msra.mxu0 0.0
    %554 = vmatprep.subr.mxu0 0.0
    %555 = vmatpush1.msra.mxu0 0.0
    %556 = vmatprep.subr.mxu0 0.0
    %557 = vmatpush1.msra.mxu0 0.0
    %558 = vmatprep.subr.mxu0 0.0
    %559 = vmatpush1.msra.mxu0 0.0
    %560 = vmatprep.subr.mxu0 0.0
    %561 = vmatpush1.msra.mxu0 0.0
    %562 = vmatprep.subr.mxu0 0.0
    %563 = vmatpush1.msra.mxu0 0.0
    %564 = vmatprep.subr.mxu0 0.0
    %565 = vmatpush1.msra.mxu0 0.0
    %566 = vmatprep.subr.mxu0 0.0
    %567 = vmatpush1.msra.mxu0 0.0
    %568 = vmatprep.subr.mxu0 0.0
    %569 = vmatpush1.msra.mxu0 0.0
    %570 = vmatprep.subr.mxu0 0.0
    %571 = vmatpush1.msra.mxu0 0.0
    %572 = vmatprep.subr.mxu0 0.0
    %573 = vmatpush1.msra.mxu0 0.0
    %574 = vmatprep.subr.mxu0 0.0
    %575 = vmatpush1.msra.mxu0 0.0
    %576 = vmatprep.subr.mxu0 0.0
    %577 = vmatpush1.msra.mxu0 0.0
    %578 = vmatprep.subr.mxu0 0.0
    %579 = vmatpush1.msra.mxu0 0.0
    %580 = vmatprep.subr.mxu0 0.0
    %581 = vmatpush1.msra.mxu0 0.0
    %582 = vmatprep.subr.mxu0 0.0
    %583 = vmatpush1.msra.mxu0 0.0
    %584 = vmatprep.subr.mxu0 0.0
    %585 = vmatpush1.msra.mxu0 0.0
    %586 = vmatprep.subr.mxu0 0.0
    %587 = vmatpush1.msra.mxu0 0.0
    %588 = vmatprep.subr.mxu0 0.0
    %589 = vmatpush1.msra.mxu0 0.0
    %590 = vmatprep.subr.mxu0 0.0
    %591 = vmatpush1.msra.mxu0 0.0
    %592 = vmatprep.subr.mxu0 0.0
    %593 = vmatpush1.msra.mxu0 0.0
    %594 = vmatprep.subr.mxu0 0.0
    %595 = vmatpush1.msra.mxu0 0.0
    %596 = vmatprep.subr.mxu0 0.0
    %597 = vmatpush1.msra.mxu0 0.0
    %598 = vmatprep.subr.mxu0 0.0
    %599 = vmatpush1.msra.mxu0 0.0
    %600 = vmatprep.subr.mxu0 0.0
    %601 = vmatpush1.msra.mxu0 0.0
    %602 = vmatprep.subr.mxu0 0.0
    %603 = vmatpush1.msra.mxu0 0.0
    %604 = vmatprep.subr.mxu0 0.0
    %605 = vmatpush1.msra.mxu0 0.0
    %606 = vmatprep.mubr.f32.mxu0 0.0
    %607 = vmatmul.mubr.f32.gmra.mrb[0].mxu0 %v540
    %v608 = vpop.f32.mrb[0].mxu0
    %v609 = vadd.f32 %v536, %v608
    %v610 = vpop.f32.mrb[0].mxu0
    %611 = vdwg.mxu0
    %612 = vrot.lane.b32.xlu0 %v121, 112
    %v613 = vpop.permute.xlu0 %612
    %614 = vrot.lane.b32.xlu0 %v121, 80
    %v615 = vpop.permute.xlu0 %614
    %v616 = vsel %vm132, %v613, 0
    %v618 = vsel %vm132, %v615, 0
    %620 = vmatprep.subr.mxu0 0.0
    %621 = vmatpush1.xpose.msra.mxu0 %v618
    %622 = vmatprep.subr.mxu0 0.0
    %623 = vmatpush1.xpose.msra.mxu0 0.0
    %624 = vmatprep.subr.mxu0 0.0
    %625 = vmatpush1.xpose.msra.mxu0 0.0
    %626 = vmatprep.subr.mxu0 0.0
    %627 = vmatpush1.xpose.msra.mxu0 0.0
    %628 = vmatprep.subr.mxu0 0.0
    %629 = vmatpush1.xpose.msra.mxu0 0.0
    %630 = vmatprep.subr.mxu0 0.0
    %631 = vmatpush1.xpose.msra.mxu0 0.0
    %632 = vmatprep.subr.mxu0 0.0
    %633 = vmatpush1.xpose.msra.mxu0 0.0
    %634 = vmatprep.subr.mxu0 0.0
    %635 = vmatpush1.xpose.msra.mxu0 0.0
    %636 = vmatprep.subr.mxu0 0.0
    %637 = vmatpush1.xpose.msra.mxu0 0.0
    %638 = vmatprep.subr.mxu0 0.0
    %639 = vmatpush1.xpose.msra.mxu0 0.0
    %640 = vmatprep.subr.mxu0 0.0
    %641 = vmatpush1.xpose.msra.mxu0 0.0
    %642 = vmatprep.subr.mxu0 0.0
    %643 = vmatpush1.xpose.msra.mxu0 0.0
    %644 = vmatprep.subr.mxu0 0.0
    %645 = vmatpush1.xpose.msra.mxu0 0.0
    %646 = vmatprep.subr.mxu0 0.0
    %647 = vmatpush1.xpose.msra.mxu0 0.0
    %648 = vmatprep.subr.mxu0 0.0
    %649 = vmatpush1.xpose.msra.mxu0 0.0
    %650 = vmatprep.subr.mxu0 0.0
    %651 = vmatpush1.xpose.msra.mxu0 0.0
    %652 = vmatprep.subr.mxu0 0.0
    %653 = vmatpush1.xpose.msra.mxu0 0.0
    %654 = vmatprep.subr.mxu0 0.0
    %655 = vmatpush1.xpose.msra.mxu0 0.0
    %656 = vmatprep.subr.mxu0 0.0
    %657 = vmatpush1.xpose.msra.mxu0 0.0
    %658 = vmatprep.subr.mxu0 0.0
    %659 = vmatpush1.xpose.msra.mxu0 0.0
    %660 = vmatprep.subr.mxu0 0.0
    %661 = vmatpush1.xpose.msra.mxu0 0.0
    %662 = vmatprep.subr.mxu0 0.0
    %663 = vmatpush1.xpose.msra.mxu0 0.0
    %664 = vmatprep.subr.mxu0 0.0
    %665 = vmatpush1.xpose.msra.mxu0 0.0
    %666 = vmatprep.subr.mxu0 0.0
    %667 = vmatpush1.xpose.msra.mxu0 0.0
    %668 = vmatprep.subr.mxu0 0.0
    %669 = vmatpush1.xpose.msra.mxu0 0.0
    %670 = vmatprep.subr.mxu0 0.0
    %671 = vmatpush1.xpose.msra.mxu0 0.0
    %672 = vmatprep.subr.mxu0 0.0
    %673 = vmatpush1.xpose.msra.mxu0 0.0
    %674 = vmatprep.subr.mxu0 0.0
    %675 = vmatpush1.xpose.msra.mxu0 0.0
    %676 = vmatprep.subr.mxu0 0.0
    %677 = vmatpush1.xpose.msra.mxu0 0.0
    %678 = vmatprep.subr.mxu0 0.0
    %679 = vmatpush1.xpose.msra.mxu0 0.0
    %680 = vmatprep.subr.mxu0 0.0
    %681 = vmatpush1.xpose.msra.mxu0 0.0
    %682 = vmatprep.subr.mxu0 0.0
    %683 = vmatpush1.xpose.msra.mxu0 0.0
    %684 = vmatprep.mubr.f32.mxu0 0.0
    %685 = vmatmul.mubr.f32.gmra.mrb[0].mxu0 %v616
    %v686 = vpop.f32.mrb[0].mxu0
    %v687 = vadd.f32 0.0, %v686
    %v688 = vpop.f32.mrb[0].mxu0
    %689 = vdwg.mxu0
    %v690 = vmul.f32 %v687, 0.35355338
    %v691 = vsel %vm132, %v690, -inf
    %692 = vmax.xlane.f32.xlu0 %v691
    %v693 = vpop.xlane.xlu0 %692
    %v694 = vsub.f32 %v690, %v693
    %v695 = vmul.f32 %v694, 1.442695
    %v696 = vpow.pop %v695
    %v697 = vsel %vm132, %v696, 0.0
    %698 = vadd.xlane.f32.xlu0 %v697
    %v699 = vpop.xlane.xlu0 %698
    %v700 = vrcp.pop %v699
    %v701 = vmul.f32 %v696, %v700
    %s702 = scalar_lea.vmem [#allocation2], 16
    %703 = vst.msk [vmem:[%s702] sm:$0xff] %vm132, %v701
    %704 = vrot.lane.b32.xlu0 %v121, 48
    %v705 = vpop.permute.xlu0 %704
    %v708 = vsel %vm132, %v701, 0
    %710 = vmatprep.subr.mxu0 0.0
    %711 = vmatpush1.msra.mxu0 %v705
    %712 = vmatprep.subr.mxu0 0.0
    %713 = vmatpush1.msra.mxu0 0.0
    %714 = vmatprep.subr.mxu0 0.0
    %715 = vmatpush1.msra.mxu0 0.0
    %716 = vmatprep.subr.mxu0 0.0
    %717 = vmatpush1.msra.mxu0 0.0
    %718 = vmatprep.subr.mxu0 0.0
    %719 = vmatpush1.msra.mxu0 0.0
    %720 = vmatprep.subr.mxu0 0.0
    %721 = vmatpush1.msra.mxu0 0.0
    %722 = vmatprep.subr.mxu0 0.0
    %723 = vmatpush1.msra.mxu0 0.0
    %724 = vmatprep.subr.mxu0 0.0
    %725 = vmatpush1.msra.mxu0 0.0
    %726 = vmatprep.subr.mxu0 0.0
    %727 = vmatpush1.msra.mxu0 0.0
    %728 = vmatprep.subr.mxu0 0.0
    %729 = vmatpush1.msra.mxu0 0.0
    %730 = vmatprep.subr.mxu0 0.0
    %731 = vmatpush1.msra.mxu0 0.0
    %732 = vmatprep.subr.mxu0 0.0
    %733 = vmatpush1.msra.mxu0 0.0
    %734 = vmatprep.subr.mxu0 0.0
    %735 = vmatpush1.msra.mxu0 0.0
    %736 = vmatprep.subr.mxu0 0.0
    %737 = vmatpush1.msra.mxu0 0.0
    %738 = vmatprep.subr.mxu0 0.0
    %739 = vmatpush1.msra.mxu0 0.0
    %740 = vmatprep.subr.mxu0 0.0
    %741 = vmatpush1.msra.mxu0 0.0
    %742 = vmatprep.subr.mxu0 0.0
    %743 = vmatpush1.msra.mxu0 0.0
    %744 = vmatprep.subr.mxu0 0.0
    %745 = vmatpush1.msra.mxu0 0.0
    %746 = vmatprep.subr.mxu0 0.0
    %747 = vmatpush1.msra.mxu0 0.0
    %748 = vmatprep.subr.mxu0 0.0
    %749 = vmatpush1.msra.mxu0 0.0
    %750 = vmatprep.subr.mxu0 0.0
    %751 = vmatpush1.msra.mxu0 0.0
    %752 = vmatprep.subr.mxu0 0.0
    %753 = vmatpush1.msra.mxu0 0.0
    %754 = vmatprep.subr.mxu0 0.0
    %755 = vmatpush1.msra.mxu0 0.0
    %756 = vmatprep.subr.mxu0 0.0
    %757 = vmatpush1.msra.mxu0 0.0
    %758 = vmatprep.subr.mxu0 0.0
    %759 = vmatpush1.msra.mxu0 0.0
    %760 = vmatprep.subr.mxu0 0.0
    %761 = vmatpush1.msra.mxu0 0.0
    %762 = vmatprep.subr.mxu0 0.0
    %763 = vmatpush1.msra.mxu0 0.0
    %764 = vmatprep.subr.mxu0 0.0
    %765 = vmatpush1.msra.mxu0 0.0
    %766 = vmatprep.subr.mxu0 0.0
    %767 = vmatpush1.msra.mxu0 0.0
    %768 = vmatprep.subr.mxu0 0.0
    %769 = vmatpush1.msra.mxu0 0.0
    %770 = vmatprep.subr.mxu0 0.0
    %771 = vmatpush1.msra.mxu0 0.0
    %772 = vmatprep.subr.mxu0 0.0
    %773 = vmatpush1.msra.mxu0 0.0
    %774 = vmatprep.mubr.f32.mxu0 0.0
    %775 = vmatmul.mubr.f32.gmra.mrb[0].mxu0 %v708
    %v776 = vpop.f32.mrb[0].mxu0
    %v777 = vadd.f32 0.0, %v776
    %v778 = vpop.f32.mrb[0].mxu0
    %779 = vdwg.mxu0
    %v780 = vld [vmem:[%s2 + $0x10] sm:$0xff]
    %v782 = vsel %vm132, %v777, 0
    %784 = vmatprep.subr.mxu0 0.0
    %785 = vmatpush1.msra.mxu0 %v780
    %786 = vmatprep.subr.mxu0 0.0
    %787 = vmatpush1.msra.mxu0 0.0
    %788 = vmatprep.subr.mxu0 0.0
    %789 = vmatpush1.msra.mxu0 0.0
    %790 = vmatprep.subr.mxu0 0.0
    %791 = vmatpush1.msra.mxu0 0.0
    %792 = vmatprep.subr.mxu0 0.0
    %793 = vmatpush1.msra.mxu0 0.0
    %794 = vmatprep.subr.mxu0 0.0
    %795 = vmatpush1.msra.mxu0 0.0
    %796 = vmatprep.subr.mxu0 0.0
    %797 = vmatpush1.msra.mxu0 0.0
    %798 = vmatprep.subr.mxu0 0.0
    %799 = vmatpush1.msra.mxu0 0.0
    %800 = vmatprep.subr.mxu0 0.0
    %801 = vmatpush1.msra.mxu0 0.0
    %802 = vmatprep.subr.mxu0 0.0
    %803 = vmatpush1.msra.mxu0 0.0
    %804 = vmatprep.subr.mxu0 0.0
    %805 = vmatpush1.msra.mxu0 0.0
    %806 = vmatprep.subr.mxu0 0.0
    %807 = vmatpush1.msra.mxu0 0.0
    %808 = vmatprep.subr.mxu0 0.0
    %809 = vmatpush1.msra.mxu0 0.0
    %810 = vmatprep.subr.mxu0 0.0
    %811 = vmatpush1.msra.mxu0 0.0
    %812 = vmatprep.subr.mxu0 0.0
    %813 = vmatpush1.msra.mxu0 0.0
    %814 = vmatprep.subr.mxu0 0.0
    %815 = vmatpush1.msra.mxu0 0.0
    %816 = vmatprep.subr.mxu0 0.0
    %817 = vmatpush1.msra.mxu0 0.0
    %818 = vmatprep.subr.mxu0 0.0
    %819 = vmatpush1.msra.mxu0 0.0
    %820 = vmatprep.subr.mxu0 0.0
    %821 = vmatpush1.msra.mxu0 0.0
    %822 = vmatprep.subr.mxu0 0.0
    %823 = vmatpush1.msra.mxu0 0.0
    %824 = vmatprep.subr.mxu0 0.0
    %825 = vmatpush1.msra.mxu0 0.0
    %826 = vmatprep.subr.mxu0 0.0
    %827 = vmatpush1.msra.mxu0 0.0
    %828 = vmatprep.subr.mxu0 0.0
    %829 = vmatpush1.msra.mxu0 0.0
    %830 = vmatprep.subr.mxu0 0.0
    %831 = vmatpush1.msra.mxu0 0.0
    %832 = vmatprep.subr.mxu0 0.0
    %833 = vmatpush1.msra.mxu0 0.0
    %834 = vmatprep.subr.mxu0 0.0
    %835 = vmatpush1.msra.mxu0 0.0
    %836 = vmatprep.subr.mxu0 0.0
    %837 = vmatpush1.msra.mxu0 0.0
    %838 = vmatprep.subr.mxu0 0.0
    %839 = vmatpush1.msra.mxu0 0.0
    %840 = vmatprep.subr.mxu0 0.0
    %841 = vmatpush1.msra.mxu0 0.0
    %842 = vmatprep.subr.mxu0 0.0
    %843 = vmatpush1.msra.mxu0 0.0
    %844 = vmatprep.subr.mxu0 0.0
    %845 = vmatpush1.msra.mxu0 0.0
    %846 = vmatprep.subr.mxu0 0.0
    %847 = vmatpush1.msra.mxu0 0.0
    %848 = vmatprep.mubr.f32.mxu0 0.0
    %849 = vmatmul.mubr.f32.gmra.mrb[0].mxu0 %v782
    %v850 = vpop.f32.mrb[0].mxu0
    %v851 = vadd.f32 0.0, %v850
    %v852 = vpop.f32.mrb[0].mxu0
    %853 = vdwg.mxu0
    %v854 = vadd.f32 %v609, %v851
    %855 = vrot.lane.b32.xlu0 %v121, 104
    %v856 = vpop.permute.xlu0 %855
    %857 = vrot.lane.b32.xlu0 %v121, 72
    %v858 = vpop.permute.xlu0 %857
    %v859 = vsel %vm132, %v856, 0
    %v861 = vsel %vm132, %v858, 0
    %863 = vmatprep.subr.mxu0 0.0
    %864 = vmatpush1.xpose.msra.mxu0 %v861
    %865 = vmatprep.subr.mxu0 0.0
    %866 = vmatpush1.xpose.msra.mxu0 0.0
    %867 = vmatprep.subr.mxu0 0.0
    %868 = vmatpush1.xpose.msra.mxu0 0.0
    %869 = vmatprep.subr.mxu0 0.0
    %870 = vmatpush1.xpose.msra.mxu0 0.0
    %871 = vmatprep.subr.mxu0 0.0
    %872 = vmatpush1.xpose.msra.mxu0 0.0
    %873 = vmatprep.subr.mxu0 0.0
    %874 = vmatpush1.xpose.msra.mxu0 0.0
    %875 = vmatprep.subr.mxu0 0.0
    %876 = vmatpush1.xpose.msra.mxu0 0.0
    %877 = vmatprep.subr.mxu0 0.0
    %878 = vmatpush1.xpose.msra.mxu0 0.0
    %879 = vmatprep.subr.mxu0 0.0
    %880 = vmatpush1.xpose.msra.mxu0 0.0
    %881 = vmatprep.subr.mxu0 0.0
    %882 = vmatpush1.xpose.msra.mxu0 0.0
    %883 = vmatprep.subr.mxu0 0.0
    %884 = vmatpush1.xpose.msra.mxu0 0.0
    %885 = vmatprep.subr.mxu0 0.0
    %886 = vmatpush1.xpose.msra.mxu0 0.0
    %887 = vmatprep.subr.mxu0 0.0
    %888 = vmatpush1.xpose.msra.mxu0 0.0
    %889 = vmatprep.subr.mxu0 0.0
    %890 = vmatpush1.xpose.msra.mxu0 0.0
    %891 = vmatprep.subr.mxu0 0.0
    %892 = vmatpush1.xpose.msra.mxu0 0.0
    %893 = vmatprep.subr.mxu0 0.0
    %894 = vmatpush1.xpose.msra.mxu0 0.0
    %895 = vmatprep.subr.mxu0 0.0
    %896 = vmatpush1.xpose.msra.mxu0 0.0
    %897 = vmatprep.subr.mxu0 0.0
    %898 = vmatpush1.xpose.msra.mxu0 0.0
    %899 = vmatprep.subr.mxu0 0.0
    %900 = vmatpush1.xpose.msra.mxu0 0.0
    %901 = vmatprep.subr.mxu0 0.0
    %902 = vmatpush1.xpose.msra.mxu0 0.0
    %903 = vmatprep.subr.mxu0 0.0
    %904 = vmatpush1.xpose.msra.mxu0 0.0
    %905 = vmatprep.subr.mxu0 0.0
    %906 = vmatpush1.xpose.msra.mxu0 0.0
    %907 = vmatprep.subr.mxu0 0.0
    %908 = vmatpush1.xpose.msra.mxu0 0.0
    %909 = vmatprep.subr.mxu0 0.0
    %910 = vmatpush1.xpose.msra.mxu0 0.0
    %911 = vmatprep.subr.mxu0 0.0
    %912 = vmatpush1.xpose.msra.mxu0 0.0
    %913 = vmatprep.subr.mxu0 0.0
    %914 = vmatpush1.xpose.msra.mxu0 0.0
    %915 = vmatprep.subr.mxu0 0.0
    %916 = vmatpush1.xpose.msra.mxu0 0.0
    %917 = vmatprep.subr.mxu0 0.0
    %918 = vmatpush1.xpose.msra.mxu0 0.0
    %919 = vmatprep.subr.mxu0 0.0
    %920 = vmatpush1.xpose.msra.mxu0 0.0
    %921 = vmatprep.subr.mxu0 0.0
    %922 = vmatpush1.xpose.msra.mxu0 0.0
    %923 = vmatprep.subr.mxu0 0.0
    %924 = vmatpush1.xpose.msra.mxu0 0.0
    %925 = vmatprep.subr.mxu0 0.0
    %926 = vmatpush1.xpose.msra.mxu0 0.0
    %927 = vmatprep.mubr.f32.mxu0 0.0
    %928 = vmatmul.mubr.f32.gmra.mrb[0].mxu0 %v859
    %v929 = vpop.f32.mrb[0].mxu0
    %v930 = vadd.f32 0.0, %v929
    %v931 = vpop.f32.mrb[0].mxu0
    %932 = vdwg.mxu0
    %v933 = vmul.f32 %v930, 0.35355338
    %v934 = vsel %vm132, %v933, -inf
    %935 = vmax.xlane.f32.xlu0 %v934
    %v936 = vpop.xlane.xlu0 %935
    %v937 = vsub.f32 %v933, %v936
    %v938 = vmul.f32 %v937, 1.442695
    %v939 = vpow.pop %v938
    %v940 = vsel %vm132, %v939, 0.0
    %941 = vadd.xlane.f32.xlu0 %v940
    %v942 = vpop.xlane.xlu0 %941
    %v943 = vrcp.pop %v942
    %v944 = vmul.f32 %v939, %v943
    %s945 = scalar_lea.vmem [#allocation2], 24
    %946 = vst.msk [vmem:[%s945] sm:$0xff] %vm132, %v944
    %947 = vrot.lane.b32.xlu0 %v121, 40
    %v948 = vpop.permute.xlu0 %947
    %v951 = vsel %vm132, %v944, 0
    %953 = vmatprep.subr.mxu0 0.0
    %954 = vmatpush1.msra.mxu0 %v948
    %955 = vmatprep.subr.mxu0 0.0
    %956 = vmatpush1.msra.mxu0 0.0
    %957 = vmatprep.subr.mxu0 0.0
    %958 = vmatpush1.msra.mxu0 0.0
    %959 = vmatprep.subr.mxu0 0.0
    %960 = vmatpush1.msra.mxu0 0.0
    %961 = vmatprep.subr.mxu0 0.0
    %962 = vmatpush1.msra.mxu0 0.0
    %963 = vmatprep.subr.mxu0 0.0
    %964 = vmatpush1.msra.mxu0 0.0
    %965 = vmatprep.subr.mxu0 0.0
    %966 = vmatpush1.msra.mxu0 0.0
    %967 = vmatprep.subr.mxu0 0.0
    %968 = vmatpush1.msra.mxu0 0.0
    %969 = vmatprep.subr.mxu0 0.0
    %970 = vmatpush1.msra.mxu0 0.0
    %971 = vmatprep.subr.mxu0 0.0
    %972 = vmatpush1.msra.mxu0 0.0
    %973 = vmatprep.subr.mxu0 0.0
    %974 = vmatpush1.msra.mxu0 0.0
    %975 = vmatprep.subr.mxu0 0.0
    %976 = vmatpush1.msra.mxu0 0.0
    %977 = vmatprep.subr.mxu0 0.0
    %978 = vmatpush1.msra.mxu0 0.0
    %979 = vmatprep.subr.mxu0 0.0
    %980 = vmatpush1.msra.mxu0 0.0
    %981 = vmatprep.subr.mxu0 0.0
    %982 = vmatpush1.msra.mxu0 0.0
    %983 = vmatprep.subr.mxu0 0.0
    %984 = vmatpush1.msra.mxu0 0.0
    %985 = vmatprep.subr.mxu0 0.0
    %986 = vmatpush1.msra.mxu0 0.0
    %987 = vmatprep.subr.mxu0 0.0
    %988 = vmatpush1.msra.mxu0 0.0
    %989 = vmatprep.subr.mxu0 0.0
    %990 = vmatpush1.msra.mxu0 0.0
    %991 = vmatprep.subr.mxu0 0.0
    %992 = vmatpush1.msra.mxu0 0.0
    %993 = vmatprep.subr.mxu0 0.0
    %994 = vmatpush1.msra.mxu0 0.0
    %995 = vmatprep.subr.mxu0 0.0
    %996 = vmatpush1.msra.mxu0 0.0
    %997 = vmatprep.subr.mxu0 0.0
    %998 = vmatpush1.msra.mxu0 0.0
    %999 = vmatprep.subr.mxu0 0.0
    %1000 = vmatpush1.msra.mxu0 0.0
    %1001 = vmatprep.subr.mxu0 0.0
    %1002 = vmatpush1.msra.mxu0 0.0
    %1003 = vmatprep.subr.mxu0 0.0
    %1004 = vmatpush1.msra.mxu0 0.0
    %1005 = vmatprep.subr.mxu0 0.0
    %1006 = vmatpush1.msra.mxu0 0.0
    %1007 = vmatprep.subr.mxu0 0.0
    %1008 = vmatpush1.msra.mxu0 0.0
    %1009 = vmatprep.subr.mxu0 0.0
    %1010 = vmatpush1.msra.mxu0 0.0
    %1011 = vmatprep.subr.mxu0 0.0
    %1012 = vmatpush1.msra.mxu0 0.0
    %1013 = vmatprep.subr.mxu0 0.0
    %1014 = vmatpush1.msra.mxu0 0.0
    %1015 = vmatprep.subr.mxu0 0.0
    %1016 = vmatpush1.msra.mxu0 0.0
    %1017 = vmatprep.mubr.f32.mxu0 0.0
    %1018 = vmatmul.mubr.f32.gmra.mrb[0].mxu0 %v951
    %v1019 = vpop.f32.mrb[0].mxu0
    %v1020 = vadd.f32 0.0, %v1019
    %v1021 = vpop.f32.mrb[0].mxu0
    %1022 = vdwg.mxu0
    %v1023 = vld [vmem:[%s2 + $0x18] sm:$0xff]
    %v1025 = vsel %vm132, %v1020, 0
    %1027 = vmatprep.subr.mxu0 0.0
    %1028 = vmatpush1.msra.mxu0 %v1023
    %1029 = vmatprep.subr.mxu0 0.0
    %1030 = vmatpush1.msra.mxu0 0.0
    %1031 = vmatprep.subr.mxu0 0.0
    %1032 = vmatpush1.msra.mxu0 0.0
    %1033 = vmatprep.subr.mxu0 0.0
    %1034 = vmatpush1.msra.mxu0 0.0
    %1035 = vmatprep.subr.mxu0 0.0
    %1036 = vmatpush1.msra.mxu0 0.0
    %1037 = vmatprep.subr.mxu0 0.0
    %1038 = vmatpush1.msra.mxu0 0.0
    %1039 = vmatprep.subr.mxu0 0.0
    %1040 = vmatpush1.msra.mxu0 0.0
    %1041 = vmatprep.subr.mxu0 0.0
    %1042 = vmatpush1.msra.mxu0 0.0
    %1043 = vmatprep.subr.mxu0 0.0
    %1044 = vmatpush1.msra.mxu0 0.0
    %1045 = vmatprep.subr.mxu0 0.0
    %1046 = vmatpush1.msra.mxu0 0.0
    %1047 = vmatprep.subr.mxu0 0.0
    %1048 = vmatpush1.msra.mxu0 0.0
    %1049 = vmatprep.subr.mxu0 0.0
    %1050 = vmatpush1.msra.mxu0 0.0
    %1051 = vmatprep.subr.mxu0 0.0
    %1052 = vmatpush1.msra.mxu0 0.0
    %1053 = vmatprep.subr.mxu0 0.0
    %1054 = vmatpush1.msra.mxu0 0.0
    %1055 = vmatprep.subr.mxu0 0.0
    %1056 = vmatpush1.msra.mxu0 0.0
    %1057 = vmatprep.subr.mxu0 0.0
    %1058 = vmatpush1.msra.mxu0 0.0
    %1059 = vmatprep.subr.mxu0 0.0
    %1060 = vmatpush1.msra.mxu0 0.0
    %1061 = vmatprep.subr.mxu0 0.0
    %1062 = vmatpush1.msra.mxu0 0.0
    %1063 = vmatprep.subr.mxu0 0.0
    %1064 = vmatpush1.msra.mxu0 0.0
    %1065 = vmatprep.subr.mxu0 0.0
    %1066 = vmatpush1.msra.mxu0 0.0
    %1067 = vmatprep.subr.mxu0 0.0
    %1068 = vmatpush1.msra.mxu0 0.0
    %1069 = vmatprep.subr.mxu0 0.0
    %1070 = vmatpush1.msra.mxu0 0.0
    %1071 = vmatprep.subr.mxu0 0.0
    %1072 = vmatpush1.msra.mxu0 0.0
    %1073 = vmatprep.subr.mxu0 0.0
    %1074 = vmatpush1.msra.mxu0 0.0
    %1075 = vmatprep.subr.mxu0 0.0
    %1076 = vmatpush1.msra.mxu0 0.0
    %1077 = vmatprep.subr.mxu0 0.0
    %1078 = vmatpush1.msra.mxu0 0.0
    %1079 = vmatprep.subr.mxu0 0.0
    %1080 = vmatpush1.msra.mxu0 0.0
    %1081 = vmatprep.subr.mxu0 0.0
    %1082 = vmatpush1.msra.mxu0 0.0
    %1083 = vmatprep.subr.mxu0 0.0
    %1084 = vmatpush1.msra.mxu0 0.0
    %1085 = vmatprep.subr.mxu0 0.0
    %1086 = vmatpush1.msra.mxu0 0.0
    %1087 = vmatprep.subr.mxu0 0.0
    %1088 = vmatpush1.msra.mxu0 0.0
    %1089 = vmatprep.subr.mxu0 0.0
    %1090 = vmatpush1.msra.mxu0 0.0
    %1091 = vmatprep.mubr.f32.mxu0 0.0
    %1092 = vmatmul.mubr.f32.gmra.mrb[0].mxu0 %v1025
    %v1093 = vpop.f32.mrb[0].mxu0
    %v1094 = vadd.f32 0.0, %v1093
    %v1095 = vpop.f32.mrb[0].mxu0
    %1096 = vdwg.mxu0
    %v1097 = vadd.f32 %v854, %v1094
    %1099 = vrot.lane.b32.xlu0 %v126, 96
    %v1100 = vpop.permute.xlu0 %1099
    %v1101 = vsel %vm132, %v126, 0
    %v1103 = vsel %vm132, %v1100, 0
    %1105 = vmatprep.subr.mxu0 0.0
    %1106 = vmatpush1.xpose.msra.mxu0 %v1103
    %1107 = vmatprep.subr.mxu0 0.0
    %1108 = vmatpush1.xpose.msra.mxu0 0.0
    %1109 = vmatprep.subr.mxu0 0.0
    %1110 = vmatpush1.xpose.msra.mxu0 0.0
    %1111 = vmatprep.subr.mxu0 0.0
    %1112 = vmatpush1.xpose.msra.mxu0 0.0
    %1113 = vmatprep.subr.mxu0 0.0
    %1114 = vmatpush1.xpose.msra.mxu0 0.0
    %1115 = vmatprep.subr.mxu0 0.0
    %1116 = vmatpush1.xpose.msra.mxu0 0.0
    %1117 = vmatprep.subr.mxu0 0.0
    %1118 = vmatpush1.xpose.msra.mxu0 0.0
    %1119 = vmatprep.subr.mxu0 0.0
    %1120 = vmatpush1.xpose.msra.mxu0 0.0
    %1121 = vmatprep.subr.mxu0 0.0
    %1122 = vmatpush1.xpose.msra.mxu0 0.0
    %1123 = vmatprep.subr.mxu0 0.0
    %1124 = vmatpush1.xpose.msra.mxu0 0.0
    %1125 = vmatprep.subr.mxu0 0.0
    %1126 = vmatpush1.xpose.msra.mxu0 0.0
    %1127 = vmatprep.subr.mxu0 0.0
    %1128 = vmatpush1.xpose.msra.mxu0 0.0
    %1129 = vmatprep.subr.mxu0 0.0
    %1130 = vmatpush1.xpose.msra.mxu0 0.0
    %1131 = vmatprep.subr.mxu0 0.0
    %1132 = vmatpush1.xpose.msra.mxu0 0.0
    %1133 = vmatprep.subr.mxu0 0.0
    %1134 = vmatpush1.xpose.msra.mxu0 0.0
    %1135 = vmatprep.subr.mxu0 0.0
    %1136 = vmatpush1.xpose.msra.mxu0 0.0
    %1137 = vmatprep.subr.mxu0 0.0
    %1138 = vmatpush1.xpose.msra.mxu0 0.0
    %1139 = vmatprep.subr.mxu0 0.0
    %1140 = vmatpush1.xpose.msra.mxu0 0.0
    %1141 = vmatprep.subr.mxu0 0.0
    %1142 = vmatpush1.xpose.msra.mxu0 0.0
    %1143 = vmatprep.subr.mxu0 0.0
    %1144 = vmatpush1.xpose.msra.mxu0 0.0
    %1145 = vmatprep.subr.mxu0 0.0
    %1146 = vmatpush1.xpose.msra.mxu0 0.0
    %1147 = vmatprep.subr.mxu0 0.0
    %1148 = vmatpush1.xpose.msra.mxu0 0.0
    %1149 = vmatprep.subr.mxu0 0.0
    %1150 = vmatpush1.xpose.msra.mxu0 0.0
    %1151 = vmatprep.subr.mxu0 0.0
    %1152 = vmatpush1.xpose.msra.mxu0 0.0
    %1153 = vmatprep.subr.mxu0 0.0
    %1154 = vmatpush1.xpose.msra.mxu0 0.0
    %1155 = vmatprep.subr.mxu0 0.0
    %1156 = vmatpush1.xpose.msra.mxu0 0.0
    %1157 = vmatprep.subr.mxu0 0.0
    %1158 = vmatpush1.xpose.msra.mxu0 0.0
    %1159 = vmatprep.subr.mxu0 0.0
    %1160 = vmatpush1.xpose.msra.mxu0 0.0
    %1161 = vmatprep.subr.mxu0 0.0
    %1162 = vmatpush1.xpose.msra.mxu0 0.0
    %1163 = vmatprep.subr.mxu0 0.0
    %1164 = vmatpush1.xpose.msra.mxu0 0.0
    %1165 = vmatprep.subr.mxu0 0.0
    %1166 = vmatpush1.xpose.msra.mxu0 0.0
    %1167 = vmatprep.subr.mxu0 0.0
    %1168 = vmatpush1.xpose.msra.mxu0 0.0
    %1169 = vmatprep.mubr.f32.mxu0 0.0
    %1170 = vmatmul.mubr.f32.gmra.mrb[0].mxu0 %v1101
    %v1171 = vpop.f32.mrb[0].mxu0
    %v1172 = vadd.f32 0.0, %v1171
    %v1173 = vpop.f32.mrb[0].mxu0
    %1174 = vdwg.mxu0
    %v1175 = vmul.f32 %v1172, 0.35355338
    %v1176 = vsel %vm132, %v1175, -inf
    %1177 = vmax.xlane.f32.xlu0 %v1176
    %v1178 = vpop.xlane.xlu0 %1177
    %v1179 = vsub.f32 %v1175, %v1178
    %v1180 = vmul.f32 %v1179, 1.442695
    %v1181 = vpow.pop %v1180
    %v1182 = vsel %vm132, %v1181, 0.0
    %1183 = vadd.xlane.f32.xlu0 %v1182
    %v1184 = vpop.xlane.xlu0 %1183
    %v1185 = vrcp.pop %v1184
    %v1186 = vmul.f32 %v1181, %v1185
    %s1187 = scalar_lea.vmem [#allocation2], 32
    %1188 = vst.msk [vmem:[%s1187] sm:$0xff] %vm132, %v1186
    %1189 = vrot.lane.b32.xlu0 %v126, 64
    %v1190 = vpop.permute.xlu0 %1189
    %v1193 = vsel %vm132, %v1186, 0
    %1195 = vmatprep.subr.mxu0 0.0
    %1196 = vmatpush1.msra.mxu0 %v1190
    %1197 = vmatprep.subr.mxu0 0.0
    %1198 = vmatpush1.msra.mxu0 0.0
    %1199 = vmatprep.subr.mxu0 0.0
    %1200 = vmatpush1.msra.mxu0 0.0
    %1201 = vmatprep.subr.mxu0 0.0
    %1202 = vmatpush1.msra.mxu0 0.0
    %1203 = vmatprep.subr.mxu0 0.0
    %1204 = vmatpush1.msra.mxu0 0.0
    %1205 = vmatprep.subr.mxu0 0.0
    %1206 = vmatpush1.msra.mxu0 0.0
    %1207 = vmatprep.subr.mxu0 0.0
    %1208 = vmatpush1.msra.mxu0 0.0
    %1209 = vmatprep.subr.mxu0 0.0
    %1210 = vmatpush1.msra.mxu0 0.0
    %1211 = vmatprep.subr.mxu0 0.0
    %1212 = vmatpush1.msra.mxu0 0.0
    %1213 = vmatprep.subr.mxu0 0.0
    %1214 = vmatpush1.msra.mxu0 0.0
    %1215 = vmatprep.subr.mxu0 0.0
    %1216 = vmatpush1.msra.mxu0 0.0
    %1217 = vmatprep.subr.mxu0 0.0
    %1218 = vmatpush1.msra.mxu0 0.0
    %1219 = vmatprep.subr.mxu0 0.0
    %1220 = vmatpush1.msra.mxu0 0.0
    %1221 = vmatprep.subr.mxu0 0.0
    %1222 = vmatpush1.msra.mxu0 0.0
    %1223 = vmatprep.subr.mxu0 0.0
    %1224 = vmatpush1.msra.mxu0 0.0
    %1225 = vmatprep.subr.mxu0 0.0
    %1226 = vmatpush1.msra.mxu0 0.0
    %1227 = vmatprep.subr.mxu0 0.0
    %1228 = vmatpush1.msra.mxu0 0.0
    %1229 = vmatprep.subr.mxu0 0.0
    %1230 = vmatpush1.msra.mxu0 0.0
    %1231 = vmatprep.subr.mxu0 0.0
    %1232 = vmatpush1.msra.mxu0 0.0
    %1233 = vmatprep.subr.mxu0 0.0
    %1234 = vmatpush1.msra.mxu0 0.0
    %1235 = vmatprep.subr.mxu0 0.0
    %1236 = vmatpush1.msra.mxu0 0.0
    %1237 = vmatprep.subr.mxu0 0.0
    %1238 = vmatpush1.msra.mxu0 0.0
    %1239 = vmatprep.subr.mxu0 0.0
    %1240 = vmatpush1.msra.mxu0 0.0
    %1241 = vmatprep.subr.mxu0 0.0
    %1242 = vmatpush1.msra.mxu0 0.0
    %1243 = vmatprep.subr.mxu0 0.0
    %1244 = vmatpush1.msra.mxu0 0.0
    %1245 = vmatprep.subr.mxu0 0.0
    %1246 = vmatpush1.msra.mxu0 0.0
    %1247 = vmatprep.subr.mxu0 0.0
    %1248 = vmatpush1.msra.mxu0 0.0
    %1249 = vmatprep.subr.mxu0 0.0
    %1250 = vmatpush1.msra.mxu0 0.0
    %1251 = vmatprep.subr.mxu0 0.0
    %1252 = vmatpush1.msra.mxu0 0.0
    %1253 = vmatprep.subr.mxu0 0.0
    %1254 = vmatpush1.msra.mxu0 0.0
    %1255 = vmatprep.subr.mxu0 0.0
    %1256 = vmatpush1.msra.mxu0 0.0
    %1257 = vmatprep.subr.mxu0 0.0
    %1258 = vmatpush1.msra.mxu0 0.0
    %1259 = vmatprep.mubr.f32.mxu0 0.0
    %1260 = vmatmul.mubr.f32.gmra.mrb[0].mxu0 %v1193
    %v1261 = vpop.f32.mrb[0].mxu0
    %v1262 = vadd.f32 0.0, %v1261
    %v1263 = vpop.f32.mrb[0].mxu0
    %1264 = vdwg.mxu0
    %v1265 = vld [vmem:[%s2] sm:$0xff]
    %1266 = vrot.lane.b32.xlu0 %v126, 120
    %v1267 = vpop.permute.xlu0 %1266
    %1268 = vrot.lane.b32.xlu0 %v126, 88
    %v1269 = vpop.permute.xlu0 %1268
    %v1270 = vsel %vm132, %v1267, 0
    %v1272 = vsel %vm132, %v1269, 0
    %1274 = vmatprep.subr.mxu0 0.0
    %1275 = vmatpush1.xpose.msra.mxu0 %v1272
    %1276 = vmatprep.subr.mxu0 0.0
    %1277 = vmatpush1.xpose.msra.mxu0 0.0
    %1278 = vmatprep.subr.mxu0 0.0
    %1279 = vmatpush1.xpose.msra.mxu0 0.0
    %1280 = vmatprep.subr.mxu0 0.0
    %1281 = vmatpush1.xpose.msra.mxu0 0.0
    %1282 = vmatprep.subr.mxu0 0.0
    %1283 = vmatpush1.xpose.msra.mxu0 0.0
    %1284 = vmatprep.subr.mxu0 0.0
    %1285 = vmatpush1.xpose.msra.mxu0 0.0
    %1286 = vmatprep.subr.mxu0 0.0
    %1287 = vmatpush1.xpose.msra.mxu0 0.0
    %1288 = vmatprep.subr.mxu0 0.0
    %1289 = vmatpush1.xpose.msra.mxu0 0.0
    %1290 = vmatprep.subr.mxu0 0.0
    %1291 = vmatpush1.xpose.msra.mxu0 0.0
    %1292 = vmatprep.subr.mxu0 0.0
    %1293 = vmatpush1.xpose.msra.mxu0 0.0
    %1294 = vmatprep.subr.mxu0 0.0
    %1295 = vmatpush1.xpose.msra.mxu0 0.0
    %1296 = vmatprep.subr.mxu0 0.0
    %1297 = vmatpush1.xpose.msra.mxu0 0.0
    %1298 = vmatprep.subr.mxu0 0.0
    %1299 = vmatpush1.xpose.msra.mxu0 0.0
    %1300 = vmatprep.subr.mxu0 0.0
    %1301 = vmatpush1.xpose.msra.mxu0 0.0
    %1302 = vmatprep.subr.mxu0 0.0
    %1303 = vmatpush1.xpose.msra.mxu0 0.0
    %1304 = vmatprep.subr.mxu0 0.0
    %1305 = vmatpush1.xpose.msra.mxu0 0.0
    %1306 = vmatprep.subr.mxu0 0.0
    %1307 = vmatpush1.xpose.msra.mxu0 0.0
    %1308 = vmatprep.subr.mxu0 0.0
    %1309 = vmatpush1.xpose.msra.mxu0 0.0
    %1310 = vmatprep.subr.mxu0 0.0
    %1311 = vmatpush1.xpose.msra.mxu0 0.0
    %1312 = vmatprep.subr.mxu0 0.0
    %1313 = vmatpush1.xpose.msra.mxu0 0.0
    %1314 = vmatprep.subr.mxu0 0.0
    %1315 = vmatpush1.xpose.msra.mxu0 0.0
    %1316 = vmatprep.subr.mxu0 0.0
    %1317 = vmatpush1.xpose.msra.mxu0 0.0
    %1318 = vmatprep.subr.mxu0 0.0
    %1319 = vmatpush1.xpose.msra.mxu0 0.0
    %1320 = vmatprep.subr.mxu0 0.0
    %1321 = vmatpush1.xpose.msra.mxu0 0.0
    %1322 = vmatprep.subr.mxu0 0.0
    %1323 = vmatpush1.xpose.msra.mxu0 0.0
    %1324 = vmatprep.subr.mxu0 0.0
    %1325 = vmatpush1.xpose.msra.mxu0 0.0
    %1326 = vmatprep.subr.mxu0 0.0
    %1327 = vmatpush1.xpose.msra.mxu0 0.0
    %1328 = vmatprep.subr.mxu0 0.0
    %1329 = vmatpush1.xpose.msra.mxu0 0.0
    %1330 = vmatprep.subr.mxu0 0.0
    %1331 = vmatpush1.xpose.msra.mxu0 0.0
    %1332 = vmatprep.subr.mxu0 0.0
    %1333 = vmatpush1.xpose.msra.mxu0 0.0
    %1334 = vmatprep.subr.mxu0 0.0
    %1335 = vmatpush1.xpose.msra.mxu0 0.0
    %1336 = vmatprep.subr.mxu0 0.0
    %1337 = vmatpush1.xpose.msra.mxu0 0.0
    %1338 = vmatprep.mubr.f32.mxu0 0.0
    %1339 = vmatmul.mubr.f32.gmra.mrb[0].mxu0 %v1270
    %v1340 = vpop.f32.mrb[0].mxu0
    %v1341 = vadd.f32 0.0, %v1340
    %v1342 = vpop.f32.mrb[0].mxu0
    %1343 = vdwg.mxu0
    %v1344 = vmul.f32 %v1341, 0.35355338
    %v1345 = vsel %vm132, %v1344, -inf
    %1346 = vmax.xlane.f32.xlu0 %v1345
    %v1347 = vpop.xlane.xlu0 %1346
    %v1348 = vsub.f32 %v1344, %v1347
    %v1349 = vmul.f32 %v1348, 1.442695
    %v1350 = vpow.pop %v1349
    %v1351 = vsel %vm132, %v1350, 0.0
    %1352 = vadd.xlane.f32.xlu0 %v1351
    %v1353 = vpop.xlane.xlu0 %1352
    %v1354 = vrcp.pop %v1353
    %v1355 = vmul.f32 %v1350, %v1354
    %s1356 = scalar_lea.vmem [#allocation2], 40
    %1357 = vst.msk [vmem:[%s1356] sm:$0xff] %vm132, %v1355
    %1358 = vrot.lane.b32.xlu0 %v126, 56
    %v1359 = vpop.permute.xlu0 %1358
    %v1362 = vsel %vm132, %v1355, 0
    %1364 = vmatprep.subr.mxu0 0.0
    %1365 = vmatpush1.msra.mxu0 %v1359
    %1366 = vmatprep.subr.mxu0 0.0
    %1367 = vmatpush1.msra.mxu0 0.0
    %1368 = vmatprep.subr.mxu0 0.0
    %1369 = vmatpush1.msra.mxu0 0.0
    %1370 = vmatprep.subr.mxu0 0.0
    %1371 = vmatpush1.msra.mxu0 0.0
    %1372 = vmatprep.subr.mxu0 0.0
    %1373 = vmatpush1.msra.mxu0 0.0
    %1374 = vmatprep.subr.mxu0 0.0
    %1375 = vmatpush1.msra.mxu0 0.0
    %1376 = vmatprep.subr.mxu0 0.0
    %1377 = vmatpush1.msra.mxu0 0.0
    %1378 = vmatprep.subr.mxu0 0.0
    %1379 = vmatpush1.msra.mxu0 0.0
    %1380 = vmatprep.subr.mxu0 0.0
    %1381 = vmatpush1.msra.mxu0 0.0
    %1382 = vmatprep.subr.mxu0 0.0
    %1383 = vmatpush1.msra.mxu0 0.0
    %1384 = vmatprep.subr.mxu0 0.0
    %1385 = vmatpush1.msra.mxu0 0.0
    %1386 = vmatprep.subr.mxu0 0.0
    %1387 = vmatpush1.msra.mxu0 0.0
    %1388 = vmatprep.subr.mxu0 0.0
    %1389 = vmatpush1.msra.mxu0 0.0
    %1390 = vmatprep.subr.mxu0 0.0
    %1391 = vmatpush1.msra.mxu0 0.0
    %1392 = vmatprep.subr.mxu0 0.0
    %1393 = vmatpush1.msra.mxu0 0.0
    %1394 = vmatprep.subr.mxu0 0.0
    %1395 = vmatpush1.msra.mxu0 0.0
    %1396 = vmatprep.subr.mxu0 0.0
    %1397 = vmatpush1.msra.mxu0 0.0
    %1398 = vmatprep.subr.mxu0 0.0
    %1399 = vmatpush1.msra.mxu0 0.0
    %1400 = vmatprep.subr.mxu0 0.0
    %1401 = vmatpush1.msra.mxu0 0.0
    %1402 = vmatprep.subr.mxu0 0.0
    %1403 = vmatpush1.msra.mxu0 0.0
    %1404 = vmatprep.subr.mxu0 0.0
    %1405 = vmatpush1.msra.mxu0 0.0
    %1406 = vmatprep.subr.mxu0 0.0
    %1407 = vmatpush1.msra.mxu0 0.0
    %1408 = vmatprep.subr.mxu0 0.0
    %1409 = vmatpush1.msra.mxu0 0.0
    %1410 = vmatprep.subr.mxu0 0.0
    %1411 = vmatpush1.msra.mxu0 0.0
    %1412 = vmatprep.subr.mxu0 0.0
    %1413 = vmatpush1.msra.mxu0 0.0
    %1414 = vmatprep.subr.mxu0 0.0
    %1415 = vmatpush1.msra.mxu0 0.0
    %1416 = vmatprep.subr.mxu0 0.0
    %1417 = vmatpush1.msra.mxu0 0.0
    %1418 = vmatprep.subr.mxu0 0.0
    %1419 = vmatpush1.msra.mxu0 0.0
    %1420 = vmatprep.subr.mxu0 0.0
    %1421 = vmatpush1.msra.mxu0 0.0
    %1422 = vmatprep.subr.mxu0 0.0
    %1423 = vmatpush1.msra.mxu0 0.0
    %1424 = vmatprep.subr.mxu0 0.0
    %1425 = vmatpush1.msra.mxu0 0.0
    %1426 = vmatprep.subr.mxu0 0.0
    %1427 = vmatpush1.msra.mxu0 0.0
    %1428 = vmatprep.mubr.f32.mxu0 0.0
    %1429 = vmatmul.mubr.f32.gmra.mrb[0].mxu0 %v1362
    %v1430 = vpop.f32.mrb[0].mxu0
    %v1431 = vadd.f32 0.0, %v1430
    %v1432 = vpop.f32.mrb[0].mxu0
    %1433 = vdwg.mxu0
    %v1434 = vld [vmem:[%s2 + $0x8] sm:$0xff]
    %v1436 = vsel %vm132, %v1431, 0
    %1438 = vmatprep.subr.mxu0 0.0
    %1439 = vmatpush1.msra.mxu0 %v1434
    %1440 = vmatprep.subr.mxu0 0.0
    %1441 = vmatpush1.msra.mxu0 0.0
    %1442 = vmatprep.subr.mxu0 0.0
    %1443 = vmatpush1.msra.mxu0 0.0
    %1444 = vmatprep.subr.mxu0 0.0
    %1445 = vmatpush1.msra.mxu0 0.0
    %1446 = vmatprep.subr.mxu0 0.0
    %1447 = vmatpush1.msra.mxu0 0.0
    %1448 = vmatprep.subr.mxu0 0.0
    %1449 = vmatpush1.msra.mxu0 0.0
    %1450 = vmatprep.subr.mxu0 0.0
    %1451 = vmatpush1.msra.mxu0 0.0
    %1452 = vmatprep.subr.mxu0 0.0
    %1453 = vmatpush1.msra.mxu0 0.0
    %1454 = vmatprep.subr.mxu0 0.0
    %1455 = vmatpush1.msra.mxu0 0.0
    %1456 = vmatprep.subr.mxu0 0.0
    %1457 = vmatpush1.msra.mxu0 0.0
    %1458 = vmatprep.subr.mxu0 0.0
    %1459 = vmatpush1.msra.mxu0 0.0
    %1460 = vmatprep.subr.mxu0 0.0
    %1461 = vmatpush1.msra.mxu0 0.0
    %1462 = vmatprep.subr.mxu0 0.0
    %1463 = vmatpush1.msra.mxu0 0.0
    %1464 = vmatprep.subr.mxu0 0.0
    %1465 = vmatpush1.msra.mxu0 0.0
    %1466 = vmatprep.subr.mxu0 0.0
    %1467 = vmatpush1.msra.mxu0 0.0
    %1468 = vmatprep.subr.mxu0 0.0
    %1469 = vmatpush1.msra.mxu0 0.0
    %1470 = vmatprep.subr.mxu0 0.0
    %1471 = vmatpush1.msra.mxu0 0.0
    %1472 = vmatprep.subr.mxu0 0.0
    %1473 = vmatpush1.msra.mxu0 0.0
    %1474 = vmatprep.subr.mxu0 0.0
    %1475 = vmatpush1.msra.mxu0 0.0
    %1476 = vmatprep.subr.mxu0 0.0
    %1477 = vmatpush1.msra.mxu0 0.0
    %1478 = vmatprep.subr.mxu0 0.0
    %1479 = vmatpush1.msra.mxu0 0.0
    %1480 = vmatprep.subr.mxu0 0.0
    %1481 = vmatpush1.msra.mxu0 0.0
    %1482 = vmatprep.subr.mxu0 0.0
    %1483 = vmatpush1.msra.mxu0 0.0
    %1484 = vmatprep.subr.mxu0 0.0
    %1485 = vmatpush1.msra.mxu0 0.0
    %1486 = vmatprep.subr.mxu0 0.0
    %1487 = vmatpush1.msra.mxu0 0.0
    %1488 = vmatprep.subr.mxu0 0.0
    %1489 = vmatpush1.msra.mxu0 0.0
    %1490 = vmatprep.subr.mxu0 0.0
    %1491 = vmatpush1.msra.mxu0 0.0
    %1492 = vmatprep.subr.mxu0 0.0
    %1493 = vmatpush1.msra.mxu0 0.0
    %1494 = vmatprep.subr.mxu0 0.0
    %1495 = vmatpush1.msra.mxu0 0.0
    %1496 = vmatprep.subr.mxu0 0.0
    %1497 = vmatpush1.msra.mxu0 0.0
    %1498 = vmatprep.subr.mxu0 0.0
    %1499 = vmatpush1.msra.mxu0 0.0
    %1500 = vmatprep.subr.mxu0 0.0
    %1501 = vmatpush1.msra.mxu0 0.0
    %1502 = vmatprep.mubr.f32.mxu0 0.0
    %1503 = vmatmul.mubr.f32.gmra.mrb[0].mxu0 %v1436
    %v1504 = vpop.f32.mrb[0].mxu0
    %v1505 = vadd.f32 0.0, %v1504
    %v1506 = vpop.f32.mrb[0].mxu0
    %1507 = vdwg.mxu0
    %v1509 = vsel %vm132, %v1262, 0
    %1511 = vmatprep.subr.mxu0 0.0
    %1512 = vmatpush1.msra.mxu0 %v1265
    %1513 = vmatprep.subr.mxu0 0.0
    %1514 = vmatpush1.msra.mxu0 0.0
    %1515 = vmatprep.subr.mxu0 0.0
    %1516 = vmatpush1.msra.mxu0 0.0
    %1517 = vmatprep.subr.mxu0 0.0
    %1518 = vmatpush1.msra.mxu0 0.0
    %1519 = vmatprep.subr.mxu0 0.0
    %1520 = vmatpush1.msra.mxu0 0.0
    %1521 = vmatprep.subr.mxu0 0.0
    %1522 = vmatpush1.msra.mxu0 0.0
    %1523 = vmatprep.subr.mxu0 0.0
    %1524 = vmatpush1.msra.mxu0 0.0
    %1525 = vmatprep.subr.mxu0 0.0
    %1526 = vmatpush1.msra.mxu0 0.0
    %1527 = vmatprep.subr.mxu0 0.0
    %1528 = vmatpush1.msra.mxu0 0.0
    %1529 = vmatprep.subr.mxu0 0.0
    %1530 = vmatpush1.msra.mxu0 0.0
    %1531 = vmatprep.subr.mxu0 0.0
    %1532 = vmatpush1.msra.mxu0 0.0
    %1533 = vmatprep.subr.mxu0 0.0
    %1534 = vmatpush1.msra.mxu0 0.0
    %1535 = vmatprep.subr.mxu0 0.0
    %1536 = vmatpush1.msra.mxu0 0.0
    %1537 = vmatprep.subr.mxu0 0.0
    %1538 = vmatpush1.msra.mxu0 0.0
    %1539 = vmatprep.subr.mxu0 0.0
    %1540 = vmatpush1.msra.mxu0 0.0
    %1541 = vmatprep.subr.mxu0 0.0
    %1542 = vmatpush1.msra.mxu0 0.0
    %1543 = vmatprep.subr.mxu0 0.0
    %1544 = vmatpush1.msra.mxu0 0.0
    %1545 = vmatprep.subr.mxu0 0.0
    %1546 = vmatpush1.msra.mxu0 0.0
    %1547 = vmatprep.subr.mxu0 0.0
    %1548 = vmatpush1.msra.mxu0 0.0
    %1549 = vmatprep.subr.mxu0 0.0
    %1550 = vmatpush1.msra.mxu0 0.0
    %1551 = vmatprep.subr.mxu0 0.0
    %1552 = vmatpush1.msra.mxu0 0.0
    %1553 = vmatprep.subr.mxu0 0.0
    %1554 = vmatpush1.msra.mxu0 0.0
    %1555 = vmatprep.subr.mxu0 0.0
    %1556 = vmatpush1.msra.mxu0 0.0
    %1557 = vmatprep.subr.mxu0 0.0
    %1558 = vmatpush1.msra.mxu0 0.0
    %1559 = vmatprep.subr.mxu0 0.0
    %1560 = vmatpush1.msra.mxu0 0.0
    %1561 = vmatprep.subr.mxu0 0.0
    %1562 = vmatpush1.msra.mxu0 0.0
    %1563 = vmatprep.subr.mxu0 0.0
    %1564 = vmatpush1.msra.mxu0 0.0
    %1565 = vmatprep.subr.mxu0 0.0
    %1566 = vmatpush1.msra.mxu0 0.0
    %1567 = vmatprep.subr.mxu0 0.0
    %1568 = vmatpush1.msra.mxu0 0.0
    %1569 = vmatprep.subr.mxu0 0.0
    %1570 = vmatpush1.msra.mxu0 0.0
    %1571 = vmatprep.subr.mxu0 0.0
    %1572 = vmatpush1.msra.mxu0 0.0
    %1573 = vmatprep.subr.mxu0 0.0
    %1574 = vmatpush1.msra.mxu0 0.0
    %1575 = vmatprep.mubr.f32.mxu0 0.0
    %1576 = vmatmul.mubr.f32.gmra.mrb[0].mxu0 %v1509
    %v1577 = vpop.f32.mrb[0].mxu0
    %v1578 = vadd.f32 %v1505, %v1577
    %v1579 = vpop.f32.mrb[0].mxu0
    %1580 = vdwg.mxu0
    %1581 = vrot.lane.b32.xlu0 %v126, 112
    %v1582 = vpop.permute.xlu0 %1581
    %1583 = vrot.lane.b32.xlu0 %v126, 80
    %v1584 = vpop.permute.xlu0 %1583
    %v1585 = vsel %vm132, %v1582, 0
    %v1587 = vsel %vm132, %v1584, 0
    %1589 = vmatprep.subr.mxu0 0.0
    %1590 = vmatpush1.xpose.msra.mxu0 %v1587
    %1591 = vmatprep.subr.mxu0 0.0
    %1592 = vmatpush1.xpose.msra.mxu0 0.0
    %1593 = vmatprep.subr.mxu0 0.0
    %1594 = vmatpush1.xpose.msra.mxu0 0.0
    %1595 = vmatprep.subr.mxu0 0.0
    %1596 = vmatpush1.xpose.msra.mxu0 0.0
    %1597 = vmatprep.subr.mxu0 0.0
    %1598 = vmatpush1.xpose.msra.mxu0 0.0
    %1599 = vmatprep.subr.mxu0 0.0
    %1600 = vmatpush1.xpose.msra.mxu0 0.0
    %1601 = vmatprep.subr.mxu0 0.0
    %1602 = vmatpush1.xpose.msra.mxu0 0.0
    %1603 = vmatprep.subr.mxu0 0.0
    %1604 = vmatpush1.xpose.msra.mxu0 0.0
    %1605 = vmatprep.subr.mxu0 0.0
    %1606 = vmatpush1.xpose.msra.mxu0 0.0
    %1607 = vmatprep.subr.mxu0 0.0
    %1608 = vmatpush1.xpose.msra.mxu0 0.0
    %1609 = vmatprep.subr.mxu0 0.0
    %1610 = vmatpush1.xpose.msra.mxu0 0.0
    %1611 = vmatprep.subr.mxu0 0.0
    %1612 = vmatpush1.xpose.msra.mxu0 0.0
    %1613 = vmatprep.subr.mxu0 0.0
    %1614 = vmatpush1.xpose.msra.mxu0 0.0
    %1615 = vmatprep.subr.mxu0 0.0
    %1616 = vmatpush1.xpose.msra.mxu0 0.0
    %1617 = vmatprep.subr.mxu0 0.0
    %1618 = vmatpush1.xpose.msra.mxu0 0.0
    %1619 = vmatprep.subr.mxu0 0.0
    %1620 = vmatpush1.xpose.msra.mxu0 0.0
    %1621 = vmatprep.subr.mxu0 0.0
    %1622 = vmatpush1.xpose.msra.mxu0 0.0
    %1623 = vmatprep.subr.mxu0 0.0
    %1624 = vmatpush1.xpose.msra.mxu0 0.0
    %1625 = vmatprep.subr.mxu0 0.0
    %1626 = vmatpush1.xpose.msra.mxu0 0.0
    %1627 = vmatprep.subr.mxu0 0.0
    %1628 = vmatpush1.xpose.msra.mxu0 0.0
    %1629 = vmatprep.subr.mxu0 0.0
    %1630 = vmatpush1.xpose.msra.mxu0 0.0
    %1631 = vmatprep.subr.mxu0 0.0
    %1632 = vmatpush1.xpose.msra.mxu0 0.0
    %1633 = vmatprep.subr.mxu0 0.0
    %1634 = vmatpush1.xpose.msra.mxu0 0.0
    %1635 = vmatprep.subr.mxu0 0.0
    %1636 = vmatpush1.xpose.msra.mxu0 0.0
    %1637 = vmatprep.subr.mxu0 0.0
    %1638 = vmatpush1.xpose.msra.mxu0 0.0
    %1639 = vmatprep.subr.mxu0 0.0
    %1640 = vmatpush1.xpose.msra.mxu0 0.0
    %1641 = vmatprep.subr.mxu0 0.0
    %1642 = vmatpush1.xpose.msra.mxu0 0.0
    %1643 = vmatprep.subr.mxu0 0.0
    %1644 = vmatpush1.xpose.msra.mxu0 0.0
    %1645 = vmatprep.subr.mxu0 0.0
    %1646 = vmatpush1.xpose.msra.mxu0 0.0
    %1647 = vmatprep.subr.mxu0 0.0
    %1648 = vmatpush1.xpose.msra.mxu0 0.0
    %1649 = vmatprep.subr.mxu0 0.0
    %1650 = vmatpush1.xpose.msra.mxu0 0.0
    %1651 = vmatprep.subr.mxu0 0.0
    %1652 = vmatpush1.xpose.msra.mxu0 0.0
    %1653 = vmatprep.mubr.f32.mxu0 0.0
    %1654 = vmatmul.mubr.f32.gmra.mrb[0].mxu0 %v1585
    %v1655 = vpop.f32.mrb[0].mxu0
    %v1656 = vadd.f32 0.0, %v1655
    %v1657 = vpop.f32.mrb[0].mxu0
    %1658 = vdwg.mxu0
    %v1659 = vmul.f32 %v1656, 0.35355338
    %v1660 = vsel %vm132, %v1659, -inf
    %1661 = vmax.xlane.f32.xlu0 %v1660
    %v1662 = vpop.xlane.xlu0 %1661
    %v1663 = vsub.f32 %v1659, %v1662
    %v1664 = vmul.f32 %v1663, 1.442695
    %v1665 = vpow.pop %v1664
    %v1666 = vsel %vm132, %v1665, 0.0
    %1667 = vadd.xlane.f32.xlu0 %v1666
    %v1668 = vpop.xlane.xlu0 %1667
    %v1669 = vrcp.pop %v1668
    %v1670 = vmul.f32 %v1665, %v1669
    %s1671 = scalar_lea.vmem [#allocation2], 48
    %1672 = vst.msk [vmem:[%s1671] sm:$0xff] %vm132, %v1670
    %1673 = vrot.lane.b32.xlu0 %v126, 48
    %v1674 = vpop.permute.xlu0 %1673
    %v1677 = vsel %vm132, %v1670, 0
    %1679 = vmatprep.subr.mxu0 0.0
    %1680 = vmatpush1.msra.mxu0 %v1674
    %1681 = vmatprep.subr.mxu0 0.0
    %1682 = vmatpush1.msra.mxu0 0.0
    %1683 = vmatprep.subr.mxu0 0.0
    %1684 = vmatpush1.msra.mxu0 0.0
    %1685 = vmatprep.subr.mxu0 0.0
    %1686 = vmatpush1.msra.mxu0 0.0
    %1687 = vmatprep.subr.mxu0 0.0
    %1688 = vmatpush1.msra.mxu0 0.0
    %1689 = vmatprep.subr.mxu0 0.0
    %1690 = vmatpush1.msra.mxu0 0.0
    %1691 = vmatprep.subr.mxu0 0.0
    %1692 = vmatpush1.msra.mxu0 0.0
    %1693 = vmatprep.subr.mxu0 0.0
    %1694 = vmatpush1.msra.mxu0 0.0
    %1695 = vmatprep.subr.mxu0 0.0
    %1696 = vmatpush1.msra.mxu0 0.0
    %1697 = vmatprep.subr.mxu0 0.0
    %1698 = vmatpush1.msra.mxu0 0.0
    %1699 = vmatprep.subr.mxu0 0.0
    %1700 = vmatpush1.msra.mxu0 0.0
    %1701 = vmatprep.subr.mxu0 0.0
    %1702 = vmatpush1.msra.mxu0 0.0
    %1703 = vmatprep.subr.mxu0 0.0
    %1704 = vmatpush1.msra.mxu0 0.0
    %1705 = vmatprep.subr.mxu0 0.0
    %1706 = vmatpush1.msra.mxu0 0.0
    %1707 = vmatprep.subr.mxu0 0.0
    %1708 = vmatpush1.msra.mxu0 0.0
    %1709 = vmatprep.subr.mxu0 0.0
    %1710 = vmatpush1.msra.mxu0 0.0
    %1711 = vmatprep.subr.mxu0 0.0
    %1712 = vmatpush1.msra.mxu0 0.0
    %1713 = vmatprep.subr.mxu0 0.0
    %1714 = vmatpush1.msra.mxu0 0.0
    %1715 = vmatprep.subr.mxu0 0.0
    %1716 = vmatpush1.msra.mxu0 0.0
    %1717 = vmatprep.subr.mxu0 0.0
    %1718 = vmatpush1.msra.mxu0 0.0
    %1719 = vmatprep.subr.mxu0 0.0
    %1720 = vmatpush1.msra.mxu0 0.0
    %1721 = vmatprep.subr.mxu0 0.0
    %1722 = vmatpush1.msra.mxu0 0.0
    %1723 = vmatprep.subr.mxu0 0.0
    %1724 = vmatpush1.msra.mxu0 0.0
    %1725 = vmatprep.subr.mxu0 0.0
    %1726 = vmatpush1.msra.mxu0 0.0
    %1727 = vmatprep.subr.mxu0 0.0
    %1728 = vmatpush1.msra.mxu0 0.0
    %1729 = vmatprep.subr.mxu0 0.0
    %1730 = vmatpush1.msra.mxu0 0.0
    %1731 = vmatprep.subr.mxu0 0.0
    %1732 = vmatpush1.msra.mxu0 0.0
    %1733 = vmatprep.subr.mxu0 0.0
    %1734 = vmatpush1.msra.mxu0 0.0
    %1735 = vmatprep.subr.mxu0 0.0
    %1736 = vmatpush1.msra.mxu0 0.0
    %1737 = vmatprep.subr.mxu0 0.0
    %1738 = vmatpush1.msra.mxu0 0.0
    %1739 = vmatprep.subr.mxu0 0.0
    %1740 = vmatpush1.msra.mxu0 0.0
    %1741 = vmatprep.subr.mxu0 0.0
    %1742 = vmatpush1.msra.mxu0 0.0
    %1743 = vmatprep.mubr.f32.mxu0 0.0
    %1744 = vmatmul.mubr.f32.gmra.mrb[0].mxu0 %v1677
    %v1745 = vpop.f32.mrb[0].mxu0
    %v1746 = vadd.f32 0.0, %v1745
    %v1747 = vpop.f32.mrb[0].mxu0
    %1748 = vdwg.mxu0
    %v1749 = vld [vmem:[%s2 + $0x10] sm:$0xff]
    %v1751 = vsel %vm132, %v1746, 0
    %1753 = vmatprep.subr.mxu0 0.0
    %1754 = vmatpush1.msra.mxu0 %v1749
    %1755 = vmatprep.subr.mxu0 0.0
    %1756 = vmatpush1.msra.mxu0 0.0
    %1757 = vmatprep.subr.mxu0 0.0
    %1758 = vmatpush1.msra.mxu0 0.0
    %1759 = vmatprep.subr.mxu0 0.0
    %1760 = vmatpush1.msra.mxu0 0.0
    %1761 = vmatprep.subr.mxu0 0.0
    %1762 = vmatpush1.msra.mxu0 0.0
    %1763 = vmatprep.subr.mxu0 0.0
    %1764 = vmatpush1.msra.mxu0 0.0
    %1765 = vmatprep.subr.mxu0 0.0
    %1766 = vmatpush1.msra.mxu0 0.0
    %1767 = vmatprep.subr.mxu0 0.0
    %1768 = vmatpush1.msra.mxu0 0.0
    %1769 = vmatprep.subr.mxu0 0.0
    %1770 = vmatpush1.msra.mxu0 0.0
    %1771 = vmatprep.subr.mxu0 0.0
    %1772 = vmatpush1.msra.mxu0 0.0
    %1773 = vmatprep.subr.mxu0 0.0
    %1774 = vmatpush1.msra.mxu0 0.0
    %1775 = vmatprep.subr.mxu0 0.0
    %1776 = vmatpush1.msra.mxu0 0.0
    %1777 = vmatprep.subr.mxu0 0.0
    %1778 = vmatpush1.msra.mxu0 0.0
    %1779 = vmatprep.subr.mxu0 0.0
    %1780 = vmatpush1.msra.mxu0 0.0
    %1781 = vmatprep.subr.mxu0 0.0
    %1782 = vmatpush1.msra.mxu0 0.0
    %1783 = vmatprep.subr.mxu0 0.0
    %1784 = vmatpush1.msra.mxu0 0.0
    %1785 = vmatprep.subr.mxu0 0.0
    %1786 = vmatpush1.msra.mxu0 0.0
    %1787 = vmatprep.subr.mxu0 0.0
    %1788 = vmatpush1.msra.mxu0 0.0
    %1789 = vmatprep.subr.mxu0 0.0
    %1790 = vmatpush1.msra.mxu0 0.0
    %1791 = vmatprep.subr.mxu0 0.0
    %1792 = vmatpush1.msra.mxu0 0.0
    %1793 = vmatprep.subr.mxu0 0.0
    %1794 = vmatpush1.msra.mxu0 0.0
    %1795 = vmatprep.subr.mxu0 0.0
    %1796 = vmatpush1.msra.mxu0 0.0
    %1797 = vmatprep.subr.mxu0 0.0
    %1798 = vmatpush1.msra.mxu0 0.0
    %1799 = vmatprep.subr.mxu0 0.0
    %1800 = vmatpush1.msra.mxu0 0.0
    %1801 = vmatprep.subr.mxu0 0.0
    %1802 = vmatpush1.msra.mxu0 0.0
    %1803 = vmatprep.subr.mxu0 0.0
    %1804 = vmatpush1.msra.mxu0 0.0
    %1805 = vmatprep.subr.mxu0 0.0
    %1806 = vmatpush1.msra.mxu0 0.0
    %1807 = vmatprep.subr.mxu0 0.0
    %1808 = vmatpush1.msra.mxu0 0.0
    %1809 = vmatprep.subr.mxu0 0.0
    %1810 = vmatpush1.msra.mxu0 0.0
    %1811 = vmatprep.subr.mxu0 0.0
    %1812 = vmatpush1.msra.mxu0 0.0
    %1813 = vmatprep.subr.mxu0 0.0
    %1814 = vmatpush1.msra.mxu0 0.0
    %1815 = vmatprep.subr.mxu0 0.0
    %1816 = vmatpush1.msra.mxu0 0.0
    %1817 = vmatprep.mubr.f32.mxu0 0.0
    %1818 = vmatmul.mubr.f32.gmra.mrb[0].mxu0 %v1751
    %v1819 = vpop.f32.mrb[0].mxu0
    %v1820 = vadd.f32 0.0, %v1819
    %v1821 = vpop.f32.mrb[0].mxu0
    %1822 = vdwg.mxu0
    %v1823 = vadd.f32 %v1578, %v1820
    %1824 = vrot.lane.b32.xlu0 %v126, 104
    %v1825 = vpop.permute.xlu0 %1824
    %1826 = vrot.lane.b32.xlu0 %v126, 72
    %v1827 = vpop.permute.xlu0 %1826
    %v1828 = vsel %vm132, %v1825, 0
    %v1830 = vsel %vm132, %v1827, 0
    %1832 = vmatprep.subr.mxu0 0.0
    %1833 = vmatpush1.xpose.msra.mxu0 %v1830
    %1834 = vmatprep.subr.mxu0 0.0
    %1835 = vmatpush1.xpose.msra.mxu0 0.0
    %1836 = vmatprep.subr.mxu0 0.0
    %1837 = vmatpush1.xpose.msra.mxu0 0.0
    %1838 = vmatprep.subr.mxu0 0.0
    %1839 = vmatpush1.xpose.msra.mxu0 0.0
    %1840 = vmatprep.subr.mxu0 0.0
    %1841 = vmatpush1.xpose.msra.mxu0 0.0
    %1842 = vmatprep.subr.mxu0 0.0
    %1843 = vmatpush1.xpose.msra.mxu0 0.0
    %1844 = vmatprep.subr.mxu0 0.0
    %1845 = vmatpush1.xpose.msra.mxu0 0.0
    %1846 = vmatprep.subr.mxu0 0.0
    %1847 = vmatpush1.xpose.msra.mxu0 0.0
    %1848 = vmatprep.subr.mxu0 0.0
    %1849 = vmatpush1.xpose.msra.mxu0 0.0
    %1850 = vmatprep.subr.mxu0 0.0
    %1851 = vmatpush1.xpose.msra.mxu0 0.0
    %1852 = vmatprep.subr.mxu0 0.0
    %1853 = vmatpush1.xpose.msra.mxu0 0.0
    %1854 = vmatprep.subr.mxu0 0.0
    %1855 = vmatpush1.xpose.msra.mxu0 0.0
    %1856 = vmatprep.subr.mxu0 0.0
    %1857 = vmatpush1.xpose.msra.mxu0 0.0
    %1858 = vmatprep.subr.mxu0 0.0
    %1859 = vmatpush1.xpose.msra.mxu0 0.0
    %1860 = vmatprep.subr.mxu0 0.0
    %1861 = vmatpush1.xpose.msra.mxu0 0.0
    %1862 = vmatprep.subr.mxu0 0.0
    %1863 = vmatpush1.xpose.msra.mxu0 0.0
    %1864 = vmatprep.subr.mxu0 0.0
    %1865 = vmatpush1.xpose.msra.mxu0 0.0
    %1866 = vmatprep.subr.mxu0 0.0
    %1867 = vmatpush1.xpose.msra.mxu0 0.0
    %1868 = vmatprep.subr.mxu0 0.0
    %1869 = vmatpush1.xpose.msra.mxu0 0.0
    %1870 = vmatprep.subr.mxu0 0.0
    %1871 = vmatpush1.xpose.msra.mxu0 0.0
    %1872 = vmatprep.subr.mxu0 0.0
    %1873 = vmatpush1.xpose.msra.mxu0 0.0
    %1874 = vmatprep.subr.mxu0 0.0
    %1875 = vmatpush1.xpose.msra.mxu0 0.0
    %1876 = vmatprep.subr.mxu0 0.0
    %1877 = vmatpush1.xpose.msra.mxu0 0.0
    %1878 = vmatprep.subr.mxu0 0.0
    %1879 = vmatpush1.xpose.msra.mxu0 0.0
    %1880 = vmatprep.subr.mxu0 0.0
    %1881 = vmatpush1.xpose.msra.mxu0 0.0
    %1882 = vmatprep.subr.mxu0 0.0
    %1883 = vmatpush1.xpose.msra.mxu0 0.0
    %1884 = vmatprep.subr.mxu0 0.0
    %1885 = vmatpush1.xpose.msra.mxu0 0.0
    %1886 = vmatprep.subr.mxu0 0.0
    %1887 = vmatpush1.xpose.msra.mxu0 0.0
    %1888 = vmatprep.subr.mxu0 0.0
    %1889 = vmatpush1.xpose.msra.mxu0 0.0
    %1890 = vmatprep.subr.mxu0 0.0
    %1891 = vmatpush1.xpose.msra.mxu0 0.0
    %1892 = vmatprep.subr.mxu0 0.0
    %1893 = vmatpush1.xpose.msra.mxu0 0.0
    %1894 = vmatprep.subr.mxu0 0.0
    %1895 = vmatpush1.xpose.msra.mxu0 0.0
    %1896 = vmatprep.mubr.f32.mxu0 0.0
    %1897 = vmatmul.mubr.f32.gmra.mrb[0].mxu0 %v1828
    %v1898 = vpop.f32.mrb[0].mxu0
    %v1899 = vadd.f32 0.0, %v1898
    %v1900 = vpop.f32.mrb[0].mxu0
    %1901 = vdwg.mxu0
    %v1902 = vmul.f32 %v1899, 0.35355338
    %v1903 = vsel %vm132, %v1902, -inf
    %1904 = vmax.xlane.f32.xlu0 %v1903
    %v1905 = vpop.xlane.xlu0 %1904
    %v1906 = vsub.f32 %v1902, %v1905
    %v1907 = vmul.f32 %v1906, 1.442695
    %v1908 = vpow.pop %v1907
    %v1909 = vsel %vm132, %v1908, 0.0
    %1910 = vadd.xlane.f32.xlu0 %v1909
    %v1911 = vpop.xlane.xlu0 %1910
    %v1912 = vrcp.pop %v1911
    %v1913 = vmul.f32 %v1908, %v1912
    %s1914 = scalar_lea.vmem [#allocation2], 56
    %1915 = vst.msk [vmem:[%s1914] sm:$0xff] %vm132, %v1913
    %1916 = vrot.lane.b32.xlu0 %v126, 40
    %v1917 = vpop.permute.xlu0 %1916
    %v1920 = vsel %vm132, %v1913, 0
    %1922 = vmatprep.subr.mxu0 0.0
    %1923 = vmatpush1.msra.mxu0 %v1917
    %1924 = vmatprep.subr.mxu0 0.0
    %1925 = vmatpush1.msra.mxu0 0.0
    %1926 = vmatprep.subr.mxu0 0.0
    %1927 = vmatpush1.msra.mxu0 0.0
    %1928 = vmatprep.subr.mxu0 0.0
    %1929 = vmatpush1.msra.mxu0 0.0
    %1930 = vmatprep.subr.mxu0 0.0
    %1931 = vmatpush1.msra.mxu0 0.0
    %1932 = vmatprep.subr.mxu0 0.0
    %1933 = vmatpush1.msra.mxu0 0.0
    %1934 = vmatprep.subr.mxu0 0.0
    %1935 = vmatpush1.msra.mxu0 0.0
    %1936 = vmatprep.subr.mxu0 0.0
    %1937 = vmatpush1.msra.mxu0 0.0
    %1938 = vmatprep.subr.mxu0 0.0
    %1939 = vmatpush1.msra.mxu0 0.0
    %1940 = vmatprep.subr.mxu0 0.0
    %1941 = vmatpush1.msra.mxu0 0.0
    %1942 = vmatprep.subr.mxu0 0.0
    %1943 = vmatpush1.msra.mxu0 0.0
    %1944 = vmatprep.subr.mxu0 0.0
    %1945 = vmatpush1.msra.mxu0 0.0
    %1946 = vmatprep.subr.mxu0 0.0
    %1947 = vmatpush1.msra.mxu0 0.0
    %1948 = vmatprep.subr.mxu0 0.0
    %1949 = vmatpush1.msra.mxu0 0.0
    %1950 = vmatprep.subr.mxu0 0.0
    %1951 = vmatpush1.msra.mxu0 0.0
    %1952 = vmatprep.subr.mxu0 0.0
    %1953 = vmatpush1.msra.mxu0 0.0
    %1954 = vmatprep.subr.mxu0 0.0
    %1955 = vmatpush1.msra.mxu0 0.0
    %1956 = vmatprep.subr.mxu0 0.0
    %1957 = vmatpush1.msra.mxu0 0.0
    %1958 = vmatprep.subr.mxu0 0.0
    %1959 = vmatpush1.msra.mxu0 0.0
    %1960 = vmatprep.subr.mxu0 0.0
    %1961 = vmatpush1.msra.mxu0 0.0
    %1962 = vmatprep.subr.mxu0 0.0
    %1963 = vmatpush1.msra.mxu0 0.0
    %1964 = vmatprep.subr.mxu0 0.0
    %1965 = vmatpush1.msra.mxu0 0.0
    %1966 = vmatprep.subr.mxu0 0.0
    %1967 = vmatpush1.msra.mxu0 0.0
    %1968 = vmatprep.subr.mxu0 0.0
    %1969 = vmatpush1.msra.mxu0 0.0
    %1970 = vmatprep.subr.mxu0 0.0
    %1971 = vmatpush1.msra.mxu0 0.0
    %1972 = vmatprep.subr.mxu0 0.0
    %1973 = vmatpush1.msra.mxu0 0.0
    %1974 = vmatprep.subr.mxu0 0.0
    %1975 = vmatpush1.msra.mxu0 0.0
    %1976 = vmatprep.subr.mxu0 0.0
    %1977 = vmatpush1.msra.mxu0 0.0
    %1978 = vmatprep.subr.mxu0 0.0
    %1979 = vmatpush1.msra.mxu0 0.0
    %1980 = vmatprep.subr.mxu0 0.0
    %1981 = vmatpush1.msra.mxu0 0.0
    %1982 = vmatprep.subr.mxu0 0.0
    %1983 = vmatpush1.msra.mxu0 0.0
    %1984 = vmatprep.subr.mxu0 0.0
    %1985 = vmatpush1.msra.mxu0 0.0
    %1986 = vmatprep.mubr.f32.mxu0 0.0
    %1987 = vmatmul.mubr.f32.gmra.mrb[0].mxu0 %v1920
    %v1988 = vpop.f32.mrb[0].mxu0
    %v1989 = vadd.f32 0.0, %v1988
    %v1990 = vpop.f32.mrb[0].mxu0
    %1991 = vdwg.mxu0
    %v1992 = vld [vmem:[%s2 + $0x18] sm:$0xff]
    %v1994 = vsel %vm132, %v1989, 0
    %1996 = vmatprep.subr.mxu0 0.0
    %1997 = vmatpush1.msra.mxu0 %v1992
    %1998 = vmatprep.subr.mxu0 0.0
    %1999 = vmatpush1.msra.mxu0 0.0
    %2000 = vmatprep.subr.mxu0 0.0
    %2001 = vmatpush1.msra.mxu0 0.0
    %2002 = vmatprep.subr.mxu0 0.0
    %2003 = vmatpush1.msra.mxu0 0.0
    %2004 = vmatprep.subr.mxu0 0.0
    %2005 = vmatpush1.msra.mxu0 0.0
    %2006 = vmatprep.subr.mxu0 0.0
    %2007 = vmatpush1.msra.mxu0 0.0
    %2008 = vmatprep.subr.mxu0 0.0
    %2009 = vmatpush1.msra.mxu0 0.0
    %2010 = vmatprep.subr.mxu0 0.0
    %2011 = vmatpush1.msra.mxu0 0.0
    %2012 = vmatprep.subr.mxu0 0.0
    %2013 = vmatpush1.msra.mxu0 0.0
    %2014 = vmatprep.subr.mxu0 0.0
    %2015 = vmatpush1.msra.mxu0 0.0
    %2016 = vmatprep.subr.mxu0 0.0
    %2017 = vmatpush1.msra.mxu0 0.0
    %2018 = vmatprep.subr.mxu0 0.0
    %2019 = vmatpush1.msra.mxu0 0.0
    %2020 = vmatprep.subr.mxu0 0.0
    %2021 = vmatpush1.msra.mxu0 0.0
    %2022 = vmatprep.subr.mxu0 0.0
    %2023 = vmatpush1.msra.mxu0 0.0
    %2024 = vmatprep.subr.mxu0 0.0
    %2025 = vmatpush1.msra.mxu0 0.0
    %2026 = vmatprep.subr.mxu0 0.0
    %2027 = vmatpush1.msra.mxu0 0.0
    %2028 = vmatprep.subr.mxu0 0.0
    %2029 = vmatpush1.msra.mxu0 0.0
    %2030 = vmatprep.subr.mxu0 0.0
    %2031 = vmatpush1.msra.mxu0 0.0
    %2032 = vmatprep.subr.mxu0 0.0
    %2033 = vmatpush1.msra.mxu0 0.0
    %2034 = vmatprep.subr.mxu0 0.0
    %2035 = vmatpush1.msra.mxu0 0.0
    %2036 = vmatprep.subr.mxu0 0.0
    %2037 = vmatpush1.msra.mxu0 0.0
    %2038 = vmatprep.subr.mxu0 0.0
    %2039 = vmatpush1.msra.mxu0 0.0
    %2040 = vmatprep.subr.mxu0 0.0
    %2041 = vmatpush1.msra.mxu0 0.0
    %2042 = vmatprep.subr.mxu0 0.0
    %2043 = vmatpush1.msra.mxu0 0.0
    %2044 = vmatprep.subr.mxu0 0.0
    %2045 = vmatpush1.msra.mxu0 0.0
    %2046 = vmatprep.subr.mxu0 0.0
    %2047 = vmatpush1.msra.mxu0 0.0
    %2048 = vmatprep.subr.mxu0 0.0
    %2049 = vmatpush1.msra.mxu0 0.0
    %2050 = vmatprep.subr.mxu0 0.0
    %2051 = vmatpush1.msra.mxu0 0.0
    %2052 = vmatprep.subr.mxu0 0.0
    %2053 = vmatpush1.msra.mxu0 0.0
    %2054 = vmatprep.subr.mxu0 0.0
    %2055 = vmatpush1.msra.mxu0 0.0
    %2056 = vmatprep.subr.mxu0 0.0
    %2057 = vmatpush1.msra.mxu0 0.0
    %2058 = vmatprep.subr.mxu0 0.0
    %2059 = vmatpush1.msra.mxu0 0.0
    %2060 = vmatprep.mubr.f32.mxu0 0.0
    %2061 = vmatmul.mubr.f32.gmra.mrb[0].mxu0 %v1994
    %v2062 = vpop.f32.mrb[0].mxu0
    %v2063 = vadd.f32 0.0, %v2062
    %v2064 = vpop.f32.mrb[0].mxu0
    %2065 = vdwg.mxu0
    %v2066 = vadd.f32 %v1823, %v2063
    %v2067 = vadd.f32 %v41, %v1097
    %v2068 = vadd.f32 %v42, %v2066
    %v2069 = vld [vmem:[%s3] sm:$0x1]
    %v2070 = vld [vmem:[%s4] sm:$0x1]
    %v2071 = vsel %vm47, %v2067, 0.0
    %2072 = vadd.xlane.f32.xlu0 %v2071
    %v2073 = vpop.xlane.xlu0 %2072
    %v2074 = vsel %vm47, %v2068, 0.0
    %2075 = vadd.xlane.f32.xlu0 %v2074
    %v2076 = vpop.xlane.xlu0 %2075
    %v2077 = vrcp.pop 32.0
    %v2078 = vmul.f32 %v2073, %v2077
    %v2079 = vmul.f32 %v2076, %v2077
    %v2080 = vsub.f32 %v2067, %v2078
    %v2081 = vsub.f32 %v2068, %v2079
    %v2082 = vmul.f32 %v2080, %v2080
    %v2083 = vmul.f32 %v2081, %v2081
    %v2084 = vsel %vm47, %v2082, 0.0
    %2085 = vadd.xlane.f32.xlu0 %v2084
    %v2086 = vpop.xlane.xlu0 %2085
    %v2087 = vsel %vm47, %v2083, 0.0
    %2088 = vadd.xlane.f32.xlu0 %v2087
    %v2089 = vpop.xlane.xlu0 %2088
    %v2090 = vmul.f32 %v2086, %v2077
    %v2091 = vmul.f32 %v2089, %v2077
    %v2092 = vadd.f32 %v2090, 1e-05
    %v2093 = vadd.f32 %v2091, 1e-05
    %v2094 = vrsqrt.pop %v2092
    %v2095 = vrsqrt.pop %v2093
    %v2096 = vmul.f32 %v2080, %v2094
    %v2097 = vmul.f32 %v2081, %v2095
    %v2099 = vlaneseq
    %v2100 = vshrl.u32 %v2099, 7
    %v2101 = vsub.s32 0, %v2100
    %v2102 = vrot.slane %v2069, %v2101
    %v2104 = vmul.f32 %v2096, %v2102
    %v2105 = vmul.f32 %v2097, %v2102
    %v2107 = vlaneseq
    %v2108 = vshrl.u32 %v2107, 7
    %v2109 = vsub.s32 0, %v2108
    %v2110 = vrot.slane %v2070, %v2109
    %v2112 = vadd.f32 %v2104, %v2110
    %v2113 = vadd.f32 %v2105, %v2110
    %v2114 = vld [vmem:[%s5] sm:$0xff]
    %v2115 = vld [vmem:[%s5 + $0x8] sm:$0xff]
    %v2116 = vld [vmem:[%s5 + $0x10] sm:$0xff]
    %v2117 = vld [vmem:[%s5 + $0x18] sm:$0xff]
    %v2118 = vld [vmem:[%s6] sm:$0x1]
    %v2120 = vlaneseq
    %v2121 = vshrl.u32 %v2120, 7
    %v2122 = vsub.s32 0, %v2121
    %v2123 = vrot.slane %v2118, %v2122
    %v2126 = vsel %vm47, %v2112, 0
    %v2129 = vsel %vm47, %v2113, 0
    %2131 = vmatprep.subr.mxu0 0.0
    %2132 = vmatpush1.msra.mxu0 %v2114
    %2133 = vmatprep.subr.mxu0 0.0
    %2134 = vmatpush1.msra.mxu0 %v2115
    %2135 = vmatprep.subr.mxu0 0.0
    %2136 = vmatpush1.msra.mxu0 %v2116
    %2137 = vmatprep.subr.mxu0 0.0
    %2138 = vmatpush1.msra.mxu0 %v2117
    %2139 = vmatprep.subr.mxu0 0.0
    %2140 = vmatpush1.msra.mxu0 0.0
    %2141 = vmatprep.subr.mxu0 0.0
    %2142 = vmatpush1.msra.mxu0 0.0
    %2143 = vmatprep.subr.mxu0 0.0
    %2144 = vmatpush1.msra.mxu0 0.0
    %2145 = vmatprep.subr.mxu0 0.0
    %2146 = vmatpush1.msra.mxu0 0.0
    %2147 = vmatprep.subr.mxu0 0.0
    %2148 = vmatpush1.msra.mxu0 0.0
    %2149 = vmatprep.subr.mxu0 0.0
    %2150 = vmatpush1.msra.mxu0 0.0
    %2151 = vmatprep.subr.mxu0 0.0
    %2152 = vmatpush1.msra.mxu0 0.0
    %2153 = vmatprep.subr.mxu0 0.0
    %2154 = vmatpush1.msra.mxu0 0.0
    %2155 = vmatprep.subr.mxu0 0.0
    %2156 = vmatpush1.msra.mxu0 0.0
    %2157 = vmatprep.subr.mxu0 0.0
    %2158 = vmatpush1.msra.mxu0 0.0
    %2159 = vmatprep.subr.mxu0 0.0
    %2160 = vmatpush1.msra.mxu0 0.0
    %2161 = vmatprep.subr.mxu0 0.0
    %2162 = vmatpush1.msra.mxu0 0.0
    %2163 = vmatprep.subr.mxu0 0.0
    %2164 = vmatpush1.msra.mxu0 0.0
    %2165 = vmatprep.subr.mxu0 0.0
    %2166 = vmatpush1.msra.mxu0 0.0
    %2167 = vmatprep.subr.mxu0 0.0
    %2168 = vmatpush1.msra.mxu0 0.0
    %2169 = vmatprep.subr.mxu0 0.0
    %2170 = vmatpush1.msra.mxu0 0.0
    %2171 = vmatprep.subr.mxu0 0.0
    %2172 = vmatpush1.msra.mxu0 0.0
    %2173 = vmatprep.subr.mxu0 0.0
    %2174 = vmatpush1.msra.mxu0 0.0
    %2175 = vmatprep.subr.mxu0 0.0
    %2176 = vmatpush1.msra.mxu0 0.0
    %2177 = vmatprep.subr.mxu0 0.0
    %2178 = vmatpush1.msra.mxu0 0.0
    %2179 = vmatprep.subr.mxu0 0.0
    %2180 = vmatpush1.msra.mxu0 0.0
    %2181 = vmatprep.subr.mxu0 0.0
    %2182 = vmatpush1.msra.mxu0 0.0
    %2183 = vmatprep.subr.mxu0 0.0
    %2184 = vmatpush1.msra.mxu0 0.0
    %2185 = vmatprep.subr.mxu0 0.0
    %2186 = vmatpush1.msra.mxu0 0.0
    %2187 = vmatprep.subr.mxu0 0.0
    %2188 = vmatpush1.msra.mxu0 0.0
    %2189 = vmatprep.subr.mxu0 0.0
    %2190 = vmatpush1.msra.mxu0 0.0
    %2191 = vmatprep.subr.mxu0 0.0
    %2192 = vmatpush1.msra.mxu0 0.0
    %2193 = vmatprep.subr.mxu0 0.0
    %2194 = vmatpush1.msra.mxu0 0.0
    %2195 = vmatprep.mubr.f32.mxu0 0.0
    %2196 = vmatmul.mubr.f32.gmra.mrb[0].mxu0 %v2126
    %v2197 = vpop.f32.mrb[0].mxu0
    %v2198 = vadd.f32 %v2123, %v2197
    %v2199 = vpop.f32.mrb[0].mxu0
    %2200 = vmatprep.mubr.f32.mxu0 0.0
    %2201 = vmatmul.mubr.f32.gmra.mrb[0].mxu0 %v2129
    %v2202 = vpop.f32.mrb[0].mxu0
    %v2203 = vadd.f32 %v2123, %v2202
    %v2204 = vpop.f32.mrb[0].mxu0
    %2205 = vdwg.mxu0
    %v2206 = vmax.f32 %v2198, 0.0
    %v2207 = vmax.f32 %v2203, 0.0
    %v2208 = vld [vmem:[%s7] sm:$0xff]
    %v2209 = vld [vmem:[%s7 + $0x8] sm:$0xff]
    %v2210 = vld [vmem:[%s7 + $0x10] sm:$0xff]
    %v2211 = vld [vmem:[%s7 + $0x18] sm:$0xff]
    %v2212 = vld [vmem:[%s7 + $0x20] sm:$0xff]
    %v2213 = vld [vmem:[%s7 + $0x28] sm:$0xff]
    %v2214 = vld [vmem:[%s7 + $0x30] sm:$0xff]
    %v2215 = vld [vmem:[%s7 + $0x38] sm:$0xff]
    %v2216 = vld [vmem:[%s8] sm:$0x1]
    %v2218 = vlaneseq
    %v2219 = vshrl.u32 %v2218, 7
    %v2220 = vsub.s32 0, %v2219
    %v2221 = vrot.slane %v2216, %v2220
    %vm2223 = vcmask 523264
    %v2225 = vsel %vm2223, %v2206, 0
    %v2228 = vsel %vm2223, %v2207, 0
    %2230 = vmatprep.subr.mxu0 0.0
    %2231 = vmatpush1.msra.mxu0 %v2208
    %2232 = vmatprep.subr.mxu0 0.0
    %2233 = vmatpush1.msra.mxu0 %v2209
    %2234 = vmatprep.subr.mxu0 0.0
    %2235 = vmatpush1.msra.mxu0 %v2210
    %2236 = vmatprep.subr.mxu0 0.0
    %2237 = vmatpush1.msra.mxu0 %v2211
    %2238 = vmatprep.subr.mxu0 0.0
    %2239 = vmatpush1.msra.mxu0 %v2212
    %2240 = vmatprep.subr.mxu0 0.0
    %2241 = vmatpush1.msra.mxu0 %v2213
    %2242 = vmatprep.subr.mxu0 0.0
    %2243 = vmatpush1.msra.mxu0 %v2214
    %2244 = vmatprep.subr.mxu0 0.0
    %2245 = vmatpush1.msra.mxu0 %v2215
    %2246 = vmatprep.subr.mxu0 0.0
    %2247 = vmatpush1.msra.mxu0 0.0
    %2248 = vmatprep.subr.mxu0 0.0
    %2249 = vmatpush1.msra.mxu0 0.0
    %2250 = vmatprep.subr.mxu0 0.0
    %2251 = vmatpush1.msra.mxu0 0.0
    %2252 = vmatprep.subr.mxu0 0.0
    %2253 = vmatpush1.msra.mxu0 0.0
    %2254 = vmatprep.subr.mxu0 0.0
    %2255 = vmatpush1.msra.mxu0 0.0
    %2256 = vmatprep.subr.mxu0 0.0
    %2257 = vmatpush1.msra.mxu0 0.0
    %2258 = vmatprep.subr.mxu0 0.0
    %2259 = vmatpush1.msra.mxu0 0.0
    %2260 = vmatprep.subr.mxu0 0.0
    %2261 = vmatpush1.msra.mxu0 0.0
    %2262 = vmatprep.subr.mxu0 0.0
    %2263 = vmatpush1.msra.mxu0 0.0
    %2264 = vmatprep.subr.mxu0 0.0
    %2265 = vmatpush1.msra.mxu0 0.0
    %2266 = vmatprep.subr.mxu0 0.0
    %2267 = vmatpush1.msra.mxu0 0.0
    %2268 = vmatprep.subr.mxu0 0.0
    %2269 = vmatpush1.msra.mxu0 0.0
    %2270 = vmatprep.subr.mxu0 0.0
    %2271 = vmatpush1.msra.mxu0 0.0
    %2272 = vmatprep.subr.mxu0 0.0
    %2273 = vmatpush1.msra.mxu0 0.0
    %2274 = vmatprep.subr.mxu0 0.0
    %2275 = vmatpush1.msra.mxu0 0.0
    %2276 = vmatprep.subr.mxu0 0.0
    %2277 = vmatpush1.msra.mxu0 0.0
    %2278 = vmatprep.subr.mxu0 0.0
    %2279 = vmatpush1.msra.mxu0 0.0
    %2280 = vmatprep.subr.mxu0 0.0
    %2281 = vmatpush1.msra.mxu0 0.0
    %2282 = vmatprep.subr.mxu0 0.0
    %2283 = vmatpush1.msra.mxu0 0.0
    %2284 = vmatprep.subr.mxu0 0.0
    %2285 = vmatpush1.msra.mxu0 0.0
    %2286 = vmatprep.subr.mxu0 0.0
    %2287 = vmatpush1.msra.mxu0 0.0
    %2288 = vmatprep.subr.mxu0 0.0
    %2289 = vmatpush1.msra.mxu0 0.0
    %2290 = vmatprep.subr.mxu0 0.0
    %2291 = vmatpush1.msra.mxu0 0.0
    %2292 = vmatprep.subr.mxu0 0.0
    %2293 = vmatpush1.msra.mxu0 0.0
    %2294 = vmatprep.mubr.f32.mxu0 0.0
    %2295 = vmatmul.mubr.f32.gmra.mrb[0].mxu0 %v2225
    %v2296 = vpop.f32.mrb[0].mxu0
    %v2297 = vadd.f32 %v2221, %v2296
    %v2298 = vpop.f32.mrb[0].mxu0
    %2299 = vmatprep.mubr.f32.mxu0 0.0
    %2300 = vmatmul.mubr.f32.gmra.mrb[0].mxu0 %v2228
    %v2301 = vpop.f32.mrb[0].mxu0
    %v2302 = vadd.f32 %v2221, %v2301
    %v2303 = vpop.f32.mrb[0].mxu0
    %2304 = vdwg.mxu0
    %v2305 = vadd.f32 %v2112, %v2297
    %v2306 = vadd.f32 %v2113, %v2302
    %v2307 = vld [vmem:[%s9] sm:$0x1]
    %v2308 = vld [vmem:[%s10] sm:$0x1]
    %v2309 = vsel %vm47, %v2305, 0.0
    %2310 = vadd.xlane.f32.xlu0 %v2309
    %v2311 = vpop.xlane.xlu0 %2310
    %v2312 = vsel %vm47, %v2306, 0.0
    %2313 = vadd.xlane.f32.xlu0 %v2312
    %v2314 = vpop.xlane.xlu0 %2313
    %v2315 = vmul.f32 %v2311, %v2077
    %v2316 = vmul.f32 %v2314, %v2077
    %v2317 = vsub.f32 %v2305, %v2315
    %v2318 = vsub.f32 %v2306, %v2316
    %v2319 = vmul.f32 %v2317, %v2317
    %v2320 = vmul.f32 %v2318, %v2318
    %v2321 = vsel %vm47, %v2319, 0.0
    %2322 = vadd.xlane.f32.xlu0 %v2321
    %v2323 = vpop.xlane.xlu0 %2322
    %v2324 = vsel %vm47, %v2320, 0.0
    %2325 = vadd.xlane.f32.xlu0 %v2324
    %v2326 = vpop.xlane.xlu0 %2325
    %v2327 = vmul.f32 %v2323, %v2077
    %v2328 = vmul.f32 %v2326, %v2077
    %v2329 = vadd.f32 %v2327, 1e-05
    %v2330 = vadd.f32 %v2328, 1e-05
    %v2331 = vrsqrt.pop %v2329
    %v2332 = vrsqrt.pop %v2330
    %v2333 = vmul.f32 %v2317, %v2331
    %v2334 = vmul.f32 %v2318, %v2332
    %v2336 = vlaneseq
    %v2337 = vshrl.u32 %v2336, 7
    %v2338 = vsub.s32 0, %v2337
    %v2339 = vrot.slane %v2307, %v2338
    %v2341 = vmul.f32 %v2333, %v2339
    %v2342 = vmul.f32 %v2334, %v2339
    %v2344 = vlaneseq
    %v2345 = vshrl.u32 %v2344, 7
    %v2346 = vsub.s32 0, %v2345
    %v2347 = vrot.slane %v2308, %v2346
    %v2349 = vadd.f32 %v2341, %v2347
    %v2350 = vadd.f32 %v2342, %v2347
    %2351 = vst.msk [vmem:[%s11] sm:$0xff] %vm47, %v2349
    %2352 = vst.msk [vmem:[%s11 + $0x8] sm:$0xff] %vm47, %v2350
    // Predicated region
    $region46: #{generator_forward.3} parent=1 // pred_check
      _
    $region47: #{generator_forward.3} parent=1 // pred_check_branch
      %2354 = sbr.rel (0) target = $region49
    $region48: #{generator_forward.3} parent=1 // pred_region
      _
    $region49: #{generator_forward.3} parent=1 // pred_fallthru
      _
    // Predicated region
    $region50: #{generator_forward.3} parent=1 // pred_check
      _
    $region51: #{generator_forward.3} parent=1 // pred_check_branch
      %2356 = sbr.rel (0) target = $region53
    $region52: #{generator_forward.3} parent=1 // pred_region
      %s2358 = ssub.s32 1024, 1024
      %2359 = vsyncadd [#allocation3], %s2358
      %s2360 = sshll.u32 [#allocation2], 4
      %s2361 = int_to_ptr.vmem [resolvable:$true] %s2360
      %2366 = dma.vmem_to_hbm [thread:$0]  %s2361, 1024, %s12, [#allocation3], 128, 128, 8
    $region53: #{generator_forward.3} parent=1 // pred_fallthru
      _
    // Predicated region
    $region54: #{generator_forward.3} parent=1 // pred_check
      _
    $region55: #{generator_forward.3} parent=1 // pred_check_branch
      %2368 = sbr.rel (0) target = $region57
    $region56: #{generator_forward.3} parent=1 // pred_region
      _
    $region57: #{generator_forward.3} parent=1 // pred_fallthru
      _
    // Predicated region
    $region58: #{generator_forward.3} parent=1 // pred_check
      _
    $region59: #{generator_forward.3} parent=1 // pred_check_branch
      %2370 = sbr.rel (0) target = $region61
    $region60: #{generator_forward.3} parent=1 // pred_region
      %2371 = dma.done [#allocation3], 1024
    $region61: #{generator_forward.3} parent=1 // pred_fallthru
      _
    %2372 = vsyncpa [#allocation3], 1

// kernel: generator_forward.4
$region0: #{generator_forward.4}
  #allocation0 [shape = 'u32[]', space=smem, size = 0x4, offset = 0x4, fixed_abs, tag = 'smem constant byte address 0x4 - core index']
  #allocation1 [shape = 'u32[144,128]{1,0:T(1,128)}', space=vmem, size = 0x12000, scoped, tag = 'internal scratch']
  %s0 = inlined_call_operand.vmem [shape: f32[16,32], index: 0, kind: input, shape index: {}]
  %s1 = inlined_call_operand.vmem [shape: f32[16,32], index: 1, kind: input, shape index: {}]
  %s2 = inlined_call_operand.vmem [shape: f32[8,8], index: 2, kind: input, shape index: {}]
  %s3 = inlined_call_operand.vmem [shape: f32[32,96], index: 3, kind: input, shape index: {}]
  %s4 = inlined_call_operand.vmem [shape: f32[32,32], index: 4, kind: input, shape index: {}]
  %s5 = inlined_call_operand.vmem [shape: f32[1,32], index: 5, kind: input, shape index: {}]
  %s6 = inlined_call_operand.vmem [shape: f32[1,32], index: 6, kind: input, shape index: {}]
  %s7 = inlined_call_operand.vmem [shape: f32[32,32], index: 7, kind: input, shape index: {}]
  %s8 = inlined_call_operand.vmem [shape: f32[32,64], index: 8, kind: input, shape index: {}]
  %s9 = inlined_call_operand.vmem [shape: f32[32,32], index: 9, kind: input, shape index: {}]
  %s10 = inlined_call_operand.vmem [shape: f32[1,32], index: 10, kind: input, shape index: {}]
  %s11 = inlined_call_operand.vmem [shape: f32[1,32], index: 11, kind: input, shape index: {}]
  %s12 = inlined_call_operand.vmem [shape: f32[32,64], index: 12, kind: input, shape index: {}]
  %s13 = inlined_call_operand.vmem [shape: f32[1,64], index: 13, kind: input, shape index: {}]
  %s14 = inlined_call_operand.vmem [shape: f32[64,32], index: 14, kind: input, shape index: {}]
  %s15 = inlined_call_operand.vmem [shape: f32[1,32], index: 15, kind: input, shape index: {}]
  %s16 = inlined_call_operand.vmem [shape: f32[1,32], index: 16, kind: input, shape index: {}]
  %s17 = inlined_call_operand.vmem [shape: f32[1,32], index: 17, kind: input, shape index: {}]
  %s18 = inlined_call_operand.vmem [shape: f32[16,32], index: 18, kind: output, shape index: {0}]
  %s19 = inlined_call_operand.hbm [shape: f32[8,8,8], index: 19, kind: output, shape index: {1}]
  %s20 = inlined_call_operand.hbm [shape: f32[8,8,8], index: 20, kind: output, shape index: {2}]
  %21 = xla_tuple %s18, %s19, %s20
  %s22 = sld [smem:[#allocation0]]
  $region98: #{generator_forward.4} parent=0
    _
  %s24 = ssub.s32 1, %s22
  %s25 = scalar_select 0, %s24, %s22
  $region1: #{generator_forward.4} parent=0
    #allocation2 [shape = 'u8[32768]{0}', space=vmem, size = 0x8000, scoped, tag = 'output window, operand 1, single buffered']
    #allocation3 [shape = 's32[1]{0}', space=sflag, size = 0x4, scoped, tag = 'scoped memory for generator_forward.4']
    #allocation4 [shape = 'u8[32768]{0}', space=vmem, size = 0x8000, scoped, tag = 'output window, operand 2, single buffered']
    #allocation5 [shape = 's32[1]{0}', space=sflag, size = 0x4, scoped, tag = 'scoped memory for generator_forward.4']
    %26 = vsyncpa [#allocation3], 0
    %27 = vsyncpa [#allocation5], 0
    // Predicated region
    $region2: #{generator_forward.4} parent=1 // pred_check
      _
    $region3: #{generator_forward.4} parent=1 // pred_check_branch
      %29 = sbr.rel (0) target = $region5
    $region4: #{generator_forward.4} parent=1 // pred_region
      _
    $region5: #{generator_forward.4} parent=1 // pred_fallthru
      _
    // Predicated region
    $region6: #{generator_forward.4} parent=1 // pred_check
      _
    $region7: #{generator_forward.4} parent=1 // pred_check_branch
      %31 = sbr.rel (0) target = $region9
    $region8: #{generator_forward.4} parent=1 // pred_region
      _
    $region9: #{generator_forward.4} parent=1 // pred_fallthru
      _
    // Predicated region
    $region10: #{generator_forward.4} parent=1 // pred_check
      _
    $region11: #{generator_forward.4} parent=1 // pred_check_branch
      %33 = sbr.rel (0) target = $region13
    $region12: #{generator_forward.4} parent=1 // pred_region
      _
    $region13: #{generator_forward.4} parent=1 // pred_fallthru
      _
    // Predicated region
    $region14: #{generator_forward.4} parent=1 // pred_check
      _
    $region15: #{generator_forward.4} parent=1 // pred_check_branch
      %35 = sbr.rel (0) target = $region17
    $region16: #{generator_forward.4} parent=1 // pred_region
      _
    $region17: #{generator_forward.4} parent=1 // pred_fallthru
      _
    // Predicated region
    $region18: #{generator_forward.4} parent=1 // pred_check
      _
    $region19: #{generator_forward.4} parent=1 // pred_check_branch
      %37 = sbr.rel (0) target = $region21
    $region20: #{generator_forward.4} parent=1 // pred_region
      _
    $region21: #{generator_forward.4} parent=1 // pred_fallthru
      _
    // Predicated region
    $region22: #{generator_forward.4} parent=1 // pred_check
      _
    $region23: #{generator_forward.4} parent=1 // pred_check_branch
      %39 = sbr.rel (0) target = $region25
    $region24: #{generator_forward.4} parent=1 // pred_region
      _
    $region25: #{generator_forward.4} parent=1 // pred_fallthru
      _
    // Predicated region
    $region26: #{generator_forward.4} parent=1 // pred_check
      _
    $region27: #{generator_forward.4} parent=1 // pred_check_branch
      %41 = sbr.rel (0) target = $region29
    $region28: #{generator_forward.4} parent=1 // pred_region
      _
    $region29: #{generator_forward.4} parent=1 // pred_fallthru
      _
    // Predicated region
    $region30: #{generator_forward.4} parent=1 // pred_check
      _
    $region31: #{generator_forward.4} parent=1 // pred_check_branch
      %43 = sbr.rel (0) target = $region33
    $region32: #{generator_forward.4} parent=1 // pred_region
      _
    $region33: #{generator_forward.4} parent=1 // pred_fallthru
      _
    // Predicated region
    $region34: #{generator_forward.4} parent=1 // pred_check
      _
    $region35: #{generator_forward.4} parent=1 // pred_check_branch
      %45 = sbr.rel (0) target = $region37
    $region36: #{generator_forward.4} parent=1 // pred_region
      _
    $region37: #{generator_forward.4} parent=1 // pred_fallthru
      _
    // Predicated region
    $region38: #{generator_forward.4} parent=1 // pred_check
      _
    $region39: #{generator_forward.4} parent=1 // pred_check_branch
      %47 = sbr.rel (0) target = $region41
    $region40: #{generator_forward.4} parent=1 // pred_region
      _
    $region41: #{generator_forward.4} parent=1 // pred_fallthru
      _
    // Predicated region
    $region42: #{generator_forward.4} parent=1 // pred_check
      _
    $region43: #{generator_forward.4} parent=1 // pred_check_branch
      %49 = sbr.rel (0) target = $region45
    $region44: #{generator_forward.4} parent=1 // pred_region
      _
    $region45: #{generator_forward.4} parent=1 // pred_fallthru
      _
    // Predicated region
    $region46: #{generator_forward.4} parent=1 // pred_check
      _
    $region47: #{generator_forward.4} parent=1 // pred_check_branch
      %51 = sbr.rel (0) target = $region49
    $region48: #{generator_forward.4} parent=1 // pred_region
      _
    $region49: #{generator_forward.4} parent=1 // pred_fallthru
      _
    // Predicated region
    $region50: #{generator_forward.4} parent=1 // pred_check
      _
    $region51: #{generator_forward.4} parent=1 // pred_check_branch
      %53 = sbr.rel (0) target = $region53
    $region52: #{generator_forward.4} parent=1 // pred_region
      _
    $region53: #{generator_forward.4} parent=1 // pred_fallthru
      _
    // Predicated region
    $region54: #{generator_forward.4} parent=1 // pred_check
      _
    $region55: #{generator_forward.4} parent=1 // pred_check_branch
      %55 = sbr.rel (0) target = $region57
    $region56: #{generator_forward.4} parent=1 // pred_region
      _
    $region57: #{generator_forward.4} parent=1 // pred_fallthru
      _
    // Predicated region
    $region58: #{generator_forward.4} parent=1 // pred_check
      _
    $region59: #{generator_forward.4} parent=1 // pred_check_branch
      %57 = sbr.rel (0) target = $region61
    $region60: #{generator_forward.4} parent=1 // pred_region
      _
    $region61: #{generator_forward.4} parent=1 // pred_fallthru
      _
    // Predicated region
    $region62: #{generator_forward.4} parent=1 // pred_check
      _
    $region63: #{generator_forward.4} parent=1 // pred_check_branch
      %59 = sbr.rel (0) target = $region65
    $region64: #{generator_forward.4} parent=1 // pred_region
      _
    $region65: #{generator_forward.4} parent=1 // pred_fallthru
      _
    // Predicated region
    $region66: #{generator_forward.4} parent=1 // pred_check
      _
    $region67: #{generator_forward.4} parent=1 // pred_check_branch
      %61 = sbr.rel (0) target = $region69
    $region68: #{generator_forward.4} parent=1 // pred_region
      _
    $region69: #{generator_forward.4} parent=1 // pred_fallthru
      _
    // Predicated region
    $region70: #{generator_forward.4} parent=1 // pred_check
      _
    $region71: #{generator_forward.4} parent=1 // pred_check_branch
      %63 = sbr.rel (0) target = $region73
    $region72: #{generator_forward.4} parent=1 // pred_region
      _
    $region73: #{generator_forward.4} parent=1 // pred_fallthru
      _
    %v64 = vld [vmem:[%s0] sm:$0xff]
    %v65 = vld [vmem:[%s0 + $0x8] sm:$0xff]
    %v66 = vld [vmem:[%s1] sm:$0xff]
    %v67 = vld [vmem:[%s1 + $0x8] sm:$0xff]
    %v68 = vld [vmem:[%s2] sm:$0xff]
    %v69 = vld [vmem:[%s3] sm:$0xff]
    %v70 = vld [vmem:[%s3 + $0x8] sm:$0xff]
    %v71 = vld [vmem:[%s3 + $0x10] sm:$0xff]
    %v72 = vld [vmem:[%s3 + $0x18] sm:$0xff]
    %vm73 = vcmask 261120
    %v75 = vsel %vm73, %v64, 0
    %v78 = vsel %vm73, %v65, 0
    %80 = vmatprep.subr.mxu0 0.0
    %81 = vmatpush1.msra.mxu0 %v69
    %82 = vmatprep.subr.mxu0 0.0
    %83 = vmatpush1.msra.mxu0 %v70
    %84 = vmatprep.subr.mxu0 0.0
    %85 = vmatpush1.msra.mxu0 %v71
    %86 = vmatprep.subr.mxu0 0.0
    %87 = vmatpush1.msra.mxu0 %v72
    %88 = vmatprep.subr.mxu0 0.0
    %89 = vmatpush1.msra.mxu0 0.0
    %90 = vmatprep.subr.mxu0 0.0
    %91 = vmatpush1.msra.mxu0 0.0
    %92 = vmatprep.subr.mxu0 0.0
    %93 = vmatpush1.msra.mxu0 0.0
    %94 = vmatprep.subr.mxu0 0.0
    %95 = vmatpush1.msra.mxu0 0.0
    %96 = vmatprep.subr.mxu0 0.0
    %97 = vmatpush1.msra.mxu0 0.0
    %98 = vmatprep.subr.mxu0 0.0
    %99 = vmatpush1.msra.mxu0 0.0
    %100 = vmatprep.subr.mxu0 0.0
    %101 = vmatpush1.msra.mxu0 0.0
    %102 = vmatprep.subr.mxu0 0.0
    %103 = vmatpush1.msra.mxu0 0.0
    %104 = vmatprep.subr.mxu0 0.0
    %105 = vmatpush1.msra.mxu0 0.0
    %106 = vmatprep.subr.mxu0 0.0
    %107 = vmatpush1.msra.mxu0 0.0
    %108 = vmatprep.subr.mxu0 0.0
    %109 = vmatpush1.msra.mxu0 0.0
    %110 = vmatprep.subr.mxu0 0.0
    %111 = vmatpush1.msra.mxu0 0.0
    %112 = vmatprep.subr.mxu0 0.0
    %113 = vmatpush1.msra.mxu0 0.0
    %114 = vmatprep.subr.mxu0 0.0
    %115 = vmatpush1.msra.mxu0 0.0
    %116 = vmatprep.subr.mxu0 0.0
    %117 = vmatpush1.msra.mxu0 0.0
    %118 = vmatprep.subr.mxu0 0.0
    %119 = vmatpush1.msra.mxu0 0.0
    %120 = vmatprep.subr.mxu0 0.0
    %121 = vmatpush1.msra.mxu0 0.0
    %122 = vmatprep.subr.mxu0 0.0
    %123 = vmatpush1.msra.mxu0 0.0
    %124 = vmatprep.subr.mxu0 0.0
    %125 = vmatpush1.msra.mxu0 0.0
    %126 = vmatprep.subr.mxu0 0.0
    %127 = vmatpush1.msra.mxu0 0.0
    %128 = vmatprep.subr.mxu0 0.0
    %129 = vmatpush1.msra.mxu0 0.0
    %130 = vmatprep.subr.mxu0 0.0
    %131 = vmatpush1.msra.mxu0 0.0
    %132 = vmatprep.subr.mxu0 0.0
    %133 = vmatpush1.msra.mxu0 0.0
    %134 = vmatprep.subr.mxu0 0.0
    %135 = vmatpush1.msra.mxu0 0.0
    %136 = vmatprep.subr.mxu0 0.0
    %137 = vmatpush1.msra.mxu0 0.0
    %138 = vmatprep.subr.mxu0 0.0
    %139 = vmatpush1.msra.mxu0 0.0
    %140 = vmatprep.subr.mxu0 0.0
    %141 = vmatpush1.msra.mxu0 0.0
    %142 = vmatprep.subr.mxu0 0.0
    %143 = vmatpush1.msra.mxu0 0.0
    %144 = vmatprep.mubr.f32.mxu0 0.0
    %145 = vmatmul.mubr.f32.gmra.mrb[0].mxu0 %v75
    %v146 = vpop.f32.mrb[0].mxu0
    %v147 = vadd.f32 0.0, %v146
    %v148 = vpop.f32.mrb[0].mxu0
    %149 = vmatprep.mubr.f32.mxu0 0.0
    %150 = vmatmul.mubr.f32.gmra.mrb[0].mxu0 %v78
    %v151 = vpop.f32.mrb[0].mxu0
    %v152 = vadd.f32 0.0, %v151
    %v153 = vpop.f32.mrb[0].mxu0
    %154 = vdwg.mxu0
    %156 = vrot.lane.b32.xlu0 %v147, 96
    %v157 = vpop.permute.xlu0 %156
    %vm158 = vcmask 64512
    %v159 = vsel %vm158, %v147, 0
    %v161 = vsel %vm158, %v157, 0
    %163 = vmatprep.subr.mxu0 0.0
    %164 = vmatpush1.xpose.msra.mxu0 %v161
    %165 = vmatprep.subr.mxu0 0.0
    %166 = vmatpush1.xpose.msra.mxu0 0.0
    %167 = vmatprep.subr.mxu0 0.0
    %168 = vmatpush1.xpose.msra.mxu0 0.0
    %169 = vmatprep.subr.mxu0 0.0
    %170 = vmatpush1.xpose.msra.mxu0 0.0
    %171 = vmatprep.subr.mxu0 0.0
    %172 = vmatpush1.xpose.msra.mxu0 0.0
    %173 = vmatprep.subr.mxu0 0.0
    %174 = vmatpush1.xpose.msra.mxu0 0.0
    %175 = vmatprep.subr.mxu0 0.0
    %176 = vmatpush1.xpose.msra.mxu0 0.0
    %177 = vmatprep.subr.mxu0 0.0
    %178 = vmatpush1.xpose.msra.mxu0 0.0
    %179 = vmatprep.subr.mxu0 0.0
    %180 = vmatpush1.xpose.msra.mxu0 0.0
    %181 = vmatprep.subr.mxu0 0.0
    %182 = vmatpush1.xpose.msra.mxu0 0.0
    %183 = vmatprep.subr.mxu0 0.0
    %184 = vmatpush1.xpose.msra.mxu0 0.0
    %185 = vmatprep.subr.mxu0 0.0
    %186 = vmatpush1.xpose.msra.mxu0 0.0
    %187 = vmatprep.subr.mxu0 0.0
    %188 = vmatpush1.xpose.msra.mxu0 0.0
    %189 = vmatprep.subr.mxu0 0.0
    %190 = vmatpush1.xpose.msra.mxu0 0.0
    %191 = vmatprep.subr.mxu0 0.0
    %192 = vmatpush1.xpose.msra.mxu0 0.0
    %193 = vmatprep.subr.mxu0 0.0
    %194 = vmatpush1.xpose.msra.mxu0 0.0
    %195 = vmatprep.subr.mxu0 0.0
    %196 = vmatpush1.xpose.msra.mxu0 0.0
    %197 = vmatprep.subr.mxu0 0.0
    %198 = vmatpush1.xpose.msra.mxu0 0.0
    %199 = vmatprep.subr.mxu0 0.0
    %200 = vmatpush1.xpose.msra.mxu0 0.0
    %201 = vmatprep.subr.mxu0 0.0
    %202 = vmatpush1.xpose.msra.mxu0 0.0
    %203 = vmatprep.subr.mxu0 0.0
    %204 = vmatpush1.xpose.msra.mxu0 0.0
    %205 = vmatprep.subr.mxu0 0.0
    %206 = vmatpush1.xpose.msra.mxu0 0.0
    %207 = vmatprep.subr.mxu0 0.0
    %208 = vmatpush1.xpose.msra.mxu0 0.0
    %209 = vmatprep.subr.mxu0 0.0
    %210 = vmatpush1.xpose.msra.mxu0 0.0
    %211 = vmatprep.subr.mxu0 0.0
    %212 = vmatpush1.xpose.msra.mxu0 0.0
    %213 = vmatprep.subr.mxu0 0.0
    %214 = vmatpush1.xpose.msra.mxu0 0.0
    %215 = vmatprep.subr.mxu0 0.0
    %216 = vmatpush1.xpose.msra.mxu0 0.0
    %217 = vmatprep.subr.mxu0 0.0
    %218 = vmatpush1.xpose.msra.mxu0 0.0
    %219 = vmatprep.subr.mxu0 0.0
    %220 = vmatpush1.xpose.msra.mxu0 0.0
    %221 = vmatprep.subr.mxu0 0.0
    %222 = vmatpush1.xpose.msra.mxu0 0.0
    %223 = vmatprep.subr.mxu0 0.0
    %224 = vmatpush1.xpose.msra.mxu0 0.0
    %225 = vmatprep.subr.mxu0 0.0
    %226 = vmatpush1.xpose.msra.mxu0 0.0
    %227 = vmatprep.mubr.f32.mxu0 0.0
    %228 = vmatmul.mubr.f32.gmra.mrb[0].mxu0 %v159
    %v229 = vpop.f32.mrb[0].mxu0
    %v230 = vadd.f32 0.0, %v229
    %v231 = vpop.f32.mrb[0].mxu0
    %232 = vdwg.mxu0
    %v233 = vmul.f32 %v230, 0.35355338
    %v234 = vadd.f32 %v233, %v68
    %v235 = vsel %vm158, %v234, -inf
    %236 = vmax.xlane.f32.xlu0 %v235
    %v237 = vpop.xlane.xlu0 %236
    %v238 = vsub.f32 %v234, %v237
    %v239 = vmul.f32 %v238, 1.442695
    %v240 = vpow.pop %v239
    %v241 = vsel %vm158, %v240, 0.0
    %242 = vadd.xlane.f32.xlu0 %v241
    %v243 = vpop.xlane.xlu0 %242
    %v244 = vrcp.pop %v243
    %v245 = vmul.f32 %v240, %v244
    %246 = vst.msk [vmem:[#allocation2] sm:$0xff] %vm158, %v245
    %247 = vrot.lane.b32.xlu0 %v147, 64
    %v248 = vpop.permute.xlu0 %247
    %v251 = vsel %vm158, %v245, 0
    %253 = vmatprep.subr.mxu0 0.0
    %254 = vmatpush1.msra.mxu0 %v248
    %255 = vmatprep.subr.mxu0 0.0
    %256 = vmatpush1.msra.mxu0 0.0
    %257 = vmatprep.subr.mxu0 0.0
    %258 = vmatpush1.msra.mxu0 0.0
    %259 = vmatprep.subr.mxu0 0.0
    %260 = vmatpush1.msra.mxu0 0.0
    %261 = vmatprep.subr.mxu0 0.0
    %262 = vmatpush1.msra.mxu0 0.0
    %263 = vmatprep.subr.mxu0 0.0
    %264 = vmatpush1.msra.mxu0 0.0
    %265 = vmatprep.subr.mxu0 0.0
    %266 = vmatpush1.msra.mxu0 0.0
    %267 = vmatprep.subr.mxu0 0.0
    %268 = vmatpush1.msra.mxu0 0.0
    %269 = vmatprep.subr.mxu0 0.0
    %270 = vmatpush1.msra.mxu0 0.0
    %271 = vmatprep.subr.mxu0 0.0
    %272 = vmatpush1.msra.mxu0 0.0
    %273 = vmatprep.subr.mxu0 0.0
    %274 = vmatpush1.msra.mxu0 0.0
    %275 = vmatprep.subr.mxu0 0.0
    %276 = vmatpush1.msra.mxu0 0.0
    %277 = vmatprep.subr.mxu0 0.0
    %278 = vmatpush1.msra.mxu0 0.0
    %279 = vmatprep.subr.mxu0 0.0
    %280 = vmatpush1.msra.mxu0 0.0
    %281 = vmatprep.subr.mxu0 0.0
    %282 = vmatpush1.msra.mxu0 0.0
    %283 = vmatprep.subr.mxu0 0.0
    %284 = vmatpush1.msra.mxu0 0.0
    %285 = vmatprep.subr.mxu0 0.0
    %286 = vmatpush1.msra.mxu0 0.0
    %287 = vmatprep.subr.mxu0 0.0
    %288 = vmatpush1.msra.mxu0 0.0
    %289 = vmatprep.subr.mxu0 0.0
    %290 = vmatpush1.msra.mxu0 0.0
    %291 = vmatprep.subr.mxu0 0.0
    %292 = vmatpush1.msra.mxu0 0.0
    %293 = vmatprep.subr.mxu0 0.0
    %294 = vmatpush1.msra.mxu0 0.0
    %295 = vmatprep.subr.mxu0 0.0
    %296 = vmatpush1.msra.mxu0 0.0
    %297 = vmatprep.subr.mxu0 0.0
    %298 = vmatpush1.msra.mxu0 0.0
    %299 = vmatprep.subr.mxu0 0.0
    %300 = vmatpush1.msra.mxu0 0.0
    %301 = vmatprep.subr.mxu0 0.0
    %302 = vmatpush1.msra.mxu0 0.0
    %303 = vmatprep.subr.mxu0 0.0
    %304 = vmatpush1.msra.mxu0 0.0
    %305 = vmatprep.subr.mxu0 0.0
    %306 = vmatpush1.msra.mxu0 0.0
    %307 = vmatprep.subr.mxu0 0.0
    %308 = vmatpush1.msra.mxu0 0.0
    %309 = vmatprep.subr.mxu0 0.0
    %310 = vmatpush1.msra.mxu0 0.0
    %311 = vmatprep.subr.mxu0 0.0
    %312 = vmatpush1.msra.mxu0 0.0
    %313 = vmatprep.subr.mxu0 0.0
    %314 = vmatpush1.msra.mxu0 0.0
    %315 = vmatprep.subr.mxu0 0.0
    %316 = vmatpush1.msra.mxu0 0.0
    %317 = vmatprep.mubr.f32.mxu0 0.0
    %318 = vmatmul.mubr.f32.gmra.mrb[0].mxu0 %v251
    %v319 = vpop.f32.mrb[0].mxu0
    %v320 = vadd.f32 0.0, %v319
    %v321 = vpop.f32.mrb[0].mxu0
    %322 = vdwg.mxu0
    %v323 = vld [vmem:[%s4] sm:$0xff]
    %324 = vrot.lane.b32.xlu0 %v147, 120
    %v325 = vpop.permute.xlu0 %324
    %326 = vrot.lane.b32.xlu0 %v147, 88
    %v327 = vpop.permute.xlu0 %326
    %v328 = vsel %vm158, %v325, 0
    %v330 = vsel %vm158, %v327, 0
    %332 = vmatprep.subr.mxu0 0.0
    %333 = vmatpush1.xpose.msra.mxu0 %v330
    %334 = vmatprep.subr.mxu0 0.0
    %335 = vmatpush1.xpose.msra.mxu0 0.0
    %336 = vmatprep.subr.mxu0 0.0
    %337 = vmatpush1.xpose.msra.mxu0 0.0
    %338 = vmatprep.subr.mxu0 0.0
    %339 = vmatpush1.xpose.msra.mxu0 0.0
    %340 = vmatprep.subr.mxu0 0.0
    %341 = vmatpush1.xpose.msra.mxu0 0.0
    %342 = vmatprep.subr.mxu0 0.0
    %343 = vmatpush1.xpose.msra.mxu0 0.0
    %344 = vmatprep.subr.mxu0 0.0
    %345 = vmatpush1.xpose.msra.mxu0 0.0
    %346 = vmatprep.subr.mxu0 0.0
    %347 = vmatpush1.xpose.msra.mxu0 0.0
    %348 = vmatprep.subr.mxu0 0.0
    %349 = vmatpush1.xpose.msra.mxu0 0.0
    %350 = vmatprep.subr.mxu0 0.0
    %351 = vmatpush1.xpose.msra.mxu0 0.0
    %352 = vmatprep.subr.mxu0 0.0
    %353 = vmatpush1.xpose.msra.mxu0 0.0
    %354 = vmatprep.subr.mxu0 0.0
    %355 = vmatpush1.xpose.msra.mxu0 0.0
    %356 = vmatprep.subr.mxu0 0.0
    %357 = vmatpush1.xpose.msra.mxu0 0.0
    %358 = vmatprep.subr.mxu0 0.0
    %359 = vmatpush1.xpose.msra.mxu0 0.0
    %360 = vmatprep.subr.mxu0 0.0
    %361 = vmatpush1.xpose.msra.mxu0 0.0
    %362 = vmatprep.subr.mxu0 0.0
    %363 = vmatpush1.xpose.msra.mxu0 0.0
    %364 = vmatprep.subr.mxu0 0.0
    %365 = vmatpush1.xpose.msra.mxu0 0.0
    %366 = vmatprep.subr.mxu0 0.0
    %367 = vmatpush1.xpose.msra.mxu0 0.0
    %368 = vmatprep.subr.mxu0 0.0
    %369 = vmatpush1.xpose.msra.mxu0 0.0
    %370 = vmatprep.subr.mxu0 0.0
    %371 = vmatpush1.xpose.msra.mxu0 0.0
    %372 = vmatprep.subr.mxu0 0.0
    %373 = vmatpush1.xpose.msra.mxu0 0.0
    %374 = vmatprep.subr.mxu0 0.0
    %375 = vmatpush1.xpose.msra.mxu0 0.0
    %376 = vmatprep.subr.mxu0 0.0
    %377 = vmatpush1.xpose.msra.mxu0 0.0
    %378 = vmatprep.subr.mxu0 0.0
    %379 = vmatpush1.xpose.msra.mxu0 0.0
    %380 = vmatprep.subr.mxu0 0.0
    %381 = vmatpush1.xpose.msra.mxu0 0.0
    %382 = vmatprep.subr.mxu0 0.0
    %383 = vmatpush1.xpose.msra.mxu0 0.0
    %384 = vmatprep.subr.mxu0 0.0
    %385 = vmatpush1.xpose.msra.mxu0 0.0
    %386 = vmatprep.subr.mxu0 0.0
    %387 = vmatpush1.xpose.msra.mxu0 0.0
    %388 = vmatprep.subr.mxu0 0.0
    %389 = vmatpush1.xpose.msra.mxu0 0.0
    %390 = vmatprep.subr.mxu0 0.0
    %391 = vmatpush1.xpose.msra.mxu0 0.0
    %392 = vmatprep.subr.mxu0 0.0
    %393 = vmatpush1.xpose.msra.mxu0 0.0
    %394 = vmatprep.subr.mxu0 0.0
    %395 = vmatpush1.xpose.msra.mxu0 0.0
    %396 = vmatprep.mubr.f32.mxu0 0.0
    %397 = vmatmul.mubr.f32.gmra.mrb[0].mxu0 %v328
    %v398 = vpop.f32.mrb[0].mxu0
    %v399 = vadd.f32 0.0, %v398
    %v400 = vpop.f32.mrb[0].mxu0
    %401 = vdwg.mxu0
    %v402 = vmul.f32 %v399, 0.35355338
    %v403 = vadd.f32 %v402, %v68
    %v404 = vsel %vm158, %v403, -inf
    %405 = vmax.xlane.f32.xlu0 %v404
    %v406 = vpop.xlane.xlu0 %405
    %v407 = vsub.f32 %v403, %v406
    %v408 = vmul.f32 %v407, 1.442695
    %v409 = vpow.pop %v408
    %v410 = vsel %vm158, %v409, 0.0
    %411 = vadd.xlane.f32.xlu0 %v410
    %v412 = vpop.xlane.xlu0 %411
    %v413 = vrcp.pop %v412
    %v414 = vmul.f32 %v409, %v413
    %s415 = scalar_lea.vmem [#allocation2], 8
    %416 = vst.msk [vmem:[%s415] sm:$0xff] %vm158, %v414
    %417 = vrot.lane.b32.xlu0 %v147, 56
    %v418 = vpop.permute.xlu0 %417
    %v421 = vsel %vm158, %v414, 0
    %423 = vmatprep.subr.mxu0 0.0
    %424 = vmatpush1.msra.mxu0 %v418
    %425 = vmatprep.subr.mxu0 0.0
    %426 = vmatpush1.msra.mxu0 0.0
    %427 = vmatprep.subr.mxu0 0.0
    %428 = vmatpush1.msra.mxu0 0.0
    %429 = vmatprep.subr.mxu0 0.0
    %430 = vmatpush1.msra.mxu0 0.0
    %431 = vmatprep.subr.mxu0 0.0
    %432 = vmatpush1.msra.mxu0 0.0
    %433 = vmatprep.subr.mxu0 0.0
    %434 = vmatpush1.msra.mxu0 0.0
    %435 = vmatprep.subr.mxu0 0.0
    %436 = vmatpush1.msra.mxu0 0.0
    %437 = vmatprep.subr.mxu0 0.0
    %438 = vmatpush1.msra.mxu0 0.0
    %439 = vmatprep.subr.mxu0 0.0
    %440 = vmatpush1.msra.mxu0 0.0
    %441 = vmatprep.subr.mxu0 0.0
    %442 = vmatpush1.msra.mxu0 0.0
    %443 = vmatprep.subr.mxu0 0.0
    %444 = vmatpush1.msra.mxu0 0.0
    %445 = vmatprep.subr.mxu0 0.0
    %446 = vmatpush1.msra.mxu0 0.0
    %447 = vmatprep.subr.mxu0 0.0
    %448 = vmatpush1.msra.mxu0 0.0
    %449 = vmatprep.subr.mxu0 0.0
    %450 = vmatpush1.msra.mxu0 0.0
    %451 = vmatprep.subr.mxu0 0.0
    %452 = vmatpush1.msra.mxu0 0.0
    %453 = vmatprep.subr.mxu0 0.0
    %454 = vmatpush1.msra.mxu0 0.0
    %455 = vmatprep.subr.mxu0 0.0
    %456 = vmatpush1.msra.mxu0 0.0
    %457 = vmatprep.subr.mxu0 0.0
    %458 = vmatpush1.msra.mxu0 0.0
    %459 = vmatprep.subr.mxu0 0.0
    %460 = vmatpush1.msra.mxu0 0.0
    %461 = vmatprep.subr.mxu0 0.0
    %462 = vmatpush1.msra.mxu0 0.0
    %463 = vmatprep.subr.mxu0 0.0
    %464 = vmatpush1.msra.mxu0 0.0
    %465 = vmatprep.subr.mxu0 0.0
    %466 = vmatpush1.msra.mxu0 0.0
    %467 = vmatprep.subr.mxu0 0.0
    %468 = vmatpush1.msra.mxu0 0.0
    %469 = vmatprep.subr.mxu0 0.0
    %470 = vmatpush1.msra.mxu0 0.0
    %471 = vmatprep.subr.mxu0 0.0
    %472 = vmatpush1.msra.mxu0 0.0
    %473 = vmatprep.subr.mxu0 0.0
    %474 = vmatpush1.msra.mxu0 0.0
    %475 = vmatprep.subr.mxu0 0.0
    %476 = vmatpush1.msra.mxu0 0.0
    %477 = vmatprep.subr.mxu0 0.0
    %478 = vmatpush1.msra.mxu0 0.0
    %479 = vmatprep.subr.mxu0 0.0
    %480 = vmatpush1.msra.mxu0 0.0
    %481 = vmatprep.subr.mxu0 0.0
    %482 = vmatpush1.msra.mxu0 0.0
    %483 = vmatprep.subr.mxu0 0.0
    %484 = vmatpush1.msra.mxu0 0.0
    %485 = vmatprep.subr.mxu0 0.0
    %486 = vmatpush1.msra.mxu0 0.0
    %487 = vmatprep.mubr.f32.mxu0 0.0
    %488 = vmatmul.mubr.f32.gmra.mrb[0].mxu0 %v421
    %v489 = vpop.f32.mrb[0].mxu0
    %v490 = vadd.f32 0.0, %v489
    %v491 = vpop.f32.mrb[0].mxu0
    %492 = vdwg.mxu0
    %v493 = vld [vmem:[%s4 + $0x8] sm:$0xff]
    %v495 = vsel %vm158, %v490, 0
    %497 = vmatprep.subr.mxu0 0.0
    %498 = vmatpush1.msra.mxu0 %v493
    %499 = vmatprep.subr.mxu0 0.0
    %500 = vmatpush1.msra.mxu0 0.0
    %501 = vmatprep.subr.mxu0 0.0
    %502 = vmatpush1.msra.mxu0 0.0
    %503 = vmatprep.subr.mxu0 0.0
    %504 = vmatpush1.msra.mxu0 0.0
    %505 = vmatprep.subr.mxu0 0.0
    %506 = vmatpush1.msra.mxu0 0.0
    %507 = vmatprep.subr.mxu0 0.0
    %508 = vmatpush1.msra.mxu0 0.0
    %509 = vmatprep.subr.mxu0 0.0
    %510 = vmatpush1.msra.mxu0 0.0
    %511 = vmatprep.subr.mxu0 0.0
    %512 = vmatpush1.msra.mxu0 0.0
    %513 = vmatprep.subr.mxu0 0.0
    %514 = vmatpush1.msra.mxu0 0.0
    %515 = vmatprep.subr.mxu0 0.0
    %516 = vmatpush1.msra.mxu0 0.0
    %517 = vmatprep.subr.mxu0 0.0
    %518 = vmatpush1.msra.mxu0 0.0
    %519 = vmatprep.subr.mxu0 0.0
    %520 = vmatpush1.msra.mxu0 0.0
    %521 = vmatprep.subr.mxu0 0.0
    %522 = vmatpush1.msra.mxu0 0.0
    %523 = vmatprep.subr.mxu0 0.0
    %524 = vmatpush1.msra.mxu0 0.0
    %525 = vmatprep.subr.mxu0 0.0
    %526 = vmatpush1.msra.mxu0 0.0
    %527 = vmatprep.subr.mxu0 0.0
    %528 = vmatpush1.msra.mxu0 0.0
    %529 = vmatprep.subr.mxu0 0.0
    %530 = vmatpush1.msra.mxu0 0.0
    %531 = vmatprep.subr.mxu0 0.0
    %532 = vmatpush1.msra.mxu0 0.0
    %533 = vmatprep.subr.mxu0 0.0
    %534 = vmatpush1.msra.mxu0 0.0
    %535 = vmatprep.subr.mxu0 0.0
    %536 = vmatpush1.msra.mxu0 0.0
    %537 = vmatprep.subr.mxu0 0.0
    %538 = vmatpush1.msra.mxu0 0.0
    %539 = vmatprep.subr.mxu0 0.0
    %540 = vmatpush1.msra.mxu0 0.0
    %541 = vmatprep.subr.mxu0 0.0
    %542 = vmatpush1.msra.mxu0 0.0
    %543 = vmatprep.subr.mxu0 0.0
    %544 = vmatpush1.msra.mxu0 0.0
    %545 = vmatprep.subr.mxu0 0.0
    %546 = vmatpush1.msra.mxu0 0.0
    %547 = vmatprep.subr.mxu0 0.0
    %548 = vmatpush1.msra.mxu0 0.0
    %549 = vmatprep.subr.mxu0 0.0
    %550 = vmatpush1.msra.mxu0 0.0
    %551 = vmatprep.subr.mxu0 0.0
    %552 = vmatpush1.msra.mxu0 0.0
    %553 = vmatprep.subr.mxu0 0.0
    %554 = vmatpush1.msra.mxu0 0.0
    %555 = vmatprep.subr.mxu0 0.0
    %556 = vmatpush1.msra.mxu0 0.0
    %557 = vmatprep.subr.mxu0 0.0
    %558 = vmatpush1.msra.mxu0 0.0
    %559 = vmatprep.subr.mxu0 0.0
    %560 = vmatpush1.msra.mxu0 0.0
    %561 = vmatprep.mubr.f32.mxu0 0.0
    %562 = vmatmul.mubr.f32.gmra.mrb[0].mxu0 %v495
    %v563 = vpop.f32.mrb[0].mxu0
    %v564 = vadd.f32 0.0, %v563
    %v565 = vpop.f32.mrb[0].mxu0
    %566 = vdwg.mxu0
    %v568 = vsel %vm158, %v320, 0
    %570 = vmatprep.subr.mxu0 0.0
    %571 = vmatpush1.msra.mxu0 %v323
    %572 = vmatprep.subr.mxu0 0.0
    %573 = vmatpush1.msra.mxu0 0.0
    %574 = vmatprep.subr.mxu0 0.0
    %575 = vmatpush1.msra.mxu0 0.0
    %576 = vmatprep.subr.mxu0 0.0
    %577 = vmatpush1.msra.mxu0 0.0
    %578 = vmatprep.subr.mxu0 0.0
    %579 = vmatpush1.msra.mxu0 0.0
    %580 = vmatprep.subr.mxu0 0.0
    %581 = vmatpush1.msra.mxu0 0.0
    %582 = vmatprep.subr.mxu0 0.0
    %583 = vmatpush1.msra.mxu0 0.0
    %584 = vmatprep.subr.mxu0 0.0
    %585 = vmatpush1.msra.mxu0 0.0
    %586 = vmatprep.subr.mxu0 0.0
    %587 = vmatpush1.msra.mxu0 0.0
    %588 = vmatprep.subr.mxu0 0.0
    %589 = vmatpush1.msra.mxu0 0.0
    %590 = vmatprep.subr.mxu0 0.0
    %591 = vmatpush1.msra.mxu0 0.0
    %592 = vmatprep.subr.mxu0 0.0
    %593 = vmatpush1.msra.mxu0 0.0
    %594 = vmatprep.subr.mxu0 0.0
    %595 = vmatpush1.msra.mxu0 0.0
    %596 = vmatprep.subr.mxu0 0.0
    %597 = vmatpush1.msra.mxu0 0.0
    %598 = vmatprep.subr.mxu0 0.0
    %599 = vmatpush1.msra.mxu0 0.0
    %600 = vmatprep.subr.mxu0 0.0
    %601 = vmatpush1.msra.mxu0 0.0
    %602 = vmatprep.subr.mxu0 0.0
    %603 = vmatpush1.msra.mxu0 0.0
    %604 = vmatprep.subr.mxu0 0.0
    %605 = vmatpush1.msra.mxu0 0.0
    %606 = vmatprep.subr.mxu0 0.0
    %607 = vmatpush1.msra.mxu0 0.0
    %608 = vmatprep.subr.mxu0 0.0
    %609 = vmatpush1.msra.mxu0 0.0
    %610 = vmatprep.subr.mxu0 0.0
    %611 = vmatpush1.msra.mxu0 0.0
    %612 = vmatprep.subr.mxu0 0.0
    %613 = vmatpush1.msra.mxu0 0.0
    %614 = vmatprep.subr.mxu0 0.0
    %615 = vmatpush1.msra.mxu0 0.0
    %616 = vmatprep.subr.mxu0 0.0
    %617 = vmatpush1.msra.mxu0 0.0
    %618 = vmatprep.subr.mxu0 0.0
    %619 = vmatpush1.msra.mxu0 0.0
    %620 = vmatprep.subr.mxu0 0.0
    %621 = vmatpush1.msra.mxu0 0.0
    %622 = vmatprep.subr.mxu0 0.0
    %623 = vmatpush1.msra.mxu0 0.0
    %624 = vmatprep.subr.mxu0 0.0
    %625 = vmatpush1.msra.mxu0 0.0
    %626 = vmatprep.subr.mxu0 0.0
    %627 = vmatpush1.msra.mxu0 0.0
    %628 = vmatprep.subr.mxu0 0.0
    %629 = vmatpush1.msra.mxu0 0.0
    %630 = vmatprep.subr.mxu0 0.0
    %631 = vmatpush1.msra.mxu0 0.0
    %632 = vmatprep.subr.mxu0 0.0
    %633 = vmatpush1.msra.mxu0 0.0
    %634 = vmatprep.mubr.f32.mxu0 0.0
    %635 = vmatmul.mubr.f32.gmra.mrb[0].mxu0 %v568
    %v636 = vpop.f32.mrb[0].mxu0
    %v637 = vadd.f32 %v564, %v636
    %v638 = vpop.f32.mrb[0].mxu0
    %639 = vdwg.mxu0
    %640 = vrot.lane.b32.xlu0 %v147, 112
    %v641 = vpop.permute.xlu0 %640
    %642 = vrot.lane.b32.xlu0 %v147, 80
    %v643 = vpop.permute.xlu0 %642
    %v644 = vsel %vm158, %v641, 0
    %v646 = vsel %vm158, %v643, 0
    %648 = vmatprep.subr.mxu0 0.0
    %649 = vmatpush1.xpose.msra.mxu0 %v646
    %650 = vmatprep.subr.mxu0 0.0
    %651 = vmatpush1.xpose.msra.mxu0 0.0
    %652 = vmatprep.subr.mxu0 0.0
    %653 = vmatpush1.xpose.msra.mxu0 0.0
    %654 = vmatprep.subr.mxu0 0.0
    %655 = vmatpush1.xpose.msra.mxu0 0.0
    %656 = vmatprep.subr.mxu0 0.0
    %657 = vmatpush1.xpose.msra.mxu0 0.0
    %658 = vmatprep.subr.mxu0 0.0
    %659 = vmatpush1.xpose.msra.mxu0 0.0
    %660 = vmatprep.subr.mxu0 0.0
    %661 = vmatpush1.xpose.msra.mxu0 0.0
    %662 = vmatprep.subr.mxu0 0.0
    %663 = vmatpush1.xpose.msra.mxu0 0.0
    %664 = vmatprep.subr.mxu0 0.0
    %665 = vmatpush1.xpose.msra.mxu0 0.0
    %666 = vmatprep.subr.mxu0 0.0
    %667 = vmatpush1.xpose.msra.mxu0 0.0
    %668 = vmatprep.subr.mxu0 0.0
    %669 = vmatpush1.xpose.msra.mxu0 0.0
    %670 = vmatprep.subr.mxu0 0.0
    %671 = vmatpush1.xpose.msra.mxu0 0.0
    %672 = vmatprep.subr.mxu0 0.0
    %673 = vmatpush1.xpose.msra.mxu0 0.0
    %674 = vmatprep.subr.mxu0 0.0
    %675 = vmatpush1.xpose.msra.mxu0 0.0
    %676 = vmatprep.subr.mxu0 0.0
    %677 = vmatpush1.xpose.msra.mxu0 0.0
    %678 = vmatprep.subr.mxu0 0.0
    %679 = vmatpush1.xpose.msra.mxu0 0.0
    %680 = vmatprep.subr.mxu0 0.0
    %681 = vmatpush1.xpose.msra.mxu0 0.0
    %682 = vmatprep.subr.mxu0 0.0
    %683 = vmatpush1.xpose.msra.mxu0 0.0
    %684 = vmatprep.subr.mxu0 0.0
    %685 = vmatpush1.xpose.msra.mxu0 0.0
    %686 = vmatprep.subr.mxu0 0.0
    %687 = vmatpush1.xpose.msra.mxu0 0.0
    %688 = vmatprep.subr.mxu0 0.0
    %689 = vmatpush1.xpose.msra.mxu0 0.0
    %690 = vmatprep.subr.mxu0 0.0
    %691 = vmatpush1.xpose.msra.mxu0 0.0
    %692 = vmatprep.subr.mxu0 0.0
    %693 = vmatpush1.xpose.msra.mxu0 0.0
    %694 = vmatprep.subr.mxu0 0.0
    %695 = vmatpush1.xpose.msra.mxu0 0.0
    %696 = vmatprep.subr.mxu0 0.0
    %697 = vmatpush1.xpose.msra.mxu0 0.0
    %698 = vmatprep.subr.mxu0 0.0
    %699 = vmatpush1.xpose.msra.mxu0 0.0
    %700 = vmatprep.subr.mxu0 0.0
    %701 = vmatpush1.xpose.msra.mxu0 0.0
    %702 = vmatprep.subr.mxu0 0.0
    %703 = vmatpush1.xpose.msra.mxu0 0.0
    %704 = vmatprep.subr.mxu0 0.0
    %705 = vmatpush1.xpose.msra.mxu0 0.0
    %706 = vmatprep.subr.mxu0 0.0
    %707 = vmatpush1.xpose.msra.mxu0 0.0
    %708 = vmatprep.subr.mxu0 0.0
    %709 = vmatpush1.xpose.msra.mxu0 0.0
    %710 = vmatprep.subr.mxu0 0.0
    %711 = vmatpush1.xpose.msra.mxu0 0.0
    %712 = vmatprep.mubr.f32.mxu0 0.0
    %713 = vmatmul.mubr.f32.gmra.mrb[0].mxu0 %v644
    %v714 = vpop.f32.mrb[0].mxu0
    %v715 = vadd.f32 0.0, %v714
    %v716 = vpop.f32.mrb[0].mxu0
    %717 = vdwg.mxu0
    %v718 = vmul.f32 %v715, 0.35355338
    %v719 = vadd.f32 %v718, %v68
    %v720 = vsel %vm158, %v719, -inf
    %721 = vmax.xlane.f32.xlu0 %v720
    %v722 = vpop.xlane.xlu0 %721
    %v723 = vsub.f32 %v719, %v722
    %v724 = vmul.f32 %v723, 1.442695
    %v725 = vpow.pop %v724
    %v726 = vsel %vm158, %v725, 0.0
    %727 = vadd.xlane.f32.xlu0 %v726
    %v728 = vpop.xlane.xlu0 %727
    %v729 = vrcp.pop %v728
    %v730 = vmul.f32 %v725, %v729
    %s731 = scalar_lea.vmem [#allocation2], 16
    %732 = vst.msk [vmem:[%s731] sm:$0xff] %vm158, %v730
    %733 = vrot.lane.b32.xlu0 %v147, 48
    %v734 = vpop.permute.xlu0 %733
    %v737 = vsel %vm158, %v730, 0
    %739 = vmatprep.subr.mxu0 0.0
    %740 = vmatpush1.msra.mxu0 %v734
    %741 = vmatprep.subr.mxu0 0.0
    %742 = vmatpush1.msra.mxu0 0.0
    %743 = vmatprep.subr.mxu0 0.0
    %744 = vmatpush1.msra.mxu0 0.0
    %745 = vmatprep.subr.mxu0 0.0
    %746 = vmatpush1.msra.mxu0 0.0
    %747 = vmatprep.subr.mxu0 0.0
    %748 = vmatpush1.msra.mxu0 0.0
    %749 = vmatprep.subr.mxu0 0.0
    %750 = vmatpush1.msra.mxu0 0.0
    %751 = vmatprep.subr.mxu0 0.0
    %752 = vmatpush1.msra.mxu0 0.0
    %753 = vmatprep.subr.mxu0 0.0
    %754 = vmatpush1.msra.mxu0 0.0
    %755 = vmatprep.subr.mxu0 0.0
    %756 = vmatpush1.msra.mxu0 0.0
    %757 = vmatprep.subr.mxu0 0.0
    %758 = vmatpush1.msra.mxu0 0.0
    %759 = vmatprep.subr.mxu0 0.0
    %760 = vmatpush1.msra.mxu0 0.0
    %761 = vmatprep.subr.mxu0 0.0
    %762 = vmatpush1.msra.mxu0 0.0
    %763 = vmatprep.subr.mxu0 0.0
    %764 = vmatpush1.msra.mxu0 0.0
    %765 = vmatprep.subr.mxu0 0.0
    %766 = vmatpush1.msra.mxu0 0.0
    %767 = vmatprep.subr.mxu0 0.0
    %768 = vmatpush1.msra.mxu0 0.0
    %769 = vmatprep.subr.mxu0 0.0
    %770 = vmatpush1.msra.mxu0 0.0
    %771 = vmatprep.subr.mxu0 0.0
    %772 = vmatpush1.msra.mxu0 0.0
    %773 = vmatprep.subr.mxu0 0.0
    %774 = vmatpush1.msra.mxu0 0.0
    %775 = vmatprep.subr.mxu0 0.0
    %776 = vmatpush1.msra.mxu0 0.0
    %777 = vmatprep.subr.mxu0 0.0
    %778 = vmatpush1.msra.mxu0 0.0
    %779 = vmatprep.subr.mxu0 0.0
    %780 = vmatpush1.msra.mxu0 0.0
    %781 = vmatprep.subr.mxu0 0.0
    %782 = vmatpush1.msra.mxu0 0.0
    %783 = vmatprep.subr.mxu0 0.0
    %784 = vmatpush1.msra.mxu0 0.0
    %785 = vmatprep.subr.mxu0 0.0
    %786 = vmatpush1.msra.mxu0 0.0
    %787 = vmatprep.subr.mxu0 0.0
    %788 = vmatpush1.msra.mxu0 0.0
    %789 = vmatprep.subr.mxu0 0.0
    %790 = vmatpush1.msra.mxu0 0.0
    %791 = vmatprep.subr.mxu0 0.0
    %792 = vmatpush1.msra.mxu0 0.0
    %793 = vmatprep.subr.mxu0 0.0
    %794 = vmatpush1.msra.mxu0 0.0
    %795 = vmatprep.subr.mxu0 0.0
    %796 = vmatpush1.msra.mxu0 0.0
    %797 = vmatprep.subr.mxu0 0.0
    %798 = vmatpush1.msra.mxu0 0.0
    %799 = vmatprep.subr.mxu0 0.0
    %800 = vmatpush1.msra.mxu0 0.0
    %801 = vmatprep.subr.mxu0 0.0
    %802 = vmatpush1.msra.mxu0 0.0
    %803 = vmatprep.mubr.f32.mxu0 0.0
    %804 = vmatmul.mubr.f32.gmra.mrb[0].mxu0 %v737
    %v805 = vpop.f32.mrb[0].mxu0
    %v806 = vadd.f32 0.0, %v805
    %v807 = vpop.f32.mrb[0].mxu0
    %808 = vdwg.mxu0
    %v809 = vld [vmem:[%s4 + $0x10] sm:$0xff]
    %v811 = vsel %vm158, %v806, 0
    %813 = vmatprep.subr.mxu0 0.0
    %814 = vmatpush1.msra.mxu0 %v809
    %815 = vmatprep.subr.mxu0 0.0
    %816 = vmatpush1.msra.mxu0 0.0
    %817 = vmatprep.subr.mxu0 0.0
    %818 = vmatpush1.msra.mxu0 0.0
    %819 = vmatprep.subr.mxu0 0.0
    %820 = vmatpush1.msra.mxu0 0.0
    %821 = vmatprep.subr.mxu0 0.0
    %822 = vmatpush1.msra.mxu0 0.0
    %823 = vmatprep.subr.mxu0 0.0
    %824 = vmatpush1.msra.mxu0 0.0
    %825 = vmatprep.subr.mxu0 0.0
    %826 = vmatpush1.msra.mxu0 0.0
    %827 = vmatprep.subr.mxu0 0.0
    %828 = vmatpush1.msra.mxu0 0.0
    %829 = vmatprep.subr.mxu0 0.0
    %830 = vmatpush1.msra.mxu0 0.0
    %831 = vmatprep.subr.mxu0 0.0
    %832 = vmatpush1.msra.mxu0 0.0
    %833 = vmatprep.subr.mxu0 0.0
    %834 = vmatpush1.msra.mxu0 0.0
    %835 = vmatprep.subr.mxu0 0.0
    %836 = vmatpush1.msra.mxu0 0.0
    %837 = vmatprep.subr.mxu0 0.0
    %838 = vmatpush1.msra.mxu0 0.0
    %839 = vmatprep.subr.mxu0 0.0
    %840 = vmatpush1.msra.mxu0 0.0
    %841 = vmatprep.subr.mxu0 0.0
    %842 = vmatpush1.msra.mxu0 0.0
    %843 = vmatprep.subr.mxu0 0.0
    %844 = vmatpush1.msra.mxu0 0.0
    %845 = vmatprep.subr.mxu0 0.0
    %846 = vmatpush1.msra.mxu0 0.0
    %847 = vmatprep.subr.mxu0 0.0
    %848 = vmatpush1.msra.mxu0 0.0
    %849 = vmatprep.subr.mxu0 0.0
    %850 = vmatpush1.msra.mxu0 0.0
    %851 = vmatprep.subr.mxu0 0.0
    %852 = vmatpush1.msra.mxu0 0.0
    %853 = vmatprep.subr.mxu0 0.0
    %854 = vmatpush1.msra.mxu0 0.0
    %855 = vmatprep.subr.mxu0 0.0
    %856 = vmatpush1.msra.mxu0 0.0
    %857 = vmatprep.subr.mxu0 0.0
    %858 = vmatpush1.msra.mxu0 0.0
    %859 = vmatprep.subr.mxu0 0.0
    %860 = vmatpush1.msra.mxu0 0.0
    %861 = vmatprep.subr.mxu0 0.0
    %862 = vmatpush1.msra.mxu0 0.0
    %863 = vmatprep.subr.mxu0 0.0
    %864 = vmatpush1.msra.mxu0 0.0
    %865 = vmatprep.subr.mxu0 0.0
    %866 = vmatpush1.msra.mxu0 0.0
    %867 = vmatprep.subr.mxu0 0.0
    %868 = vmatpush1.msra.mxu0 0.0
    %869 = vmatprep.subr.mxu0 0.0
    %870 = vmatpush1.msra.mxu0 0.0
    %871 = vmatprep.subr.mxu0 0.0
    %872 = vmatpush1.msra.mxu0 0.0
    %873 = vmatprep.subr.mxu0 0.0
    %874 = vmatpush1.msra.mxu0 0.0
    %875 = vmatprep.subr.mxu0 0.0
    %876 = vmatpush1.msra.mxu0 0.0
    %877 = vmatprep.mubr.f32.mxu0 0.0
    %878 = vmatmul.mubr.f32.gmra.mrb[0].mxu0 %v811
    %v879 = vpop.f32.mrb[0].mxu0
    %v880 = vadd.f32 0.0, %v879
    %v881 = vpop.f32.mrb[0].mxu0
    %882 = vdwg.mxu0
    %v883 = vadd.f32 %v637, %v880
    %884 = vrot.lane.b32.xlu0 %v147, 104
    %v885 = vpop.permute.xlu0 %884
    %886 = vrot.lane.b32.xlu0 %v147, 72
    %v887 = vpop.permute.xlu0 %886
    %v888 = vsel %vm158, %v885, 0
    %v890 = vsel %vm158, %v887, 0
    %892 = vmatprep.subr.mxu0 0.0
    %893 = vmatpush1.xpose.msra.mxu0 %v890
    %894 = vmatprep.subr.mxu0 0.0
    %895 = vmatpush1.xpose.msra.mxu0 0.0
    %896 = vmatprep.subr.mxu0 0.0
    %897 = vmatpush1.xpose.msra.mxu0 0.0
    %898 = vmatprep.subr.mxu0 0.0
    %899 = vmatpush1.xpose.msra.mxu0 0.0
    %900 = vmatprep.subr.mxu0 0.0
    %901 = vmatpush1.xpose.msra.mxu0 0.0
    %902 = vmatprep.subr.mxu0 0.0
    %903 = vmatpush1.xpose.msra.mxu0 0.0
    %904 = vmatprep.subr.mxu0 0.0
    %905 = vmatpush1.xpose.msra.mxu0 0.0
    %906 = vmatprep.subr.mxu0 0.0
    %907 = vmatpush1.xpose.msra.mxu0 0.0
    %908 = vmatprep.subr.mxu0 0.0
    %909 = vmatpush1.xpose.msra.mxu0 0.0
    %910 = vmatprep.subr.mxu0 0.0
    %911 = vmatpush1.xpose.msra.mxu0 0.0
    %912 = vmatprep.subr.mxu0 0.0
    %913 = vmatpush1.xpose.msra.mxu0 0.0
    %914 = vmatprep.subr.mxu0 0.0
    %915 = vmatpush1.xpose.msra.mxu0 0.0
    %916 = vmatprep.subr.mxu0 0.0
    %917 = vmatpush1.xpose.msra.mxu0 0.0
    %918 = vmatprep.subr.mxu0 0.0
    %919 = vmatpush1.xpose.msra.mxu0 0.0
    %920 = vmatprep.subr.mxu0 0.0
    %921 = vmatpush1.xpose.msra.mxu0 0.0
    %922 = vmatprep.subr.mxu0 0.0
    %923 = vmatpush1.xpose.msra.mxu0 0.0
    %924 = vmatprep.subr.mxu0 0.0
    %925 = vmatpush1.xpose.msra.mxu0 0.0
    %926 = vmatprep.subr.mxu0 0.0
    %927 = vmatpush1.xpose.msra.mxu0 0.0
    %928 = vmatprep.subr.mxu0 0.0
    %929 = vmatpush1.xpose.msra.mxu0 0.0
    %930 = vmatprep.subr.mxu0 0.0
    %931 = vmatpush1.xpose.msra.mxu0 0.0
    %932 = vmatprep.subr.mxu0 0.0
    %933 = vmatpush1.xpose.msra.mxu0 0.0
    %934 = vmatprep.subr.mxu0 0.0
    %935 = vmatpush1.xpose.msra.mxu0 0.0
    %936 = vmatprep.subr.mxu0 0.0
    %937 = vmatpush1.xpose.msra.mxu0 0.0
    %938 = vmatprep.subr.mxu0 0.0
    %939 = vmatpush1.xpose.msra.mxu0 0.0
    %940 = vmatprep.subr.mxu0 0.0
    %941 = vmatpush1.xpose.msra.mxu0 0.0
    %942 = vmatprep.subr.mxu0 0.0
    %943 = vmatpush1.xpose.msra.mxu0 0.0
    %944 = vmatprep.subr.mxu0 0.0
    %945 = vmatpush1.xpose.msra.mxu0 0.0
    %946 = vmatprep.subr.mxu0 0.0
    %947 = vmatpush1.xpose.msra.mxu0 0.0
    %948 = vmatprep.subr.mxu0 0.0
    %949 = vmatpush1.xpose.msra.mxu0 0.0
    %950 = vmatprep.subr.mxu0 0.0
    %951 = vmatpush1.xpose.msra.mxu0 0.0
    %952 = vmatprep.subr.mxu0 0.0
    %953 = vmatpush1.xpose.msra.mxu0 0.0
    %954 = vmatprep.subr.mxu0 0.0
    %955 = vmatpush1.xpose.msra.mxu0 0.0
    %956 = vmatprep.mubr.f32.mxu0 0.0
    %957 = vmatmul.mubr.f32.gmra.mrb[0].mxu0 %v888
    %v958 = vpop.f32.mrb[0].mxu0
    %v959 = vadd.f32 0.0, %v958
    %v960 = vpop.f32.mrb[0].mxu0
    %961 = vdwg.mxu0
    %v962 = vmul.f32 %v959, 0.35355338
    %v963 = vadd.f32 %v962, %v68
    %v964 = vsel %vm158, %v963, -inf
    %965 = vmax.xlane.f32.xlu0 %v964
    %v966 = vpop.xlane.xlu0 %965
    %v967 = vsub.f32 %v963, %v966
    %v968 = vmul.f32 %v967, 1.442695
    %v969 = vpow.pop %v968
    %v970 = vsel %vm158, %v969, 0.0
    %971 = vadd.xlane.f32.xlu0 %v970
    %v972 = vpop.xlane.xlu0 %971
    %v973 = vrcp.pop %v972
    %v974 = vmul.f32 %v969, %v973
    %s975 = scalar_lea.vmem [#allocation2], 24
    %976 = vst.msk [vmem:[%s975] sm:$0xff] %vm158, %v974
    %977 = vrot.lane.b32.xlu0 %v147, 40
    %v978 = vpop.permute.xlu0 %977
    %v981 = vsel %vm158, %v974, 0
    %983 = vmatprep.subr.mxu0 0.0
    %984 = vmatpush1.msra.mxu0 %v978
    %985 = vmatprep.subr.mxu0 0.0
    %986 = vmatpush1.msra.mxu0 0.0
    %987 = vmatprep.subr.mxu0 0.0
    %988 = vmatpush1.msra.mxu0 0.0
    %989 = vmatprep.subr.mxu0 0.0
    %990 = vmatpush1.msra.mxu0 0.0
    %991 = vmatprep.subr.mxu0 0.0
    %992 = vmatpush1.msra.mxu0 0.0
    %993 = vmatprep.subr.mxu0 0.0
    %994 = vmatpush1.msra.mxu0 0.0
    %995 = vmatprep.subr.mxu0 0.0
    %996 = vmatpush1.msra.mxu0 0.0
    %997 = vmatprep.subr.mxu0 0.0
    %998 = vmatpush1.msra.mxu0 0.0
    %999 = vmatprep.subr.mxu0 0.0
    %1000 = vmatpush1.msra.mxu0 0.0
    %1001 = vmatprep.subr.mxu0 0.0
    %1002 = vmatpush1.msra.mxu0 0.0
    %1003 = vmatprep.subr.mxu0 0.0
    %1004 = vmatpush1.msra.mxu0 0.0
    %1005 = vmatprep.subr.mxu0 0.0
    %1006 = vmatpush1.msra.mxu0 0.0
    %1007 = vmatprep.subr.mxu0 0.0
    %1008 = vmatpush1.msra.mxu0 0.0
    %1009 = vmatprep.subr.mxu0 0.0
    %1010 = vmatpush1.msra.mxu0 0.0
    %1011 = vmatprep.subr.mxu0 0.0
    %1012 = vmatpush1.msra.mxu0 0.0
    %1013 = vmatprep.subr.mxu0 0.0
    %1014 = vmatpush1.msra.mxu0 0.0
    %1015 = vmatprep.subr.mxu0 0.0
    %1016 = vmatpush1.msra.mxu0 0.0
    %1017 = vmatprep.subr.mxu0 0.0
    %1018 = vmatpush1.msra.mxu0 0.0
    %1019 = vmatprep.subr.mxu0 0.0
    %1020 = vmatpush1.msra.mxu0 0.0
    %1021 = vmatprep.subr.mxu0 0.0
    %1022 = vmatpush1.msra.mxu0 0.0
    %1023 = vmatprep.subr.mxu0 0.0
    %1024 = vmatpush1.msra.mxu0 0.0
    %1025 = vmatprep.subr.mxu0 0.0
    %1026 = vmatpush1.msra.mxu0 0.0
    %1027 = vmatprep.subr.mxu0 0.0
    %1028 = vmatpush1.msra.mxu0 0.0
    %1029 = vmatprep.subr.mxu0 0.0
    %1030 = vmatpush1.msra.mxu0 0.0
    %1031 = vmatprep.subr.mxu0 0.0
    %1032 = vmatpush1.msra.mxu0 0.0
    %1033 = vmatprep.subr.mxu0 0.0
    %1034 = vmatpush1.msra.mxu0 0.0
    %1035 = vmatprep.subr.mxu0 0.0
    %1036 = vmatpush1.msra.mxu0 0.0
    %1037 = vmatprep.subr.mxu0 0.0
    %1038 = vmatpush1.msra.mxu0 0.0
    %1039 = vmatprep.subr.mxu0 0.0
    %1040 = vmatpush1.msra.mxu0 0.0
    %1041 = vmatprep.subr.mxu0 0.0
    %1042 = vmatpush1.msra.mxu0 0.0
    %1043 = vmatprep.subr.mxu0 0.0
    %1044 = vmatpush1.msra.mxu0 0.0
    %1045 = vmatprep.subr.mxu0 0.0
    %1046 = vmatpush1.msra.mxu0 0.0
    %1047 = vmatprep.mubr.f32.mxu0 0.0
    %1048 = vmatmul.mubr.f32.gmra.mrb[0].mxu0 %v981
    %v1049 = vpop.f32.mrb[0].mxu0
    %v1050 = vadd.f32 0.0, %v1049
    %v1051 = vpop.f32.mrb[0].mxu0
    %1052 = vdwg.mxu0
    %v1053 = vld [vmem:[%s4 + $0x18] sm:$0xff]
    %v1055 = vsel %vm158, %v1050, 0
    %1057 = vmatprep.subr.mxu0 0.0
    %1058 = vmatpush1.msra.mxu0 %v1053
    %1059 = vmatprep.subr.mxu0 0.0
    %1060 = vmatpush1.msra.mxu0 0.0
    %1061 = vmatprep.subr.mxu0 0.0
    %1062 = vmatpush1.msra.mxu0 0.0
    %1063 = vmatprep.subr.mxu0 0.0
    %1064 = vmatpush1.msra.mxu0 0.0
    %1065 = vmatprep.subr.mxu0 0.0
    %1066 = vmatpush1.msra.mxu0 0.0
    %1067 = vmatprep.subr.mxu0 0.0
    %1068 = vmatpush1.msra.mxu0 0.0
    %1069 = vmatprep.subr.mxu0 0.0
    %1070 = vmatpush1.msra.mxu0 0.0
    %1071 = vmatprep.subr.mxu0 0.0
    %1072 = vmatpush1.msra.mxu0 0.0
    %1073 = vmatprep.subr.mxu0 0.0
    %1074 = vmatpush1.msra.mxu0 0.0
    %1075 = vmatprep.subr.mxu0 0.0
    %1076 = vmatpush1.msra.mxu0 0.0
    %1077 = vmatprep.subr.mxu0 0.0
    %1078 = vmatpush1.msra.mxu0 0.0
    %1079 = vmatprep.subr.mxu0 0.0
    %1080 = vmatpush1.msra.mxu0 0.0
    %1081 = vmatprep.subr.mxu0 0.0
    %1082 = vmatpush1.msra.mxu0 0.0
    %1083 = vmatprep.subr.mxu0 0.0
    %1084 = vmatpush1.msra.mxu0 0.0
    %1085 = vmatprep.subr.mxu0 0.0
    %1086 = vmatpush1.msra.mxu0 0.0
    %1087 = vmatprep.subr.mxu0 0.0
    %1088 = vmatpush1.msra.mxu0 0.0
    %1089 = vmatprep.subr.mxu0 0.0
    %1090 = vmatpush1.msra.mxu0 0.0
    %1091 = vmatprep.subr.mxu0 0.0
    %1092 = vmatpush1.msra.mxu0 0.0
    %1093 = vmatprep.subr.mxu0 0.0
    %1094 = vmatpush1.msra.mxu0 0.0
    %1095 = vmatprep.subr.mxu0 0.0
    %1096 = vmatpush1.msra.mxu0 0.0
    %1097 = vmatprep.subr.mxu0 0.0
    %1098 = vmatpush1.msra.mxu0 0.0
    %1099 = vmatprep.subr.mxu0 0.0
    %1100 = vmatpush1.msra.mxu0 0.0
    %1101 = vmatprep.subr.mxu0 0.0
    %1102 = vmatpush1.msra.mxu0 0.0
    %1103 = vmatprep.subr.mxu0 0.0
    %1104 = vmatpush1.msra.mxu0 0.0
    %1105 = vmatprep.subr.mxu0 0.0
    %1106 = vmatpush1.msra.mxu0 0.0
    %1107 = vmatprep.subr.mxu0 0.0
    %1108 = vmatpush1.msra.mxu0 0.0
    %1109 = vmatprep.subr.mxu0 0.0
    %1110 = vmatpush1.msra.mxu0 0.0
    %1111 = vmatprep.subr.mxu0 0.0
    %1112 = vmatpush1.msra.mxu0 0.0
    %1113 = vmatprep.subr.mxu0 0.0
    %1114 = vmatpush1.msra.mxu0 0.0
    %1115 = vmatprep.subr.mxu0 0.0
    %1116 = vmatpush1.msra.mxu0 0.0
    %1117 = vmatprep.subr.mxu0 0.0
    %1118 = vmatpush1.msra.mxu0 0.0
    %1119 = vmatprep.subr.mxu0 0.0
    %1120 = vmatpush1.msra.mxu0 0.0
    %1121 = vmatprep.mubr.f32.mxu0 0.0
    %1122 = vmatmul.mubr.f32.gmra.mrb[0].mxu0 %v1055
    %v1123 = vpop.f32.mrb[0].mxu0
    %v1124 = vadd.f32 0.0, %v1123
    %v1125 = vpop.f32.mrb[0].mxu0
    %1126 = vdwg.mxu0
    %v1127 = vadd.f32 %v883, %v1124
    %1129 = vrot.lane.b32.xlu0 %v152, 96
    %v1130 = vpop.permute.xlu0 %1129
    %v1131 = vsel %vm158, %v152, 0
    %v1133 = vsel %vm158, %v1130, 0
    %1135 = vmatprep.subr.mxu0 0.0
    %1136 = vmatpush1.xpose.msra.mxu0 %v1133
    %1137 = vmatprep.subr.mxu0 0.0
    %1138 = vmatpush1.xpose.msra.mxu0 0.0
    %1139 = vmatprep.subr.mxu0 0.0
    %1140 = vmatpush1.xpose.msra.mxu0 0.0
    %1141 = vmatprep.subr.mxu0 0.0
    %1142 = vmatpush1.xpose.msra.mxu0 0.0
    %1143 = vmatprep.subr.mxu0 0.0
    %1144 = vmatpush1.xpose.msra.mxu0 0.0
    %1145 = vmatprep.subr.mxu0 0.0
    %1146 = vmatpush1.xpose.msra.mxu0 0.0
    %1147 = vmatprep.subr.mxu0 0.0
    %1148 = vmatpush1.xpose.msra.mxu0 0.0
    %1149 = vmatprep.subr.mxu0 0.0
    %1150 = vmatpush1.xpose.msra.mxu0 0.0
    %1151 = vmatprep.subr.mxu0 0.0
    %1152 = vmatpush1.xpose.msra.mxu0 0.0
    %1153 = vmatprep.subr.mxu0 0.0
    %1154 = vmatpush1.xpose.msra.mxu0 0.0
    %1155 = vmatprep.subr.mxu0 0.0
    %1156 = vmatpush1.xpose.msra.mxu0 0.0
    %1157 = vmatprep.subr.mxu0 0.0
    %1158 = vmatpush1.xpose.msra.mxu0 0.0
    %1159 = vmatprep.subr.mxu0 0.0
    %1160 = vmatpush1.xpose.msra.mxu0 0.0
    %1161 = vmatprep.subr.mxu0 0.0
    %1162 = vmatpush1.xpose.msra.mxu0 0.0
    %1163 = vmatprep.subr.mxu0 0.0
    %1164 = vmatpush1.xpose.msra.mxu0 0.0
    %1165 = vmatprep.subr.mxu0 0.0
    %1166 = vmatpush1.xpose.msra.mxu0 0.0
    %1167 = vmatprep.subr.mxu0 0.0
    %1168 = vmatpush1.xpose.msra.mxu0 0.0
    %1169 = vmatprep.subr.mxu0 0.0
    %1170 = vmatpush1.xpose.msra.mxu0 0.0
    %1171 = vmatprep.subr.mxu0 0.0
    %1172 = vmatpush1.xpose.msra.mxu0 0.0
    %1173 = vmatprep.subr.mxu0 0.0
    %1174 = vmatpush1.xpose.msra.mxu0 0.0
    %1175 = vmatprep.subr.mxu0 0.0
    %1176 = vmatpush1.xpose.msra.mxu0 0.0
    %1177 = vmatprep.subr.mxu0 0.0
    %1178 = vmatpush1.xpose.msra.mxu0 0.0
    %1179 = vmatprep.subr.mxu0 0.0
    %1180 = vmatpush1.xpose.msra.mxu0 0.0
    %1181 = vmatprep.subr.mxu0 0.0
    %1182 = vmatpush1.xpose.msra.mxu0 0.0
    %1183 = vmatprep.subr.mxu0 0.0
    %1184 = vmatpush1.xpose.msra.mxu0 0.0
    %1185 = vmatprep.subr.mxu0 0.0
    %1186 = vmatpush1.xpose.msra.mxu0 0.0
    %1187 = vmatprep.subr.mxu0 0.0
    %1188 = vmatpush1.xpose.msra.mxu0 0.0
    %1189 = vmatprep.subr.mxu0 0.0
    %1190 = vmatpush1.xpose.msra.mxu0 0.0
    %1191 = vmatprep.subr.mxu0 0.0
    %1192 = vmatpush1.xpose.msra.mxu0 0.0
    %1193 = vmatprep.subr.mxu0 0.0
    %1194 = vmatpush1.xpose.msra.mxu0 0.0
    %1195 = vmatprep.subr.mxu0 0.0
    %1196 = vmatpush1.xpose.msra.mxu0 0.0
    %1197 = vmatprep.subr.mxu0 0.0
    %1198 = vmatpush1.xpose.msra.mxu0 0.0
    %1199 = vmatprep.mubr.f32.mxu0 0.0
    %1200 = vmatmul.mubr.f32.gmra.mrb[0].mxu0 %v1131
    %v1201 = vpop.f32.mrb[0].mxu0
    %v1202 = vadd.f32 0.0, %v1201
    %v1203 = vpop.f32.mrb[0].mxu0
    %1204 = vdwg.mxu0
    %v1205 = vmul.f32 %v1202, 0.35355338
    %v1206 = vadd.f32 %v1205, %v68
    %v1207 = vsel %vm158, %v1206, -inf
    %1208 = vmax.xlane.f32.xlu0 %v1207
    %v1209 = vpop.xlane.xlu0 %1208
    %v1210 = vsub.f32 %v1206, %v1209
    %v1211 = vmul.f32 %v1210, 1.442695
    %v1212 = vpow.pop %v1211
    %v1213 = vsel %vm158, %v1212, 0.0
    %1214 = vadd.xlane.f32.xlu0 %v1213
    %v1215 = vpop.xlane.xlu0 %1214
    %v1216 = vrcp.pop %v1215
    %v1217 = vmul.f32 %v1212, %v1216
    %s1218 = scalar_lea.vmem [#allocation2], 32
    %1219 = vst.msk [vmem:[%s1218] sm:$0xff] %vm158, %v1217
    %1220 = vrot.lane.b32.xlu0 %v152, 64
    %v1221 = vpop.permute.xlu0 %1220
    %v1224 = vsel %vm158, %v1217, 0
    %1226 = vmatprep.subr.mxu0 0.0
    %1227 = vmatpush1.msra.mxu0 %v1221
    %1228 = vmatprep.subr.mxu0 0.0
    %1229 = vmatpush1.msra.mxu0 0.0
    %1230 = vmatprep.subr.mxu0 0.0
    %1231 = vmatpush1.msra.mxu0 0.0
    %1232 = vmatprep.subr.mxu0 0.0
    %1233 = vmatpush1.msra.mxu0 0.0
    %1234 = vmatprep.subr.mxu0 0.0
    %1235 = vmatpush1.msra.mxu0 0.0
    %1236 = vmatprep.subr.mxu0 0.0
    %1237 = vmatpush1.msra.mxu0 0.0
    %1238 = vmatprep.subr.mxu0 0.0
    %1239 = vmatpush1.msra.mxu0 0.0
    %1240 = vmatprep.subr.mxu0 0.0
    %1241 = vmatpush1.msra.mxu0 0.0
    %1242 = vmatprep.subr.mxu0 0.0
    %1243 = vmatpush1.msra.mxu0 0.0
    %1244 = vmatprep.subr.mxu0 0.0
    %1245 = vmatpush1.msra.mxu0 0.0
    %1246 = vmatprep.subr.mxu0 0.0
    %1247 = vmatpush1.msra.mxu0 0.0
    %1248 = vmatprep.subr.mxu0 0.0
    %1249 = vmatpush1.msra.mxu0 0.0
    %1250 = vmatprep.subr.mxu0 0.0
    %1251 = vmatpush1.msra.mxu0 0.0
    %1252 = vmatprep.subr.mxu0 0.0
    %1253 = vmatpush1.msra.mxu0 0.0
    %1254 = vmatprep.subr.mxu0 0.0
    %1255 = vmatpush1.msra.mxu0 0.0
    %1256 = vmatprep.subr.mxu0 0.0
    %1257 = vmatpush1.msra.mxu0 0.0
    %1258 = vmatprep.subr.mxu0 0.0
    %1259 = vmatpush1.msra.mxu0 0.0
    %1260 = vmatprep.subr.mxu0 0.0
    %1261 = vmatpush1.msra.mxu0 0.0
    %1262 = vmatprep.subr.mxu0 0.0
    %1263 = vmatpush1.msra.mxu0 0.0
    %1264 = vmatprep.subr.mxu0 0.0
    %1265 = vmatpush1.msra.mxu0 0.0
    %1266 = vmatprep.subr.mxu0 0.0
    %1267 = vmatpush1.msra.mxu0 0.0
    %1268 = vmatprep.subr.mxu0 0.0
    %1269 = vmatpush1.msra.mxu0 0.0
    %1270 = vmatprep.subr.mxu0 0.0
    %1271 = vmatpush1.msra.mxu0 0.0
    %1272 = vmatprep.subr.mxu0 0.0
    %1273 = vmatpush1.msra.mxu0 0.0
    %1274 = vmatprep.subr.mxu0 0.0
    %1275 = vmatpush1.msra.mxu0 0.0
    %1276 = vmatprep.subr.mxu0 0.0
    %1277 = vmatpush1.msra.mxu0 0.0
    %1278 = vmatprep.subr.mxu0 0.0
    %1279 = vmatpush1.msra.mxu0 0.0
    %1280 = vmatprep.subr.mxu0 0.0
    %1281 = vmatpush1.msra.mxu0 0.0
    %1282 = vmatprep.subr.mxu0 0.0
    %1283 = vmatpush1.msra.mxu0 0.0
    %1284 = vmatprep.subr.mxu0 0.0
    %1285 = vmatpush1.msra.mxu0 0.0
    %1286 = vmatprep.subr.mxu0 0.0
    %1287 = vmatpush1.msra.mxu0 0.0
    %1288 = vmatprep.subr.mxu0 0.0
    %1289 = vmatpush1.msra.mxu0 0.0
    %1290 = vmatprep.mubr.f32.mxu0 0.0
    %1291 = vmatmul.mubr.f32.gmra.mrb[0].mxu0 %v1224
    %v1292 = vpop.f32.mrb[0].mxu0
    %v1293 = vadd.f32 0.0, %v1292
    %v1294 = vpop.f32.mrb[0].mxu0
    %1295 = vdwg.mxu0
    %v1296 = vld [vmem:[%s4] sm:$0xff]
    %1297 = vrot.lane.b32.xlu0 %v152, 120
    %v1298 = vpop.permute.xlu0 %1297
    %1299 = vrot.lane.b32.xlu0 %v152, 88
    %v1300 = vpop.permute.xlu0 %1299
    %v1301 = vsel %vm158, %v1298, 0
    %v1303 = vsel %vm158, %v1300, 0
    %1305 = vmatprep.subr.mxu0 0.0
    %1306 = vmatpush1.xpose.msra.mxu0 %v1303
    %1307 = vmatprep.subr.mxu0 0.0
    %1308 = vmatpush1.xpose.msra.mxu0 0.0
    %1309 = vmatprep.subr.mxu0 0.0
    %1310 = vmatpush1.xpose.msra.mxu0 0.0
    %1311 = vmatprep.subr.mxu0 0.0
    %1312 = vmatpush1.xpose.msra.mxu0 0.0
    %1313 = vmatprep.subr.mxu0 0.0
    %1314 = vmatpush1.xpose.msra.mxu0 0.0
    %1315 = vmatprep.subr.mxu0 0.0
    %1316 = vmatpush1.xpose.msra.mxu0 0.0
    %1317 = vmatprep.subr.mxu0 0.0
    %1318 = vmatpush1.xpose.msra.mxu0 0.0
    %1319 = vmatprep.subr.mxu0 0.0
    %1320 = vmatpush1.xpose.msra.mxu0 0.0
    %1321 = vmatprep.subr.mxu0 0.0
    %1322 = vmatpush1.xpose.msra.mxu0 0.0
    %1323 = vmatprep.subr.mxu0 0.0
    %1324 = vmatpush1.xpose.msra.mxu0 0.0
    %1325 = vmatprep.subr.mxu0 0.0
    %1326 = vmatpush1.xpose.msra.mxu0 0.0
    %1327 = vmatprep.subr.mxu0 0.0
    %1328 = vmatpush1.xpose.msra.mxu0 0.0
    %1329 = vmatprep.subr.mxu0 0.0
    %1330 = vmatpush1.xpose.msra.mxu0 0.0
    %1331 = vmatprep.subr.mxu0 0.0
    %1332 = vmatpush1.xpose.msra.mxu0 0.0
    %1333 = vmatprep.subr.mxu0 0.0
    %1334 = vmatpush1.xpose.msra.mxu0 0.0
    %1335 = vmatprep.subr.mxu0 0.0
    %1336 = vmatpush1.xpose.msra.mxu0 0.0
    %1337 = vmatprep.subr.mxu0 0.0
    %1338 = vmatpush1.xpose.msra.mxu0 0.0
    %1339 = vmatprep.subr.mxu0 0.0
    %1340 = vmatpush1.xpose.msra.mxu0 0.0
    %1341 = vmatprep.subr.mxu0 0.0
    %1342 = vmatpush1.xpose.msra.mxu0 0.0
    %1343 = vmatprep.subr.mxu0 0.0
    %1344 = vmatpush1.xpose.msra.mxu0 0.0
    %1345 = vmatprep.subr.mxu0 0.0
    %1346 = vmatpush1.xpose.msra.mxu0 0.0
    %1347 = vmatprep.subr.mxu0 0.0
    %1348 = vmatpush1.xpose.msra.mxu0 0.0
    %1349 = vmatprep.subr.mxu0 0.0
    %1350 = vmatpush1.xpose.msra.mxu0 0.0
    %1351 = vmatprep.subr.mxu0 0.0
    %1352 = vmatpush1.xpose.msra.mxu0 0.0
    %1353 = vmatprep.subr.mxu0 0.0
    %1354 = vmatpush1.xpose.msra.mxu0 0.0
    %1355 = vmatprep.subr.mxu0 0.0
    %1356 = vmatpush1.xpose.msra.mxu0 0.0
    %1357 = vmatprep.subr.mxu0 0.0
    %1358 = vmatpush1.xpose.msra.mxu0 0.0
    %1359 = vmatprep.subr.mxu0 0.0
    %1360 = vmatpush1.xpose.msra.mxu0 0.0
    %1361 = vmatprep.subr.mxu0 0.0
    %1362 = vmatpush1.xpose.msra.mxu0 0.0
    %1363 = vmatprep.subr.mxu0 0.0
    %1364 = vmatpush1.xpose.msra.mxu0 0.0
    %1365 = vmatprep.subr.mxu0 0.0
    %1366 = vmatpush1.xpose.msra.mxu0 0.0
    %1367 = vmatprep.subr.mxu0 0.0
    %1368 = vmatpush1.xpose.msra.mxu0 0.0
    %1369 = vmatprep.mubr.f32.mxu0 0.0
    %1370 = vmatmul.mubr.f32.gmra.mrb[0].mxu0 %v1301
    %v1371 = vpop.f32.mrb[0].mxu0
    %v1372 = vadd.f32 0.0, %v1371
    %v1373 = vpop.f32.mrb[0].mxu0
    %1374 = vdwg.mxu0
    %v1375 = vmul.f32 %v1372, 0.35355338
    %v1376 = vadd.f32 %v1375, %v68
    %v1377 = vsel %vm158, %v1376, -inf
    %1378 = vmax.xlane.f32.xlu0 %v1377
    %v1379 = vpop.xlane.xlu0 %1378
    %v1380 = vsub.f32 %v1376, %v1379
    %v1381 = vmul.f32 %v1380, 1.442695
    %v1382 = vpow.pop %v1381
    %v1383 = vsel %vm158, %v1382, 0.0
    %1384 = vadd.xlane.f32.xlu0 %v1383
    %v1385 = vpop.xlane.xlu0 %1384
    %v1386 = vrcp.pop %v1385
    %v1387 = vmul.f32 %v1382, %v1386
    %s1388 = scalar_lea.vmem [#allocation2], 40
    %1389 = vst.msk [vmem:[%s1388] sm:$0xff] %vm158, %v1387
    %1390 = vrot.lane.b32.xlu0 %v152, 56
    %v1391 = vpop.permute.xlu0 %1390
    %v1394 = vsel %vm158, %v1387, 0
    %1396 = vmatprep.subr.mxu0 0.0
    %1397 = vmatpush1.msra.mxu0 %v1391
    %1398 = vmatprep.subr.mxu0 0.0
    %1399 = vmatpush1.msra.mxu0 0.0
    %1400 = vmatprep.subr.mxu0 0.0
    %1401 = vmatpush1.msra.mxu0 0.0
    %1402 = vmatprep.subr.mxu0 0.0
    %1403 = vmatpush1.msra.mxu0 0.0
    %1404 = vmatprep.subr.mxu0 0.0
    %1405 = vmatpush1.msra.mxu0 0.0
    %1406 = vmatprep.subr.mxu0 0.0
    %1407 = vmatpush1.msra.mxu0 0.0
    %1408 = vmatprep.subr.mxu0 0.0
    %1409 = vmatpush1.msra.mxu0 0.0
    %1410 = vmatprep.subr.mxu0 0.0
    %1411 = vmatpush1.msra.mxu0 0.0
    %1412 = vmatprep.subr.mxu0 0.0
    %1413 = vmatpush1.msra.mxu0 0.0
    %1414 = vmatprep.subr.mxu0 0.0
    %1415 = vmatpush1.msra.mxu0 0.0
    %1416 = vmatprep.subr.mxu0 0.0
    %1417 = vmatpush1.msra.mxu0 0.0
    %1418 = vmatprep.subr.mxu0 0.0
    %1419 = vmatpush1.msra.mxu0 0.0
    %1420 = vmatprep.subr.mxu0 0.0
    %1421 = vmatpush1.msra.mxu0 0.0
    %1422 = vmatprep.subr.mxu0 0.0
    %1423 = vmatpush1.msra.mxu0 0.0
    %1424 = vmatprep.subr.mxu0 0.0
    %1425 = vmatpush1.msra.mxu0 0.0
    %1426 = vmatprep.subr.mxu0 0.0
    %1427 = vmatpush1.msra.mxu0 0.0
    %1428 = vmatprep.subr.mxu0 0.0
    %1429 = vmatpush1.msra.mxu0 0.0
    %1430 = vmatprep.subr.mxu0 0.0
    %1431 = vmatpush1.msra.mxu0 0.0
    %1432 = vmatprep.subr.mxu0 0.0
    %1433 = vmatpush1.msra.mxu0 0.0
    %1434 = vmatprep.subr.mxu0 0.0
    %1435 = vmatpush1.msra.mxu0 0.0
    %1436 = vmatprep.subr.mxu0 0.0
    %1437 = vmatpush1.msra.mxu0 0.0
    %1438 = vmatprep.subr.mxu0 0.0
    %1439 = vmatpush1.msra.mxu0 0.0
    %1440 = vmatprep.subr.mxu0 0.0
    %1441 = vmatpush1.msra.mxu0 0.0
    %1442 = vmatprep.subr.mxu0 0.0
    %1443 = vmatpush1.msra.mxu0 0.0
    %1444 = vmatprep.subr.mxu0 0.0
    %1445 = vmatpush1.msra.mxu0 0.0
    %1446 = vmatprep.subr.mxu0 0.0
    %1447 = vmatpush1.msra.mxu0 0.0
    %1448 = vmatprep.subr.mxu0 0.0
    %1449 = vmatpush1.msra.mxu0 0.0
    %1450 = vmatprep.subr.mxu0 0.0
    %1451 = vmatpush1.msra.mxu0 0.0
    %1452 = vmatprep.subr.mxu0 0.0
    %1453 = vmatpush1.msra.mxu0 0.0
    %1454 = vmatprep.subr.mxu0 0.0
    %1455 = vmatpush1.msra.mxu0 0.0
    %1456 = vmatprep.subr.mxu0 0.0
    %1457 = vmatpush1.msra.mxu0 0.0
    %1458 = vmatprep.subr.mxu0 0.0
    %1459 = vmatpush1.msra.mxu0 0.0
    %1460 = vmatprep.mubr.f32.mxu0 0.0
    %1461 = vmatmul.mubr.f32.gmra.mrb[0].mxu0 %v1394
    %v1462 = vpop.f32.mrb[0].mxu0
    %v1463 = vadd.f32 0.0, %v1462
    %v1464 = vpop.f32.mrb[0].mxu0
    %1465 = vdwg.mxu0
    %v1466 = vld [vmem:[%s4 + $0x8] sm:$0xff]
    %v1468 = vsel %vm158, %v1463, 0
    %1470 = vmatprep.subr.mxu0 0.0
    %1471 = vmatpush1.msra.mxu0 %v1466
    %1472 = vmatprep.subr.mxu0 0.0
    %1473 = vmatpush1.msra.mxu0 0.0
    %1474 = vmatprep.subr.mxu0 0.0
    %1475 = vmatpush1.msra.mxu0 0.0
    %1476 = vmatprep.subr.mxu0 0.0
    %1477 = vmatpush1.msra.mxu0 0.0
    %1478 = vmatprep.subr.mxu0 0.0
    %1479 = vmatpush1.msra.mxu0 0.0
    %1480 = vmatprep.subr.mxu0 0.0
    %1481 = vmatpush1.msra.mxu0 0.0
    %1482 = vmatprep.subr.mxu0 0.0
    %1483 = vmatpush1.msra.mxu0 0.0
    %1484 = vmatprep.subr.mxu0 0.0
    %1485 = vmatpush1.msra.mxu0 0.0
    %1486 = vmatprep.subr.mxu0 0.0
    %1487 = vmatpush1.msra.mxu0 0.0
    %1488 = vmatprep.subr.mxu0 0.0
    %1489 = vmatpush1.msra.mxu0 0.0
    %1490 = vmatprep.subr.mxu0 0.0
    %1491 = vmatpush1.msra.mxu0 0.0
    %1492 = vmatprep.subr.mxu0 0.0
    %1493 = vmatpush1.msra.mxu0 0.0
    %1494 = vmatprep.subr.mxu0 0.0
    %1495 = vmatpush1.msra.mxu0 0.0
    %1496 = vmatprep.subr.mxu0 0.0
    %1497 = vmatpush1.msra.mxu0 0.0
    %1498 = vmatprep.subr.mxu0 0.0
    %1499 = vmatpush1.msra.mxu0 0.0
    %1500 = vmatprep.subr.mxu0 0.0
    %1501 = vmatpush1.msra.mxu0 0.0
    %1502 = vmatprep.subr.mxu0 0.0
    %1503 = vmatpush1.msra.mxu0 0.0
    %1504 = vmatprep.subr.mxu0 0.0
    %1505 = vmatpush1.msra.mxu0 0.0
    %1506 = vmatprep.subr.mxu0 0.0
    %1507 = vmatpush1.msra.mxu0 0.0
    %1508 = vmatprep.subr.mxu0 0.0
    %1509 = vmatpush1.msra.mxu0 0.0
    %1510 = vmatprep.subr.mxu0 0.0
    %1511 = vmatpush1.msra.mxu0 0.0
    %1512 = vmatprep.subr.mxu0 0.0
    %1513 = vmatpush1.msra.mxu0 0.0
    %1514 = vmatprep.subr.mxu0 0.0
    %1515 = vmatpush1.msra.mxu0 0.0
    %1516 = vmatprep.subr.mxu0 0.0
    %1517 = vmatpush1.msra.mxu0 0.0
    %1518 = vmatprep.subr.mxu0 0.0
    %1519 = vmatpush1.msra.mxu0 0.0
    %1520 = vmatprep.subr.mxu0 0.0
    %1521 = vmatpush1.msra.mxu0 0.0
    %1522 = vmatprep.subr.mxu0 0.0
    %1523 = vmatpush1.msra.mxu0 0.0
    %1524 = vmatprep.subr.mxu0 0.0
    %1525 = vmatpush1.msra.mxu0 0.0
    %1526 = vmatprep.subr.mxu0 0.0
    %1527 = vmatpush1.msra.mxu0 0.0
    %1528 = vmatprep.subr.mxu0 0.0
    %1529 = vmatpush1.msra.mxu0 0.0
    %1530 = vmatprep.subr.mxu0 0.0
    %1531 = vmatpush1.msra.mxu0 0.0
    %1532 = vmatprep.subr.mxu0 0.0
    %1533 = vmatpush1.msra.mxu0 0.0
    %1534 = vmatprep.mubr.f32.mxu0 0.0
    %1535 = vmatmul.mubr.f32.gmra.mrb[0].mxu0 %v1468
    %v1536 = vpop.f32.mrb[0].mxu0
    %v1537 = vadd.f32 0.0, %v1536
    %v1538 = vpop.f32.mrb[0].mxu0
    %1539 = vdwg.mxu0
    %v1541 = vsel %vm158, %v1293, 0
    %1543 = vmatprep.subr.mxu0 0.0
    %1544 = vmatpush1.msra.mxu0 %v1296
    %1545 = vmatprep.subr.mxu0 0.0
    %1546 = vmatpush1.msra.mxu0 0.0
    %1547 = vmatprep.subr.mxu0 0.0
    %1548 = vmatpush1.msra.mxu0 0.0
    %1549 = vmatprep.subr.mxu0 0.0
    %1550 = vmatpush1.msra.mxu0 0.0
    %1551 = vmatprep.subr.mxu0 0.0
    %1552 = vmatpush1.msra.mxu0 0.0
    %1553 = vmatprep.subr.mxu0 0.0
    %1554 = vmatpush1.msra.mxu0 0.0
    %1555 = vmatprep.subr.mxu0 0.0
    %1556 = vmatpush1.msra.mxu0 0.0
    %1557 = vmatprep.subr.mxu0 0.0
    %1558 = vmatpush1.msra.mxu0 0.0
    %1559 = vmatprep.subr.mxu0 0.0
    %1560 = vmatpush1.msra.mxu0 0.0
    %1561 = vmatprep.subr.mxu0 0.0
    %1562 = vmatpush1.msra.mxu0 0.0
    %1563 = vmatprep.subr.mxu0 0.0
    %1564 = vmatpush1.msra.mxu0 0.0
    %1565 = vmatprep.subr.mxu0 0.0
    %1566 = vmatpush1.msra.mxu0 0.0
    %1567 = vmatprep.subr.mxu0 0.0
    %1568 = vmatpush1.msra.mxu0 0.0
    %1569 = vmatprep.subr.mxu0 0.0
    %1570 = vmatpush1.msra.mxu0 0.0
    %1571 = vmatprep.subr.mxu0 0.0
    %1572 = vmatpush1.msra.mxu0 0.0
    %1573 = vmatprep.subr.mxu0 0.0
    %1574 = vmatpush1.msra.mxu0 0.0
    %1575 = vmatprep.subr.mxu0 0.0
    %1576 = vmatpush1.msra.mxu0 0.0
    %1577 = vmatprep.subr.mxu0 0.0
    %1578 = vmatpush1.msra.mxu0 0.0
    %1579 = vmatprep.subr.mxu0 0.0
    %1580 = vmatpush1.msra.mxu0 0.0
    %1581 = vmatprep.subr.mxu0 0.0
    %1582 = vmatpush1.msra.mxu0 0.0
    %1583 = vmatprep.subr.mxu0 0.0
    %1584 = vmatpush1.msra.mxu0 0.0
    %1585 = vmatprep.subr.mxu0 0.0
    %1586 = vmatpush1.msra.mxu0 0.0
    %1587 = vmatprep.subr.mxu0 0.0
    %1588 = vmatpush1.msra.mxu0 0.0
    %1589 = vmatprep.subr.mxu0 0.0
    %1590 = vmatpush1.msra.mxu0 0.0
    %1591 = vmatprep.subr.mxu0 0.0
    %1592 = vmatpush1.msra.mxu0 0.0
    %1593 = vmatprep.subr.mxu0 0.0
    %1594 = vmatpush1.msra.mxu0 0.0
    %1595 = vmatprep.subr.mxu0 0.0
    %1596 = vmatpush1.msra.mxu0 0.0
    %1597 = vmatprep.subr.mxu0 0.0
    %1598 = vmatpush1.msra.mxu0 0.0
    %1599 = vmatprep.subr.mxu0 0.0
    %1600 = vmatpush1.msra.mxu0 0.0
    %1601 = vmatprep.subr.mxu0 0.0
    %1602 = vmatpush1.msra.mxu0 0.0
    %1603 = vmatprep.subr.mxu0 0.0
    %1604 = vmatpush1.msra.mxu0 0.0
    %1605 = vmatprep.subr.mxu0 0.0
    %1606 = vmatpush1.msra.mxu0 0.0
    %1607 = vmatprep.mubr.f32.mxu0 0.0
    %1608 = vmatmul.mubr.f32.gmra.mrb[0].mxu0 %v1541
    %v1609 = vpop.f32.mrb[0].mxu0
    %v1610 = vadd.f32 %v1537, %v1609
    %v1611 = vpop.f32.mrb[0].mxu0
    %1612 = vdwg.mxu0
    %1613 = vrot.lane.b32.xlu0 %v152, 112
    %v1614 = vpop.permute.xlu0 %1613
    %1615 = vrot.lane.b32.xlu0 %v152, 80
    %v1616 = vpop.permute.xlu0 %1615
    %v1617 = vsel %vm158, %v1614, 0
    %v1619 = vsel %vm158, %v1616, 0
    %1621 = vmatprep.subr.mxu0 0.0
    %1622 = vmatpush1.xpose.msra.mxu0 %v1619
    %1623 = vmatprep.subr.mxu0 0.0
    %1624 = vmatpush1.xpose.msra.mxu0 0.0
    %1625 = vmatprep.subr.mxu0 0.0
    %1626 = vmatpush1.xpose.msra.mxu0 0.0
    %1627 = vmatprep.subr.mxu0 0.0
    %1628 = vmatpush1.xpose.msra.mxu0 0.0
    %1629 = vmatprep.subr.mxu0 0.0
    %1630 = vmatpush1.xpose.msra.mxu0 0.0
    %1631 = vmatprep.subr.mxu0 0.0
    %1632 = vmatpush1.xpose.msra.mxu0 0.0
    %1633 = vmatprep.subr.mxu0 0.0
    %1634 = vmatpush1.xpose.msra.mxu0 0.0
    %1635 = vmatprep.subr.mxu0 0.0
    %1636 = vmatpush1.xpose.msra.mxu0 0.0
    %1637 = vmatprep.subr.mxu0 0.0
    %1638 = vmatpush1.xpose.msra.mxu0 0.0
    %1639 = vmatprep.subr.mxu0 0.0
    %1640 = vmatpush1.xpose.msra.mxu0 0.0
    %1641 = vmatprep.subr.mxu0 0.0
    %1642 = vmatpush1.xpose.msra.mxu0 0.0
    %1643 = vmatprep.subr.mxu0 0.0
    %1644 = vmatpush1.xpose.msra.mxu0 0.0
    %1645 = vmatprep.subr.mxu0 0.0
    %1646 = vmatpush1.xpose.msra.mxu0 0.0
    %1647 = vmatprep.subr.mxu0 0.0
    %1648 = vmatpush1.xpose.msra.mxu0 0.0
    %1649 = vmatprep.subr.mxu0 0.0
    %1650 = vmatpush1.xpose.msra.mxu0 0.0
    %1651 = vmatprep.subr.mxu0 0.0
    %1652 = vmatpush1.xpose.msra.mxu0 0.0
    %1653 = vmatprep.subr.mxu0 0.0
    %1654 = vmatpush1.xpose.msra.mxu0 0.0
    %1655 = vmatprep.subr.mxu0 0.0
    %1656 = vmatpush1.xpose.msra.mxu0 0.0
    %1657 = vmatprep.subr.mxu0 0.0
    %1658 = vmatpush1.xpose.msra.mxu0 0.0
    %1659 = vmatprep.subr.mxu0 0.0
    %1660 = vmatpush1.xpose.msra.mxu0 0.0
    %1661 = vmatprep.subr.mxu0 0.0
    %1662 = vmatpush1.xpose.msra.mxu0 0.0
    %1663 = vmatprep.subr.mxu0 0.0
    %1664 = vmatpush1.xpose.msra.mxu0 0.0
    %1665 = vmatprep.subr.mxu0 0.0
    %1666 = vmatpush1.xpose.msra.mxu0 0.0
    %1667 = vmatprep.subr.mxu0 0.0
    %1668 = vmatpush1.xpose.msra.mxu0 0.0
    %1669 = vmatprep.subr.mxu0 0.0
    %1670 = vmatpush1.xpose.msra.mxu0 0.0
    %1671 = vmatprep.subr.mxu0 0.0
    %1672 = vmatpush1.xpose.msra.mxu0 0.0
    %1673 = vmatprep.subr.mxu0 0.0
    %1674 = vmatpush1.xpose.msra.mxu0 0.0
    %1675 = vmatprep.subr.mxu0 0.0
    %1676 = vmatpush1.xpose.msra.mxu0 0.0
    %1677 = vmatprep.subr.mxu0 0.0
    %1678 = vmatpush1.xpose.msra.mxu0 0.0
    %1679 = vmatprep.subr.mxu0 0.0
    %1680 = vmatpush1.xpose.msra.mxu0 0.0
    %1681 = vmatprep.subr.mxu0 0.0
    %1682 = vmatpush1.xpose.msra.mxu0 0.0
    %1683 = vmatprep.subr.mxu0 0.0
    %1684 = vmatpush1.xpose.msra.mxu0 0.0
    %1685 = vmatprep.mubr.f32.mxu0 0.0
    %1686 = vmatmul.mubr.f32.gmra.mrb[0].mxu0 %v1617
    %v1687 = vpop.f32.mrb[0].mxu0
    %v1688 = vadd.f32 0.0, %v1687
    %v1689 = vpop.f32.mrb[0].mxu0
    %1690 = vdwg.mxu0
    %v1691 = vmul.f32 %v1688, 0.35355338
    %v1692 = vadd.f32 %v1691, %v68
    %v1693 = vsel %vm158, %v1692, -inf
    %1694 = vmax.xlane.f32.xlu0 %v1693
    %v1695 = vpop.xlane.xlu0 %1694
    %v1696 = vsub.f32 %v1692, %v1695
    %v1697 = vmul.f32 %v1696, 1.442695
    %v1698 = vpow.pop %v1697
    %v1699 = vsel %vm158, %v1698, 0.0
    %1700 = vadd.xlane.f32.xlu0 %v1699
    %v1701 = vpop.xlane.xlu0 %1700
    %v1702 = vrcp.pop %v1701
    %v1703 = vmul.f32 %v1698, %v1702
    %s1704 = scalar_lea.vmem [#allocation2], 48
    %1705 = vst.msk [vmem:[%s1704] sm:$0xff] %vm158, %v1703
    %1706 = vrot.lane.b32.xlu0 %v152, 48
    %v1707 = vpop.permute.xlu0 %1706
    %v1710 = vsel %vm158, %v1703, 0
    %1712 = vmatprep.subr.mxu0 0.0
    %1713 = vmatpush1.msra.mxu0 %v1707
    %1714 = vmatprep.subr.mxu0 0.0
    %1715 = vmatpush1.msra.mxu0 0.0
    %1716 = vmatprep.subr.mxu0 0.0
    %1717 = vmatpush1.msra.mxu0 0.0
    %1718 = vmatprep.subr.mxu0 0.0
    %1719 = vmatpush1.msra.mxu0 0.0
    %1720 = vmatprep.subr.mxu0 0.0
    %1721 = vmatpush1.msra.mxu0 0.0
    %1722 = vmatprep.subr.mxu0 0.0
    %1723 = vmatpush1.msra.mxu0 0.0
    %1724 = vmatprep.subr.mxu0 0.0
    %1725 = vmatpush1.msra.mxu0 0.0
    %1726 = vmatprep.subr.mxu0 0.0
    %1727 = vmatpush1.msra.mxu0 0.0
    %1728 = vmatprep.subr.mxu0 0.0
    %1729 = vmatpush1.msra.mxu0 0.0
    %1730 = vmatprep.subr.mxu0 0.0
    %1731 = vmatpush1.msra.mxu0 0.0
    %1732 = vmatprep.subr.mxu0 0.0
    %1733 = vmatpush1.msra.mxu0 0.0
    %1734 = vmatprep.subr.mxu0 0.0
    %1735 = vmatpush1.msra.mxu0 0.0
    %1736 = vmatprep.subr.mxu0 0.0
    %1737 = vmatpush1.msra.mxu0 0.0
    %1738 = vmatprep.subr.mxu0 0.0
    %1739 = vmatpush1.msra.mxu0 0.0
    %1740 = vmatprep.subr.mxu0 0.0
    %1741 = vmatpush1.msra.mxu0 0.0
    %1742 = vmatprep.subr.mxu0 0.0
    %1743 = vmatpush1.msra.mxu0 0.0
    %1744 = vmatprep.subr.mxu0 0.0
    %1745 = vmatpush1.msra.mxu0 0.0
    %1746 = vmatprep.subr.mxu0 0.0
    %1747 = vmatpush1.msra.mxu0 0.0
    %1748 = vmatprep.subr.mxu0 0.0
    %1749 = vmatpush1.msra.mxu0 0.0
    %1750 = vmatprep.subr.mxu0 0.0
    %1751 = vmatpush1.msra.mxu0 0.0
    %1752 = vmatprep.subr.mxu0 0.0
    %1753 = vmatpush1.msra.mxu0 0.0
    %1754 = vmatprep.subr.mxu0 0.0
    %1755 = vmatpush1.msra.mxu0 0.0
    %1756 = vmatprep.subr.mxu0 0.0
    %1757 = vmatpush1.msra.mxu0 0.0
    %1758 = vmatprep.subr.mxu0 0.0
    %1759 = vmatpush1.msra.mxu0 0.0
    %1760 = vmatprep.subr.mxu0 0.0
    %1761 = vmatpush1.msra.mxu0 0.0
    %1762 = vmatprep.subr.mxu0 0.0
    %1763 = vmatpush1.msra.mxu0 0.0
    %1764 = vmatprep.subr.mxu0 0.0
    %1765 = vmatpush1.msra.mxu0 0.0
    %1766 = vmatprep.subr.mxu0 0.0
    %1767 = vmatpush1.msra.mxu0 0.0
    %1768 = vmatprep.subr.mxu0 0.0
    %1769 = vmatpush1.msra.mxu0 0.0
    %1770 = vmatprep.subr.mxu0 0.0
    %1771 = vmatpush1.msra.mxu0 0.0
    %1772 = vmatprep.subr.mxu0 0.0
    %1773 = vmatpush1.msra.mxu0 0.0
    %1774 = vmatprep.subr.mxu0 0.0
    %1775 = vmatpush1.msra.mxu0 0.0
    %1776 = vmatprep.mubr.f32.mxu0 0.0
    %1777 = vmatmul.mubr.f32.gmra.mrb[0].mxu0 %v1710
    %v1778 = vpop.f32.mrb[0].mxu0
    %v1779 = vadd.f32 0.0, %v1778
    %v1780 = vpop.f32.mrb[0].mxu0
    %1781 = vdwg.mxu0
    %v1782 = vld [vmem:[%s4 + $0x10] sm:$0xff]
    %v1784 = vsel %vm158, %v1779, 0
    %1786 = vmatprep.subr.mxu0 0.0
    %1787 = vmatpush1.msra.mxu0 %v1782
    %1788 = vmatprep.subr.mxu0 0.0
    %1789 = vmatpush1.msra.mxu0 0.0
    %1790 = vmatprep.subr.mxu0 0.0
    %1791 = vmatpush1.msra.mxu0 0.0
    %1792 = vmatprep.subr.mxu0 0.0
    %1793 = vmatpush1.msra.mxu0 0.0
    %1794 = vmatprep.subr.mxu0 0.0
    %1795 = vmatpush1.msra.mxu0 0.0
    %1796 = vmatprep.subr.mxu0 0.0
    %1797 = vmatpush1.msra.mxu0 0.0
    %1798 = vmatprep.subr.mxu0 0.0
    %1799 = vmatpush1.msra.mxu0 0.0
    %1800 = vmatprep.subr.mxu0 0.0
    %1801 = vmatpush1.msra.mxu0 0.0
    %1802 = vmatprep.subr.mxu0 0.0
    %1803 = vmatpush1.msra.mxu0 0.0
    %1804 = vmatprep.subr.mxu0 0.0
    %1805 = vmatpush1.msra.mxu0 0.0
    %1806 = vmatprep.subr.mxu0 0.0
    %1807 = vmatpush1.msra.mxu0 0.0
    %1808 = vmatprep.subr.mxu0 0.0
    %1809 = vmatpush1.msra.mxu0 0.0
    %1810 = vmatprep.subr.mxu0 0.0
    %1811 = vmatpush1.msra.mxu0 0.0
    %1812 = vmatprep.subr.mxu0 0.0
    %1813 = vmatpush1.msra.mxu0 0.0
    %1814 = vmatprep.subr.mxu0 0.0
    %1815 = vmatpush1.msra.mxu0 0.0
    %1816 = vmatprep.subr.mxu0 0.0
    %1817 = vmatpush1.msra.mxu0 0.0
    %1818 = vmatprep.subr.mxu0 0.0
    %1819 = vmatpush1.msra.mxu0 0.0
    %1820 = vmatprep.subr.mxu0 0.0
    %1821 = vmatpush1.msra.mxu0 0.0
    %1822 = vmatprep.subr.mxu0 0.0
    %1823 = vmatpush1.msra.mxu0 0.0
    %1824 = vmatprep.subr.mxu0 0.0
    %1825 = vmatpush1.msra.mxu0 0.0
    %1826 = vmatprep.subr.mxu0 0.0
    %1827 = vmatpush1.msra.mxu0 0.0
    %1828 = vmatprep.subr.mxu0 0.0
    %1829 = vmatpush1.msra.mxu0 0.0
    %1830 = vmatprep.subr.mxu0 0.0
    %1831 = vmatpush1.msra.mxu0 0.0
    %1832 = vmatprep.subr.mxu0 0.0
    %1833 = vmatpush1.msra.mxu0 0.0
    %1834 = vmatprep.subr.mxu0 0.0
    %1835 = vmatpush1.msra.mxu0 0.0
    %1836 = vmatprep.subr.mxu0 0.0
    %1837 = vmatpush1.msra.mxu0 0.0
    %1838 = vmatprep.subr.mxu0 0.0
    %1839 = vmatpush1.msra.mxu0 0.0
    %1840 = vmatprep.subr.mxu0 0.0
    %1841 = vmatpush1.msra.mxu0 0.0
    %1842 = vmatprep.subr.mxu0 0.0
    %1843 = vmatpush1.msra.mxu0 0.0
    %1844 = vmatprep.subr.mxu0 0.0
    %1845 = vmatpush1.msra.mxu0 0.0
    %1846 = vmatprep.subr.mxu0 0.0
    %1847 = vmatpush1.msra.mxu0 0.0
    %1848 = vmatprep.subr.mxu0 0.0
    %1849 = vmatpush1.msra.mxu0 0.0
    %1850 = vmatprep.mubr.f32.mxu0 0.0
    %1851 = vmatmul.mubr.f32.gmra.mrb[0].mxu0 %v1784
    %v1852 = vpop.f32.mrb[0].mxu0
    %v1853 = vadd.f32 0.0, %v1852
    %v1854 = vpop.f32.mrb[0].mxu0
    %1855 = vdwg.mxu0
    %v1856 = vadd.f32 %v1610, %v1853
    %1857 = vrot.lane.b32.xlu0 %v152, 104
    %v1858 = vpop.permute.xlu0 %1857
    %1859 = vrot.lane.b32.xlu0 %v152, 72
    %v1860 = vpop.permute.xlu0 %1859
    %v1861 = vsel %vm158, %v1858, 0
    %v1863 = vsel %vm158, %v1860, 0
    %1865 = vmatprep.subr.mxu0 0.0
    %1866 = vmatpush1.xpose.msra.mxu0 %v1863
    %1867 = vmatprep.subr.mxu0 0.0
    %1868 = vmatpush1.xpose.msra.mxu0 0.0
    %1869 = vmatprep.subr.mxu0 0.0
    %1870 = vmatpush1.xpose.msra.mxu0 0.0
    %1871 = vmatprep.subr.mxu0 0.0
    %1872 = vmatpush1.xpose.msra.mxu0 0.0
    %1873 = vmatprep.subr.mxu0 0.0
    %1874 = vmatpush1.xpose.msra.mxu0 0.0
    %1875 = vmatprep.subr.mxu0 0.0
    %1876 = vmatpush1.xpose.msra.mxu0 0.0
    %1877 = vmatprep.subr.mxu0 0.0
    %1878 = vmatpush1.xpose.msra.mxu0 0.0
    %1879 = vmatprep.subr.mxu0 0.0
    %1880 = vmatpush1.xpose.msra.mxu0 0.0
    %1881 = vmatprep.subr.mxu0 0.0
    %1882 = vmatpush1.xpose.msra.mxu0 0.0
    %1883 = vmatprep.subr.mxu0 0.0
    %1884 = vmatpush1.xpose.msra.mxu0 0.0
    %1885 = vmatprep.subr.mxu0 0.0
    %1886 = vmatpush1.xpose.msra.mxu0 0.0
    %1887 = vmatprep.subr.mxu0 0.0
    %1888 = vmatpush1.xpose.msra.mxu0 0.0
    %1889 = vmatprep.subr.mxu0 0.0
    %1890 = vmatpush1.xpose.msra.mxu0 0.0
    %1891 = vmatprep.subr.mxu0 0.0
    %1892 = vmatpush1.xpose.msra.mxu0 0.0
    %1893 = vmatprep.subr.mxu0 0.0
    %1894 = vmatpush1.xpose.msra.mxu0 0.0
    %1895 = vmatprep.subr.mxu0 0.0
    %1896 = vmatpush1.xpose.msra.mxu0 0.0
    %1897 = vmatprep.subr.mxu0 0.0
    %1898 = vmatpush1.xpose.msra.mxu0 0.0
    %1899 = vmatprep.subr.mxu0 0.0
    %1900 = vmatpush1.xpose.msra.mxu0 0.0
    %1901 = vmatprep.subr.mxu0 0.0
    %1902 = vmatpush1.xpose.msra.mxu0 0.0
    %1903 = vmatprep.subr.mxu0 0.0
    %1904 = vmatpush1.xpose.msra.mxu0 0.0
    %1905 = vmatprep.subr.mxu0 0.0
    %1906 = vmatpush1.xpose.msra.mxu0 0.0
    %1907 = vmatprep.subr.mxu0 0.0
    %1908 = vmatpush1.xpose.msra.mxu0 0.0
    %1909 = vmatprep.subr.mxu0 0.0
    %1910 = vmatpush1.xpose.msra.mxu0 0.0
    %1911 = vmatprep.subr.mxu0 0.0
    %1912 = vmatpush1.xpose.msra.mxu0 0.0
    %1913 = vmatprep.subr.mxu0 0.0
    %1914 = vmatpush1.xpose.msra.mxu0 0.0
    %1915 = vmatprep.subr.mxu0 0.0
    %1916 = vmatpush1.xpose.msra.mxu0 0.0
    %1917 = vmatprep.subr.mxu0 0.0
    %1918 = vmatpush1.xpose.msra.mxu0 0.0
    %1919 = vmatprep.subr.mxu0 0.0
    %1920 = vmatpush1.xpose.msra.mxu0 0.0
    %1921 = vmatprep.subr.mxu0 0.0
    %1922 = vmatpush1.xpose.msra.mxu0 0.0
    %1923 = vmatprep.subr.mxu0 0.0
    %1924 = vmatpush1.xpose.msra.mxu0 0.0
    %1925 = vmatprep.subr.mxu0 0.0
    %1926 = vmatpush1.xpose.msra.mxu0 0.0
    %1927 = vmatprep.subr.mxu0 0.0
    %1928 = vmatpush1.xpose.msra.mxu0 0.0
    %1929 = vmatprep.mubr.f32.mxu0 0.0
    %1930 = vmatmul.mubr.f32.gmra.mrb[0].mxu0 %v1861
    %v1931 = vpop.f32.mrb[0].mxu0
    %v1932 = vadd.f32 0.0, %v1931
    %v1933 = vpop.f32.mrb[0].mxu0
    %1934 = vdwg.mxu0
    %v1935 = vmul.f32 %v1932, 0.35355338
    %v1936 = vadd.f32 %v1935, %v68
    %v1937 = vsel %vm158, %v1936, -inf
    %1938 = vmax.xlane.f32.xlu0 %v1937
    %v1939 = vpop.xlane.xlu0 %1938
    %v1940 = vsub.f32 %v1936, %v1939
    %v1941 = vmul.f32 %v1940, 1.442695
    %v1942 = vpow.pop %v1941
    %v1943 = vsel %vm158, %v1942, 0.0
    %1944 = vadd.xlane.f32.xlu0 %v1943
    %v1945 = vpop.xlane.xlu0 %1944
    %v1946 = vrcp.pop %v1945
    %v1947 = vmul.f32 %v1942, %v1946
    %s1948 = scalar_lea.vmem [#allocation2], 56
    %1949 = vst.msk [vmem:[%s1948] sm:$0xff] %vm158, %v1947
    %1950 = vrot.lane.b32.xlu0 %v152, 40
    %v1951 = vpop.permute.xlu0 %1950
    %v1954 = vsel %vm158, %v1947, 0
    %1956 = vmatprep.subr.mxu0 0.0
    %1957 = vmatpush1.msra.mxu0 %v1951
    %1958 = vmatprep.subr.mxu0 0.0
    %1959 = vmatpush1.msra.mxu0 0.0
    %1960 = vmatprep.subr.mxu0 0.0
    %1961 = vmatpush1.msra.mxu0 0.0
    %1962 = vmatprep.subr.mxu0 0.0
    %1963 = vmatpush1.msra.mxu0 0.0
    %1964 = vmatprep.subr.mxu0 0.0
    %1965 = vmatpush1.msra.mxu0 0.0
    %1966 = vmatprep.subr.mxu0 0.0
    %1967 = vmatpush1.msra.mxu0 0.0
    %1968 = vmatprep.subr.mxu0 0.0
    %1969 = vmatpush1.msra.mxu0 0.0
    %1970 = vmatprep.subr.mxu0 0.0
    %1971 = vmatpush1.msra.mxu0 0.0
    %1972 = vmatprep.subr.mxu0 0.0
    %1973 = vmatpush1.msra.mxu0 0.0
    %1974 = vmatprep.subr.mxu0 0.0
    %1975 = vmatpush1.msra.mxu0 0.0
    %1976 = vmatprep.subr.mxu0 0.0
    %1977 = vmatpush1.msra.mxu0 0.0
    %1978 = vmatprep.subr.mxu0 0.0
    %1979 = vmatpush1.msra.mxu0 0.0
    %1980 = vmatprep.subr.mxu0 0.0
    %1981 = vmatpush1.msra.mxu0 0.0
    %1982 = vmatprep.subr.mxu0 0.0
    %1983 = vmatpush1.msra.mxu0 0.0
    %1984 = vmatprep.subr.mxu0 0.0
    %1985 = vmatpush1.msra.mxu0 0.0
    %1986 = vmatprep.subr.mxu0 0.0
    %1987 = vmatpush1.msra.mxu0 0.0
    %1988 = vmatprep.subr.mxu0 0.0
    %1989 = vmatpush1.msra.mxu0 0.0
    %1990 = vmatprep.subr.mxu0 0.0
    %1991 = vmatpush1.msra.mxu0 0.0
    %1992 = vmatprep.subr.mxu0 0.0
    %1993 = vmatpush1.msra.mxu0 0.0
    %1994 = vmatprep.subr.mxu0 0.0
    %1995 = vmatpush1.msra.mxu0 0.0
    %1996 = vmatprep.subr.mxu0 0.0
    %1997 = vmatpush1.msra.mxu0 0.0
    %1998 = vmatprep.subr.mxu0 0.0
    %1999 = vmatpush1.msra.mxu0 0.0
    %2000 = vmatprep.subr.mxu0 0.0
    %2001 = vmatpush1.msra.mxu0 0.0
    %2002 = vmatprep.subr.mxu0 0.0
    %2003 = vmatpush1.msra.mxu0 0.0
    %2004 = vmatprep.subr.mxu0 0.0
    %2005 = vmatpush1.msra.mxu0 0.0
    %2006 = vmatprep.subr.mxu0 0.0
    %2007 = vmatpush1.msra.mxu0 0.0
    %2008 = vmatprep.subr.mxu0 0.0
    %2009 = vmatpush1.msra.mxu0 0.0
    %2010 = vmatprep.subr.mxu0 0.0
    %2011 = vmatpush1.msra.mxu0 0.0
    %2012 = vmatprep.subr.mxu0 0.0
    %2013 = vmatpush1.msra.mxu0 0.0
    %2014 = vmatprep.subr.mxu0 0.0
    %2015 = vmatpush1.msra.mxu0 0.0
    %2016 = vmatprep.subr.mxu0 0.0
    %2017 = vmatpush1.msra.mxu0 0.0
    %2018 = vmatprep.subr.mxu0 0.0
    %2019 = vmatpush1.msra.mxu0 0.0
    %2020 = vmatprep.mubr.f32.mxu0 0.0
    %2021 = vmatmul.mubr.f32.gmra.mrb[0].mxu0 %v1954
    %v2022 = vpop.f32.mrb[0].mxu0
    %v2023 = vadd.f32 0.0, %v2022
    %v2024 = vpop.f32.mrb[0].mxu0
    %2025 = vdwg.mxu0
    %v2026 = vld [vmem:[%s4 + $0x18] sm:$0xff]
    %v2028 = vsel %vm158, %v2023, 0
    %2030 = vmatprep.subr.mxu0 0.0
    %2031 = vmatpush1.msra.mxu0 %v2026
    %2032 = vmatprep.subr.mxu0 0.0
    %2033 = vmatpush1.msra.mxu0 0.0
    %2034 = vmatprep.subr.mxu0 0.0
    %2035 = vmatpush1.msra.mxu0 0.0
    %2036 = vmatprep.subr.mxu0 0.0
    %2037 = vmatpush1.msra.mxu0 0.0
    %2038 = vmatprep.subr.mxu0 0.0
    %2039 = vmatpush1.msra.mxu0 0.0
    %2040 = vmatprep.subr.mxu0 0.0
    %2041 = vmatpush1.msra.mxu0 0.0
    %2042 = vmatprep.subr.mxu0 0.0
    %2043 = vmatpush1.msra.mxu0 0.0
    %2044 = vmatprep.subr.mxu0 0.0
    %2045 = vmatpush1.msra.mxu0 0.0
    %2046 = vmatprep.subr.mxu0 0.0
    %2047 = vmatpush1.msra.mxu0 0.0
    %2048 = vmatprep.subr.mxu0 0.0
    %2049 = vmatpush1.msra.mxu0 0.0
    %2050 = vmatprep.subr.mxu0 0.0
    %2051 = vmatpush1.msra.mxu0 0.0
    %2052 = vmatprep.subr.mxu0 0.0
    %2053 = vmatpush1.msra.mxu0 0.0
    %2054 = vmatprep.subr.mxu0 0.0
    %2055 = vmatpush1.msra.mxu0 0.0
    %2056 = vmatprep.subr.mxu0 0.0
    %2057 = vmatpush1.msra.mxu0 0.0
    %2058 = vmatprep.subr.mxu0 0.0
    %2059 = vmatpush1.msra.mxu0 0.0
    %2060 = vmatprep.subr.mxu0 0.0
    %2061 = vmatpush1.msra.mxu0 0.0
    %2062 = vmatprep.subr.mxu0 0.0
    %2063 = vmatpush1.msra.mxu0 0.0
    %2064 = vmatprep.subr.mxu0 0.0
    %2065 = vmatpush1.msra.mxu0 0.0
    %2066 = vmatprep.subr.mxu0 0.0
    %2067 = vmatpush1.msra.mxu0 0.0
    %2068 = vmatprep.subr.mxu0 0.0
    %2069 = vmatpush1.msra.mxu0 0.0
    %2070 = vmatprep.subr.mxu0 0.0
    %2071 = vmatpush1.msra.mxu0 0.0
    %2072 = vmatprep.subr.mxu0 0.0
    %2073 = vmatpush1.msra.mxu0 0.0
    %2074 = vmatprep.subr.mxu0 0.0
    %2075 = vmatpush1.msra.mxu0 0.0
    %2076 = vmatprep.subr.mxu0 0.0
    %2077 = vmatpush1.msra.mxu0 0.0
    %2078 = vmatprep.subr.mxu0 0.0
    %2079 = vmatpush1.msra.mxu0 0.0
    %2080 = vmatprep.subr.mxu0 0.0
    %2081 = vmatpush1.msra.mxu0 0.0
    %2082 = vmatprep.subr.mxu0 0.0
    %2083 = vmatpush1.msra.mxu0 0.0
    %2084 = vmatprep.subr.mxu0 0.0
    %2085 = vmatpush1.msra.mxu0 0.0
    %2086 = vmatprep.subr.mxu0 0.0
    %2087 = vmatpush1.msra.mxu0 0.0
    %2088 = vmatprep.subr.mxu0 0.0
    %2089 = vmatpush1.msra.mxu0 0.0
    %2090 = vmatprep.subr.mxu0 0.0
    %2091 = vmatpush1.msra.mxu0 0.0
    %2092 = vmatprep.subr.mxu0 0.0
    %2093 = vmatpush1.msra.mxu0 0.0
    %2094 = vmatprep.mubr.f32.mxu0 0.0
    %2095 = vmatmul.mubr.f32.gmra.mrb[0].mxu0 %v2028
    %v2096 = vpop.f32.mrb[0].mxu0
    %v2097 = vadd.f32 0.0, %v2096
    %v2098 = vpop.f32.mrb[0].mxu0
    %2099 = vdwg.mxu0
    %v2100 = vadd.f32 %v1856, %v2097
    %v2101 = vadd.f32 %v64, %v1127
    %v2102 = vadd.f32 %v65, %v2100
    %v2103 = vld [vmem:[%s5] sm:$0x1]
    %v2104 = vld [vmem:[%s6] sm:$0x1]
    %v2105 = vsel %vm73, %v2101, 0.0
    %2106 = vadd.xlane.f32.xlu0 %v2105
    %v2107 = vpop.xlane.xlu0 %2106
    %v2108 = vsel %vm73, %v2102, 0.0
    %2109 = vadd.xlane.f32.xlu0 %v2108
    %v2110 = vpop.xlane.xlu0 %2109
    %v2111 = vrcp.pop 32.0
    %v2112 = vmul.f32 %v2107, %v2111
    %v2113 = vmul.f32 %v2110, %v2111
    %v2114 = vsub.f32 %v2101, %v2112
    %v2115 = vsub.f32 %v2102, %v2113
    %v2116 = vmul.f32 %v2114, %v2114
    %v2117 = vmul.f32 %v2115, %v2115
    %v2118 = vsel %vm73, %v2116, 0.0
    %2119 = vadd.xlane.f32.xlu0 %v2118
    %v2120 = vpop.xlane.xlu0 %2119
    %v2121 = vsel %vm73, %v2117, 0.0
    %2122 = vadd.xlane.f32.xlu0 %v2121
    %v2123 = vpop.xlane.xlu0 %2122
    %v2124 = vmul.f32 %v2120, %v2111
    %v2125 = vmul.f32 %v2123, %v2111
    %v2126 = vadd.f32 %v2124, 1e-05
    %v2127 = vadd.f32 %v2125, 1e-05
    %v2128 = vrsqrt.pop %v2126
    %v2129 = vrsqrt.pop %v2127
    %v2130 = vmul.f32 %v2114, %v2128
    %v2131 = vmul.f32 %v2115, %v2129
    %v2133 = vlaneseq
    %v2134 = vshrl.u32 %v2133, 7
    %v2135 = vsub.s32 0, %v2134
    %v2136 = vrot.slane %v2103, %v2135
    %v2138 = vmul.f32 %v2130, %v2136
    %v2139 = vmul.f32 %v2131, %v2136
    %v2141 = vlaneseq
    %v2142 = vshrl.u32 %v2141, 7
    %v2143 = vsub.s32 0, %v2142
    %v2144 = vrot.slane %v2104, %v2143
    %v2146 = vadd.f32 %v2138, %v2144
    %v2147 = vadd.f32 %v2139, %v2144
    %v2148 = vld [vmem:[%s7] sm:$0xff]
    %v2149 = vld [vmem:[%s7 + $0x8] sm:$0xff]
    %v2150 = vld [vmem:[%s7 + $0x10] sm:$0xff]
    %v2151 = vld [vmem:[%s7 + $0x18] sm:$0xff]
    %v2153 = vsel %vm73, %v2146, 0
    %v2156 = vsel %vm73, %v2147, 0
    %2158 = vmatprep.subr.mxu0 0.0
    %2159 = vmatpush1.msra.mxu0 %v2148
    %2160 = vmatprep.subr.mxu0 0.0
    %2161 = vmatpush1.msra.mxu0 %v2149
    %2162 = vmatprep.subr.mxu0 0.0
    %2163 = vmatpush1.msra.mxu0 %v2150
    %2164 = vmatprep.subr.mxu0 0.0
    %2165 = vmatpush1.msra.mxu0 %v2151
    %2166 = vmatprep.subr.mxu0 0.0
    %2167 = vmatpush1.msra.mxu0 0.0
    %2168 = vmatprep.subr.mxu0 0.0
    %2169 = vmatpush1.msra.mxu0 0.0
    %2170 = vmatprep.subr.mxu0 0.0
    %2171 = vmatpush1.msra.mxu0 0.0
    %2172 = vmatprep.subr.mxu0 0.0
    %2173 = vmatpush1.msra.mxu0 0.0
    %2174 = vmatprep.subr.mxu0 0.0
    %2175 = vmatpush1.msra.mxu0 0.0
    %2176 = vmatprep.subr.mxu0 0.0
    %2177 = vmatpush1.msra.mxu0 0.0
    %2178 = vmatprep.subr.mxu0 0.0
    %2179 = vmatpush1.msra.mxu0 0.0
    %2180 = vmatprep.subr.mxu0 0.0
    %2181 = vmatpush1.msra.mxu0 0.0
    %2182 = vmatprep.subr.mxu0 0.0
    %2183 = vmatpush1.msra.mxu0 0.0
    %2184 = vmatprep.subr.mxu0 0.0
    %2185 = vmatpush1.msra.mxu0 0.0
    %2186 = vmatprep.subr.mxu0 0.0
    %2187 = vmatpush1.msra.mxu0 0.0
    %2188 = vmatprep.subr.mxu0 0.0
    %2189 = vmatpush1.msra.mxu0 0.0
    %2190 = vmatprep.subr.mxu0 0.0
    %2191 = vmatpush1.msra.mxu0 0.0
    %2192 = vmatprep.subr.mxu0 0.0
    %2193 = vmatpush1.msra.mxu0 0.0
    %2194 = vmatprep.subr.mxu0 0.0
    %2195 = vmatpush1.msra.mxu0 0.0
    %2196 = vmatprep.subr.mxu0 0.0
    %2197 = vmatpush1.msra.mxu0 0.0
    %2198 = vmatprep.subr.mxu0 0.0
    %2199 = vmatpush1.msra.mxu0 0.0
    %2200 = vmatprep.subr.mxu0 0.0
    %2201 = vmatpush1.msra.mxu0 0.0
    %2202 = vmatprep.subr.mxu0 0.0
    %2203 = vmatpush1.msra.mxu0 0.0
    %2204 = vmatprep.subr.mxu0 0.0
    %2205 = vmatpush1.msra.mxu0 0.0
    %2206 = vmatprep.subr.mxu0 0.0
    %2207 = vmatpush1.msra.mxu0 0.0
    %2208 = vmatprep.subr.mxu0 0.0
    %2209 = vmatpush1.msra.mxu0 0.0
    %2210 = vmatprep.subr.mxu0 0.0
    %2211 = vmatpush1.msra.mxu0 0.0
    %2212 = vmatprep.subr.mxu0 0.0
    %2213 = vmatpush1.msra.mxu0 0.0
    %2214 = vmatprep.subr.mxu0 0.0
    %2215 = vmatpush1.msra.mxu0 0.0
    %2216 = vmatprep.subr.mxu0 0.0
    %2217 = vmatpush1.msra.mxu0 0.0
    %2218 = vmatprep.subr.mxu0 0.0
    %2219 = vmatpush1.msra.mxu0 0.0
    %2220 = vmatprep.subr.mxu0 0.0
    %2221 = vmatpush1.msra.mxu0 0.0
    %2222 = vmatprep.mubr.f32.mxu0 0.0
    %2223 = vmatmul.mubr.f32.gmra.mrb[0].mxu0 %v2153
    %v2224 = vpop.f32.mrb[0].mxu0
    %v2225 = vadd.f32 0.0, %v2224
    %v2226 = vpop.f32.mrb[0].mxu0
    %2227 = vmatprep.mubr.f32.mxu0 0.0
    %2228 = vmatmul.mubr.f32.gmra.mrb[0].mxu0 %v2156
    %v2229 = vpop.f32.mrb[0].mxu0
    %v2230 = vadd.f32 0.0, %v2229
    %v2231 = vpop.f32.mrb[0].mxu0
    %2232 = vdwg.mxu0
    %v2233 = vld [vmem:[%s8] sm:$0xff]
    %v2234 = vld [vmem:[%s8 + $0x8] sm:$0xff]
    %v2235 = vld [vmem:[%s8 + $0x10] sm:$0xff]
    %v2236 = vld [vmem:[%s8 + $0x18] sm:$0xff]
    %v2238 = vsel %vm73, %v66, 0
    %v2241 = vsel %vm73, %v67, 0
    %2243 = vmatprep.subr.mxu0 0.0
    %2244 = vmatpush1.msra.mxu0 %v2233
    %2245 = vmatprep.subr.mxu0 0.0
    %2246 = vmatpush1.msra.mxu0 %v2234
    %2247 = vmatprep.subr.mxu0 0.0
    %2248 = vmatpush1.msra.mxu0 %v2235
    %2249 = vmatprep.subr.mxu0 0.0
    %2250 = vmatpush1.msra.mxu0 %v2236
    %2251 = vmatprep.subr.mxu0 0.0
    %2252 = vmatpush1.msra.mxu0 0.0
    %2253 = vmatprep.subr.mxu0 0.0
    %2254 = vmatpush1.msra.mxu0 0.0
    %2255 = vmatprep.subr.mxu0 0.0
    %2256 = vmatpush1.msra.mxu0 0.0
    %2257 = vmatprep.subr.mxu0 0.0
    %2258 = vmatpush1.msra.mxu0 0.0
    %2259 = vmatprep.subr.mxu0 0.0
    %2260 = vmatpush1.msra.mxu0 0.0
    %2261 = vmatprep.subr.mxu0 0.0
    %2262 = vmatpush1.msra.mxu0 0.0
    %2263 = vmatprep.subr.mxu0 0.0
    %2264 = vmatpush1.msra.mxu0 0.0
    %2265 = vmatprep.subr.mxu0 0.0
    %2266 = vmatpush1.msra.mxu0 0.0
    %2267 = vmatprep.subr.mxu0 0.0
    %2268 = vmatpush1.msra.mxu0 0.0
    %2269 = vmatprep.subr.mxu0 0.0
    %2270 = vmatpush1.msra.mxu0 0.0
    %2271 = vmatprep.subr.mxu0 0.0
    %2272 = vmatpush1.msra.mxu0 0.0
    %2273 = vmatprep.subr.mxu0 0.0
    %2274 = vmatpush1.msra.mxu0 0.0
    %2275 = vmatprep.subr.mxu0 0.0
    %2276 = vmatpush1.msra.mxu0 0.0
    %2277 = vmatprep.subr.mxu0 0.0
    %2278 = vmatpush1.msra.mxu0 0.0
    %2279 = vmatprep.subr.mxu0 0.0
    %2280 = vmatpush1.msra.mxu0 0.0
    %2281 = vmatprep.subr.mxu0 0.0
    %2282 = vmatpush1.msra.mxu0 0.0
    %2283 = vmatprep.subr.mxu0 0.0
    %2284 = vmatpush1.msra.mxu0 0.0
    %2285 = vmatprep.subr.mxu0 0.0
    %2286 = vmatpush1.msra.mxu0 0.0
    %2287 = vmatprep.subr.mxu0 0.0
    %2288 = vmatpush1.msra.mxu0 0.0
    %2289 = vmatprep.subr.mxu0 0.0
    %2290 = vmatpush1.msra.mxu0 0.0
    %2291 = vmatprep.subr.mxu0 0.0
    %2292 = vmatpush1.msra.mxu0 0.0
    %2293 = vmatprep.subr.mxu0 0.0
    %2294 = vmatpush1.msra.mxu0 0.0
    %2295 = vmatprep.subr.mxu0 0.0
    %2296 = vmatpush1.msra.mxu0 0.0
    %2297 = vmatprep.subr.mxu0 0.0
    %2298 = vmatpush1.msra.mxu0 0.0
    %2299 = vmatprep.subr.mxu0 0.0
    %2300 = vmatpush1.msra.mxu0 0.0
    %2301 = vmatprep.subr.mxu0 0.0
    %2302 = vmatpush1.msra.mxu0 0.0
    %2303 = vmatprep.subr.mxu0 0.0
    %2304 = vmatpush1.msra.mxu0 0.0
    %2305 = vmatprep.subr.mxu0 0.0
    %2306 = vmatpush1.msra.mxu0 0.0
    %2307 = vmatprep.mubr.f32.mxu0 0.0
    %2308 = vmatmul.mubr.f32.gmra.mrb[0].mxu0 %v2238
    %v2309 = vpop.f32.mrb[0].mxu0
    %v2310 = vadd.f32 0.0, %v2309
    %v2311 = vpop.f32.mrb[0].mxu0
    %2312 = vmatprep.mubr.f32.mxu0 0.0
    %2313 = vmatmul.mubr.f32.gmra.mrb[0].mxu0 %v2241
    %v2314 = vpop.f32.mrb[0].mxu0
    %v2315 = vadd.f32 0.0, %v2314
    %v2316 = vpop.f32.mrb[0].mxu0
    %2317 = vdwg.mxu0
    %v2319 = vsel %vm158, %v2225, 0
    %v2322 = vsel %vm158, %v2310, 0
    %2324 = vmatprep.subr.mxu0 0.0
    %2325 = vmatpush1.xpose.msra.mxu0 %v2322
    %2326 = vmatprep.subr.mxu0 0.0
    %2327 = vmatpush1.xpose.msra.mxu0 0.0
    %2328 = vmatprep.subr.mxu0 0.0
    %2329 = vmatpush1.xpose.msra.mxu0 0.0
    %2330 = vmatprep.subr.mxu0 0.0
    %2331 = vmatpush1.xpose.msra.mxu0 0.0
    %2332 = vmatprep.subr.mxu0 0.0
    %2333 = vmatpush1.xpose.msra.mxu0 0.0
    %2334 = vmatprep.subr.mxu0 0.0
    %2335 = vmatpush1.xpose.msra.mxu0 0.0
    %2336 = vmatprep.subr.mxu0 0.0
    %2337 = vmatpush1.xpose.msra.mxu0 0.0
    %2338 = vmatprep.subr.mxu0 0.0
    %2339 = vmatpush1.xpose.msra.mxu0 0.0
    %2340 = vmatprep.subr.mxu0 0.0
    %2341 = vmatpush1.xpose.msra.mxu0 0.0
    %2342 = vmatprep.subr.mxu0 0.0
    %2343 = vmatpush1.xpose.msra.mxu0 0.0
    %2344 = vmatprep.subr.mxu0 0.0
    %2345 = vmatpush1.xpose.msra.mxu0 0.0
    %2346 = vmatprep.subr.mxu0 0.0
    %2347 = vmatpush1.xpose.msra.mxu0 0.0
    %2348 = vmatprep.subr.mxu0 0.0
    %2349 = vmatpush1.xpose.msra.mxu0 0.0
    %2350 = vmatprep.subr.mxu0 0.0
    %2351 = vmatpush1.xpose.msra.mxu0 0.0
    %2352 = vmatprep.subr.mxu0 0.0
    %2353 = vmatpush1.xpose.msra.mxu0 0.0
    %2354 = vmatprep.subr.mxu0 0.0
    %2355 = vmatpush1.xpose.msra.mxu0 0.0
    %2356 = vmatprep.subr.mxu0 0.0
    %2357 = vmatpush1.xpose.msra.mxu0 0.0
    %2358 = vmatprep.subr.mxu0 0.0
    %2359 = vmatpush1.xpose.msra.mxu0 0.0
    %2360 = vmatprep.subr.mxu0 0.0
    %2361 = vmatpush1.xpose.msra.mxu0 0.0
    %2362 = vmatprep.subr.mxu0 0.0
    %2363 = vmatpush1.xpose.msra.mxu0 0.0
    %2364 = vmatprep.subr.mxu0 0.0
    %2365 = vmatpush1.xpose.msra.mxu0 0.0
    %2366 = vmatprep.subr.mxu0 0.0
    %2367 = vmatpush1.xpose.msra.mxu0 0.0
    %2368 = vmatprep.subr.mxu0 0.0
    %2369 = vmatpush1.xpose.msra.mxu0 0.0
    %2370 = vmatprep.subr.mxu0 0.0
    %2371 = vmatpush1.xpose.msra.mxu0 0.0
    %2372 = vmatprep.subr.mxu0 0.0
    %2373 = vmatpush1.xpose.msra.mxu0 0.0
    %2374 = vmatprep.subr.mxu0 0.0
    %2375 = vmatpush1.xpose.msra.mxu0 0.0
    %2376 = vmatprep.subr.mxu0 0.0
    %2377 = vmatpush1.xpose.msra.mxu0 0.0
    %2378 = vmatprep.subr.mxu0 0.0
    %2379 = vmatpush1.xpose.msra.mxu0 0.0
    %2380 = vmatprep.subr.mxu0 0.0
    %2381 = vmatpush1.xpose.msra.mxu0 0.0
    %2382 = vmatprep.subr.mxu0 0.0
    %2383 = vmatpush1.xpose.msra.mxu0 0.0
    %2384 = vmatprep.subr.mxu0 0.0
    %2385 = vmatpush1.xpose.msra.mxu0 0.0
    %2386 = vmatprep.subr.mxu0 0.0
    %2387 = vmatpush1.xpose.msra.mxu0 0.0
    %2388 = vmatprep.mubr.f32.mxu0 0.0
    %2389 = vmatmul.mubr.f32.gmra.mrb[0].mxu0 %v2319
    %v2390 = vpop.f32.mrb[0].mxu0
    %v2391 = vadd.f32 0.0, %v2390
    %v2392 = vpop.f32.mrb[0].mxu0
    %2393 = vdwg.mxu0
    %v2394 = vmul.f32 %v2391, 0.35355338
    %v2395 = vsel %vm158, %v2394, -inf
    %2396 = vmax.xlane.f32.xlu0 %v2395
    %v2397 = vpop.xlane.xlu0 %2396
    %v2398 = vsub.f32 %v2394, %v2397
    %v2399 = vmul.f32 %v2398, 1.442695
    %v2400 = vpow.pop %v2399
    %v2401 = vsel %vm158, %v2400, 0.0
    %2402 = vadd.xlane.f32.xlu0 %v2401
    %v2403 = vpop.xlane.xlu0 %2402
    %v2404 = vrcp.pop %v2403
    %v2405 = vmul.f32 %v2400, %v2404
    %2406 = vst.msk [vmem:[#allocation4] sm:$0xff] %vm158, %v2405
    %2407 = vrot.lane.b32.xlu0 %v2310, 96
    %v2408 = vpop.permute.xlu0 %2407
    %v2411 = vsel %vm158, %v2405, 0
    %2413 = vmatprep.subr.mxu0 0.0
    %2414 = vmatpush1.msra.mxu0 %v2408
    %2415 = vmatprep.subr.mxu0 0.0
    %2416 = vmatpush1.msra.mxu0 0.0
    %2417 = vmatprep.subr.mxu0 0.0
    %2418 = vmatpush1.msra.mxu0 0.0
    %2419 = vmatprep.subr.mxu0 0.0
    %2420 = vmatpush1.msra.mxu0 0.0
    %2421 = vmatprep.subr.mxu0 0.0
    %2422 = vmatpush1.msra.mxu0 0.0
    %2423 = vmatprep.subr.mxu0 0.0
    %2424 = vmatpush1.msra.mxu0 0.0
    %2425 = vmatprep.subr.mxu0 0.0
    %2426 = vmatpush1.msra.mxu0 0.0
    %2427 = vmatprep.subr.mxu0 0.0
    %2428 = vmatpush1.msra.mxu0 0.0
    %2429 = vmatprep.subr.mxu0 0.0
    %2430 = vmatpush1.msra.mxu0 0.0
    %2431 = vmatprep.subr.mxu0 0.0
    %2432 = vmatpush1.msra.mxu0 0.0
    %2433 = vmatprep.subr.mxu0 0.0
    %2434 = vmatpush1.msra.mxu0 0.0
    %2435 = vmatprep.subr.mxu0 0.0
    %2436 = vmatpush1.msra.mxu0 0.0
    %2437 = vmatprep.subr.mxu0 0.0
    %2438 = vmatpush1.msra.mxu0 0.0
    %2439 = vmatprep.subr.mxu0 0.0
    %2440 = vmatpush1.msra.mxu0 0.0
    %2441 = vmatprep.subr.mxu0 0.0
    %2442 = vmatpush1.msra.mxu0 0.0
    %2443 = vmatprep.subr.mxu0 0.0
    %2444 = vmatpush1.msra.mxu0 0.0
    %2445 = vmatprep.subr.mxu0 0.0
    %2446 = vmatpush1.msra.mxu0 0.0
    %2447 = vmatprep.subr.mxu0 0.0
    %2448 = vmatpush1.msra.mxu0 0.0
    %2449 = vmatprep.subr.mxu0 0.0
    %2450 = vmatpush1.msra.mxu0 0.0
    %2451 = vmatprep.subr.mxu0 0.0
    %2452 = vmatpush1.msra.mxu0 0.0
    %2453 = vmatprep.subr.mxu0 0.0
    %2454 = vmatpush1.msra.mxu0 0.0
    %2455 = vmatprep.subr.mxu0 0.0
    %2456 = vmatpush1.msra.mxu0 0.0
    %2457 = vmatprep.subr.mxu0 0.0
    %2458 = vmatpush1.msra.mxu0 0.0
    %2459 = vmatprep.subr.mxu0 0.0
    %2460 = vmatpush1.msra.mxu0 0.0
    %2461 = vmatprep.subr.mxu0 0.0
    %2462 = vmatpush1.msra.mxu0 0.0
    %2463 = vmatprep.subr.mxu0 0.0
    %2464 = vmatpush1.msra.mxu0 0.0
    %2465 = vmatprep.subr.mxu0 0.0
    %2466 = vmatpush1.msra.mxu0 0.0
    %2467 = vmatprep.subr.mxu0 0.0
    %2468 = vmatpush1.msra.mxu0 0.0
    %2469 = vmatprep.subr.mxu0 0.0
    %2470 = vmatpush1.msra.mxu0 0.0
    %2471 = vmatprep.subr.mxu0 0.0
    %2472 = vmatpush1.msra.mxu0 0.0
    %2473 = vmatprep.subr.mxu0 0.0
    %2474 = vmatpush1.msra.mxu0 0.0
    %2475 = vmatprep.subr.mxu0 0.0
    %2476 = vmatpush1.msra.mxu0 0.0
    %2477 = vmatprep.mubr.f32.mxu0 0.0
    %2478 = vmatmul.mubr.f32.gmra.mrb[0].mxu0 %v2411
    %v2479 = vpop.f32.mrb[0].mxu0
    %v2480 = vadd.f32 0.0, %v2479
    %v2481 = vpop.f32.mrb[0].mxu0
    %2482 = vdwg.mxu0
    %v2483 = vld [vmem:[%s9] sm:$0xff]
    %2484 = vrot.lane.b32.xlu0 %v2225, 120
    %v2485 = vpop.permute.xlu0 %2484
    %2486 = vrot.lane.b32.xlu0 %v2310, 120
    %v2487 = vpop.permute.xlu0 %2486
    %v2488 = vsel %vm158, %v2485, 0
    %v2490 = vsel %vm158, %v2487, 0
    %2492 = vmatprep.subr.mxu0 0.0
    %2493 = vmatpush1.xpose.msra.mxu0 %v2490
    %2494 = vmatprep.subr.mxu0 0.0
    %2495 = vmatpush1.xpose.msra.mxu0 0.0
    %2496 = vmatprep.subr.mxu0 0.0
    %2497 = vmatpush1.xpose.msra.mxu0 0.0
    %2498 = vmatprep.subr.mxu0 0.0
    %2499 = vmatpush1.xpose.msra.mxu0 0.0
    %2500 = vmatprep.subr.mxu0 0.0
    %2501 = vmatpush1.xpose.msra.mxu0 0.0
    %2502 = vmatprep.subr.mxu0 0.0
    %2503 = vmatpush1.xpose.msra.mxu0 0.0
    %2504 = vmatprep.subr.mxu0 0.0
    %2505 = vmatpush1.xpose.msra.mxu0 0.0
    %2506 = vmatprep.subr.mxu0 0.0
    %2507 = vmatpush1.xpose.msra.mxu0 0.0
    %2508 = vmatprep.subr.mxu0 0.0
    %2509 = vmatpush1.xpose.msra.mxu0 0.0
    %2510 = vmatprep.subr.mxu0 0.0
    %2511 = vmatpush1.xpose.msra.mxu0 0.0
    %2512 = vmatprep.subr.mxu0 0.0
    %2513 = vmatpush1.xpose.msra.mxu0 0.0
    %2514 = vmatprep.subr.mxu0 0.0
    %2515 = vmatpush1.xpose.msra.mxu0 0.0
    %2516 = vmatprep.subr.mxu0 0.0
    %2517 = vmatpush1.xpose.msra.mxu0 0.0
    %2518 = vmatprep.subr.mxu0 0.0
    %2519 = vmatpush1.xpose.msra.mxu0 0.0
    %2520 = vmatprep.subr.mxu0 0.0
    %2521 = vmatpush1.xpose.msra.mxu0 0.0
    %2522 = vmatprep.subr.mxu0 0.0
    %2523 = vmatpush1.xpose.msra.mxu0 0.0
    %2524 = vmatprep.subr.mxu0 0.0
    %2525 = vmatpush1.xpose.msra.mxu0 0.0
    %2526 = vmatprep.subr.mxu0 0.0
    %2527 = vmatpush1.xpose.msra.mxu0 0.0
    %2528 = vmatprep.subr.mxu0 0.0
    %2529 = vmatpush1.xpose.msra.mxu0 0.0
    %2530 = vmatprep.subr.mxu0 0.0
    %2531 = vmatpush1.xpose.msra.mxu0 0.0
    %2532 = vmatprep.subr.mxu0 0.0
    %2533 = vmatpush1.xpose.msra.mxu0 0.0
    %2534 = vmatprep.subr.mxu0 0.0
    %2535 = vmatpush1.xpose.msra.mxu0 0.0
    %2536 = vmatprep.subr.mxu0 0.0
    %2537 = vmatpush1.xpose.msra.mxu0 0.0
    %2538 = vmatprep.subr.mxu0 0.0
    %2539 = vmatpush1.xpose.msra.mxu0 0.0
    %2540 = vmatprep.subr.mxu0 0.0
    %2541 = vmatpush1.xpose.msra.mxu0 0.0
    %2542 = vmatprep.subr.mxu0 0.0
    %2543 = vmatpush1.xpose.msra.mxu0 0.0
    %2544 = vmatprep.subr.mxu0 0.0
    %2545 = vmatpush1.xpose.msra.mxu0 0.0
    %2546 = vmatprep.subr.mxu0 0.0
    %2547 = vmatpush1.xpose.msra.mxu0 0.0
    %2548 = vmatprep.subr.mxu0 0.0
    %2549 = vmatpush1.xpose.msra.mxu0 0.0
    %2550 = vmatprep.subr.mxu0 0.0
    %2551 = vmatpush1.xpose.msra.mxu0 0.0
    %2552 = vmatprep.subr.mxu0 0.0
    %2553 = vmatpush1.xpose.msra.mxu0 0.0
    %2554 = vmatprep.subr.mxu0 0.0
    %2555 = vmatpush1.xpose.msra.mxu0 0.0
    %2556 = vmatprep.mubr.f32.mxu0 0.0
    %2557 = vmatmul.mubr.f32.gmra.mrb[0].mxu0 %v2488
    %v2558 = vpop.f32.mrb[0].mxu0
    %v2559 = vadd.f32 0.0, %v2558
    %v2560 = vpop.f32.mrb[0].mxu0
    %2561 = vdwg.mxu0
    %v2562 = vmul.f32 %v2559, 0.35355338
    %v2563 = vsel %vm158, %v2562, -inf
    %2564 = vmax.xlane.f32.xlu0 %v2563
    %v2565 = vpop.xlane.xlu0 %2564
    %v2566 = vsub.f32 %v2562, %v2565
    %v2567 = vmul.f32 %v2566, 1.442695
    %v2568 = vpow.pop %v2567
    %v2569 = vsel %vm158, %v2568, 0.0
    %2570 = vadd.xlane.f32.xlu0 %v2569
    %v2571 = vpop.xlane.xlu0 %2570
    %v2572 = vrcp.pop %v2571
    %v2573 = vmul.f32 %v2568, %v2572
    %s2574 = scalar_lea.vmem [#allocation4], 8
    %2575 = vst.msk [vmem:[%s2574] sm:$0xff] %vm158, %v2573
    %2576 = vrot.lane.b32.xlu0 %v2310, 88
    %v2577 = vpop.permute.xlu0 %2576
    %v2580 = vsel %vm158, %v2573, 0
    %2582 = vmatprep.subr.mxu0 0.0
    %2583 = vmatpush1.msra.mxu0 %v2577
    %2584 = vmatprep.subr.mxu0 0.0
    %2585 = vmatpush1.msra.mxu0 0.0
    %2586 = vmatprep.subr.mxu0 0.0
    %2587 = vmatpush1.msra.mxu0 0.0
    %2588 = vmatprep.subr.mxu0 0.0
    %2589 = vmatpush1.msra.mxu0 0.0
    %2590 = vmatprep.subr.mxu0 0.0
    %2591 = vmatpush1.msra.mxu0 0.0
    %2592 = vmatprep.subr.mxu0 0.0
    %2593 = vmatpush1.msra.mxu0 0.0
    %2594 = vmatprep.subr.mxu0 0.0
    %2595 = vmatpush1.msra.mxu0 0.0
    %2596 = vmatprep.subr.mxu0 0.0
    %2597 = vmatpush1.msra.mxu0 0.0
    %2598 = vmatprep.subr.mxu0 0.0
    %2599 = vmatpush1.msra.mxu0 0.0
    %2600 = vmatprep.subr.mxu0 0.0
    %2601 = vmatpush1.msra.mxu0 0.0
    %2602 = vmatprep.subr.mxu0 0.0
    %2603 = vmatpush1.msra.mxu0 0.0
    %2604 = vmatprep.subr.mxu0 0.0
    %2605 = vmatpush1.msra.mxu0 0.0
    %2606 = vmatprep.subr.mxu0 0.0
    %2607 = vmatpush1.msra.mxu0 0.0
    %2608 = vmatprep.subr.mxu0 0.0
    %2609 = vmatpush1.msra.mxu0 0.0
    %2610 = vmatprep.subr.mxu0 0.0
    %2611 = vmatpush1.msra.mxu0 0.0
    %2612 = vmatprep.subr.mxu0 0.0
    %2613 = vmatpush1.msra.mxu0 0.0
    %2614 = vmatprep.subr.mxu0 0.0
    %2615 = vmatpush1.msra.mxu0 0.0
    %2616 = vmatprep.subr.mxu0 0.0
    %2617 = vmatpush1.msra.mxu0 0.0
    %2618 = vmatprep.subr.mxu0 0.0
    %2619 = vmatpush1.msra.mxu0 0.0
    %2620 = vmatprep.subr.mxu0 0.0
    %2621 = vmatpush1.msra.mxu0 0.0
    %2622 = vmatprep.subr.mxu0 0.0
    %2623 = vmatpush1.msra.mxu0 0.0
    %2624 = vmatprep.subr.mxu0 0.0
    %2625 = vmatpush1.msra.mxu0 0.0
    %2626 = vmatprep.subr.mxu0 0.0
    %2627 = vmatpush1.msra.mxu0 0.0
    %2628 = vmatprep.subr.mxu0 0.0
    %2629 = vmatpush1.msra.mxu0 0.0
    %2630 = vmatprep.subr.mxu0 0.0
    %2631 = vmatpush1.msra.mxu0 0.0
    %2632 = vmatprep.subr.mxu0 0.0
    %2633 = vmatpush1.msra.mxu0 0.0
    %2634 = vmatprep.subr.mxu0 0.0
    %2635 = vmatpush1.msra.mxu0 0.0
    %2636 = vmatprep.subr.mxu0 0.0
    %2637 = vmatpush1.msra.mxu0 0.0
    %2638 = vmatprep.subr.mxu0 0.0
    %2639 = vmatpush1.msra.mxu0 0.0
    %2640 = vmatprep.subr.mxu0 0.0
    %2641 = vmatpush1.msra.mxu0 0.0
    %2642 = vmatprep.subr.mxu0 0.0
    %2643 = vmatpush1.msra.mxu0 0.0
    %2644 = vmatprep.subr.mxu0 0.0
    %2645 = vmatpush1.msra.mxu0 0.0
    %2646 = vmatprep.mubr.f32.mxu0 0.0
    %2647 = vmatmul.mubr.f32.gmra.mrb[0].mxu0 %v2580
    %v2648 = vpop.f32.mrb[0].mxu0
    %v2649 = vadd.f32 0.0, %v2648
    %v2650 = vpop.f32.mrb[0].mxu0
    %2651 = vdwg.mxu0
    %v2652 = vld [vmem:[%s9 + $0x8] sm:$0xff]
    %v2654 = vsel %vm158, %v2649, 0
    %2656 = vmatprep.subr.mxu0 0.0
    %2657 = vmatpush1.msra.mxu0 %v2652
    %2658 = vmatprep.subr.mxu0 0.0
    %2659 = vmatpush1.msra.mxu0 0.0
    %2660 = vmatprep.subr.mxu0 0.0
    %2661 = vmatpush1.msra.mxu0 0.0
    %2662 = vmatprep.subr.mxu0 0.0
    %2663 = vmatpush1.msra.mxu0 0.0
    %2664 = vmatprep.subr.mxu0 0.0
    %2665 = vmatpush1.msra.mxu0 0.0
    %2666 = vmatprep.subr.mxu0 0.0
    %2667 = vmatpush1.msra.mxu0 0.0
    %2668 = vmatprep.subr.mxu0 0.0
    %2669 = vmatpush1.msra.mxu0 0.0
    %2670 = vmatprep.subr.mxu0 0.0
    %2671 = vmatpush1.msra.mxu0 0.0
    %2672 = vmatprep.subr.mxu0 0.0
    %2673 = vmatpush1.msra.mxu0 0.0
    %2674 = vmatprep.subr.mxu0 0.0
    %2675 = vmatpush1.msra.mxu0 0.0
    %2676 = vmatprep.subr.mxu0 0.0
    %2677 = vmatpush1.msra.mxu0 0.0
    %2678 = vmatprep.subr.mxu0 0.0
    %2679 = vmatpush1.msra.mxu0 0.0
    %2680 = vmatprep.subr.mxu0 0.0
    %2681 = vmatpush1.msra.mxu0 0.0
    %2682 = vmatprep.subr.mxu0 0.0
    %2683 = vmatpush1.msra.mxu0 0.0
    %2684 = vmatprep.subr.mxu0 0.0
    %2685 = vmatpush1.msra.mxu0 0.0
    %2686 = vmatprep.subr.mxu0 0.0
    %2687 = vmatpush1.msra.mxu0 0.0
    %2688 = vmatprep.subr.mxu0 0.0
    %2689 = vmatpush1.msra.mxu0 0.0
    %2690 = vmatprep.subr.mxu0 0.0
    %2691 = vmatpush1.msra.mxu0 0.0
    %2692 = vmatprep.subr.mxu0 0.0
    %2693 = vmatpush1.msra.mxu0 0.0
    %2694 = vmatprep.subr.mxu0 0.0
    %2695 = vmatpush1.msra.mxu0 0.0
    %2696 = vmatprep.subr.mxu0 0.0
    %2697 = vmatpush1.msra.mxu0 0.0
    %2698 = vmatprep.subr.mxu0 0.0
    %2699 = vmatpush1.msra.mxu0 0.0
    %2700 = vmatprep.subr.mxu0 0.0
    %2701 = vmatpush1.msra.mxu0 0.0
    %2702 = vmatprep.subr.mxu0 0.0
    %2703 = vmatpush1.msra.mxu0 0.0
    %2704 = vmatprep.subr.mxu0 0.0
    %2705 = vmatpush1.msra.mxu0 0.0
    %2706 = vmatprep.subr.mxu0 0.0
    %2707 = vmatpush1.msra.mxu0 0.0
    %2708 = vmatprep.subr.mxu0 0.0
    %2709 = vmatpush1.msra.mxu0 0.0
    %2710 = vmatprep.subr.mxu0 0.0
    %2711 = vmatpush1.msra.mxu0 0.0
    %2712 = vmatprep.subr.mxu0 0.0
    %2713 = vmatpush1.msra.mxu0 0.0
    %2714 = vmatprep.subr.mxu0 0.0
    %2715 = vmatpush1.msra.mxu0 0.0
    %2716 = vmatprep.subr.mxu0 0.0
    %2717 = vmatpush1.msra.mxu0 0.0
    %2718 = vmatprep.subr.mxu0 0.0
    %2719 = vmatpush1.msra.mxu0 0.0
    %2720 = vmatprep.mubr.f32.mxu0 0.0
    %2721 = vmatmul.mubr.f32.gmra.mrb[0].mxu0 %v2654
    %v2722 = vpop.f32.mrb[0].mxu0
    %v2723 = vadd.f32 0.0, %v2722
    %v2724 = vpop.f32.mrb[0].mxu0
    %2725 = vdwg.mxu0
    %v2727 = vsel %vm158, %v2480, 0
    %2729 = vmatprep.subr.mxu0 0.0
    %2730 = vmatpush1.msra.mxu0 %v2483
    %2731 = vmatprep.subr.mxu0 0.0
    %2732 = vmatpush1.msra.mxu0 0.0
    %2733 = vmatprep.subr.mxu0 0.0
    %2734 = vmatpush1.msra.mxu0 0.0
    %2735 = vmatprep.subr.mxu0 0.0
    %2736 = vmatpush1.msra.mxu0 0.0
    %2737 = vmatprep.subr.mxu0 0.0
    %2738 = vmatpush1.msra.mxu0 0.0
    %2739 = vmatprep.subr.mxu0 0.0
    %2740 = vmatpush1.msra.mxu0 0.0
    %2741 = vmatprep.subr.mxu0 0.0
    %2742 = vmatpush1.msra.mxu0 0.0
    %2743 = vmatprep.subr.mxu0 0.0
    %2744 = vmatpush1.msra.mxu0 0.0
    %2745 = vmatprep.subr.mxu0 0.0
    %2746 = vmatpush1.msra.mxu0 0.0
    %2747 = vmatprep.subr.mxu0 0.0
    %2748 = vmatpush1.msra.mxu0 0.0
    %2749 = vmatprep.subr.mxu0 0.0
    %2750 = vmatpush1.msra.mxu0 0.0
    %2751 = vmatprep.subr.mxu0 0.0
    %2752 = vmatpush1.msra.mxu0 0.0
    %2753 = vmatprep.subr.mxu0 0.0
    %2754 = vmatpush1.msra.mxu0 0.0
    %2755 = vmatprep.subr.mxu0 0.0
    %2756 = vmatpush1.msra.mxu0 0.0
    %2757 = vmatprep.subr.mxu0 0.0
    %2758 = vmatpush1.msra.mxu0 0.0
    %2759 = vmatprep.subr.mxu0 0.0
    %2760 = vmatpush1.msra.mxu0 0.0
    %2761 = vmatprep.subr.mxu0 0.0
    %2762 = vmatpush1.msra.mxu0 0.0
    %2763 = vmatprep.subr.mxu0 0.0
    %2764 = vmatpush1.msra.mxu0 0.0
    %2765 = vmatprep.subr.mxu0 0.0
    %2766 = vmatpush1.msra.mxu0 0.0
    %2767 = vmatprep.subr.mxu0 0.0
    %2768 = vmatpush1.msra.mxu0 0.0
    %2769 = vmatprep.subr.mxu0 0.0
    %2770 = vmatpush1.msra.mxu0 0.0
    %2771 = vmatprep.subr.mxu0 0.0
    %2772 = vmatpush1.msra.mxu0 0.0
    %2773 = vmatprep.subr.mxu0 0.0
    %2774 = vmatpush1.msra.mxu0 0.0
    %2775 = vmatprep.subr.mxu0 0.0
    %2776 = vmatpush1.msra.mxu0 0.0
    %2777 = vmatprep.subr.mxu0 0.0
    %2778 = vmatpush1.msra.mxu0 0.0
    %2779 = vmatprep.subr.mxu0 0.0
    %2780 = vmatpush1.msra.mxu0 0.0
    %2781 = vmatprep.subr.mxu0 0.0
    %2782 = vmatpush1.msra.mxu0 0.0
    %2783 = vmatprep.subr.mxu0 0.0
    %2784 = vmatpush1.msra.mxu0 0.0
    %2785 = vmatprep.subr.mxu0 0.0
    %2786 = vmatpush1.msra.mxu0 0.0
    %2787 = vmatprep.subr.mxu0 0.0
    %2788 = vmatpush1.msra.mxu0 0.0
    %2789 = vmatprep.subr.mxu0 0.0
    %2790 = vmatpush1.msra.mxu0 0.0
    %2791 = vmatprep.subr.mxu0 0.0
    %2792 = vmatpush1.msra.mxu0 0.0
    %2793 = vmatprep.mubr.f32.mxu0 0.0
    %2794 = vmatmul.mubr.f32.gmra.mrb[0].mxu0 %v2727
    %v2795 = vpop.f32.mrb[0].mxu0
    %v2796 = vadd.f32 %v2723, %v2795
    %v2797 = vpop.f32.mrb[0].mxu0
    %2798 = vdwg.mxu0
    %2799 = vrot.lane.b32.xlu0 %v2225, 112
    %v2800 = vpop.permute.xlu0 %2799
    %2801 = vrot.lane.b32.xlu0 %v2310, 112
    %v2802 = vpop.permute.xlu0 %2801
    %v2803 = vsel %vm158, %v2800, 0
    %v2805 = vsel %vm158, %v2802, 0
    %2807 = vmatprep.subr.mxu0 0.0
    %2808 = vmatpush1.xpose.msra.mxu0 %v2805
    %2809 = vmatprep.subr.mxu0 0.0
    %2810 = vmatpush1.xpose.msra.mxu0 0.0
    %2811 = vmatprep.subr.mxu0 0.0
    %2812 = vmatpush1.xpose.msra.mxu0 0.0
    %2813 = vmatprep.subr.mxu0 0.0
    %2814 = vmatpush1.xpose.msra.mxu0 0.0
    %2815 = vmatprep.subr.mxu0 0.0
    %2816 = vmatpush1.xpose.msra.mxu0 0.0
    %2817 = vmatprep.subr.mxu0 0.0
    %2818 = vmatpush1.xpose.msra.mxu0 0.0
    %2819 = vmatprep.subr.mxu0 0.0
    %2820 = vmatpush1.xpose.msra.mxu0 0.0
    %2821 = vmatprep.subr.mxu0 0.0
    %2822 = vmatpush1.xpose.msra.mxu0 0.0
    %2823 = vmatprep.subr.mxu0 0.0
    %2824 = vmatpush1.xpose.msra.mxu0 0.0
    %2825 = vmatprep.subr.mxu0 0.0
    %2826 = vmatpush1.xpose.msra.mxu0 0.0
    %2827 = vmatprep.subr.mxu0 0.0
    %2828 = vmatpush1.xpose.msra.mxu0 0.0
    %2829 = vmatprep.subr.mxu0 0.0
    %2830 = vmatpush1.xpose.msra.mxu0 0.0
    %2831 = vmatprep.subr.mxu0 0.0
    %2832 = vmatpush1.xpose.msra.mxu0 0.0
    %2833 = vmatprep.subr.mxu0 0.0
    %2834 = vmatpush1.xpose.msra.mxu0 0.0
    %2835 = vmatprep.subr.mxu0 0.0
    %2836 = vmatpush1.xpose.msra.mxu0 0.0
    %2837 = vmatprep.subr.mxu0 0.0
    %2838 = vmatpush1.xpose.msra.mxu0 0.0
    %2839 = vmatprep.subr.mxu0 0.0
    %2840 = vmatpush1.xpose.msra.mxu0 0.0
    %2841 = vmatprep.subr.mxu0 0.0
    %2842 = vmatpush1.xpose.msra.mxu0 0.0
    %2843 = vmatprep.subr.mxu0 0.0
    %2844 = vmatpush1.xpose.msra.mxu0 0.0
    %2845 = vmatprep.subr.mxu0 0.0
    %2846 = vmatpush1.xpose.msra.mxu0 0.0
    %2847 = vmatprep.subr.mxu0 0.0
    %2848 = vmatpush1.xpose.msra.mxu0 0.0
    %2849 = vmatprep.subr.mxu0 0.0
    %2850 = vmatpush1.xpose.msra.mxu0 0.0
    %2851 = vmatprep.subr.mxu0 0.0
    %2852 = vmatpush1.xpose.msra.mxu0 0.0
    %2853 = vmatprep.subr.mxu0 0.0
    %2854 = vmatpush1.xpose.msra.mxu0 0.0
    %2855 = vmatprep.subr.mxu0 0.0
    %2856 = vmatpush1.xpose.msra.mxu0 0.0
    %2857 = vmatprep.subr.mxu0 0.0
    %2858 = vmatpush1.xpose.msra.mxu0 0.0
    %2859 = vmatprep.subr.mxu0 0.0
    %2860 = vmatpush1.xpose.msra.mxu0 0.0
    %2861 = vmatprep.subr.mxu0 0.0
    %2862 = vmatpush1.xpose.msra.mxu0 0.0
    %2863 = vmatprep.subr.mxu0 0.0
    %2864 = vmatpush1.xpose.msra.mxu0 0.0
    %2865 = vmatprep.subr.mxu0 0.0
    %2866 = vmatpush1.xpose.msra.mxu0 0.0
    %2867 = vmatprep.subr.mxu0 0.0
    %2868 = vmatpush1.xpose.msra.mxu0 0.0
    %2869 = vmatprep.subr.mxu0 0.0
    %2870 = vmatpush1.xpose.msra.mxu0 0.0
    %2871 = vmatprep.mubr.f32.mxu0 0.0
    %2872 = vmatmul.mubr.f32.gmra.mrb[0].mxu0 %v2803
    %v2873 = vpop.f32.mrb[0].mxu0
    %v2874 = vadd.f32 0.0, %v2873
    %v2875 = vpop.f32.mrb[0].mxu0
    %2876 = vdwg.mxu0
    %v2877 = vmul.f32 %v2874, 0.35355338
    %v2878 = vsel %vm158, %v2877, -inf
    %2879 = vmax.xlane.f32.xlu0 %v2878
    %v2880 = vpop.xlane.xlu0 %2879
    %v2881 = vsub.f32 %v2877, %v2880
    %v2882 = vmul.f32 %v2881, 1.442695
    %v2883 = vpow.pop %v2882
    %v2884 = vsel %vm158, %v2883, 0.0
    %2885 = vadd.xlane.f32.xlu0 %v2884
    %v2886 = vpop.xlane.xlu0 %2885
    %v2887 = vrcp.pop %v2886
    %v2888 = vmul.f32 %v2883, %v2887
    %s2889 = scalar_lea.vmem [#allocation4], 16
    %2890 = vst.msk [vmem:[%s2889] sm:$0xff] %vm158, %v2888
    %2891 = vrot.lane.b32.xlu0 %v2310, 80
    %v2892 = vpop.permute.xlu0 %2891
    %v2895 = vsel %vm158, %v2888, 0
    %2897 = vmatprep.subr.mxu0 0.0
    %2898 = vmatpush1.msra.mxu0 %v2892
    %2899 = vmatprep.subr.mxu0 0.0
    %2900 = vmatpush1.msra.mxu0 0.0
    %2901 = vmatprep.subr.mxu0 0.0
    %2902 = vmatpush1.msra.mxu0 0.0
    %2903 = vmatprep.subr.mxu0 0.0
    %2904 = vmatpush1.msra.mxu0 0.0
    %2905 = vmatprep.subr.mxu0 0.0
    %2906 = vmatpush1.msra.mxu0 0.0
    %2907 = vmatprep.subr.mxu0 0.0
    %2908 = vmatpush1.msra.mxu0 0.0
    %2909 = vmatprep.subr.mxu0 0.0
    %2910 = vmatpush1.msra.mxu0 0.0
    %2911 = vmatprep.subr.mxu0 0.0
    %2912 = vmatpush1.msra.mxu0 0.0
    %2913 = vmatprep.subr.mxu0 0.0
    %2914 = vmatpush1.msra.mxu0 0.0
    %2915 = vmatprep.subr.mxu0 0.0
    %2916 = vmatpush1.msra.mxu0 0.0
    %2917 = vmatprep.subr.mxu0 0.0
    %2918 = vmatpush1.msra.mxu0 0.0
    %2919 = vmatprep.subr.mxu0 0.0
    %2920 = vmatpush1.msra.mxu0 0.0
    %2921 = vmatprep.subr.mxu0 0.0
    %2922 = vmatpush1.msra.mxu0 0.0
    %2923 = vmatprep.subr.mxu0 0.0
    %2924 = vmatpush1.msra.mxu0 0.0
    %2925 = vmatprep.subr.mxu0 0.0
    %2926 = vmatpush1.msra.mxu0 0.0
    %2927 = vmatprep.subr.mxu0 0.0
    %2928 = vmatpush1.msra.mxu0 0.0
    %2929 = vmatprep.subr.mxu0 0.0
    %2930 = vmatpush1.msra.mxu0 0.0
    %2931 = vmatprep.subr.mxu0 0.0
    %2932 = vmatpush1.msra.mxu0 0.0
    %2933 = vmatprep.subr.mxu0 0.0
    %2934 = vmatpush1.msra.mxu0 0.0
    %2935 = vmatprep.subr.mxu0 0.0
    %2936 = vmatpush1.msra.mxu0 0.0
    %2937 = vmatprep.subr.mxu0 0.0
    %2938 = vmatpush1.msra.mxu0 0.0
    %2939 = vmatprep.subr.mxu0 0.0
    %2940 = vmatpush1.msra.mxu0 0.0
    %2941 = vmatprep.subr.mxu0 0.0
    %2942 = vmatpush1.msra.mxu0 0.0
    %2943 = vmatprep.subr.mxu0 0.0
    %2944 = vmatpush1.msra.mxu0 0.0
    %2945 = vmatprep.subr.mxu0 0.0
    %2946 = vmatpush1.msra.mxu0 0.0
    %2947 = vmatprep.subr.mxu0 0.0
    %2948 = vmatpush1.msra.mxu0 0.0
    %2949 = vmatprep.subr.mxu0 0.0
    %2950 = vmatpush1.msra.mxu0 0.0
    %2951 = vmatprep.subr.mxu0 0.0
    %2952 = vmatpush1.msra.mxu0 0.0
    %2953 = vmatprep.subr.mxu0 0.0
    %2954 = vmatpush1.msra.mxu0 0.0
    %2955 = vmatprep.subr.mxu0 0.0
    %2956 = vmatpush1.msra.mxu0 0.0
    %2957 = vmatprep.subr.mxu0 0.0
    %2958 = vmatpush1.msra.mxu0 0.0
    %2959 = vmatprep.subr.mxu0 0.0
    %2960 = vmatpush1.msra.mxu0 0.0
    %2961 = vmatprep.mubr.f32.mxu0 0.0
    %2962 = vmatmul.mubr.f32.gmra.mrb[0].mxu0 %v2895
    %v2963 = vpop.f32.mrb[0].mxu0
    %v2964 = vadd.f32 0.0, %v2963
    %v2965 = vpop.f32.mrb[0].mxu0
    %2966 = vdwg.mxu0
    %v2967 = vld [vmem:[%s9 + $0x10] sm:$0xff]
    %v2969 = vsel %vm158, %v2964, 0
    %2971 = vmatprep.subr.mxu0 0.0
    %2972 = vmatpush1.msra.mxu0 %v2967
    %2973 = vmatprep.subr.mxu0 0.0
    %2974 = vmatpush1.msra.mxu0 0.0
    %2975 = vmatprep.subr.mxu0 0.0
    %2976 = vmatpush1.msra.mxu0 0.0
    %2977 = vmatprep.subr.mxu0 0.0
    %2978 = vmatpush1.msra.mxu0 0.0
    %2979 = vmatprep.subr.mxu0 0.0
    %2980 = vmatpush1.msra.mxu0 0.0
    %2981 = vmatprep.subr.mxu0 0.0
    %2982 = vmatpush1.msra.mxu0 0.0
    %2983 = vmatprep.subr.mxu0 0.0
    %2984 = vmatpush1.msra.mxu0 0.0
    %2985 = vmatprep.subr.mxu0 0.0
    %2986 = vmatpush1.msra.mxu0 0.0
    %2987 = vmatprep.subr.mxu0 0.0
    %2988 = vmatpush1.msra.mxu0 0.0
    %2989 = vmatprep.subr.mxu0 0.0
    %2990 = vmatpush1.msra.mxu0 0.0
    %2991 = vmatprep.subr.mxu0 0.0
    %2992 = vmatpush1.msra.mxu0 0.0
    %2993 = vmatprep.subr.mxu0 0.0
    %2994 = vmatpush1.msra.mxu0 0.0
    %2995 = vmatprep.subr.mxu0 0.0
    %2996 = vmatpush1.msra.mxu0 0.0
    %2997 = vmatprep.subr.mxu0 0.0
    %2998 = vmatpush1.msra.mxu0 0.0
    %2999 = vmatprep.subr.mxu0 0.0
    %3000 = vmatpush1.msra.mxu0 0.0
    %3001 = vmatprep.subr.mxu0 0.0
    %3002 = vmatpush1.msra.mxu0 0.0
    %3003 = vmatprep.subr.mxu0 0.0
    %3004 = vmatpush1.msra.mxu0 0.0
    %3005 = vmatprep.subr.mxu0 0.0
    %3006 = vmatpush1.msra.mxu0 0.0
    %3007 = vmatprep.subr.mxu0 0.0
    %3008 = vmatpush1.msra.mxu0 0.0
    %3009 = vmatprep.subr.mxu0 0.0
    %3010 = vmatpush1.msra.mxu0 0.0
    %3011 = vmatprep.subr.mxu0 0.0
    %3012 = vmatpush1.msra.mxu0 0.0
    %3013 = vmatprep.subr.mxu0 0.0
    %3014 = vmatpush1.msra.mxu0 0.0
    %3015 = vmatprep.subr.mxu0 0.0
    %3016 = vmatpush1.msra.mxu0 0.0
    %3017 = vmatprep.subr.mxu0 0.0
    %3018 = vmatpush1.msra.mxu0 0.0
    %3019 = vmatprep.subr.mxu0 0.0
    %3020 = vmatpush1.msra.mxu0 0.0
    %3021 = vmatprep.subr.mxu0 0.0
    %3022 = vmatpush1.msra.mxu0 0.0
    %3023 = vmatprep.subr.mxu0 0.0
    %3024 = vmatpush1.msra.mxu0 0.0
    %3025 = vmatprep.subr.mxu0 0.0
    %3026 = vmatpush1.msra.mxu0 0.0
    %3027 = vmatprep.subr.mxu0 0.0
    %3028 = vmatpush1.msra.mxu0 0.0
    %3029 = vmatprep.subr.mxu0 0.0
    %3030 = vmatpush1.msra.mxu0 0.0
    %3031 = vmatprep.subr.mxu0 0.0
    %3032 = vmatpush1.msra.mxu0 0.0
    %3033 = vmatprep.subr.mxu0 0.0
    %3034 = vmatpush1.msra.mxu0 0.0
    %3035 = vmatprep.mubr.f32.mxu0 0.0
    %3036 = vmatmul.mubr.f32.gmra.mrb[0].mxu0 %v2969
    %v3037 = vpop.f32.mrb[0].mxu0
    %v3038 = vadd.f32 0.0, %v3037
    %v3039 = vpop.f32.mrb[0].mxu0
    %3040 = vdwg.mxu0
    %v3041 = vadd.f32 %v2796, %v3038
    %3042 = vrot.lane.b32.xlu0 %v2225, 104
    %v3043 = vpop.permute.xlu0 %3042
    %3044 = vrot.lane.b32.xlu0 %v2310, 104
    %v3045 = vpop.permute.xlu0 %3044
    %v3046 = vsel %vm158, %v3043, 0
    %v3048 = vsel %vm158, %v3045, 0
    %3050 = vmatprep.subr.mxu0 0.0
    %3051 = vmatpush1.xpose.msra.mxu0 %v3048
    %3052 = vmatprep.subr.mxu0 0.0
    %3053 = vmatpush1.xpose.msra.mxu0 0.0
    %3054 = vmatprep.subr.mxu0 0.0
    %3055 = vmatpush1.xpose.msra.mxu0 0.0
    %3056 = vmatprep.subr.mxu0 0.0
    %3057 = vmatpush1.xpose.msra.mxu0 0.0
    %3058 = vmatprep.subr.mxu0 0.0
    %3059 = vmatpush1.xpose.msra.mxu0 0.0
    %3060 = vmatprep.subr.mxu0 0.0
    %3061 = vmatpush1.xpose.msra.mxu0 0.0
    %3062 = vmatprep.subr.mxu0 0.0
    %3063 = vmatpush1.xpose.msra.mxu0 0.0
    %3064 = vmatprep.subr.mxu0 0.0
    %3065 = vmatpush1.xpose.msra.mxu0 0.0
    %3066 = vmatprep.subr.mxu0 0.0
    %3067 = vmatpush1.xpose.msra.mxu0 0.0
    %3068 = vmatprep.subr.mxu0 0.0
    %3069 = vmatpush1.xpose.msra.mxu0 0.0
    %3070 = vmatprep.subr.mxu0 0.0
    %3071 = vmatpush1.xpose.msra.mxu0 0.0
    %3072 = vmatprep.subr.mxu0 0.0
    %3073 = vmatpush1.xpose.msra.mxu0 0.0
    %3074 = vmatprep.subr.mxu0 0.0
    %3075 = vmatpush1.xpose.msra.mxu0 0.0
    %3076 = vmatprep.subr.mxu0 0.0
    %3077 = vmatpush1.xpose.msra.mxu0 0.0
    %3078 = vmatprep.subr.mxu0 0.0
    %3079 = vmatpush1.xpose.msra.mxu0 0.0
    %3080 = vmatprep.subr.mxu0 0.0
    %3081 = vmatpush1.xpose.msra.mxu0 0.0
    %3082 = vmatprep.subr.mxu0 0.0
    %3083 = vmatpush1.xpose.msra.mxu0 0.0
    %3084 = vmatprep.subr.mxu0 0.0
    %3085 = vmatpush1.xpose.msra.mxu0 0.0
    %3086 = vmatprep.subr.mxu0 0.0
    %3087 = vmatpush1.xpose.msra.mxu0 0.0
    %3088 = vmatprep.subr.mxu0 0.0
    %3089 = vmatpush1.xpose.msra.mxu0 0.0
    %3090 = vmatprep.subr.mxu0 0.0
    %3091 = vmatpush1.xpose.msra.mxu0 0.0
    %3092 = vmatprep.subr.mxu0 0.0
    %3093 = vmatpush1.xpose.msra.mxu0 0.0
    %3094 = vmatprep.subr.mxu0 0.0
    %3095 = vmatpush1.xpose.msra.mxu0 0.0
    %3096 = vmatprep.subr.mxu0 0.0
    %3097 = vmatpush1.xpose.msra.mxu0 0.0
    %3098 = vmatprep.subr.mxu0 0.0
    %3099 = vmatpush1.xpose.msra.mxu0 0.0
    %3100 = vmatprep.subr.mxu0 0.0
    %3101 = vmatpush1.xpose.msra.mxu0 0.0
    %3102 = vmatprep.subr.mxu0 0.0
    %3103 = vmatpush1.xpose.msra.mxu0 0.0
    %3104 = vmatprep.subr.mxu0 0.0
    %3105 = vmatpush1.xpose.msra.mxu0 0.0
    %3106 = vmatprep.subr.mxu0 0.0
    %3107 = vmatpush1.xpose.msra.mxu0 0.0
    %3108 = vmatprep.subr.mxu0 0.0
    %3109 = vmatpush1.xpose.msra.mxu0 0.0
    %3110 = vmatprep.subr.mxu0 0.0
    %3111 = vmatpush1.xpose.msra.mxu0 0.0
    %3112 = vmatprep.subr.mxu0 0.0
    %3113 = vmatpush1.xpose.msra.mxu0 0.0
    %3114 = vmatprep.mubr.f32.mxu0 0.0
    %3115 = vmatmul.mubr.f32.gmra.mrb[0].mxu0 %v3046
    %v3116 = vpop.f32.mrb[0].mxu0
    %v3117 = vadd.f32 0.0, %v3116
    %v3118 = vpop.f32.mrb[0].mxu0
    %3119 = vdwg.mxu0
    %v3120 = vmul.f32 %v3117, 0.35355338
    %v3121 = vsel %vm158, %v3120, -inf
    %3122 = vmax.xlane.f32.xlu0 %v3121
    %v3123 = vpop.xlane.xlu0 %3122
    %v3124 = vsub.f32 %v3120, %v3123
    %v3125 = vmul.f32 %v3124, 1.442695
    %v3126 = vpow.pop %v3125
    %v3127 = vsel %vm158, %v3126, 0.0
    %3128 = vadd.xlane.f32.xlu0 %v3127
    %v3129 = vpop.xlane.xlu0 %3128
    %v3130 = vrcp.pop %v3129
    %v3131 = vmul.f32 %v3126, %v3130
    %s3132 = scalar_lea.vmem [#allocation4], 24
    %3133 = vst.msk [vmem:[%s3132] sm:$0xff] %vm158, %v3131
    %3134 = vrot.lane.b32.xlu0 %v2310, 72
    %v3135 = vpop.permute.xlu0 %3134
    %v3138 = vsel %vm158, %v3131, 0
    %3140 = vmatprep.subr.mxu0 0.0
    %3141 = vmatpush1.msra.mxu0 %v3135
    %3142 = vmatprep.subr.mxu0 0.0
    %3143 = vmatpush1.msra.mxu0 0.0
    %3144 = vmatprep.subr.mxu0 0.0
    %3145 = vmatpush1.msra.mxu0 0.0
    %3146 = vmatprep.subr.mxu0 0.0
    %3147 = vmatpush1.msra.mxu0 0.0
    %3148 = vmatprep.subr.mxu0 0.0
    %3149 = vmatpush1.msra.mxu0 0.0
    %3150 = vmatprep.subr.mxu0 0.0
    %3151 = vmatpush1.msra.mxu0 0.0
    %3152 = vmatprep.subr.mxu0 0.0
    %3153 = vmatpush1.msra.mxu0 0.0
    %3154 = vmatprep.subr.mxu0 0.0
    %3155 = vmatpush1.msra.mxu0 0.0
    %3156 = vmatprep.subr.mxu0 0.0
    %3157 = vmatpush1.msra.mxu0 0.0
    %3158 = vmatprep.subr.mxu0 0.0
    %3159 = vmatpush1.msra.mxu0 0.0
    %3160 = vmatprep.subr.mxu0 0.0
    %3161 = vmatpush1.msra.mxu0 0.0
    %3162 = vmatprep.subr.mxu0 0.0
    %3163 = vmatpush1.msra.mxu0 0.0
    %3164 = vmatprep.subr.mxu0 0.0
    %3165 = vmatpush1.msra.mxu0 0.0
    %3166 = vmatprep.subr.mxu0 0.0
    %3167 = vmatpush1.msra.mxu0 0.0
    %3168 = vmatprep.subr.mxu0 0.0
    %3169 = vmatpush1.msra.mxu0 0.0
    %3170 = vmatprep.subr.mxu0 0.0
    %3171 = vmatpush1.msra.mxu0 0.0
    %3172 = vmatprep.subr.mxu0 0.0
    %3173 = vmatpush1.msra.mxu0 0.0
    %3174 = vmatprep.subr.mxu0 0.0
    %3175 = vmatpush1.msra.mxu0 0.0
    %3176 = vmatprep.subr.mxu0 0.0
    %3177 = vmatpush1.msra.mxu0 0.0
    %3178 = vmatprep.subr.mxu0 0.0
    %3179 = vmatpush1.msra.mxu0 0.0
    %3180 = vmatprep.subr.mxu0 0.0
    %3181 = vmatpush1.msra.mxu0 0.0
    %3182 = vmatprep.subr.mxu0 0.0
    %3183 = vmatpush1.msra.mxu0 0.0
    %3184 = vmatprep.subr.mxu0 0.0
    %3185 = vmatpush1.msra.mxu0 0.0
    %3186 = vmatprep.subr.mxu0 0.0
    %3187 = vmatpush1.msra.mxu0 0.0
    %3188 = vmatprep.subr.mxu0 0.0
    %3189 = vmatpush1.msra.mxu0 0.0
    %3190 = vmatprep.subr.mxu0 0.0
    %3191 = vmatpush1.msra.mxu0 0.0
    %3192 = vmatprep.subr.mxu0 0.0
    %3193 = vmatpush1.msra.mxu0 0.0
    %3194 = vmatprep.subr.mxu0 0.0
    %3195 = vmatpush1.msra.mxu0 0.0
    %3196 = vmatprep.subr.mxu0 0.0
    %3197 = vmatpush1.msra.mxu0 0.0
    %3198 = vmatprep.subr.mxu0 0.0
    %3199 = vmatpush1.msra.mxu0 0.0
    %3200 = vmatprep.subr.mxu0 0.0
    %3201 = vmatpush1.msra.mxu0 0.0
    %3202 = vmatprep.subr.mxu0 0.0
    %3203 = vmatpush1.msra.mxu0 0.0
    %3204 = vmatprep.mubr.f32.mxu0 0.0
    %3205 = vmatmul.mubr.f32.gmra.mrb[0].mxu0 %v3138
    %v3206 = vpop.f32.mrb[0].mxu0
    %v3207 = vadd.f32 0.0, %v3206
    %v3208 = vpop.f32.mrb[0].mxu0
    %3209 = vdwg.mxu0
    %v3210 = vld [vmem:[%s9 + $0x18] sm:$0xff]
    %v3212 = vsel %vm158, %v3207, 0
    %3214 = vmatprep.subr.mxu0 0.0
    %3215 = vmatpush1.msra.mxu0 %v3210
    %3216 = vmatprep.subr.mxu0 0.0
    %3217 = vmatpush1.msra.mxu0 0.0
    %3218 = vmatprep.subr.mxu0 0.0
    %3219 = vmatpush1.msra.mxu0 0.0
    %3220 = vmatprep.subr.mxu0 0.0
    %3221 = vmatpush1.msra.mxu0 0.0
    %3222 = vmatprep.subr.mxu0 0.0
    %3223 = vmatpush1.msra.mxu0 0.0
    %3224 = vmatprep.subr.mxu0 0.0
    %3225 = vmatpush1.msra.mxu0 0.0
    %3226 = vmatprep.subr.mxu0 0.0
    %3227 = vmatpush1.msra.mxu0 0.0
    %3228 = vmatprep.subr.mxu0 0.0
    %3229 = vmatpush1.msra.mxu0 0.0
    %3230 = vmatprep.subr.mxu0 0.0
    %3231 = vmatpush1.msra.mxu0 0.0
    %3232 = vmatprep.subr.mxu0 0.0
    %3233 = vmatpush1.msra.mxu0 0.0
    %3234 = vmatprep.subr.mxu0 0.0
    %3235 = vmatpush1.msra.mxu0 0.0
    %3236 = vmatprep.subr.mxu0 0.0
    %3237 = vmatpush1.msra.mxu0 0.0
    %3238 = vmatprep.subr.mxu0 0.0
    %3239 = vmatpush1.msra.mxu0 0.0
    %3240 = vmatprep.subr.mxu0 0.0
    %3241 = vmatpush1.msra.mxu0 0.0
    %3242 = vmatprep.subr.mxu0 0.0
    %3243 = vmatpush1.msra.mxu0 0.0
    %3244 = vmatprep.subr.mxu0 0.0
    %3245 = vmatpush1.msra.mxu0 0.0
    %3246 = vmatprep.subr.mxu0 0.0
    %3247 = vmatpush1.msra.mxu0 0.0
    %3248 = vmatprep.subr.mxu0 0.0
    %3249 = vmatpush1.msra.mxu0 0.0
    %3250 = vmatprep.subr.mxu0 0.0
    %3251 = vmatpush1.msra.mxu0 0.0
    %3252 = vmatprep.subr.mxu0 0.0
    %3253 = vmatpush1.msra.mxu0 0.0
    %3254 = vmatprep.subr.mxu0 0.0
    %3255 = vmatpush1.msra.mxu0 0.0
    %3256 = vmatprep.subr.mxu0 0.0
    %3257 = vmatpush1.msra.mxu0 0.0
    %3258 = vmatprep.subr.mxu0 0.0
    %3259 = vmatpush1.msra.mxu0 0.0
    %3260 = vmatprep.subr.mxu0 0.0
    %3261 = vmatpush1.msra.mxu0 0.0
    %3262 = vmatprep.subr.mxu0 0.0
    %3263 = vmatpush1.msra.mxu0 0.0
    %3264 = vmatprep.subr.mxu0 0.0
    %3265 = vmatpush1.msra.mxu0 0.0
    %3266 = vmatprep.subr.mxu0 0.0
    %3267 = vmatpush1.msra.mxu0 0.0
    %3268 = vmatprep.subr.mxu0 0.0
    %3269 = vmatpush1.msra.mxu0 0.0
    %3270 = vmatprep.subr.mxu0 0.0
    %3271 = vmatpush1.msra.mxu0 0.0
    %3272 = vmatprep.subr.mxu0 0.0
    %3273 = vmatpush1.msra.mxu0 0.0
    %3274 = vmatprep.subr.mxu0 0.0
    %3275 = vmatpush1.msra.mxu0 0.0
    %3276 = vmatprep.subr.mxu0 0.0
    %3277 = vmatpush1.msra.mxu0 0.0
    %3278 = vmatprep.mubr.f32.mxu0 0.0
    %3279 = vmatmul.mubr.f32.gmra.mrb[0].mxu0 %v3212
    %v3280 = vpop.f32.mrb[0].mxu0
    %v3281 = vadd.f32 0.0, %v3280
    %v3282 = vpop.f32.mrb[0].mxu0
    %3283 = vdwg.mxu0
    %v3284 = vadd.f32 %v3041, %v3281
    %v3286 = vsel %vm158, %v2230, 0
    %v3289 = vsel %vm158, %v2315, 0
    %3291 = vmatprep.subr.mxu0 0.0
    %3292 = vmatpush1.xpose.msra.mxu0 %v3289
    %3293 = vmatprep.subr.mxu0 0.0
    %3294 = vmatpush1.xpose.msra.mxu0 0.0
    %3295 = vmatprep.subr.mxu0 0.0
    %3296 = vmatpush1.xpose.msra.mxu0 0.0
    %3297 = vmatprep.subr.mxu0 0.0
    %3298 = vmatpush1.xpose.msra.mxu0 0.0
    %3299 = vmatprep.subr.mxu0 0.0
    %3300 = vmatpush1.xpose.msra.mxu0 0.0
    %3301 = vmatprep.subr.mxu0 0.0
    %3302 = vmatpush1.xpose.msra.mxu0 0.0
    %3303 = vmatprep.subr.mxu0 0.0
    %3304 = vmatpush1.xpose.msra.mxu0 0.0
    %3305 = vmatprep.subr.mxu0 0.0
    %3306 = vmatpush1.xpose.msra.mxu0 0.0
    %3307 = vmatprep.subr.mxu0 0.0
    %3308 = vmatpush1.xpose.msra.mxu0 0.0
    %3309 = vmatprep.subr.mxu0 0.0
    %3310 = vmatpush1.xpose.msra.mxu0 0.0
    %3311 = vmatprep.subr.mxu0 0.0
    %3312 = vmatpush1.xpose.msra.mxu0 0.0
    %3313 = vmatprep.subr.mxu0 0.0
    %3314 = vmatpush1.xpose.msra.mxu0 0.0
    %3315 = vmatprep.subr.mxu0 0.0
    %3316 = vmatpush1.xpose.msra.mxu0 0.0
    %3317 = vmatprep.subr.mxu0 0.0
    %3318 = vmatpush1.xpose.msra.mxu0 0.0
    %3319 = vmatprep.subr.mxu0 0.0
    %3320 = vmatpush1.xpose.msra.mxu0 0.0
    %3321 = vmatprep.subr.mxu0 0.0
    %3322 = vmatpush1.xpose.msra.mxu0 0.0
    %3323 = vmatprep.subr.mxu0 0.0
    %3324 = vmatpush1.xpose.msra.mxu0 0.0
    %3325 = vmatprep.subr.mxu0 0.0
    %3326 = vmatpush1.xpose.msra.mxu0 0.0
    %3327 = vmatprep.subr.mxu0 0.0
    %3328 = vmatpush1.xpose.msra.mxu0 0.0
    %3329 = vmatprep.subr.mxu0 0.0
    %3330 = vmatpush1.xpose.msra.mxu0 0.0
    %3331 = vmatprep.subr.mxu0 0.0
    %3332 = vmatpush1.xpose.msra.mxu0 0.0
    %3333 = vmatprep.subr.mxu0 0.0
    %3334 = vmatpush1.xpose.msra.mxu0 0.0
    %3335 = vmatprep.subr.mxu0 0.0
    %3336 = vmatpush1.xpose.msra.mxu0 0.0
    %3337 = vmatprep.subr.mxu0 0.0
    %3338 = vmatpush1.xpose.msra.mxu0 0.0
    %3339 = vmatprep.subr.mxu0 0.0
    %3340 = vmatpush1.xpose.msra.mxu0 0.0
    %3341 = vmatprep.subr.mxu0 0.0
    %3342 = vmatpush1.xpose.msra.mxu0 0.0
    %3343 = vmatprep.subr.mxu0 0.0
    %3344 = vmatpush1.xpose.msra.mxu0 0.0
    %3345 = vmatprep.subr.mxu0 0.0
    %3346 = vmatpush1.xpose.msra.mxu0 0.0
    %3347 = vmatprep.subr.mxu0 0.0
    %3348 = vmatpush1.xpose.msra.mxu0 0.0
    %3349 = vmatprep.subr.mxu0 0.0
    %3350 = vmatpush1.xpose.msra.mxu0 0.0
    %3351 = vmatprep.subr.mxu0 0.0
    %3352 = vmatpush1.xpose.msra.mxu0 0.0
    %3353 = vmatprep.subr.mxu0 0.0
    %3354 = vmatpush1.xpose.msra.mxu0 0.0
    %3355 = vmatprep.mubr.f32.mxu0 0.0
    %3356 = vmatmul.mubr.f32.gmra.mrb[0].mxu0 %v3286
    %v3357 = vpop.f32.mrb[0].mxu0
    %v3358 = vadd.f32 0.0, %v3357
    %v3359 = vpop.f32.mrb[0].mxu0
    %3360 = vdwg.mxu0
    %v3361 = vmul.f32 %v3358, 0.35355338
    %v3362 = vsel %vm158, %v3361, -inf
    %3363 = vmax.xlane.f32.xlu0 %v3362
    %v3364 = vpop.xlane.xlu0 %3363
    %v3365 = vsub.f32 %v3361, %v3364
    %v3366 = vmul.f32 %v3365, 1.442695
    %v3367 = vpow.pop %v3366
    %v3368 = vsel %vm158, %v3367, 0.0
    %3369 = vadd.xlane.f32.xlu0 %v3368
    %v3370 = vpop.xlane.xlu0 %3369
    %v3371 = vrcp.pop %v3370
    %v3372 = vmul.f32 %v3367, %v3371
    %s3373 = scalar_lea.vmem [#allocation4], 32
    %3374 = vst.msk [vmem:[%s3373] sm:$0xff] %vm158, %v3372
    %3375 = vrot.lane.b32.xlu0 %v2315, 96
    %v3376 = vpop.permute.xlu0 %3375
    %v3379 = vsel %vm158, %v3372, 0
    %3381 = vmatprep.subr.mxu0 0.0
    %3382 = vmatpush1.msra.mxu0 %v3376
    %3383 = vmatprep.subr.mxu0 0.0
    %3384 = vmatpush1.msra.mxu0 0.0
    %3385 = vmatprep.subr.mxu0 0.0
    %3386 = vmatpush1.msra.mxu0 0.0
    %3387 = vmatprep.subr.mxu0 0.0
    %3388 = vmatpush1.msra.mxu0 0.0
    %3389 = vmatprep.subr.mxu0 0.0
    %3390 = vmatpush1.msra.mxu0 0.0
    %3391 = vmatprep.subr.mxu0 0.0
    %3392 = vmatpush1.msra.mxu0 0.0
    %3393 = vmatprep.subr.mxu0 0.0
    %3394 = vmatpush1.msra.mxu0 0.0
    %3395 = vmatprep.subr.mxu0 0.0
    %3396 = vmatpush1.msra.mxu0 0.0
    %3397 = vmatprep.subr.mxu0 0.0
    %3398 = vmatpush1.msra.mxu0 0.0
    %3399 = vmatprep.subr.mxu0 0.0
    %3400 = vmatpush1.msra.mxu0 0.0
    %3401 = vmatprep.subr.mxu0 0.0
    %3402 = vmatpush1.msra.mxu0 0.0
    %3403 = vmatprep.subr.mxu0 0.0
    %3404 = vmatpush1.msra.mxu0 0.0
    %3405 = vmatprep.subr.mxu0 0.0
    %3406 = vmatpush1.msra.mxu0 0.0
    %3407 = vmatprep.subr.mxu0 0.0
    %3408 = vmatpush1.msra.mxu0 0.0
    %3409 = vmatprep.subr.mxu0 0.0
    %3410 = vmatpush1.msra.mxu0 0.0
    %3411 = vmatprep.subr.mxu0 0.0
    %3412 = vmatpush1.msra.mxu0 0.0
    %3413 = vmatprep.subr.mxu0 0.0
    %3414 = vmatpush1.msra.mxu0 0.0
    %3415 = vmatprep.subr.mxu0 0.0
    %3416 = vmatpush1.msra.mxu0 0.0
    %3417 = vmatprep.subr.mxu0 0.0
    %3418 = vmatpush1.msra.mxu0 0.0
    %3419 = vmatprep.subr.mxu0 0.0
    %3420 = vmatpush1.msra.mxu0 0.0
    %3421 = vmatprep.subr.mxu0 0.0
    %3422 = vmatpush1.msra.mxu0 0.0
    %3423 = vmatprep.subr.mxu0 0.0
    %3424 = vmatpush1.msra.mxu0 0.0
    %3425 = vmatprep.subr.mxu0 0.0
    %3426 = vmatpush1.msra.mxu0 0.0
    %3427 = vmatprep.subr.mxu0 0.0
    %3428 = vmatpush1.msra.mxu0 0.0
    %3429 = vmatprep.subr.mxu0 0.0
    %3430 = vmatpush1.msra.mxu0 0.0
    %3431 = vmatprep.subr.mxu0 0.0
    %3432 = vmatpush1.msra.mxu0 0.0
    %3433 = vmatprep.subr.mxu0 0.0
    %3434 = vmatpush1.msra.mxu0 0.0
    %3435 = vmatprep.subr.mxu0 0.0
    %3436 = vmatpush1.msra.mxu0 0.0
    %3437 = vmatprep.subr.mxu0 0.0
    %3438 = vmatpush1.msra.mxu0 0.0
    %3439 = vmatprep.subr.mxu0 0.0
    %3440 = vmatpush1.msra.mxu0 0.0
    %3441 = vmatprep.subr.mxu0 0.0
    %3442 = vmatpush1.msra.mxu0 0.0
    %3443 = vmatprep.subr.mxu0 0.0
    %3444 = vmatpush1.msra.mxu0 0.0
    %3445 = vmatprep.mubr.f32.mxu0 0.0
    %3446 = vmatmul.mubr.f32.gmra.mrb[0].mxu0 %v3379
    %v3447 = vpop.f32.mrb[0].mxu0
    %v3448 = vadd.f32 0.0, %v3447
    %v3449 = vpop.f32.mrb[0].mxu0
    %3450 = vdwg.mxu0
    %v3451 = vld [vmem:[%s9] sm:$0xff]
    %3452 = vrot.lane.b32.xlu0 %v2230, 120
    %v3453 = vpop.permute.xlu0 %3452
    %3454 = vrot.lane.b32.xlu0 %v2315, 120
    %v3455 = vpop.permute.xlu0 %3454
    %v3456 = vsel %vm158, %v3453, 0
    %v3458 = vsel %vm158, %v3455, 0
    %3460 = vmatprep.subr.mxu0 0.0
    %3461 = vmatpush1.xpose.msra.mxu0 %v3458
    %3462 = vmatprep.subr.mxu0 0.0
    %3463 = vmatpush1.xpose.msra.mxu0 0.0
    %3464 = vmatprep.subr.mxu0 0.0
    %3465 = vmatpush1.xpose.msra.mxu0 0.0
    %3466 = vmatprep.subr.mxu0 0.0
    %3467 = vmatpush1.xpose.msra.mxu0 0.0
    %3468 = vmatprep.subr.mxu0 0.0
    %3469 = vmatpush1.xpose.msra.mxu0 0.0
    %3470 = vmatprep.subr.mxu0 0.0
    %3471 = vmatpush1.xpose.msra.mxu0 0.0
    %3472 = vmatprep.subr.mxu0 0.0
    %3473 = vmatpush1.xpose.msra.mxu0 0.0
    %3474 = vmatprep.subr.mxu0 0.0
    %3475 = vmatpush1.xpose.msra.mxu0 0.0
    %3476 = vmatprep.subr.mxu0 0.0
    %3477 = vmatpush1.xpose.msra.mxu0 0.0
    %3478 = vmatprep.subr.mxu0 0.0
    %3479 = vmatpush1.xpose.msra.mxu0 0.0
    %3480 = vmatprep.subr.mxu0 0.0
    %3481 = vmatpush1.xpose.msra.mxu0 0.0
    %3482 = vmatprep.subr.mxu0 0.0
    %3483 = vmatpush1.xpose.msra.mxu0 0.0
    %3484 = vmatprep.subr.mxu0 0.0
    %3485 = vmatpush1.xpose.msra.mxu0 0.0
    %3486 = vmatprep.subr.mxu0 0.0
    %3487 = vmatpush1.xpose.msra.mxu0 0.0
    %3488 = vmatprep.subr.mxu0 0.0
    %3489 = vmatpush1.xpose.msra.mxu0 0.0
    %3490 = vmatprep.subr.mxu0 0.0
    %3491 = vmatpush1.xpose.msra.mxu0 0.0
    %3492 = vmatprep.subr.mxu0 0.0
    %3493 = vmatpush1.xpose.msra.mxu0 0.0
    %3494 = vmatprep.subr.mxu0 0.0
    %3495 = vmatpush1.xpose.msra.mxu0 0.0
    %3496 = vmatprep.subr.mxu0 0.0
    %3497 = vmatpush1.xpose.msra.mxu0 0.0
    %3498 = vmatprep.subr.mxu0 0.0
    %3499 = vmatpush1.xpose.msra.mxu0 0.0
    %3500 = vmatprep.subr.mxu0 0.0
    %3501 = vmatpush1.xpose.msra.mxu0 0.0
    %3502 = vmatprep.subr.mxu0 0.0
    %3503 = vmatpush1.xpose.msra.mxu0 0.0
    %3504 = vmatprep.subr.mxu0 0.0
    %3505 = vmatpush1.xpose.msra.mxu0 0.0
    %3506 = vmatprep.subr.mxu0 0.0
    %3507 = vmatpush1.xpose.msra.mxu0 0.0
    %3508 = vmatprep.subr.mxu0 0.0
    %3509 = vmatpush1.xpose.msra.mxu0 0.0
    %3510 = vmatprep.subr.mxu0 0.0
    %3511 = vmatpush1.xpose.msra.mxu0 0.0
    %3512 = vmatprep.subr.mxu0 0.0
    %3513 = vmatpush1.xpose.msra.mxu0 0.0
    %3514 = vmatprep.subr.mxu0 0.0
    %3515 = vmatpush1.xpose.msra.mxu0 0.0
    %3516 = vmatprep.subr.mxu0 0.0
    %3517 = vmatpush1.xpose.msra.mxu0 0.0
    %3518 = vmatprep.subr.mxu0 0.0
    %3519 = vmatpush1.xpose.msra.mxu0 0.0
    %3520 = vmatprep.subr.mxu0 0.0
    %3521 = vmatpush1.xpose.msra.mxu0 0.0
    %3522 = vmatprep.subr.mxu0 0.0
    %3523 = vmatpush1.xpose.msra.mxu0 0.0
    %3524 = vmatprep.mubr.f32.mxu0 0.0
    %3525 = vmatmul.mubr.f32.gmra.mrb[0].mxu0 %v3456
    %v3526 = vpop.f32.mrb[0].mxu0
    %v3527 = vadd.f32 0.0, %v3526
    %v3528 = vpop.f32.mrb[0].mxu0
    %3529 = vdwg.mxu0
    %v3530 = vmul.f32 %v3527, 0.35355338
    %v3531 = vsel %vm158, %v3530, -inf
    %3532 = vmax.xlane.f32.xlu0 %v3531
    %v3533 = vpop.xlane.xlu0 %3532
    %v3534 = vsub.f32 %v3530, %v3533
    %v3535 = vmul.f32 %v3534, 1.442695
    %v3536 = vpow.pop %v3535
    %v3537 = vsel %vm158, %v3536, 0.0
    %3538 = vadd.xlane.f32.xlu0 %v3537
    %v3539 = vpop.xlane.xlu0 %3538
    %v3540 = vrcp.pop %v3539
    %v3541 = vmul.f32 %v3536, %v3540
    %s3542 = scalar_lea.vmem [#allocation4], 40
    %3543 = vst.msk [vmem:[%s3542] sm:$0xff] %vm158, %v3541
    %3544 = vrot.lane.b32.xlu0 %v2315, 88
    %v3545 = vpop.permute.xlu0 %3544
    %v3548 = vsel %vm158, %v3541, 0
    %3550 = vmatprep.subr.mxu0 0.0
    %3551 = vmatpush1.msra.mxu0 %v3545
    %3552 = vmatprep.subr.mxu0 0.0
    %3553 = vmatpush1.msra.mxu0 0.0
    %3554 = vmatprep.subr.mxu0 0.0
    %3555 = vmatpush1.msra.mxu0 0.0
    %3556 = vmatprep.subr.mxu0 0.0
    %3557 = vmatpush1.msra.mxu0 0.0
    %3558 = vmatprep.subr.mxu0 0.0
    %3559 = vmatpush1.msra.mxu0 0.0
    %3560 = vmatprep.subr.mxu0 0.0
    %3561 = vmatpush1.msra.mxu0 0.0
    %3562 = vmatprep.subr.mxu0 0.0
    %3563 = vmatpush1.msra.mxu0 0.0
    %3564 = vmatprep.subr.mxu0 0.0
    %3565 = vmatpush1.msra.mxu0 0.0
    %3566 = vmatprep.subr.mxu0 0.0
    %3567 = vmatpush1.msra.mxu0 0.0
    %3568 = vmatprep.subr.mxu0 0.0
    %3569 = vmatpush1.msra.mxu0 0.0
    %3570 = vmatprep.subr.mxu0 0.0
    %3571 = vmatpush1.msra.mxu0 0.0
    %3572 = vmatprep.subr.mxu0 0.0
    %3573 = vmatpush1.msra.mxu0 0.0
    %3574 = vmatprep.subr.mxu0 0.0
    %3575 = vmatpush1.msra.mxu0 0.0
    %3576 = vmatprep.subr.mxu0 0.0
    %3577 = vmatpush1.msra.mxu0 0.0
    %3578 = vmatprep.subr.mxu0 0.0
    %3579 = vmatpush1.msra.mxu0 0.0
    %3580 = vmatprep.subr.mxu0 0.0
    %3581 = vmatpush1.msra.mxu0 0.0
    %3582 = vmatprep.subr.mxu0 0.0
    %3583 = vmatpush1.msra.mxu0 0.0
    %3584 = vmatprep.subr.mxu0 0.0
    %3585 = vmatpush1.msra.mxu0 0.0
    %3586 = vmatprep.subr.mxu0 0.0
    %3587 = vmatpush1.msra.mxu0 0.0
    %3588 = vmatprep.subr.mxu0 0.0
    %3589 = vmatpush1.msra.mxu0 0.0
    %3590 = vmatprep.subr.mxu0 0.0
    %3591 = vmatpush1.msra.mxu0 0.0
    %3592 = vmatprep.subr.mxu0 0.0
    %3593 = vmatpush1.msra.mxu0 0.0
    %3594 = vmatprep.subr.mxu0 0.0
    %3595 = vmatpush1.msra.mxu0 0.0
    %3596 = vmatprep.subr.mxu0 0.0
    %3597 = vmatpush1.msra.mxu0 0.0
    %3598 = vmatprep.subr.mxu0 0.0
    %3599 = vmatpush1.msra.mxu0 0.0
    %3600 = vmatprep.subr.mxu0 0.0
    %3601 = vmatpush1.msra.mxu0 0.0
    %3602 = vmatprep.subr.mxu0 0.0
    %3603 = vmatpush1.msra.mxu0 0.0
    %3604 = vmatprep.subr.mxu0 0.0
    %3605 = vmatpush1.msra.mxu0 0.0
    %3606 = vmatprep.subr.mxu0 0.0
    %3607 = vmatpush1.msra.mxu0 0.0
    %3608 = vmatprep.subr.mxu0 0.0
    %3609 = vmatpush1.msra.mxu0 0.0
    %3610 = vmatprep.subr.mxu0 0.0
    %3611 = vmatpush1.msra.mxu0 0.0
    %3612 = vmatprep.subr.mxu0 0.0
    %3613 = vmatpush1.msra.mxu0 0.0
    %3614 = vmatprep.mubr.f32.mxu0 0.0
    %3615 = vmatmul.mubr.f32.gmra.mrb[0].mxu0 %v3548
    %v3616 = vpop.f32.mrb[0].mxu0
    %v3617 = vadd.f32 0.0, %v3616
    %v3618 = vpop.f32.mrb[0].mxu0
    %3619 = vdwg.mxu0
    %v3620 = vld [vmem:[%s9 + $0x8] sm:$0xff]
    %v3622 = vsel %vm158, %v3617, 0
    %3624 = vmatprep.subr.mxu0 0.0
    %3625 = vmatpush1.msra.mxu0 %v3620
    %3626 = vmatprep.subr.mxu0 0.0
    %3627 = vmatpush1.msra.mxu0 0.0
    %3628 = vmatprep.subr.mxu0 0.0
    %3629 = vmatpush1.msra.mxu0 0.0
    %3630 = vmatprep.subr.mxu0 0.0
    %3631 = vmatpush1.msra.mxu0 0.0
    %3632 = vmatprep.subr.mxu0 0.0
    %3633 = vmatpush1.msra.mxu0 0.0
    %3634 = vmatprep.subr.mxu0 0.0
    %3635 = vmatpush1.msra.mxu0 0.0
    %3636 = vmatprep.subr.mxu0 0.0
    %3637 = vmatpush1.msra.mxu0 0.0
    %3638 = vmatprep.subr.mxu0 0.0
    %3639 = vmatpush1.msra.mxu0 0.0
    %3640 = vmatprep.subr.mxu0 0.0
    %3641 = vmatpush1.msra.mxu0 0.0
    %3642 = vmatprep.subr.mxu0 0.0
    %3643 = vmatpush1.msra.mxu0 0.0
    %3644 = vmatprep.subr.mxu0 0.0
    %3645 = vmatpush1.msra.mxu0 0.0
    %3646 = vmatprep.subr.mxu0 0.0
    %3647 = vmatpush1.msra.mxu0 0.0
    %3648 = vmatprep.subr.mxu0 0.0
    %3649 = vmatpush1.msra.mxu0 0.0
    %3650 = vmatprep.subr.mxu0 0.0
    %3651 = vmatpush1.msra.mxu0 0.0
    %3652 = vmatprep.subr.mxu0 0.0
    %3653 = vmatpush1.msra.mxu0 0.0
    %3654 = vmatprep.subr.mxu0 0.0
    %3655 = vmatpush1.msra.mxu0 0.0
    %3656 = vmatprep.subr.mxu0 0.0
    %3657 = vmatpush1.msra.mxu0 0.0
    %3658 = vmatprep.subr.mxu0 0.0
    %3659 = vmatpush1.msra.mxu0 0.0
    %3660 = vmatprep.subr.mxu0 0.0
    %3661 = vmatpush1.msra.mxu0 0.0
    %3662 = vmatprep.subr.mxu0 0.0
    %3663 = vmatpush1.msra.mxu0 0.0
    %3664 = vmatprep.subr.mxu0 0.0
    %3665 = vmatpush1.msra.mxu0 0.0
    %3666 = vmatprep.subr.mxu0 0.0
    %3667 = vmatpush1.msra.mxu0 0.0
    %3668 = vmatprep.subr.mxu0 0.0
    %3669 = vmatpush1.msra.mxu0 0.0
    %3670 = vmatprep.subr.mxu0 0.0
    %3671 = vmatpush1.msra.mxu0 0.0
    %3672 = vmatprep.subr.mxu0 0.0
    %3673 = vmatpush1.msra.mxu0 0.0
    %3674 = vmatprep.subr.mxu0 0.0
    %3675 = vmatpush1.msra.mxu0 0.0
    %3676 = vmatprep.subr.mxu0 0.0
    %3677 = vmatpush1.msra.mxu0 0.0
    %3678 = vmatprep.subr.mxu0 0.0
    %3679 = vmatpush1.msra.mxu0 0.0
    %3680 = vmatprep.subr.mxu0 0.0
    %3681 = vmatpush1.msra.mxu0 0.0
    %3682 = vmatprep.subr.mxu0 0.0
    %3683 = vmatpush1.msra.mxu0 0.0
    %3684 = vmatprep.subr.mxu0 0.0
    %3685 = vmatpush1.msra.mxu0 0.0
    %3686 = vmatprep.subr.mxu0 0.0
    %3687 = vmatpush1.msra.mxu0 0.0
    %3688 = vmatprep.mubr.f32.mxu0 0.0
    %3689 = vmatmul.mubr.f32.gmra.mrb[0].mxu0 %v3622
    %v3690 = vpop.f32.mrb[0].mxu0
    %v3691 = vadd.f32 0.0, %v3690
    %v3692 = vpop.f32.mrb[0].mxu0
    %3693 = vdwg.mxu0
    %v3695 = vsel %vm158, %v3448, 0
    %3697 = vmatprep.subr.mxu0 0.0
    %3698 = vmatpush1.msra.mxu0 %v3451
    %3699 = vmatprep.subr.mxu0 0.0
    %3700 = vmatpush1.msra.mxu0 0.0
    %3701 = vmatprep.subr.mxu0 0.0
    %3702 = vmatpush1.msra.mxu0 0.0
    %3703 = vmatprep.subr.mxu0 0.0
    %3704 = vmatpush1.msra.mxu0 0.0
    %3705 = vmatprep.subr.mxu0 0.0
    %3706 = vmatpush1.msra.mxu0 0.0
    %3707 = vmatprep.subr.mxu0 0.0
    %3708 = vmatpush1.msra.mxu0 0.0
    %3709 = vmatprep.subr.mxu0 0.0
    %3710 = vmatpush1.msra.mxu0 0.0
    %3711 = vmatprep.subr.mxu0 0.0
    %3712 = vmatpush1.msra.mxu0 0.0
    %3713 = vmatprep.subr.mxu0 0.0
    %3714 = vmatpush1.msra.mxu0 0.0
    %3715 = vmatprep.subr.mxu0 0.0
    %3716 = vmatpush1.msra.mxu0 0.0
    %3717 = vmatprep.subr.mxu0 0.0
    %3718 = vmatpush1.msra.mxu0 0.0
    %3719 = vmatprep.subr.mxu0 0.0
    %3720 = vmatpush1.msra.mxu0 0.0
    %3721 = vmatprep.subr.mxu0 0.0
    %3722 = vmatpush1.msra.mxu0 0.0
    %3723 = vmatprep.subr.mxu0 0.0
    %3724 = vmatpush1.msra.mxu0 0.0
    %3725 = vmatprep.subr.mxu0 0.0
    %3726 = vmatpush1.msra.mxu0 0.0
    %3727 = vmatprep.subr.mxu0 0.0
    %3728 = vmatpush1.msra.mxu0 0.0
    %3729 = vmatprep.subr.mxu0 0.0
    %3730 = vmatpush1.msra.mxu0 0.0
    %3731 = vmatprep.subr.mxu0 0.0
    %3732 = vmatpush1.msra.mxu0 0.0
    %3733 = vmatprep.subr.mxu0 0.0
    %3734 = vmatpush1.msra.mxu0 0.0
    %3735 = vmatprep.subr.mxu0 0.0
    %3736 = vmatpush1.msra.mxu0 0.0
    %3737 = vmatprep.subr.mxu0 0.0
    %3738 = vmatpush1.msra.mxu0 0.0
    %3739 = vmatprep.subr.mxu0 0.0
    %3740 = vmatpush1.msra.mxu0 0.0
    %3741 = vmatprep.subr.mxu0 0.0
    %3742 = vmatpush1.msra.mxu0 0.0
    %3743 = vmatprep.subr.mxu0 0.0
    %3744 = vmatpush1.msra.mxu0 0.0
    %3745 = vmatprep.subr.mxu0 0.0
    %3746 = vmatpush1.msra.mxu0 0.0
    %3747 = vmatprep.subr.mxu0 0.0
    %3748 = vmatpush1.msra.mxu0 0.0
    %3749 = vmatprep.subr.mxu0 0.0
    %3750 = vmatpush1.msra.mxu0 0.0
    %3751 = vmatprep.subr.mxu0 0.0
    %3752 = vmatpush1.msra.mxu0 0.0
    %3753 = vmatprep.subr.mxu0 0.0
    %3754 = vmatpush1.msra.mxu0 0.0
    %3755 = vmatprep.subr.mxu0 0.0
    %3756 = vmatpush1.msra.mxu0 0.0
    %3757 = vmatprep.subr.mxu0 0.0
    %3758 = vmatpush1.msra.mxu0 0.0
    %3759 = vmatprep.subr.mxu0 0.0
    %3760 = vmatpush1.msra.mxu0 0.0
    %3761 = vmatprep.mubr.f32.mxu0 0.0
    %3762 = vmatmul.mubr.f32.gmra.mrb[0].mxu0 %v3695
    %v3763 = vpop.f32.mrb[0].mxu0
    %v3764 = vadd.f32 %v3691, %v3763
    %v3765 = vpop.f32.mrb[0].mxu0
    %3766 = vdwg.mxu0
    %3767 = vrot.lane.b32.xlu0 %v2230, 112
    %v3768 = vpop.permute.xlu0 %3767
    %3769 = vrot.lane.b32.xlu0 %v2315, 112
    %v3770 = vpop.permute.xlu0 %3769
    %v3771 = vsel %vm158, %v3768, 0
    %v3773 = vsel %vm158, %v3770, 0
    %3775 = vmatprep.subr.mxu0 0.0
    %3776 = vmatpush1.xpose.msra.mxu0 %v3773
    %3777 = vmatprep.subr.mxu0 0.0
    %3778 = vmatpush1.xpose.msra.mxu0 0.0
    %3779 = vmatprep.subr.mxu0 0.0
    %3780 = vmatpush1.xpose.msra.mxu0 0.0
    %3781 = vmatprep.subr.mxu0 0.0
    %3782 = vmatpush1.xpose.msra.mxu0 0.0
    %3783 = vmatprep.subr.mxu0 0.0
    %3784 = vmatpush1.xpose.msra.mxu0 0.0
    %3785 = vmatprep.subr.mxu0 0.0
    %3786 = vmatpush1.xpose.msra.mxu0 0.0
    %3787 = vmatprep.subr.mxu0 0.0
    %3788 = vmatpush1.xpose.msra.mxu0 0.0
    %3789 = vmatprep.subr.mxu0 0.0
    %3790 = vmatpush1.xpose.msra.mxu0 0.0
    %3791 = vmatprep.subr.mxu0 0.0
    %3792 = vmatpush1.xpose.msra.mxu0 0.0
    %3793 = vmatprep.subr.mxu0 0.0
    %3794 = vmatpush1.xpose.msra.mxu0 0.0
    %3795 = vmatprep.subr.mxu0 0.0
    %3796 = vmatpush1.xpose.msra.mxu0 0.0
    %3797 = vmatprep.subr.mxu0 0.0
    %3798 = vmatpush1.xpose.msra.mxu0 0.0
    %3799 = vmatprep.subr.mxu0 0.0
    %3800 = vmatpush1.xpose.msra.mxu0 0.0
    %3801 = vmatprep.subr.mxu0 0.0
    %3802 = vmatpush1.xpose.msra.mxu0 0.0
    %3803 = vmatprep.subr.mxu0 0.0
    %3804 = vmatpush1.xpose.msra.mxu0 0.0
    %3805 = vmatprep.subr.mxu0 0.0
    %3806 = vmatpush1.xpose.msra.mxu0 0.0
    %3807 = vmatprep.subr.mxu0 0.0
    %3808 = vmatpush1.xpose.msra.mxu0 0.0
    %3809 = vmatprep.subr.mxu0 0.0
    %3810 = vmatpush1.xpose.msra.mxu0 0.0
    %3811 = vmatprep.subr.mxu0 0.0
    %3812 = vmatpush1.xpose.msra.mxu0 0.0
    %3813 = vmatprep.subr.mxu0 0.0
    %3814 = vmatpush1.xpose.msra.mxu0 0.0
    %3815 = vmatprep.subr.mxu0 0.0
    %3816 = vmatpush1.xpose.msra.mxu0 0.0
    %3817 = vmatprep.subr.mxu0 0.0
    %3818 = vmatpush1.xpose.msra.mxu0 0.0
    %3819 = vmatprep.subr.mxu0 0.0
    %3820 = vmatpush1.xpose.msra.mxu0 0.0
    %3821 = vmatprep.subr.mxu0 0.0
    %3822 = vmatpush1.xpose.msra.mxu0 0.0
    %3823 = vmatprep.subr.mxu0 0.0
    %3824 = vmatpush1.xpose.msra.mxu0 0.0
    %3825 = vmatprep.subr.mxu0 0.0
    %3826 = vmatpush1.xpose.msra.mxu0 0.0
    %3827 = vmatprep.subr.mxu0 0.0
    %3828 = vmatpush1.xpose.msra.mxu0 0.0
    %3829 = vmatprep.subr.mxu0 0.0
    %3830 = vmatpush1.xpose.msra.mxu0 0.0
    %3831 = vmatprep.subr.mxu0 0.0
    %3832 = vmatpush1.xpose.msra.mxu0 0.0
    %3833 = vmatprep.subr.mxu0 0.0
    %3834 = vmatpush1.xpose.msra.mxu0 0.0
    %3835 = vmatprep.subr.mxu0 0.0
    %3836 = vmatpush1.xpose.msra.mxu0 0.0
    %3837 = vmatprep.subr.mxu0 0.0
    %3838 = vmatpush1.xpose.msra.mxu0 0.0
    %3839 = vmatprep.mubr.f32.mxu0 0.0
    %3840 = vmatmul.mubr.f32.gmra.mrb[0].mxu0 %v3771
    %v3841 = vpop.f32.mrb[0].mxu0
    %v3842 = vadd.f32 0.0, %v3841
    %v3843 = vpop.f32.mrb[0].mxu0
    %3844 = vdwg.mxu0
    %v3845 = vmul.f32 %v3842, 0.35355338
    %v3846 = vsel %vm158, %v3845, -inf
    %3847 = vmax.xlane.f32.xlu0 %v3846
    %v3848 = vpop.xlane.xlu0 %3847
    %v3849 = vsub.f32 %v3845, %v3848
    %v3850 = vmul.f32 %v3849, 1.442695
    %v3851 = vpow.pop %v3850
    %v3852 = vsel %vm158, %v3851, 0.0
    %3853 = vadd.xlane.f32.xlu0 %v3852
    %v3854 = vpop.xlane.xlu0 %3853
    %v3855 = vrcp.pop %v3854
    %v3856 = vmul.f32 %v3851, %v3855
    %s3857 = scalar_lea.vmem [#allocation4], 48
    %3858 = vst.msk [vmem:[%s3857] sm:$0xff] %vm158, %v3856
    %3859 = vrot.lane.b32.xlu0 %v2315, 80
    %v3860 = vpop.permute.xlu0 %3859
    %v3863 = vsel %vm158, %v3856, 0
    %3865 = vmatprep.subr.mxu0 0.0
    %3866 = vmatpush1.msra.mxu0 %v3860
    %3867 = vmatprep.subr.mxu0 0.0
    %3868 = vmatpush1.msra.mxu0 0.0
    %3869 = vmatprep.subr.mxu0 0.0
    %3870 = vmatpush1.msra.mxu0 0.0
    %3871 = vmatprep.subr.mxu0 0.0
    %3872 = vmatpush1.msra.mxu0 0.0
    %3873 = vmatprep.subr.mxu0 0.0
    %3874 = vmatpush1.msra.mxu0 0.0
    %3875 = vmatprep.subr.mxu0 0.0
    %3876 = vmatpush1.msra.mxu0 0.0
    %3877 = vmatprep.subr.mxu0 0.0
    %3878 = vmatpush1.msra.mxu0 0.0
    %3879 = vmatprep.subr.mxu0 0.0
    %3880 = vmatpush1.msra.mxu0 0.0
    %3881 = vmatprep.subr.mxu0 0.0
    %3882 = vmatpush1.msra.mxu0 0.0
    %3883 = vmatprep.subr.mxu0 0.0
    %3884 = vmatpush1.msra.mxu0 0.0
    %3885 = vmatprep.subr.mxu0 0.0
    %3886 = vmatpush1.msra.mxu0 0.0
    %3887 = vmatprep.subr.mxu0 0.0
    %3888 = vmatpush1.msra.mxu0 0.0
    %3889 = vmatprep.subr.mxu0 0.0
    %3890 = vmatpush1.msra.mxu0 0.0
    %3891 = vmatprep.subr.mxu0 0.0
    %3892 = vmatpush1.msra.mxu0 0.0
    %3893 = vmatprep.subr.mxu0 0.0
    %3894 = vmatpush1.msra.mxu0 0.0
    %3895 = vmatprep.subr.mxu0 0.0
    %3896 = vmatpush1.msra.mxu0 0.0
    %3897 = vmatprep.subr.mxu0 0.0
    %3898 = vmatpush1.msra.mxu0 0.0
    %3899 = vmatprep.subr.mxu0 0.0
    %3900 = vmatpush1.msra.mxu0 0.0
    %3901 = vmatprep.subr.mxu0 0.0
    %3902 = vmatpush1.msra.mxu0 0.0
    %3903 = vmatprep.subr.mxu0 0.0
    %3904 = vmatpush1.msra.mxu0 0.0
    %3905 = vmatprep.subr.mxu0 0.0
    %3906 = vmatpush1.msra.mxu0 0.0
    %3907 = vmatprep.subr.mxu0 0.0
    %3908 = vmatpush1.msra.mxu0 0.0
    %3909 = vmatprep.subr.mxu0 0.0
    %3910 = vmatpush1.msra.mxu0 0.0
    %3911 = vmatprep.subr.mxu0 0.0
    %3912 = vmatpush1.msra.mxu0 0.0
    %3913 = vmatprep.subr.mxu0 0.0
    %3914 = vmatpush1.msra.mxu0 0.0
    %3915 = vmatprep.subr.mxu0 0.0
    %3916 = vmatpush1.msra.mxu0 0.0
    %3917 = vmatprep.subr.mxu0 0.0
    %3918 = vmatpush1.msra.mxu0 0.0
    %3919 = vmatprep.subr.mxu0 0.0
    %3920 = vmatpush1.msra.mxu0 0.0
    %3921 = vmatprep.subr.mxu0 0.0
    %3922 = vmatpush1.msra.mxu0 0.0
    %3923 = vmatprep.subr.mxu0 0.0
    %3924 = vmatpush1.msra.mxu0 0.0
    %3925 = vmatprep.subr.mxu0 0.0
    %3926 = vmatpush1.msra.mxu0 0.0
    %3927 = vmatprep.subr.mxu0 0.0
    %3928 = vmatpush1.msra.mxu0 0.0
    %3929 = vmatprep.mubr.f32.mxu0 0.0
    %3930 = vmatmul.mubr.f32.gmra.mrb[0].mxu0 %v3863
    %v3931 = vpop.f32.mrb[0].mxu0
    %v3932 = vadd.f32 0.0, %v3931
    %v3933 = vpop.f32.mrb[0].mxu0
    %3934 = vdwg.mxu0
    %v3935 = vld [vmem:[%s9 + $0x10] sm:$0xff]
    %v3937 = vsel %vm158, %v3932, 0
    %3939 = vmatprep.subr.mxu0 0.0
    %3940 = vmatpush1.msra.mxu0 %v3935
    %3941 = vmatprep.subr.mxu0 0.0
    %3942 = vmatpush1.msra.mxu0 0.0
    %3943 = vmatprep.subr.mxu0 0.0
    %3944 = vmatpush1.msra.mxu0 0.0
    %3945 = vmatprep.subr.mxu0 0.0
    %3946 = vmatpush1.msra.mxu0 0.0
    %3947 = vmatprep.subr.mxu0 0.0
    %3948 = vmatpush1.msra.mxu0 0.0
    %3949 = vmatprep.subr.mxu0 0.0
    %3950 = vmatpush1.msra.mxu0 0.0
    %3951 = vmatprep.subr.mxu0 0.0
    %3952 = vmatpush1.msra.mxu0 0.0
    %3953 = vmatprep.subr.mxu0 0.0
    %3954 = vmatpush1.msra.mxu0 0.0
    %3955 = vmatprep.subr.mxu0 0.0
    %3956 = vmatpush1.msra.mxu0 0.0
    %3957 = vmatprep.subr.mxu0 0.0
    %3958 = vmatpush1.msra.mxu0 0.0
    %3959 = vmatprep.subr.mxu0 0.0
    %3960 = vmatpush1.msra.mxu0 0.0
    %3961 = vmatprep.subr.mxu0 0.0
    %3962 = vmatpush1.msra.mxu0 0.0
    %3963 = vmatprep.subr.mxu0 0.0
    %3964 = vmatpush1.msra.mxu0 0.0
    %3965 = vmatprep.subr.mxu0 0.0
    %3966 = vmatpush1.msra.mxu0 0.0
    %3967 = vmatprep.subr.mxu0 0.0
    %3968 = vmatpush1.msra.mxu0 0.0
    %3969 = vmatprep.subr.mxu0 0.0
    %3970 = vmatpush1.msra.mxu0 0.0
    %3971 = vmatprep.subr.mxu0 0.0
    %3972 = vmatpush1.msra.mxu0 0.0
    %3973 = vmatprep.subr.mxu0 0.0
    %3974 = vmatpush1.msra.mxu0 0.0
    %3975 = vmatprep.subr.mxu0 0.0
    %3976 = vmatpush1.msra.mxu0 0.0
    %3977 = vmatprep.subr.mxu0 0.0
    %3978 = vmatpush1.msra.mxu0 0.0
    %3979 = vmatprep.subr.mxu0 0.0
    %3980 = vmatpush1.msra.mxu0 0.0
    %3981 = vmatprep.subr.mxu0 0.0
    %3982 = vmatpush1.msra.mxu0 0.0
    %3983 = vmatprep.subr.mxu0 0.0
    %3984 = vmatpush1.msra.mxu0 0.0
    %3985 = vmatprep.subr.mxu0 0.0
    %3986 = vmatpush1.msra.mxu0 0.0
    %3987 = vmatprep.subr.mxu0 0.0
    %3988 = vmatpush1.msra.mxu0 0.0
    %3989 = vmatprep.subr.mxu0 0.0
    %3990 = vmatpush1.msra.mxu0 0.0
    %3991 = vmatprep.subr.mxu0 0.0
    %3992 = vmatpush1.msra.mxu0 0.0
    %3993 = vmatprep.subr.mxu0 0.0
    %3994 = vmatpush1.msra.mxu0 0.0
    %3995 = vmatprep.subr.mxu0 0.0
    %3996 = vmatpush1.msra.mxu0 0.0
    %3997 = vmatprep.subr.mxu0 0.0
    %3998 = vmatpush1.msra.mxu0 0.0
    %3999 = vmatprep.subr.mxu0 0.0
    %4000 = vmatpush1.msra.mxu0 0.0
    %4001 = vmatprep.subr.mxu0 0.0
    %4002 = vmatpush1.msra.mxu0 0.0
    %4003 = vmatprep.mubr.f32.mxu0 0.0
    %4004 = vmatmul.mubr.f32.gmra.mrb[0].mxu0 %v3937
    %v4005 = vpop.f32.mrb[0].mxu0
    %v4006 = vadd.f32 0.0, %v4005
    %v4007 = vpop.f32.mrb[0].mxu0
    %4008 = vdwg.mxu0
    %v4009 = vadd.f32 %v3764, %v4006
    %4010 = vrot.lane.b32.xlu0 %v2230, 104
    %v4011 = vpop.permute.xlu0 %4010
    %4012 = vrot.lane.b32.xlu0 %v2315, 104
    %v4013 = vpop.permute.xlu0 %4012
    %v4014 = vsel %vm158, %v4011, 0
    %v4016 = vsel %vm158, %v4013, 0
    %4018 = vmatprep.subr.mxu0 0.0
    %4019 = vmatpush1.xpose.msra.mxu0 %v4016
    %4020 = vmatprep.subr.mxu0 0.0
    %4021 = vmatpush1.xpose.msra.mxu0 0.0
    %4022 = vmatprep.subr.mxu0 0.0
    %4023 = vmatpush1.xpose.msra.mxu0 0.0
    %4024 = vmatprep.subr.mxu0 0.0
    %4025 = vmatpush1.xpose.msra.mxu0 0.0
    %4026 = vmatprep.subr.mxu0 0.0
    %4027 = vmatpush1.xpose.msra.mxu0 0.0
    %4028 = vmatprep.subr.mxu0 0.0
    %4029 = vmatpush1.xpose.msra.mxu0 0.0
    %4030 = vmatprep.subr.mxu0 0.0
    %4031 = vmatpush1.xpose.msra.mxu0 0.0
    %4032 = vmatprep.subr.mxu0 0.0
    %4033 = vmatpush1.xpose.msra.mxu0 0.0
    %4034 = vmatprep.subr.mxu0 0.0
    %4035 = vmatpush1.xpose.msra.mxu0 0.0
    %4036 = vmatprep.subr.mxu0 0.0
    %4037 = vmatpush1.xpose.msra.mxu0 0.0
    %4038 = vmatprep.subr.mxu0 0.0
    %4039 = vmatpush1.xpose.msra.mxu0 0.0
    %4040 = vmatprep.subr.mxu0 0.0
    %4041 = vmatpush1.xpose.msra.mxu0 0.0
    %4042 = vmatprep.subr.mxu0 0.0
    %4043 = vmatpush1.xpose.msra.mxu0 0.0
    %4044 = vmatprep.subr.mxu0 0.0
    %4045 = vmatpush1.xpose.msra.mxu0 0.0
    %4046 = vmatprep.subr.mxu0 0.0
    %4047 = vmatpush1.xpose.msra.mxu0 0.0
    %4048 = vmatprep.subr.mxu0 0.0
    %4049 = vmatpush1.xpose.msra.mxu0 0.0
    %4050 = vmatprep.subr.mxu0 0.0
    %4051 = vmatpush1.xpose.msra.mxu0 0.0
    %4052 = vmatprep.subr.mxu0 0.0
    %4053 = vmatpush1.xpose.msra.mxu0 0.0
    %4054 = vmatprep.subr.mxu0 0.0
    %4055 = vmatpush1.xpose.msra.mxu0 0.0
    %4056 = vmatprep.subr.mxu0 0.0
    %4057 = vmatpush1.xpose.msra.mxu0 0.0
    %4058 = vmatprep.subr.mxu0 0.0
    %4059 = vmatpush1.xpose.msra.mxu0 0.0
    %4060 = vmatprep.subr.mxu0 0.0
    %4061 = vmatpush1.xpose.msra.mxu0 0.0
    %4062 = vmatprep.subr.mxu0 0.0
    %4063 = vmatpush1.xpose.msra.mxu0 0.0
    %4064 = vmatprep.subr.mxu0 0.0
    %4065 = vmatpush1.xpose.msra.mxu0 0.0
    %4066 = vmatprep.subr.mxu0 0.0
    %4067 = vmatpush1.xpose.msra.mxu0 0.0
    %4068 = vmatprep.subr.mxu0 0.0
    %4069 = vmatpush1.xpose.msra.mxu0 0.0
    %4070 = vmatprep.subr.mxu0 0.0
    %4071 = vmatpush1.xpose.msra.mxu0 0.0
    %4072 = vmatprep.subr.mxu0 0.0
    %4073 = vmatpush1.xpose.msra.mxu0 0.0
    %4074 = vmatprep.subr.mxu0 0.0
    %4075 = vmatpush1.xpose.msra.mxu0 0.0
    %4076 = vmatprep.subr.mxu0 0.0
    %4077 = vmatpush1.xpose.msra.mxu0 0.0
    %4078 = vmatprep.subr.mxu0 0.0
    %4079 = vmatpush1.xpose.msra.mxu0 0.0
    %4080 = vmatprep.subr.mxu0 0.0
    %4081 = vmatpush1.xpose.msra.mxu0 0.0
    %4082 = vmatprep.mubr.f32.mxu0 0.0
    %4083 = vmatmul.mubr.f32.gmra.mrb[0].mxu0 %v4014
    %v4084 = vpop.f32.mrb[0].mxu0
    %v4085 = vadd.f32 0.0, %v4084
    %v4086 = vpop.f32.mrb[0].mxu0
    %4087 = vdwg.mxu0
    %v4088 = vmul.f32 %v4085, 0.35355338
    %v4089 = vsel %vm158, %v4088, -inf
    %4090 = vmax.xlane.f32.xlu0 %v4089
    %v4091 = vpop.xlane.xlu0 %4090
    %v4092 = vsub.f32 %v4088, %v4091
    %v4093 = vmul.f32 %v4092, 1.442695
    %v4094 = vpow.pop %v4093
    %v4095 = vsel %vm158, %v4094, 0.0
    %4096 = vadd.xlane.f32.xlu0 %v4095
    %v4097 = vpop.xlane.xlu0 %4096
    %v4098 = vrcp.pop %v4097
    %v4099 = vmul.f32 %v4094, %v4098
    %s4100 = scalar_lea.vmem [#allocation4], 56
    %4101 = vst.msk [vmem:[%s4100] sm:$0xff] %vm158, %v4099
    %4102 = vrot.lane.b32.xlu0 %v2315, 72
    %v4103 = vpop.permute.xlu0 %4102
    %v4106 = vsel %vm158, %v4099, 0
    %4108 = vmatprep.subr.mxu0 0.0
    %4109 = vmatpush1.msra.mxu0 %v4103
    %4110 = vmatprep.subr.mxu0 0.0
    %4111 = vmatpush1.msra.mxu0 0.0
    %4112 = vmatprep.subr.mxu0 0.0
    %4113 = vmatpush1.msra.mxu0 0.0
    %4114 = vmatprep.subr.mxu0 0.0
    %4115 = vmatpush1.msra.mxu0 0.0
    %4116 = vmatprep.subr.mxu0 0.0
    %4117 = vmatpush1.msra.mxu0 0.0
    %4118 = vmatprep.subr.mxu0 0.0
    %4119 = vmatpush1.msra.mxu0 0.0
    %4120 = vmatprep.subr.mxu0 0.0
    %4121 = vmatpush1.msra.mxu0 0.0
    %4122 = vmatprep.subr.mxu0 0.0
    %4123 = vmatpush1.msra.mxu0 0.0
    %4124 = vmatprep.subr.mxu0 0.0
    %4125 = vmatpush1.msra.mxu0 0.0
    %4126 = vmatprep.subr.mxu0 0.0
    %4127 = vmatpush1.msra.mxu0 0.0
    %4128 = vmatprep.subr.mxu0 0.0
    %4129 = vmatpush1.msra.mxu0 0.0
    %4130 = vmatprep.subr.mxu0 0.0
    %4131 = vmatpush1.msra.mxu0 0.0
    %4132 = vmatprep.subr.mxu0 0.0
    %4133 = vmatpush1.msra.mxu0 0.0
    %4134 = vmatprep.subr.mxu0 0.0
    %4135 = vmatpush1.msra.mxu0 0.0
    %4136 = vmatprep.subr.mxu0 0.0
    %4137 = vmatpush1.msra.mxu0 0.0
    %4138 = vmatprep.subr.mxu0 0.0
    %4139 = vmatpush1.msra.mxu0 0.0
    %4140 = vmatprep.subr.mxu0 0.0
    %4141 = vmatpush1.msra.mxu0 0.0
    %4142 = vmatprep.subr.mxu0 0.0
    %4143 = vmatpush1.msra.mxu0 0.0
    %4144 = vmatprep.subr.mxu0 0.0
    %4145 = vmatpush1.msra.mxu0 0.0
    %4146 = vmatprep.subr.mxu0 0.0
    %4147 = vmatpush1.msra.mxu0 0.0
    %4148 = vmatprep.subr.mxu0 0.0
    %4149 = vmatpush1.msra.mxu0 0.0
    %4150 = vmatprep.subr.mxu0 0.0
    %4151 = vmatpush1.msra.mxu0 0.0
    %4152 = vmatprep.subr.mxu0 0.0
    %4153 = vmatpush1.msra.mxu0 0.0
    %4154 = vmatprep.subr.mxu0 0.0
    %4155 = vmatpush1.msra.mxu0 0.0
    %4156 = vmatprep.subr.mxu0 0.0
    %4157 = vmatpush1.msra.mxu0 0.0
    %4158 = vmatprep.subr.mxu0 0.0
    %4159 = vmatpush1.msra.mxu0 0.0
    %4160 = vmatprep.subr.mxu0 0.0
    %4161 = vmatpush1.msra.mxu0 0.0
    %4162 = vmatprep.subr.mxu0 0.0
    %4163 = vmatpush1.msra.mxu0 0.0
    %4164 = vmatprep.subr.mxu0 0.0
    %4165 = vmatpush1.msra.mxu0 0.0
    %4166 = vmatprep.subr.mxu0 0.0
    %4167 = vmatpush1.msra.mxu0 0.0
    %4168 = vmatprep.subr.mxu0 0.0
    %4169 = vmatpush1.msra.mxu0 0.0
    %4170 = vmatprep.subr.mxu0 0.0
    %4171 = vmatpush1.msra.mxu0 0.0
    %4172 = vmatprep.mubr.f32.mxu0 0.0
    %4173 = vmatmul.mubr.f32.gmra.mrb[0].mxu0 %v4106
    %v4174 = vpop.f32.mrb[0].mxu0
    %v4175 = vadd.f32 0.0, %v4174
    %v4176 = vpop.f32.mrb[0].mxu0
    %4177 = vdwg.mxu0
    %v4178 = vld [vmem:[%s9 + $0x18] sm:$0xff]
    %v4180 = vsel %vm158, %v4175, 0
    %4182 = vmatprep.subr.mxu0 0.0
    %4183 = vmatpush1.msra.mxu0 %v4178
    %4184 = vmatprep.subr.mxu0 0.0
    %4185 = vmatpush1.msra.mxu0 0.0
    %4186 = vmatprep.subr.mxu0 0.0
    %4187 = vmatpush1.msra.mxu0 0.0
    %4188 = vmatprep.subr.mxu0 0.0
    %4189 = vmatpush1.msra.mxu0 0.0
    %4190 = vmatprep.subr.mxu0 0.0
    %4191 = vmatpush1.msra.mxu0 0.0
    %4192 = vmatprep.subr.mxu0 0.0
    %4193 = vmatpush1.msra.mxu0 0.0
    %4194 = vmatprep.subr.mxu0 0.0
    %4195 = vmatpush1.msra.mxu0 0.0
    %4196 = vmatprep.subr.mxu0 0.0
    %4197 = vmatpush1.msra.mxu0 0.0
    %4198 = vmatprep.subr.mxu0 0.0
    %4199 = vmatpush1.msra.mxu0 0.0
    %4200 = vmatprep.subr.mxu0 0.0
    %4201 = vmatpush1.msra.mxu0 0.0
    %4202 = vmatprep.subr.mxu0 0.0
    %4203 = vmatpush1.msra.mxu0 0.0
    %4204 = vmatprep.subr.mxu0 0.0
    %4205 = vmatpush1.msra.mxu0 0.0
    %4206 = vmatprep.subr.mxu0 0.0
    %4207 = vmatpush1.msra.mxu0 0.0
    %4208 = vmatprep.subr.mxu0 0.0
    %4209 = vmatpush1.msra.mxu0 0.0
    %4210 = vmatprep.subr.mxu0 0.0
    %4211 = vmatpush1.msra.mxu0 0.0
    %4212 = vmatprep.subr.mxu0 0.0
    %4213 = vmatpush1.msra.mxu0 0.0
    %4214 = vmatprep.subr.mxu0 0.0
    %4215 = vmatpush1.msra.mxu0 0.0
    %4216 = vmatprep.subr.mxu0 0.0
    %4217 = vmatpush1.msra.mxu0 0.0
    %4218 = vmatprep.subr.mxu0 0.0
    %4219 = vmatpush1.msra.mxu0 0.0
    %4220 = vmatprep.subr.mxu0 0.0
    %4221 = vmatpush1.msra.mxu0 0.0
    %4222 = vmatprep.subr.mxu0 0.0
    %4223 = vmatpush1.msra.mxu0 0.0
    %4224 = vmatprep.subr.mxu0 0.0
    %4225 = vmatpush1.msra.mxu0 0.0
    %4226 = vmatprep.subr.mxu0 0.0
    %4227 = vmatpush1.msra.mxu0 0.0
    %4228 = vmatprep.subr.mxu0 0.0
    %4229 = vmatpush1.msra.mxu0 0.0
    %4230 = vmatprep.subr.mxu0 0.0
    %4231 = vmatpush1.msra.mxu0 0.0
    %4232 = vmatprep.subr.mxu0 0.0
    %4233 = vmatpush1.msra.mxu0 0.0
    %4234 = vmatprep.subr.mxu0 0.0
    %4235 = vmatpush1.msra.mxu0 0.0
    %4236 = vmatprep.subr.mxu0 0.0
    %4237 = vmatpush1.msra.mxu0 0.0
    %4238 = vmatprep.subr.mxu0 0.0
    %4239 = vmatpush1.msra.mxu0 0.0
    %4240 = vmatprep.subr.mxu0 0.0
    %4241 = vmatpush1.msra.mxu0 0.0
    %4242 = vmatprep.subr.mxu0 0.0
    %4243 = vmatpush1.msra.mxu0 0.0
    %4244 = vmatprep.subr.mxu0 0.0
    %4245 = vmatpush1.msra.mxu0 0.0
    %4246 = vmatprep.mubr.f32.mxu0 0.0
    %4247 = vmatmul.mubr.f32.gmra.mrb[0].mxu0 %v4180
    %v4248 = vpop.f32.mrb[0].mxu0
    %v4249 = vadd.f32 0.0, %v4248
    %v4250 = vpop.f32.mrb[0].mxu0
    %4251 = vdwg.mxu0
    %v4252 = vadd.f32 %v4009, %v4249
    %v4253 = vadd.f32 %v2146, %v3284
    %v4254 = vadd.f32 %v2147, %v4252
    %v4255 = vld [vmem:[%s10] sm:$0x1]
    %v4256 = vld [vmem:[%s11] sm:$0x1]
    %v4257 = vsel %vm73, %v4253, 0.0
    %4258 = vadd.xlane.f32.xlu0 %v4257
    %v4259 = vpop.xlane.xlu0 %4258
    %v4260 = vsel %vm73, %v4254, 0.0
    %4261 = vadd.xlane.f32.xlu0 %v4260
    %v4262 = vpop.xlane.xlu0 %4261
    %v4263 = vmul.f32 %v4259, %v2111
    %v4264 = vmul.f32 %v4262, %v2111
    %v4265 = vsub.f32 %v4253, %v4263
    %v4266 = vsub.f32 %v4254, %v4264
    %v4267 = vmul.f32 %v4265, %v4265
    %v4268 = vmul.f32 %v4266, %v4266
    %v4269 = vsel %vm73, %v4267, 0.0
    %4270 = vadd.xlane.f32.xlu0 %v4269
    %v4271 = vpop.xlane.xlu0 %4270
    %v4272 = vsel %vm73, %v4268, 0.0
    %4273 = vadd.xlane.f32.xlu0 %v4272
    %v4274 = vpop.xlane.xlu0 %4273
    %v4275 = vmul.f32 %v4271, %v2111
    %v4276 = vmul.f32 %v4274, %v2111
    %v4277 = vadd.f32 %v4275, 1e-05
    %v4278 = vadd.f32 %v4276, 1e-05
    %v4279 = vrsqrt.pop %v4277
    %v4280 = vrsqrt.pop %v4278
    %v4281 = vmul.f32 %v4265, %v4279
    %v4282 = vmul.f32 %v4266, %v4280
    %v4284 = vlaneseq
    %v4285 = vshrl.u32 %v4284, 7
    %v4286 = vsub.s32 0, %v4285
    %v4287 = vrot.slane %v4255, %v4286
    %v4289 = vmul.f32 %v4281, %v4287
    %v4290 = vmul.f32 %v4282, %v4287
    %v4292 = vlaneseq
    %v4293 = vshrl.u32 %v4292, 7
    %v4294 = vsub.s32 0, %v4293
    %v4295 = vrot.slane %v4256, %v4294
    %v4297 = vadd.f32 %v4289, %v4295
    %v4298 = vadd.f32 %v4290, %v4295
    %v4299 = vld [vmem:[%s12] sm:$0xff]
    %v4300 = vld [vmem:[%s12 + $0x8] sm:$0xff]
    %v4301 = vld [vmem:[%s12 + $0x10] sm:$0xff]
    %v4302 = vld [vmem:[%s12 + $0x18] sm:$0xff]
    %v4303 = vld [vmem:[%s13] sm:$0x1]
    %v4305 = vlaneseq
    %v4306 = vshrl.u32 %v4305, 7
    %v4307 = vsub.s32 0, %v4306
    %v4308 = vrot.slane %v4303, %v4307
    %v4311 = vsel %vm73, %v4297, 0
    %v4314 = vsel %vm73, %v4298, 0
    %4316 = vmatprep.subr.mxu0 0.0
    %4317 = vmatpush1.msra.mxu0 %v4299
    %4318 = vmatprep.subr.mxu0 0.0
    %4319 = vmatpush1.msra.mxu0 %v4300
    %4320 = vmatprep.subr.mxu0 0.0
    %4321 = vmatpush1.msra.mxu0 %v4301
    %4322 = vmatprep.subr.mxu0 0.0
    %4323 = vmatpush1.msra.mxu0 %v4302
    %4324 = vmatprep.subr.mxu0 0.0
    %4325 = vmatpush1.msra.mxu0 0.0
    %4326 = vmatprep.subr.mxu0 0.0
    %4327 = vmatpush1.msra.mxu0 0.0
    %4328 = vmatprep.subr.mxu0 0.0
    %4329 = vmatpush1.msra.mxu0 0.0
    %4330 = vmatprep.subr.mxu0 0.0
    %4331 = vmatpush1.msra.mxu0 0.0
    %4332 = vmatprep.subr.mxu0 0.0
    %4333 = vmatpush1.msra.mxu0 0.0
    %4334 = vmatprep.subr.mxu0 0.0
    %4335 = vmatpush1.msra.mxu0 0.0
    %4336 = vmatprep.subr.mxu0 0.0
    %4337 = vmatpush1.msra.mxu0 0.0
    %4338 = vmatprep.subr.mxu0 0.0
    %4339 = vmatpush1.msra.mxu0 0.0
    %4340 = vmatprep.subr.mxu0 0.0
    %4341 = vmatpush1.msra.mxu0 0.0
    %4342 = vmatprep.subr.mxu0 0.0
    %4343 = vmatpush1.msra.mxu0 0.0
    %4344 = vmatprep.subr.mxu0 0.0
    %4345 = vmatpush1.msra.mxu0 0.0
    %4346 = vmatprep.subr.mxu0 0.0
    %4347 = vmatpush1.msra.mxu0 0.0
    %4348 = vmatprep.subr.mxu0 0.0
    %4349 = vmatpush1.msra.mxu0 0.0
    %4350 = vmatprep.subr.mxu0 0.0
    %4351 = vmatpush1.msra.mxu0 0.0
    %4352 = vmatprep.subr.mxu0 0.0
    %4353 = vmatpush1.msra.mxu0 0.0
    %4354 = vmatprep.subr.mxu0 0.0
    %4355 = vmatpush1.msra.mxu0 0.0
    %4356 = vmatprep.subr.mxu0 0.0
    %4357 = vmatpush1.msra.mxu0 0.0
    %4358 = vmatprep.subr.mxu0 0.0
    %4359 = vmatpush1.msra.mxu0 0.0
    %4360 = vmatprep.subr.mxu0 0.0
    %4361 = vmatpush1.msra.mxu0 0.0
    %4362 = vmatprep.subr.mxu0 0.0
    %4363 = vmatpush1.msra.mxu0 0.0
    %4364 = vmatprep.subr.mxu0 0.0
    %4365 = vmatpush1.msra.mxu0 0.0
    %4366 = vmatprep.subr.mxu0 0.0
    %4367 = vmatpush1.msra.mxu0 0.0
    %4368 = vmatprep.subr.mxu0 0.0
    %4369 = vmatpush1.msra.mxu0 0.0
    %4370 = vmatprep.subr.mxu0 0.0
    %4371 = vmatpush1.msra.mxu0 0.0
    %4372 = vmatprep.subr.mxu0 0.0
    %4373 = vmatpush1.msra.mxu0 0.0
    %4374 = vmatprep.subr.mxu0 0.0
    %4375 = vmatpush1.msra.mxu0 0.0
    %4376 = vmatprep.subr.mxu0 0.0
    %4377 = vmatpush1.msra.mxu0 0.0
    %4378 = vmatprep.subr.mxu0 0.0
    %4379 = vmatpush1.msra.mxu0 0.0
    %4380 = vmatprep.mubr.f32.mxu0 0.0
    %4381 = vmatmul.mubr.f32.gmra.mrb[0].mxu0 %v4311
    %v4382 = vpop.f32.mrb[0].mxu0
    %v4383 = vadd.f32 %v4308, %v4382
    %v4384 = vpop.f32.mrb[0].mxu0
    %4385 = vmatprep.mubr.f32.mxu0 0.0
    %4386 = vmatmul.mubr.f32.gmra.mrb[0].mxu0 %v4314
    %v4387 = vpop.f32.mrb[0].mxu0
    %v4388 = vadd.f32 %v4308, %v4387
    %v4389 = vpop.f32.mrb[0].mxu0
    %4390 = vdwg.mxu0
    %v4391 = vmax.f32 %v4383, 0.0
    %v4392 = vmax.f32 %v4388, 0.0
    %v4393 = vld [vmem:[%s14] sm:$0xff]
    %v4394 = vld [vmem:[%s14 + $0x8] sm:$0xff]
    %v4395 = vld [vmem:[%s14 + $0x10] sm:$0xff]
    %v4396 = vld [vmem:[%s14 + $0x18] sm:$0xff]
    %v4397 = vld [vmem:[%s14 + $0x20] sm:$0xff]
    %v4398 = vld [vmem:[%s14 + $0x28] sm:$0xff]
    %v4399 = vld [vmem:[%s14 + $0x30] sm:$0xff]
    %v4400 = vld [vmem:[%s14 + $0x38] sm:$0xff]
    %v4401 = vld [vmem:[%s15] sm:$0x1]
    %v4403 = vlaneseq
    %v4404 = vshrl.u32 %v4403, 7
    %v4405 = vsub.s32 0, %v4404
    %v4406 = vrot.slane %v4401, %v4405
    %vm4408 = vcmask 523264
    %v4410 = vsel %vm4408, %v4391, 0
    %v4413 = vsel %vm4408, %v4392, 0
    %4415 = vmatprep.subr.mxu0 0.0
    %4416 = vmatpush1.msra.mxu0 %v4393
    %4417 = vmatprep.subr.mxu0 0.0
    %4418 = vmatpush1.msra.mxu0 %v4394
    %4419 = vmatprep.subr.mxu0 0.0
    %4420 = vmatpush1.msra.mxu0 %v4395
    %4421 = vmatprep.subr.mxu0 0.0
    %4422 = vmatpush1.msra.mxu0 %v4396
    %4423 = vmatprep.subr.mxu0 0.0
    %4424 = vmatpush1.msra.mxu0 %v4397
    %4425 = vmatprep.subr.mxu0 0.0
    %4426 = vmatpush1.msra.mxu0 %v4398
    %4427 = vmatprep.subr.mxu0 0.0
    %4428 = vmatpush1.msra.mxu0 %v4399
    %4429 = vmatprep.subr.mxu0 0.0
    %4430 = vmatpush1.msra.mxu0 %v4400
    %4431 = vmatprep.subr.mxu0 0.0
    %4432 = vmatpush1.msra.mxu0 0.0
    %4433 = vmatprep.subr.mxu0 0.0
    %4434 = vmatpush1.msra.mxu0 0.0
    %4435 = vmatprep.subr.mxu0 0.0
    %4436 = vmatpush1.msra.mxu0 0.0
    %4437 = vmatprep.subr.mxu0 0.0
    %4438 = vmatpush1.msra.mxu0 0.0
    %4439 = vmatprep.subr.mxu0 0.0
    %4440 = vmatpush1.msra.mxu0 0.0
    %4441 = vmatprep.subr.mxu0 0.0
    %4442 = vmatpush1.msra.mxu0 0.0
    %4443 = vmatprep.subr.mxu0 0.0
    %4444 = vmatpush1.msra.mxu0 0.0
    %4445 = vmatprep.subr.mxu0 0.0
    %4446 = vmatpush1.msra.mxu0 0.0
    %4447 = vmatprep.subr.mxu0 0.0
    %4448 = vmatpush1.msra.mxu0 0.0
    %4449 = vmatprep.subr.mxu0 0.0
    %4450 = vmatpush1.msra.mxu0 0.0
    %4451 = vmatprep.subr.mxu0 0.0
    %4452 = vmatpush1.msra.mxu0 0.0
    %4453 = vmatprep.subr.mxu0 0.0
    %4454 = vmatpush1.msra.mxu0 0.0
    %4455 = vmatprep.subr.mxu0 0.0
    %4456 = vmatpush1.msra.mxu0 0.0
    %4457 = vmatprep.subr.mxu0 0.0
    %4458 = vmatpush1.msra.mxu0 0.0
    %4459 = vmatprep.subr.mxu0 0.0
    %4460 = vmatpush1.msra.mxu0 0.0
    %4461 = vmatprep.subr.mxu0 0.0
    %4462 = vmatpush1.msra.mxu0 0.0
    %4463 = vmatprep.subr.mxu0 0.0
    %4464 = vmatpush1.msra.mxu0 0.0
    %4465 = vmatprep.subr.mxu0 0.0
    %4466 = vmatpush1.msra.mxu0 0.0
    %4467 = vmatprep.subr.mxu0 0.0
    %4468 = vmatpush1.msra.mxu0 0.0
    %4469 = vmatprep.subr.mxu0 0.0
    %4470 = vmatpush1.msra.mxu0 0.0
    %4471 = vmatprep.subr.mxu0 0.0
    %4472 = vmatpush1.msra.mxu0 0.0
    %4473 = vmatprep.subr.mxu0 0.0
    %4474 = vmatpush1.msra.mxu0 0.0
    %4475 = vmatprep.subr.mxu0 0.0
    %4476 = vmatpush1.msra.mxu0 0.0
    %4477 = vmatprep.subr.mxu0 0.0
    %4478 = vmatpush1.msra.mxu0 0.0
    %4479 = vmatprep.mubr.f32.mxu0 0.0
    %4480 = vmatmul.mubr.f32.gmra.mrb[0].mxu0 %v4410
    %v4481 = vpop.f32.mrb[0].mxu0
    %v4482 = vadd.f32 %v4406, %v4481
    %v4483 = vpop.f32.mrb[0].mxu0
    %4484 = vmatprep.mubr.f32.mxu0 0.0
    %4485 = vmatmul.mubr.f32.gmra.mrb[0].mxu0 %v4413
    %v4486 = vpop.f32.mrb[0].mxu0
    %v4487 = vadd.f32 %v4406, %v4486
    %v4488 = vpop.f32.mrb[0].mxu0
    %4489 = vdwg.mxu0
    %v4490 = vadd.f32 %v4297, %v4482
    %v4491 = vadd.f32 %v4298, %v4487
    %v4492 = vld [vmem:[%s16] sm:$0x1]
    %v4493 = vld [vmem:[%s17] sm:$0x1]
    %v4494 = vsel %vm73, %v4490, 0.0
    %4495 = vadd.xlane.f32.xlu0 %v4494
    %v4496 = vpop.xlane.xlu0 %4495
    %v4497 = vsel %vm73, %v4491, 0.0
    %4498 = vadd.xlane.f32.xlu0 %v4497
    %v4499 = vpop.xlane.xlu0 %4498
    %v4500 = vmul.f32 %v4496, %v2111
    %v4501 = vmul.f32 %v4499, %v2111
    %v4502 = vsub.f32 %v4490, %v4500
    %v4503 = vsub.f32 %v4491, %v4501
    %v4504 = vmul.f32 %v4502, %v4502
    %v4505 = vmul.f32 %v4503, %v4503
    %v4506 = vsel %vm73, %v4504, 0.0
    %4507 = vadd.xlane.f32.xlu0 %v4506
    %v4508 = vpop.xlane.xlu0 %4507
    %v4509 = vsel %vm73, %v4505, 0.0
    %4510 = vadd.xlane.f32.xlu0 %v4509
    %v4511 = vpop.xlane.xlu0 %4510
    %v4512 = vmul.f32 %v4508, %v2111
    %v4513 = vmul.f32 %v4511, %v2111
    %v4514 = vadd.f32 %v4512, 1e-05
    %v4515 = vadd.f32 %v4513, 1e-05
    %v4516 = vrsqrt.pop %v4514
    %v4517 = vrsqrt.pop %v4515
    %v4518 = vmul.f32 %v4502, %v4516
    %v4519 = vmul.f32 %v4503, %v4517
    %v4521 = vlaneseq
    %v4522 = vshrl.u32 %v4521, 7
    %v4523 = vsub.s32 0, %v4522
    %v4524 = vrot.slane %v4492, %v4523
    %v4526 = vmul.f32 %v4518, %v4524
    %v4527 = vmul.f32 %v4519, %v4524
    %v4529 = vlaneseq
    %v4530 = vshrl.u32 %v4529, 7
    %v4531 = vsub.s32 0, %v4530
    %v4532 = vrot.slane %v4493, %v4531
    %v4534 = vadd.f32 %v4526, %v4532
    %v4535 = vadd.f32 %v4527, %v4532
    %4536 = vst.msk [vmem:[%s18] sm:$0xff] %vm73, %v4534
    %4537 = vst.msk [vmem:[%s18 + $0x8] sm:$0xff] %vm73, %v4535
    // Predicated region
    $region74: #{generator_forward.4} parent=1 // pred_check
      _
    $region75: #{generator_forward.4} parent=1 // pred_check_branch
      %4539 = sbr.rel (0) target = $region77
    $region76: #{generator_forward.4} parent=1 // pred_region
      _
    $region77: #{generator_forward.4} parent=1 // pred_fallthru
      _
    // Predicated region
    $region78: #{generator_forward.4} parent=1 // pred_check
      _
    $region79: #{generator_forward.4} parent=1 // pred_check_branch
      %4541 = sbr.rel (0) target = $region81
    $region80: #{generator_forward.4} parent=1 // pred_region
      %s4543 = ssub.s32 1024, 1024
      %4544 = vsyncadd [#allocation3], %s4543
      %s4545 = sshll.u32 [#allocation2], 4
      %s4546 = int_to_ptr.vmem [resolvable:$true] %s4545
      %4551 = dma.vmem_to_hbm [thread:$0]  %s4546, 1024, %s19, [#allocation3], 128, 128, 8
    $region81: #{generator_forward.4} parent=1 // pred_fallthru
      _
    // Predicated region
    $region82: #{generator_forward.4} parent=1 // pred_check
      _
    $region83: #{generator_forward.4} parent=1 // pred_check_branch
      %4553 = sbr.rel (0) target = $region85
    $region84: #{generator_forward.4} parent=1 // pred_region
      %s4555 = ssub.s32 1024, 1024
      %4556 = vsyncadd [#allocation5], %s4555
      %s4557 = sshll.u32 [#allocation4], 4
      %s4558 = int_to_ptr.vmem [resolvable:$true] %s4557
      %4563 = dma.vmem_to_hbm [thread:$0]  %s4558, 1024, %s20, [#allocation5], 128, 128, 8
    $region85: #{generator_forward.4} parent=1 // pred_fallthru
      _
    // Predicated region
    $region86: #{generator_forward.4} parent=1 // pred_check
      _
    $region87: #{generator_forward.4} parent=1 // pred_check_branch
      %4565 = sbr.rel (0) target = $region89
    $region88: #{generator_forward.4} parent=1 // pred_region
      _
    $region89: #{generator_forward.4} parent=1 // pred_fallthru
      _
    // Predicated region
    $region90: #{generator_forward.4} parent=1 // pred_check
      _
    $region91: #{generator_forward.4} parent=1 // pred_check_branch
      %4567 = sbr.rel (0) target = $region93
    $region92: #{generator_forward.4} parent=1 // pred_region
      %4568 = dma.done [#allocation3], 1024
    $region93: #{generator_forward.4} parent=1 // pred_fallthru
      _
    // Predicated region
    $region94: #{generator_forward.4} parent=1 // pred_check
      _
    $region95: #{generator_forward.4} parent=1 // pred_check_branch
      %4570 = sbr.rel (0) target = $region97
    $region96: #{generator_forward.4} parent=1 // pred_region
      %4571 = dma.done [#allocation5], 1024
    $region97: #{generator_forward.4} parent=1 // pred_fallthru
      _
    %4572 = vsyncpa [#allocation3], 1
    %4573 = vsyncpa [#allocation5], 1

</llo_original>
